<compile_context>
chip_gen: v7x
topology: tpu7x:2x2x1
jax: 0.10.0
libtpu: 0.0.40
codegen_flags: <defaults>
</compile_context>

<pallas_src>
import numpy as np
import jax
import jax.numpy as jnp
from jax.experimental import pallas as pl
from jax.experimental.pallas import tpu as pltpu

# ---------------------------------------------------------------------------
# Scaled-down config (original: channels 128/256/256, 28x28 input, fc [512,10],
# time_window=10).  Structure and forward semantics are identical.
# ---------------------------------------------------------------------------
CFG_CNN = [(1, 8, 1, 1, 3), (8, 16, 1, 1, 3), (16, 16, 1, 1, 3)]
CNN_DIM = [16, 8, 4, 2]
CFG_FC = [32, 10]
FC_DIM = CFG_CNN[-1][1] * CNN_DIM[-1] * CNN_DIM[-1]          # 16 * 2 * 2 = 64

DECAY = 0.75
THRESH = 0.45
W_DECAY = 0.9
TAU_W = 30.0
TIME_WINDOW = 4
BATCH = 8

_VMEM = pl.BlockSpec(memory_space=pltpu.MemorySpace.VMEM)
_SMEM = pl.BlockSpec(memory_space=pltpu.MemorySpace.SMEM)

# fc1 feature permutation: inside the kernel fc1 features are kept in (slot, channel) order
# g = s*C3 + c; PyTorch's CHW flatten order is f = c*SLOTS + s.  W1/beta/hebb are permuted at the
# call boundary so the kernel never transposes activations.
_C3 = CFG_CNN[2][1]
_SLOTS = CNN_DIM[3] * CNN_DIM[3]
PERM = np.array([(g % _C3) * _SLOTS + (g // _C3) for g in range(FC_DIM)], np.int32)
INV_PERM = np.array([(f % _SLOTS) * _C3 + (f // _SLOTS) for f in range(FC_DIM)], np.int32)


# ---------------------------------------------------------------------------
# The single fused kernel: whole time loop, all layers, all state resident.
# ---------------------------------------------------------------------------
def _snn_kernel(alpha_ref, df_ref,                              # SMEM: (1,1), (T,)
                p1_ref, w1_ref, b1_ref,                         # conv1: (9,N0), (C1,9), (C1,1)
                pool1_ref, mask1_ref, w2_ref, b2_ref,           # conv2: (N0,N1) bf16, (9,1,N1), (C2,9*C1), (C2,1)
                pool2_ref, mask2_ref, w3_ref, b3_ref,           # conv3: (N1,N2) bf16, (9,1,N2), (C3,9*C2), (C3,1)
                flt_ref,                                        # flatten: (4, N2, B) bf16
                wf1_ref, bf1_ref, beta_ref, eta_ref, hebb_in_ref,   # fc1 (permuted feature order)
                wf2_ref, bf2_ref,                               # fc2: (D2,D1), (D2,1)
                h2_out_ref, h1_out_ref, hebb_out_ref,           # outputs (also the live state)
                c1_mem, c1_spk, c2_mem, c2_spk, c3_mem, c3_spk, # VMEM state scratch
                h1_spk, h2_spk, st1_ref, done_ref):             # spikes, hoisted conv1, SMEM flag
    f32 = jnp.float32
    bf16 = jnp.bfloat16
    bsz = h2_out_ref.shape[1]
    alpha = alpha_ref[0, 0]

    # ---- init persistent state (all mem/spike start at zero; hebb copied from the input) ----
    for r in (c1_mem, c1_spk, c2_mem, c2_spk, c3_mem, c3_spk,
              h1_spk, h2_spk, h1_out_ref, h2_out_ref):
        r[...] = jnp.zeros_like(r)
    hebb_out_ref[...] = hebb_in_ref[...]
    done_ref[0] = jnp.int32(0)

    # ---- conv1 GEMM hoisted out of the time loop (raw input, no decay factor) ----
    st1_ref[...] = (jnp.dot(w1_ref[...], p1_ref[...], preferred_element_type=f32)
                    + b1_ref[...])

    def lif(mem_ref, spk_ref, state):
        new_mem = mem_ref[...] * (1.0 - spk_ref[...]) * DECAY + state
        new_spk = (new_mem > THRESH).astype(f32)
        mem_ref[...] = new_mem
        spk_ref[...] = new_spk
        return new_mem, new_spk

    def conv_block(spk, pool_ref, mask_ref, wp, w_ref, b_ref, df):
        # avg-pool2 as ONE bf16 MXU pass (spikes are 0/1, pool entries 0.25 -> exact in bf16),
        # 3x3/pad-1 taps as lane rolls + precomputed boundary masks (no MXU),
        # then ONE fused weight GEMM over the stacked (9*Cin, N) patches.
        pooled = jnp.dot(spk.astype(bf16), pool_ref[...], preferred_element_type=f32)
        n = pooled.shape[1]
        patches = []
        for ky in range(3):
            for kx in range(3):
                off = (ky - 1) * wp + (kx - 1)
                tap = ky * 3 + kx
                shifted = pooled if off == 0 else pltpu.roll(
                    pooled, shift=(-off) % n, axis=1)
                patches.append(shifted * mask_ref[tap])
        patches = jnp.concatenate(patches, axis=0)                       # (9*Cin, N)
        return df * jnp.dot(w_ref[...], patches,
                            preferred_element_type=f32) + b_ref[...]

    n_slots = flt_ref.shape[0]

    def step_body(step, carry):
        # Real early stop: once `done` is set, the remaining steps are skipped entirely.
        @pl.when(done_ref[0] == 0)
        def _():
            df = df_ref[step]

            # ---- conv1 (state reused from the hoisted GEMM) ----
            _, n_c1_spk = lif(c1_mem, c1_spk, st1_ref[...])

            # ---- conv2 ----
            # TODO(synk): F.dropout(p=0.5, training=True) on the pooled input is stochastic;
            # eval-mode identity is used here.
            st2 = conv_block(n_c1_spk, pool1_ref, mask1_ref, CNN_DIM[1], w2_ref, b2_ref, df)
            _, n_c2_spk = lif(c2_mem, c2_spk, st2)

            # ---- conv3 ----
            st3 = conv_block(n_c2_spk, pool2_ref, mask2_ref, CNN_DIM[2], w3_ref, b3_ref, df)
            _, n_c3_spk = lif(c3_mem, c3_spk, st3)

            # ---- avg-pool + flatten into the permuted (slot, channel) order, transposed ----
            c3_bf = n_c3_spk.astype(bf16)
            cols = [jnp.dot(c3_bf, flt_ref[s], preferred_element_type=f32)
                    for s in range(n_slots)]
            x_t = jnp.concatenate(cols, axis=0) * df                      # (DIN, B)

            # ---- fc1 (plastic): single GEMM with the merged (W1 + alpha*hebb^T) weight ----
            hebb = hebb_out_ref[...]                                      # (D1, DIN)
            w_comb = wf1_ref[...] + alpha * hebb
            st_f1 = jnp.dot(w_comb, x_t, preferred_element_type=f32) + bf1_ref[...]
            n_h1_mem, n_h1_spk = lif(h1_out_ref, h1_spk, st_f1)
            pre = x_t * beta_ref[...]                      # beta pre-clamped (>=0) in the wrapper
            post = n_h1_mem * (1.0 / THRESH) - eta_ref[...]
            outer = jax.lax.dot_general(post, pre, (((1,), (1,)), ((), ())),
                                        preferred_element_type=f32) * (1.0 / bsz)
            hebb_out_ref[...] = jnp.clip(W_DECAY * hebb - outer, -4.0, 4.0)

            # ---- fc2 (non-plastic, as in the reference forward) ----
            st_f2 = (df * jnp.dot(wf2_ref[...], n_h1_spk, preferred_element_type=f32)
                     + bf2_ref[...])
            _, n_h2_spk = lif(h2_out_ref, h2_spk, st_f2)

            # ---- early stop: buf = mean_b(any_class(h2_mem > thresh)); break if >0.9 & step>0 ----
            any_spk = (jnp.sum(n_h2_spk, axis=0, keepdims=True) > 0.5).astype(f32)   # (1, B)
            frac = jnp.sum(any_spk) * (1.0 / bsz)
            done_ref[0] = jnp.logical_and(frac > 0.9, step > 0).astype(jnp.int32)
        return carry

    jax.lax.fori_loop(0, TIME_WINDOW, step_body, 0)


# ---------------------------------------------------------------------------
# Constant pixel-side matrices (pooling, tap masks, flatten selectors) — built once.
# Pixel index convention everywhere: idx(b, y, x) = (b*H + y)*W + x.
# ---------------------------------------------------------------------------
def _pool_matrix(b, h, w):
    hp, wp = h // 2, w // 2
    m = np.zeros((b * h * w, b * hp * wp), np.float32)
    for bb in range(b):
        for y in range(h):
            for x in range(w):
                m[(bb * h + y) * w + x, (bb * hp + y // 2) * wp + x // 2] = 0.25
    return m


def _tap_masks(b, hp, wp):
    """(9, 1, b*hp*wp): 1 where the 3x3/pad-1 tap source pixel is in-bounds (zero-pad elsewhere)."""
    m = np.zeros((9, 1, b * hp * wp), np.float32)
    for ky in range(3):
        for kx in range(3):
            dy, dx = ky - 1, kx - 1
            for y in range(hp):
                for x in range(wp):
                    if 0 <= y + dy < hp and 0 <= x + dx < wp:
                        for bb in range(b):
                            m[ky * 3 + kx, 0, (bb * hp + y) * wp + x] = 1.0
    return m


def _flatten_consts(b, h, w):
    """(hp*wp, b*h*w, b): per spatial slot s, avg-pool the conv3 map and select (slot, batch)."""
    hp, wp = h // 2, w // 2
    pool = _pool_matrix(b, h, w)
    flt = np.zeros((hp * wp, b * h * w, b), np.float32)
    for s in range(hp * wp):
        for bb in range(b):
            flt[s, :, bb] = pool[:, bb * hp * wp + s]
    return flt


def build_consts(batch):
    d0, d1, d2 = CNN_DIM[0], CNN_DIM[1], CNN_DIM[2]
    return {
        'pool1': jnp.asarray(_pool_matrix(batch, d0, d0), jnp.bfloat16),    # (B*256, B*64)
        'pool2': jnp.asarray(_pool_matrix(batch, d1, d1), jnp.bfloat16),    # (B*64,  B*16)
        'mask1': jnp.asarray(_tap_masks(batch, d1, d1)),                    # (9, 1, B*64)
        'mask2': jnp.asarray(_tap_masks(batch, d2, d2)),                    # (9, 1, B*16)
        'flt':   jnp.asarray(_flatten_consts(batch, d2, d2), jnp.bfloat16), # (4, B*16, B)
        'df':    jnp.asarray(np.exp(-np.arange(TIME_WINDOW) / TAU_W), jnp.float32),
    }


def _conv1_patches(x_nchw):
    """im2col of the (time-constant) input: (9*Cin, B*H*W), pixel order (b,y,x),
    patch rows ordered (tap=(ky,kx), cin). Computed once per forward, outside the kernel."""
    b, cin, h, w = x_nchw.shape
    xp = jnp.pad(x_nchw.astype(jnp.float32), ((0, 0), (0, 0), (1, 1), (1, 1)))
    taps = []
    for ky in range(3):
        for kx in range(3):
            t = xp[:, :, ky:ky + h, kx:kx + w]                  # (B, Cin, H, W)
            taps.append(jnp.transpose(t, (1, 0, 2, 3)).reshape(cin, b * h * w))
    return jnp.concatenate(taps, axis=0)


# ---------------------------------------------------------------------------
# Parameters (random; layouts pre-arranged for the kernel at init time).
# ---------------------------------------------------------------------------
def init_params(key):
    ks = jax.random.split(key, 10)

    def nrm(k, shape, scale=0.1):
        return scale * jax.random.normal(k, shape, jnp.float32)

    def conv_flat(wt):   # torch (Cout, Cin, 3, 3) -> (Cout, 9*Cin), col = (ky*3+kx)*Cin + ci
        co, ci = wt.shape[0], wt.shape[1]
        return jnp.transpose(wt, (0, 2, 3, 1)).reshape(co, 9 * ci)

    ci1, co1 = CFG_CNN[0][0], CFG_CNN[0][1]
    ci2, co2 = CFG_CNN[1][0], CFG_CNN[1][1]
    ci3, co3 = CFG_CNN[2][0], CFG_CNN[2][1]

    return {
        'conv1_w': conv_flat(nrm(ks[0], (co1, ci1, 3, 3))),
        'conv1_b': nrm(ks[3], (co1, 1), 0.01),
        'conv2_w': conv_flat(nrm(ks[1], (co2, ci2, 3, 3))),
        'conv2_b': nrm(ks[4], (co2, 1), 0.01),
        'conv3_w': conv_flat(nrm(ks[2], (co3, ci3, 3, 3))),
        'conv3_b': nrm(ks[5], (co3, 1), 0.01),
        # fc weights kept in PyTorch (out, in) orientation (kernel runs fc transposed)
        'fc1_w': nrm(ks[6], (CFG_FC[0], FC_DIM)),
        'fc1_b': nrm(ks[7], (CFG_FC[0], 1), 0.01),
        'fc2_w': 0.5 * nrm(ks[8], (CFG_FC[1], CFG_FC[0])),      # __init__: fc2.weight *= 0.5
        'fc2_b': nrm(ks[9], (CFG_FC[1], 1), 0.01),
        'alpha1': jnp.full((1, 1), 0.1, jnp.float32),
        'alpha2': jnp.full((1, 1), 0.1, jnp.float32),
        'eta1': jnp.zeros((1, CFG_FC[0]), jnp.float32),
        'eta2': jnp.zeros((1, CFG_FC[1]), jnp.float32),
        'gamma1': jnp.full((1, 1), 0.01, jnp.float32),
        'gamma2': jnp.full((1, 1), 0.01, jnp.float32),
        'beta1': jnp.full((1, FC_DIM), 0.001, jnp.float32),
        'beta2': jnp.full((1, CFG_FC[0]), 0.001, jnp.float32),
    }


# ---------------------------------------------------------------------------
# Forward pass: one fused pallas_call (consts must be built for x's batch size).
# ---------------------------------------------------------------------------
def snn_forward(params, consts, x_nchw, hebb1, hebb2):
    b = x_nchw.shape[0]
    d1_fc, d2_fc = CFG_FC
    c1, c2, c3 = CFG_CNN[0][1], CFG_CNN[1][1], CFG_CNN[2][1]
    n0 = b * CNN_DIM[0] * CNN_DIM[0]
    n1 = b * CNN_DIM[1] * CNN_DIM[1]
    n2 = b * CNN_DIM[2] * CNN_DIM[2]

    p1 = _conv1_patches(x_nchw)                                 # (9*Cin, B*H0*W0)
    wf1_perm = params['fc1_w'][:, PERM]                         # (D1, DIN), permuted columns
    beta_perm = jnp.maximum(params['beta1'], 0.0)[0, PERM].reshape(FC_DIM, 1)
    eta_col = jnp.transpose(params['eta1'])                     # (D1, 1)
    hebb_perm_t = jnp.transpose(hebb1[PERM, :])                 # (D1, DIN), permuted

    out_shape = (
        jax.ShapeDtypeStruct((d2_fc, b), jnp.float32),          # h2_mem^T
        jax.ShapeDtypeStruct((d1_fc, b), jnp.float32),          # h1_mem^T
        jax.ShapeDtypeStruct((d1_fc, FC_DIM), jnp.float32),     # hebb1^T (permuted)
    )

    h2_mem_t, h1_mem_t, hebb_perm_new = pl.pallas_call(
        _snn_kernel,
        out_shape=out_shape,
        in_specs=[_SMEM, _SMEM] + [_VMEM] * 19,
        out_specs=(_VMEM, _VMEM, _VMEM),
        scratch_shapes=[
            pltpu.VMEM((c1, n0), jnp.float32),      # c1_mem
            pltpu.VMEM((c1, n0), jnp.float32),      # c1_spk
            pltpu.VMEM((c2, n1), jnp.float32),      # c2_mem
            pltpu.VMEM((c2, n1), jnp.float32),      # c2_spk
            pltpu.VMEM((c3, n2), jnp.float32),      # c3_mem
            pltpu.VMEM((c3, n2), jnp.float32),      # c3_spk
            pltpu.VMEM((d1_fc, b), jnp.float32),    # h1_spk
            pltpu.VMEM((d2_fc, b), jnp.float32),    # h2_spk
            pltpu.VMEM((c1, n0), jnp.float32),      # st1 (hoisted conv1 state)
            pltpu.SMEM((1,), jnp.int32),            # early-stop flag
        ],
        compiler_params=pltpu.CompilerParams(vmem_limit_bytes=32 * 1024 * 1024),
    )(params['alpha1'], consts['df'],
      p1, params['conv1_w'], params['conv1_b'],
      consts['pool1'], consts['mask1'], params['conv2_w'], params['conv2_b'],
      consts['pool2'], consts['mask2'], params['conv3_w'], params['conv3_b'],
      consts['flt'],
      wf1_perm, params['fc1_b'], beta_perm, eta_col, hebb_perm_t,
      params['fc2_w'], params['fc2_b'])

    outs = jnp.minimum(jnp.transpose(h2_mem_t) / THRESH, 1.1)       # .clamp(max=1.1)
    hebb1_new = jnp.transpose(hebb_perm_new)[INV_PERM]              # back to (DIN, D1) CHW order
    return (outs, jnp.transpose(h1_mem_t), hebb1_new,
            hebb2, params['eta1'], params['eta2'])


if __name__ == "__main__":
    key = jax.random.PRNGKey(0)
    kp, kx = jax.random.split(key)
    params = init_params(kp)
    consts = build_consts(BATCH)

    # Input follows the PyTorch NCHW convention: (batch, 1, 16, 16)
    x = jax.random.normal(kx, (BATCH, CFG_CNN[0][0], CNN_DIM[0], CNN_DIM[0]), jnp.float32)
    hebb1 = jnp.zeros((FC_DIM, CFG_FC[0]), jnp.float32)     # produce_hebb()
    hebb2 = jnp.zeros((CFG_FC[0], CFG_FC[1]), jnp.float32)

    fwd = jax.jit(snn_forward)
    out = fwd(params, consts, x, hebb1, hebb2)
    jax.block_until_ready(out)
    print("KERNEL_OK")
</pallas_src>

<mosaic_0001>
module attributes {stable_mosaic.version = 11 : i64} {
  func.func @_snn_kernel(%arg0: memref<1x1xf32, #tpu.memory_space<smem>>, %arg1: memref<4xf32, #tpu.memory_space<smem>>, %arg2: memref<9x2048xf32, #tpu.memory_space<vmem>>, %arg3: memref<8x9xf32, #tpu.memory_space<vmem>>, %arg4: memref<8x1xf32, #tpu.memory_space<vmem>>, %arg5: memref<2048x512xbf16, #tpu.memory_space<vmem>>, %arg6: memref<9x1x512xf32, #tpu.memory_space<vmem>>, %arg7: memref<16x72xf32, #tpu.memory_space<vmem>>, %arg8: memref<16x1xf32, #tpu.memory_space<vmem>>, %arg9: memref<512x128xbf16, #tpu.memory_space<vmem>>, %arg10: memref<9x1x128xf32, #tpu.memory_space<vmem>>, %arg11: memref<16x144xf32, #tpu.memory_space<vmem>>, %arg12: memref<16x1xf32, #tpu.memory_space<vmem>>, %arg13: memref<4x128x8xbf16, #tpu.memory_space<vmem>>, %arg14: memref<32x64xf32, #tpu.memory_space<vmem>>, %arg15: memref<32x1xf32, #tpu.memory_space<vmem>>, %arg16: memref<64x1xf32, #tpu.memory_space<vmem>>, %arg17: memref<32x1xf32, #tpu.memory_space<vmem>>, %arg18: memref<32x64xf32, #tpu.memory_space<vmem>>, %arg19: memref<10x32xf32, #tpu.memory_space<vmem>>, %arg20: memref<10x1xf32, #tpu.memory_space<vmem>>, %arg21: memref<10x8xf32, #tpu.memory_space<vmem>>, %arg22: memref<32x8xf32, #tpu.memory_space<vmem>>, %arg23: memref<32x64xf32, #tpu.memory_space<vmem>>, %arg24: memref<8x2048xf32, #tpu.memory_space<vmem>>, %arg25: memref<8x2048xf32, #tpu.memory_space<vmem>>, %arg26: memref<16x512xf32, #tpu.memory_space<vmem>>, %arg27: memref<16x512xf32, #tpu.memory_space<vmem>>, %arg28: memref<16x128xf32, #tpu.memory_space<vmem>>, %arg29: memref<16x128xf32, #tpu.memory_space<vmem>>, %arg30: memref<32x8xf32, #tpu.memory_space<vmem>>, %arg31: memref<10x8xf32, #tpu.memory_space<vmem>>, %arg32: memref<8x2048xf32, #tpu.memory_space<vmem>>, %arg33: memref<1xi32, #tpu.memory_space<smem>>) attributes {dimension_semantics = [], scalar_prefetch = 0 : i64, scratch_operands = 10 : i64, tpu.core_type = #tpu.core_type<tc>} {
    %c0 = arith.constant 0 : index
    %c0_0 = arith.constant 0 : index
    %0 = memref.load %arg0[%c0, %c0_0] : memref<1x1xf32, #tpu.memory_space<smem>>
    %cst = arith.constant 0.000000e+00 : f32
    %1 = vector.broadcast %cst : f32 to vector<8x2048xf32>
    %c0_1 = arith.constant 0 : index
    %c0_2 = arith.constant 0 : index
    %2 = vector.load %arg24[%c0_1, %c0_2] : memref<8x2048xf32, #tpu.memory_space<vmem>>, vector<8x2048xf32>
    tpu.vector_store %arg24[%c0_1, %c0_2], %1 {strides = array<i32>} : memref<8x2048xf32, #tpu.memory_space<vmem>>, vector<8x2048xf32>,
    %cst_3 = arith.constant 0.000000e+00 : f32
    %3 = vector.broadcast %cst_3 : f32 to vector<8x2048xf32>
    %c0_4 = arith.constant 0 : index
    %c0_5 = arith.constant 0 : index
    %4 = vector.load %arg25[%c0_4, %c0_5] : memref<8x2048xf32, #tpu.memory_space<vmem>>, vector<8x2048xf32>
    tpu.vector_store %arg25[%c0_4, %c0_5], %3 {strides = array<i32>} : memref<8x2048xf32, #tpu.memory_space<vmem>>, vector<8x2048xf32>,
    %cst_6 = arith.constant 0.000000e+00 : f32
    %5 = vector.broadcast %cst_6 : f32 to vector<16x512xf32>
    %c0_7 = arith.constant 0 : index
    %c0_8 = arith.constant 0 : index
    %6 = vector.load %arg26[%c0_7, %c0_8] : memref<16x512xf32, #tpu.memory_space<vmem>>, vector<16x512xf32>
    tpu.vector_store %arg26[%c0_7, %c0_8], %5 {strides = array<i32>} : memref<16x512xf32, #tpu.memory_space<vmem>>, vector<16x512xf32>,
    %cst_9 = arith.constant 0.000000e+00 : f32
    %7 = vector.broadcast %cst_9 : f32 to vector<16x512xf32>
    %c0_10 = arith.constant 0 : index
    %c0_11 = arith.constant 0 : index
    %8 = vector.load %arg27[%c0_10, %c0_11] : memref<16x512xf32, #tpu.memory_space<vmem>>, vector<16x512xf32>
    tpu.vector_store %arg27[%c0_10, %c0_11], %7 {strides = array<i32>} : memref<16x512xf32, #tpu.memory_space<vmem>>, vector<16x512xf32>,
    %cst_12 = arith.constant 0.000000e+00 : f32
    %9 = vector.broadcast %cst_12 : f32 to vector<16x128xf32>
    %c0_13 = arith.constant 0 : index
    %c0_14 = arith.constant 0 : index
    %10 = vector.load %arg28[%c0_13, %c0_14] : memref<16x128xf32, #tpu.memory_space<vmem>>, vector<16x128xf32>
    tpu.vector_store %arg28[%c0_13, %c0_14], %9 {strides = array<i32>} : memref<16x128xf32, #tpu.memory_space<vmem>>, vector<16x128xf32>,
    %cst_15 = arith.constant 0.000000e+00 : f32
    %11 = vector.broadcast %cst_15 : f32 to vector<16x128xf32>
    %c0_16 = arith.constant 0 : index
    %c0_17 = arith.constant 0 : index
    %12 = vector.load %arg29[%c0_16, %c0_17] : memref<16x128xf32, #tpu.memory_space<vmem>>, vector<16x128xf32>
    tpu.vector_store %arg29[%c0_16, %c0_17], %11 {strides = array<i32>} : memref<16x128xf32, #tpu.memory_space<vmem>>, vector<16x128xf32>,
    %cst_18 = arith.constant 0.000000e+00 : f32
    %13 = vector.broadcast %cst_18 : f32 to vector<32x8xf32>
    %c0_19 = arith.constant 0 : index
    %c0_20 = arith.constant 0 : index
    %14 = vector.load %arg30[%c0_19, %c0_20] : memref<32x8xf32, #tpu.memory_space<vmem>>, vector<32x8xf32>
    tpu.vector_store %arg30[%c0_19, %c0_20], %13 {strides = array<i32>} : memref<32x8xf32, #tpu.memory_space<vmem>>, vector<32x8xf32>,
    %cst_21 = arith.constant 0.000000e+00 : f32
    %15 = vector.broadcast %cst_21 : f32 to vector<10x8xf32>
    %c0_22 = arith.constant 0 : index
    %c0_23 = arith.constant 0 : index
    %16 = vector.load %arg31[%c0_22, %c0_23] : memref<10x8xf32, #tpu.memory_space<vmem>>, vector<10x8xf32>
    tpu.vector_store %arg31[%c0_22, %c0_23], %15 {strides = array<i32>} : memref<10x8xf32, #tpu.memory_space<vmem>>, vector<10x8xf32>,
    %cst_24 = arith.constant 0.000000e+00 : f32
    %17 = vector.broadcast %cst_24 : f32 to vector<32x8xf32>
    %c0_25 = arith.constant 0 : index
    %c0_26 = arith.constant 0 : index
    %18 = vector.load %arg22[%c0_25, %c0_26] : memref<32x8xf32, #tpu.memory_space<vmem>>, vector<32x8xf32>
    tpu.vector_store %arg22[%c0_25, %c0_26], %17 {strides = array<i32>} : memref<32x8xf32, #tpu.memory_space<vmem>>, vector<32x8xf32>,
    %cst_27 = arith.constant 0.000000e+00 : f32
    %19 = vector.broadcast %cst_27 : f32 to vector<10x8xf32>
    %c0_28 = arith.constant 0 : index
    %c0_29 = arith.constant 0 : index
    %20 = vector.load %arg21[%c0_28, %c0_29] : memref<10x8xf32, #tpu.memory_space<vmem>>, vector<10x8xf32>
    tpu.vector_store %arg21[%c0_28, %c0_29], %19 {strides = array<i32>} : memref<10x8xf32, #tpu.memory_space<vmem>>, vector<10x8xf32>,
    %c0_30 = arith.constant 0 : index
    %c0_31 = arith.constant 0 : index
    %21 = vector.load %arg18[%c0_30, %c0_31] : memref<32x64xf32, #tpu.memory_space<vmem>>, vector<32x64xf32>
    %c0_32 = arith.constant 0 : index
    %c0_33 = arith.constant 0 : index
    %22 = vector.load %arg23[%c0_32, %c0_33] : memref<32x64xf32, #tpu.memory_space<vmem>>, vector<32x64xf32>
    tpu.vector_store %arg23[%c0_32, %c0_33], %21 {strides = array<i32>} : memref<32x64xf32, #tpu.memory_space<vmem>>, vector<32x64xf32>,
    %c0_i32 = arith.constant 0 : i32
    %c0_34 = arith.constant 0 : index
    %23 = memref.load %arg33[%c0_34] : memref<1xi32, #tpu.memory_space<smem>>
    memref.store %c0_i32, %arg33[%c0_34] : memref<1xi32, #tpu.memory_space<smem>>
    %c0_35 = arith.constant 0 : index
    %c0_36 = arith.constant 0 : index
    %24 = vector.load %arg3[%c0_35, %c0_36] : memref<8x9xf32, #tpu.memory_space<vmem>>, vector<8x9xf32>
    %c0_37 = arith.constant 0 : index
    %c0_38 = arith.constant 0 : index
    %25 = vector.load %arg2[%c0_37, %c0_38] : memref<9x2048xf32, #tpu.memory_space<vmem>>, vector<9x2048xf32>
    %cst_39 = arith.constant dense<0.000000e+00> : vector<8x2048xf32>
    %26 = tpu.matmul %24, %25, %cst_39 {dimension_numbers = #tpu.dot_dimension_numbers<[1], [0], [0], [1], [0, 0, 1, 1], [], []>} : vector<8x9xf32>, vector<9x2048xf32>, vector<8x2048xf32> -> vector<8x2048xf32>
    %c0_40 = arith.constant 0 : index
    %c0_41 = arith.constant 0 : index
    %27 = vector.load %arg4[%c0_40, %c0_41] : memref<8x1xf32, #tpu.memory_space<vmem>>, vector<8x1xf32>
    %28 = vector.broadcast %27 : vector<8x1xf32> to vector<8x2048xf32>
    %29 = arith.addf %26, %28 : vector<8x2048xf32>
    %c0_42 = arith.constant 0 : index
    %c0_43 = arith.constant 0 : index
    %30 = vector.load %arg32[%c0_42, %c0_43] : memref<8x2048xf32, #tpu.memory_space<vmem>>, vector<8x2048xf32>
    tpu.vector_store %arg32[%c0_42, %c0_43], %29 {strides = array<i32>} : memref<8x2048xf32, #tpu.memory_space<vmem>>, vector<8x2048xf32>,
    %c0_i32_44 = arith.constant 0 : i32
    %c4_i32 = arith.constant 4 : i32
    %31 = arith.addi %c0_i32_44, %c4_i32 : i32
    %c1_i32 = arith.constant 1 : i32
    scf.for %arg34 = %c0_i32_44 to %31 step %c1_i32  : i32 {
      %c0_46 = arith.constant 0 : index
      %32 = memref.load %arg33[%c0_46] : memref<1xi32, #tpu.memory_space<smem>>
      %c0_i32_47 = arith.constant 0 : i32
      %33 = arith.cmpi eq, %32, %c0_i32_47 : i32
      %34 = arith.extui %33 : i1 to i32
      %c0_i32_48 = arith.constant 0 : i32
      %35 = arith.cmpi ne, %34, %c0_i32_48 : i32
      scf.if %35 {
        %36 = arith.index_cast %arg34 : i32 to index
        %37 = memref.load %arg1[%36] : memref<4xf32, #tpu.memory_space<smem>>
        %c0_49 = arith.constant 0 : index
        %c0_50 = arith.constant 0 : index
        %38 = vector.load %arg32[%c0_49, %c0_50] : memref<8x2048xf32, #tpu.memory_space<vmem>>, vector<8x2048xf32>
        %c0_51 = arith.constant 0 : index
        %c0_52 = arith.constant 0 : index
        %39 = vector.load %arg24[%c0_51, %c0_52] : memref<8x2048xf32, #tpu.memory_space<vmem>>, vector<8x2048xf32>
        %c0_53 = arith.constant 0 : index
        %c0_54 = arith.constant 0 : index
        %40 = vector.load %arg25[%c0_53, %c0_54] : memref<8x2048xf32, #tpu.memory_space<vmem>>, vector<8x2048xf32>
        %cst_55 = arith.constant 1.000000e+00 : f32
        %41 = vector.broadcast %cst_55 : f32 to vector<8x2048xf32>
        %42 = arith.subf %41, %40 : vector<8x2048xf32>
        %43 = arith.mulf %39, %42 : vector<8x2048xf32>
        %cst_56 = arith.constant 7.500000e-01 : f32
        %44 = vector.broadcast %cst_56 : f32 to vector<8x2048xf32>
        %45 = arith.mulf %43, %44 : vector<8x2048xf32>
        %46 = arith.addf %45, %38 : vector<8x2048xf32>
        %cst_57 = arith.constant 4.500000e-01 : f32
        %47 = vector.broadcast %cst_57 : f32 to vector<8x2048xf32>
        %48 = arith.cmpf ogt, %46, %47 : vector<8x2048xf32>
        %49 = arith.extui %48 : vector<8x2048xi1> to vector<8x2048xi32>
        %50 = arith.sitofp %49 : vector<8x2048xi32> to vector<8x2048xf32>
        %c0_58 = arith.constant 0 : index
        %c0_59 = arith.constant 0 : index
        %51 = vector.load %arg24[%c0_58, %c0_59] : memref<8x2048xf32, #tpu.memory_space<vmem>>, vector<8x2048xf32>
        tpu.vector_store %arg24[%c0_58, %c0_59], %46 {strides = array<i32>} : memref<8x2048xf32, #tpu.memory_space<vmem>>, vector<8x2048xf32>,
        %c0_60 = arith.constant 0 : index
        %c0_61 = arith.constant 0 : index
        %52 = vector.load %arg25[%c0_60, %c0_61] : memref<8x2048xf32, #tpu.memory_space<vmem>>, vector<8x2048xf32>
        tpu.vector_store %arg25[%c0_60, %c0_61], %50 {strides = array<i32>} : memref<8x2048xf32, #tpu.memory_space<vmem>>, vector<8x2048xf32>,
        %53 = arith.truncf %50 : vector<8x2048xf32> to vector<8x2048xbf16>
        %c0_62 = arith.constant 0 : index
        %c0_63 = arith.constant 0 : index
        %54 = vector.load %arg5[%c0_62, %c0_63] : memref<2048x512xbf16, #tpu.memory_space<vmem>>, vector<2048x512xbf16>
        %cst_64 = arith.constant dense<0.000000e+00> : vector<8x512xf32>
        %55 = tpu.matmul %53, %54, %cst_64 {dimension_numbers = #tpu.dot_dimension_numbers<[1], [0], [0], [1], [0, 0, 1, 1], [], []>} : vector<8x2048xbf16>, vector<2048x512xbf16>, vector<8x512xf32> -> vector<8x512xf32>
        %c9_i32 = arith.constant 9 : i32
        %56 = tpu.dynamic_rotate %55 by %c9_i32 dim 1 : vector<8x512xf32>, i32 -> vector<8x512xf32>
        %c0_65 = arith.constant 0 : index
        %c0_66 = arith.constant 0 : index
        %c0_67 = arith.constant 0 : index
        %57 = vector.load %arg6[%c0_65, %c0_66, %c0_67] : memref<9x1x512xf32, #tpu.memory_space<vmem>>, vector<1x1x512xf32>
        %58 = vector.shape_cast %57 : vector<1x1x512xf32> to vector<1x512xf32>
        %59 = vector.broadcast %58 : vector<1x512xf32> to vector<8x512xf32>
        %60 = arith.mulf %56, %59 : vector<8x512xf32>
        %c8_i32 = arith.constant 8 : i32
        %61 = tpu.dynamic_rotate %55 by %c8_i32 dim 1 : vector<8x512xf32>, i32 -> vector<8x512xf32>
        %c1 = arith.constant 1 : index
        %c0_68 = arith.constant 0 : index
        %c0_69 = arith.constant 0 : index
        %62 = vector.load %arg6[%c1, %c0_68, %c0_69] : memref<9x1x512xf32, #tpu.memory_space<vmem>>, vector<1x1x512xf32>
        %63 = vector.shape_cast %62 : vector<1x1x512xf32> to vector<1x512xf32>
        %64 = vector.broadcast %63 : vector<1x512xf32> to vector<8x512xf32>
        %65 = arith.mulf %61, %64 : vector<8x512xf32>
        %c7_i32 = arith.constant 7 : i32
        %66 = tpu.dynamic_rotate %55 by %c7_i32 dim 1 : vector<8x512xf32>, i32 -> vector<8x512xf32>
        %c2 = arith.constant 2 : index
        %c0_70 = arith.constant 0 : index
        %c0_71 = arith.constant 0 : index
        %67 = vector.load %arg6[%c2, %c0_70, %c0_71] : memref<9x1x512xf32, #tpu.memory_space<vmem>>, vector<1x1x512xf32>
        %68 = vector.shape_cast %67 : vector<1x1x512xf32> to vector<1x512xf32>
        %69 = vector.broadcast %68 : vector<1x512xf32> to vector<8x512xf32>
        %70 = arith.mulf %66, %69 : vector<8x512xf32>
        %c1_i32_72 = arith.constant 1 : i32
        %71 = tpu.dynamic_rotate %55 by %c1_i32_72 dim 1 : vector<8x512xf32>, i32 -> vector<8x512xf32>
        %c3 = arith.constant 3 : index
        %c0_73 = arith.constant 0 : index
        %c0_74 = arith.constant 0 : index
        %72 = vector.load %arg6[%c3, %c0_73, %c0_74] : memref<9x1x512xf32, #tpu.memory_space<vmem>>, vector<1x1x512xf32>
        %73 = vector.shape_cast %72 : vector<1x1x512xf32> to vector<1x512xf32>
        %74 = vector.broadcast %73 : vector<1x512xf32> to vector<8x512xf32>
        %75 = arith.mulf %71, %74 : vector<8x512xf32>
        %c4 = arith.constant 4 : index
        %c0_75 = arith.constant 0 : index
        %c0_76 = arith.constant 0 : index
        %76 = vector.load %arg6[%c4, %c0_75, %c0_76] : memref<9x1x512xf32, #tpu.memory_space<vmem>>, vector<1x1x512xf32>
        %77 = vector.shape_cast %76 : vector<1x1x512xf32> to vector<1x512xf32>
        %78 = vector.broadcast %77 : vector<1x512xf32> to vector<8x512xf32>
        %79 = arith.mulf %55, %78 : vector<8x512xf32>
        %c511_i32 = arith.constant 511 : i32
        %80 = tpu.dynamic_rotate %55 by %c511_i32 dim 1 : vector<8x512xf32>, i32 -> vector<8x512xf32>
        %c5 = arith.constant 5 : index
        %c0_77 = arith.constant 0 : index
        %c0_78 = arith.constant 0 : index
        %81 = vector.load %arg6[%c5, %c0_77, %c0_78] : memref<9x1x512xf32, #tpu.memory_space<vmem>>, vector<1x1x512xf32>
        %82 = vector.shape_cast %81 : vector<1x1x512xf32> to vector<1x512xf32>
        %83 = vector.broadcast %82 : vector<1x512xf32> to vector<8x512xf32>
        %84 = arith.mulf %80, %83 : vector<8x512xf32>
        %c505_i32 = arith.constant 505 : i32
        %85 = tpu.dynamic_rotate %55 by %c505_i32 dim 1 : vector<8x512xf32>, i32 -> vector<8x512xf32>
        %c6 = arith.constant 6 : index
        %c0_79 = arith.constant 0 : index
        %c0_80 = arith.constant 0 : index
        %86 = vector.load %arg6[%c6, %c0_79, %c0_80] : memref<9x1x512xf32, #tpu.memory_space<vmem>>, vector<1x1x512xf32>
        %87 = vector.shape_cast %86 : vector<1x1x512xf32> to vector<1x512xf32>
        %88 = vector.broadcast %87 : vector<1x512xf32> to vector<8x512xf32>
        %89 = arith.mulf %85, %88 : vector<8x512xf32>
        %c504_i32 = arith.constant 504 : i32
        %90 = tpu.dynamic_rotate %55 by %c504_i32 dim 1 : vector<8x512xf32>, i32 -> vector<8x512xf32>
        %c7 = arith.constant 7 : index
        %c0_81 = arith.constant 0 : index
        %c0_82 = arith.constant 0 : index
        %91 = vector.load %arg6[%c7, %c0_81, %c0_82] : memref<9x1x512xf32, #tpu.memory_space<vmem>>, vector<1x1x512xf32>
        %92 = vector.shape_cast %91 : vector<1x1x512xf32> to vector<1x512xf32>
        %93 = vector.broadcast %92 : vector<1x512xf32> to vector<8x512xf32>
        %94 = arith.mulf %90, %93 : vector<8x512xf32>
        %c503_i32 = arith.constant 503 : i32
        %95 = tpu.dynamic_rotate %55 by %c503_i32 dim 1 : vector<8x512xf32>, i32 -> vector<8x512xf32>
        %c8 = arith.constant 8 : index
        %c0_83 = arith.constant 0 : index
        %c0_84 = arith.constant 0 : index
        %96 = vector.load %arg6[%c8, %c0_83, %c0_84] : memref<9x1x512xf32, #tpu.memory_space<vmem>>, vector<1x1x512xf32>
        %97 = vector.shape_cast %96 : vector<1x1x512xf32> to vector<1x512xf32>
        %98 = vector.broadcast %97 : vector<1x512xf32> to vector<8x512xf32>
        %99 = arith.mulf %95, %98 : vector<8x512xf32>
        %100 = tpu.concatenate %60, %65, %70, %75, %79, %84, %89, %94, %99 in 0 : vector<8x512xf32>, vector<8x512xf32>, vector<8x512xf32>, vector<8x512xf32>, vector<8x512xf32>, vector<8x512xf32>, vector<8x512xf32>, vector<8x512xf32>, vector<8x512xf32> -> vector<72x512xf32>
        %c0_85 = arith.constant 0 : index
        %c0_86 = arith.constant 0 : index
        %101 = vector.load %arg7[%c0_85, %c0_86] : memref<16x72xf32, #tpu.memory_space<vmem>>, vector<16x72xf32>
        %cst_87 = arith.constant dense<0.000000e+00> : vector<16x512xf32>
        %102 = tpu.matmul %101, %100, %cst_87 {dimension_numbers = #tpu.dot_dimension_numbers<[1], [0], [0], [1], [0, 0, 1, 1], [], []>} : vector<16x72xf32>, vector<72x512xf32>, vector<16x512xf32> -> vector<16x512xf32>
        %103 = vector.broadcast %37 : f32 to vector<16x512xf32>
        %104 = arith.mulf %103, %102 : vector<16x512xf32>
        %c0_88 = arith.constant 0 : index
        %c0_89 = arith.constant 0 : index
        %105 = vector.load %arg8[%c0_88, %c0_89] : memref<16x1xf32, #tpu.memory_space<vmem>>, vector<16x1xf32>
        %106 = vector.broadcast %105 : vector<16x1xf32> to vector<16x512xf32>
        %107 = arith.addf %104, %106 : vector<16x512xf32>
        %c0_90 = arith.constant 0 : index
        %c0_91 = arith.constant 0 : index
        %108 = vector.load %arg26[%c0_90, %c0_91] : memref<16x512xf32, #tpu.memory_space<vmem>>, vector<16x512xf32>
        %c0_92 = arith.constant 0 : index
        %c0_93 = arith.constant 0 : index
        %109 = vector.load %arg27[%c0_92, %c0_93] : memref<16x512xf32, #tpu.memory_space<vmem>>, vector<16x512xf32>
        %cst_94 = arith.constant 1.000000e+00 : f32
        %110 = vector.broadcast %cst_94 : f32 to vector<16x512xf32>
        %111 = arith.subf %110, %109 : vector<16x512xf32>
        %112 = arith.mulf %108, %111 : vector<16x512xf32>
        %cst_95 = arith.constant 7.500000e-01 : f32
        %113 = vector.broadcast %cst_95 : f32 to vector<16x512xf32>
        %114 = arith.mulf %112, %113 : vector<16x512xf32>
        %115 = arith.addf %114, %107 : vector<16x512xf32>
        %cst_96 = arith.constant 4.500000e-01 : f32
        %116 = vector.broadcast %cst_96 : f32 to vector<16x512xf32>
        %117 = arith.cmpf ogt, %115, %116 : vector<16x512xf32>
        %118 = arith.extui %117 : vector<16x512xi1> to vector<16x512xi32>
        %119 = arith.sitofp %118 : vector<16x512xi32> to vector<16x512xf32>
        %c0_97 = arith.constant 0 : index
        %c0_98 = arith.constant 0 : index
        %120 = vector.load %arg26[%c0_97, %c0_98] : memref<16x512xf32, #tpu.memory_space<vmem>>, vector<16x512xf32>
        tpu.vector_store %arg26[%c0_97, %c0_98], %115 {strides = array<i32>} : memref<16x512xf32, #tpu.memory_space<vmem>>, vector<16x512xf32>,
        %c0_99 = arith.constant 0 : index
        %c0_100 = arith.constant 0 : index
        %121 = vector.load %arg27[%c0_99, %c0_100] : memref<16x512xf32, #tpu.memory_space<vmem>>, vector<16x512xf32>
        tpu.vector_store %arg27[%c0_99, %c0_100], %119 {strides = array<i32>} : memref<16x512xf32, #tpu.memory_space<vmem>>, vector<16x512xf32>,
        %122 = arith.truncf %119 : vector<16x512xf32> to vector<16x512xbf16>
        %c0_101 = arith.constant 0 : index
        %c0_102 = arith.constant 0 : index
        %123 = vector.load %arg9[%c0_101, %c0_102] : memref<512x128xbf16, #tpu.memory_space<vmem>>, vector<512x128xbf16>
        %cst_103 = arith.constant dense<0.000000e+00> : vector<16x128xf32>
        %124 = tpu.matmul %122, %123, %cst_103 {dimension_numbers = #tpu.dot_dimension_numbers<[1], [0], [0], [1], [0, 0, 1, 1], [], []>} : vector<16x512xbf16>, vector<512x128xbf16>, vector<16x128xf32> -> vector<16x128xf32>
        %c5_i32 = arith.constant 5 : i32
        %125 = tpu.dynamic_rotate %124 by %c5_i32 dim 1 : vector<16x128xf32>, i32 -> vector<16x128xf32>
        %c0_104 = arith.constant 0 : index
        %c0_105 = arith.constant 0 : index
        %c0_106 = arith.constant 0 : index
        %126 = vector.load %arg10[%c0_104, %c0_105, %c0_106] : memref<9x1x128xf32, #tpu.memory_space<vmem>>, vector<1x1x128xf32>
        %127 = vector.shape_cast %126 : vector<1x1x128xf32> to vector<1x128xf32>
        %128 = vector.broadcast %127 : vector<1x128xf32> to vector<16x128xf32>
        %129 = arith.mulf %125, %128 : vector<16x128xf32>
        %c4_i32_107 = arith.constant 4 : i32
        %130 = tpu.dynamic_rotate %124 by %c4_i32_107 dim 1 : vector<16x128xf32>, i32 -> vector<16x128xf32>
        %c1_108 = arith.constant 1 : index
        %c0_109 = arith.constant 0 : index
        %c0_110 = arith.constant 0 : index
        %131 = vector.load %arg10[%c1_108, %c0_109, %c0_110] : memref<9x1x128xf32, #tpu.memory_space<vmem>>, vector<1x1x128xf32>
        %132 = vector.shape_cast %131 : vector<1x1x128xf32> to vector<1x128xf32>
        %133 = vector.broadcast %132 : vector<1x128xf32> to vector<16x128xf32>
        %134 = arith.mulf %130, %133 : vector<16x128xf32>
        %c3_i32 = arith.constant 3 : i32
        %135 = tpu.dynamic_rotate %124 by %c3_i32 dim 1 : vector<16x128xf32>, i32 -> vector<16x128xf32>
        %c2_111 = arith.constant 2 : index
        %c0_112 = arith.constant 0 : index
        %c0_113 = arith.constant 0 : index
        %136 = vector.load %arg10[%c2_111, %c0_112, %c0_113] : memref<9x1x128xf32, #tpu.memory_space<vmem>>, vector<1x1x128xf32>
        %137 = vector.shape_cast %136 : vector<1x1x128xf32> to vector<1x128xf32>
        %138 = vector.broadcast %137 : vector<1x128xf32> to vector<16x128xf32>
        %139 = arith.mulf %135, %138 : vector<16x128xf32>
        %c1_i32_114 = arith.constant 1 : i32
        %140 = tpu.dynamic_rotate %124 by %c1_i32_114 dim 1 : vector<16x128xf32>, i32 -> vector<16x128xf32>
        %c3_115 = arith.constant 3 : index
        %c0_116 = arith.constant 0 : index
        %c0_117 = arith.constant 0 : index
        %141 = vector.load %arg10[%c3_115, %c0_116, %c0_117] : memref<9x1x128xf32, #tpu.memory_space<vmem>>, vector<1x1x128xf32>
        %142 = vector.shape_cast %141 : vector<1x1x128xf32> to vector<1x128xf32>
        %143 = vector.broadcast %142 : vector<1x128xf32> to vector<16x128xf32>
        %144 = arith.mulf %140, %143 : vector<16x128xf32>
        %c4_118 = arith.constant 4 : index
        %c0_119 = arith.constant 0 : index
        %c0_120 = arith.constant 0 : index
        %145 = vector.load %arg10[%c4_118, %c0_119, %c0_120] : memref<9x1x128xf32, #tpu.memory_space<vmem>>, vector<1x1x128xf32>
        %146 = vector.shape_cast %145 : vector<1x1x128xf32> to vector<1x128xf32>
        %147 = vector.broadcast %146 : vector<1x128xf32> to vector<16x128xf32>
        %148 = arith.mulf %124, %147 : vector<16x128xf32>
        %c127_i32 = arith.constant 127 : i32
        %149 = tpu.dynamic_rotate %124 by %c127_i32 dim 1 : vector<16x128xf32>, i32 -> vector<16x128xf32>
        %c5_121 = arith.constant 5 : index
        %c0_122 = arith.constant 0 : index
        %c0_123 = arith.constant 0 : index
        %150 = vector.load %arg10[%c5_121, %c0_122, %c0_123] : memref<9x1x128xf32, #tpu.memory_space<vmem>>, vector<1x1x128xf32>
        %151 = vector.shape_cast %150 : vector<1x1x128xf32> to vector<1x128xf32>
        %152 = vector.broadcast %151 : vector<1x128xf32> to vector<16x128xf32>
        %153 = arith.mulf %149, %152 : vector<16x128xf32>
        %c125_i32 = arith.constant 125 : i32
        %154 = tpu.dynamic_rotate %124 by %c125_i32 dim 1 : vector<16x128xf32>, i32 -> vector<16x128xf32>
        %c6_124 = arith.constant 6 : index
        %c0_125 = arith.constant 0 : index
        %c0_126 = arith.constant 0 : index
        %155 = vector.load %arg10[%c6_124, %c0_125, %c0_126] : memref<9x1x128xf32, #tpu.memory_space<vmem>>, vector<1x1x128xf32>
        %156 = vector.shape_cast %155 : vector<1x1x128xf32> to vector<1x128xf32>
        %157 = vector.broadcast %156 : vector<1x128xf32> to vector<16x128xf32>
        %158 = arith.mulf %154, %157 : vector<16x128xf32>
        %c124_i32 = arith.constant 124 : i32
        %159 = tpu.dynamic_rotate %124 by %c124_i32 dim 1 : vector<16x128xf32>, i32 -> vector<16x128xf32>
        %c7_127 = arith.constant 7 : index
        %c0_128 = arith.constant 0 : index
        %c0_129 = arith.constant 0 : index
        %160 = vector.load %arg10[%c7_127, %c0_128, %c0_129] : memref<9x1x128xf32, #tpu.memory_space<vmem>>, vector<1x1x128xf32>
        %161 = vector.shape_cast %160 : vector<1x1x128xf32> to vector<1x128xf32>
        %162 = vector.broadcast %161 : vector<1x128xf32> to vector<16x128xf32>
        %163 = arith.mulf %159, %162 : vector<16x128xf32>
        %c123_i32 = arith.constant 123 : i32
        %164 = tpu.dynamic_rotate %124 by %c123_i32 dim 1 : vector<16x128xf32>, i32 -> vector<16x128xf32>
        %c8_130 = arith.constant 8 : index
        %c0_131 = arith.constant 0 : index
        %c0_132 = arith.constant 0 : index
        %165 = vector.load %arg10[%c8_130, %c0_131, %c0_132] : memref<9x1x128xf32, #tpu.memory_space<vmem>>, vector<1x1x128xf32>
        %166 = vector.shape_cast %165 : vector<1x1x128xf32> to vector<1x128xf32>
        %167 = vector.broadcast %166 : vector<1x128xf32> to vector<16x128xf32>
        %168 = arith.mulf %164, %167 : vector<16x128xf32>
        %169 = tpu.concatenate %129, %134, %139, %144, %148, %153, %158, %163, %168 in 0 : vector<16x128xf32>, vector<16x128xf32>, vector<16x128xf32>, vector<16x128xf32>, vector<16x128xf32>, vector<16x128xf32>, vector<16x128xf32>, vector<16x128xf32>, vector<16x128xf32> -> vector<144x128xf32>
        %c0_133 = arith.constant 0 : index
        %c0_134 = arith.constant 0 : index
        %170 = vector.load %arg11[%c0_133, %c0_134] : memref<16x144xf32, #tpu.memory_space<vmem>>, vector<16x144xf32>
        %cst_135 = arith.constant dense<0.000000e+00> : vector<16x128xf32>
        %171 = tpu.matmul %170, %169, %cst_135 {dimension_numbers = #tpu.dot_dimension_numbers<[1], [0], [0], [1], [0, 0, 1, 1], [], []>} : vector<16x144xf32>, vector<144x128xf32>, vector<16x128xf32> -> vector<16x128xf32>
        %172 = vector.broadcast %37 : f32 to vector<16x128xf32>
        %173 = arith.mulf %172, %171 : vector<16x128xf32>
        %c0_136 = arith.constant 0 : index
        %c0_137 = arith.constant 0 : index
        %174 = vector.load %arg12[%c0_136, %c0_137] : memref<16x1xf32, #tpu.memory_space<vmem>>, vector<16x1xf32>
        %175 = vector.broadcast %174 : vector<16x1xf32> to vector<16x128xf32>
        %176 = arith.addf %173, %175 : vector<16x128xf32>
        %c0_138 = arith.constant 0 : index
        %c0_139 = arith.constant 0 : index
        %177 = vector.load %arg28[%c0_138, %c0_139] : memref<16x128xf32, #tpu.memory_space<vmem>>, vector<16x128xf32>
        %c0_140 = arith.constant 0 : index
        %c0_141 = arith.constant 0 : index
        %178 = vector.load %arg29[%c0_140, %c0_141] : memref<16x128xf32, #tpu.memory_space<vmem>>, vector<16x128xf32>
        %cst_142 = arith.constant 1.000000e+00 : f32
        %179 = vector.broadcast %cst_142 : f32 to vector<16x128xf32>
        %180 = arith.subf %179, %178 : vector<16x128xf32>
        %181 = arith.mulf %177, %180 : vector<16x128xf32>
        %cst_143 = arith.constant 7.500000e-01 : f32
        %182 = vector.broadcast %cst_143 : f32 to vector<16x128xf32>
        %183 = arith.mulf %181, %182 : vector<16x128xf32>
        %184 = arith.addf %183, %176 : vector<16x128xf32>
        %cst_144 = arith.constant 4.500000e-01 : f32
        %185 = vector.broadcast %cst_144 : f32 to vector<16x128xf32>
        %186 = arith.cmpf ogt, %184, %185 : vector<16x128xf32>
        %187 = arith.extui %186 : vector<16x128xi1> to vector<16x128xi32>
        %188 = arith.sitofp %187 : vector<16x128xi32> to vector<16x128xf32>
        %c0_145 = arith.constant 0 : index
        %c0_146 = arith.constant 0 : index
        %189 = vector.load %arg28[%c0_145, %c0_146] : memref<16x128xf32, #tpu.memory_space<vmem>>, vector<16x128xf32>
        tpu.vector_store %arg28[%c0_145, %c0_146], %184 {strides = array<i32>} : memref<16x128xf32, #tpu.memory_space<vmem>>, vector<16x128xf32>,
        %c0_147 = arith.constant 0 : index
        %c0_148 = arith.constant 0 : index
        %190 = vector.load %arg29[%c0_147, %c0_148] : memref<16x128xf32, #tpu.memory_space<vmem>>, vector<16x128xf32>
        tpu.vector_store %arg29[%c0_147, %c0_148], %188 {strides = array<i32>} : memref<16x128xf32, #tpu.memory_space<vmem>>, vector<16x128xf32>,
        %191 = arith.truncf %188 : vector<16x128xf32> to vector<16x128xbf16>
        %c0_149 = arith.constant 0 : index
        %c0_150 = arith.constant 0 : index
        %c0_151 = arith.constant 0 : index
        %192 = vector.load %arg13[%c0_149, %c0_150, %c0_151] : memref<4x128x8xbf16, #tpu.memory_space<vmem>>, vector<1x128x8xbf16>
        %193 = vector.shape_cast %192 : vector<1x128x8xbf16> to vector<128x8xbf16>
        %cst_152 = arith.constant dense<0.000000e+00> : vector<16x8xf32>
        %194 = tpu.matmul %191, %193, %cst_152 {dimension_numbers = #tpu.dot_dimension_numbers<[1], [0], [0], [1], [0, 0, 1, 1], [], []>} : vector<16x128xbf16>, vector<128x8xbf16>, vector<16x8xf32> -> vector<16x8xf32>
        %c1_153 = arith.constant 1 : index
        %c0_154 = arith.constant 0 : index
        %c0_155 = arith.constant 0 : index
        %195 = vector.load %arg13[%c1_153, %c0_154, %c0_155] : memref<4x128x8xbf16, #tpu.memory_space<vmem>>, vector<1x128x8xbf16>
        %196 = vector.shape_cast %195 : vector<1x128x8xbf16> to vector<128x8xbf16>
        %cst_156 = arith.constant dense<0.000000e+00> : vector<16x8xf32>
        %197 = tpu.matmul %191, %196, %cst_156 {dimension_numbers = #tpu.dot_dimension_numbers<[1], [0], [0], [1], [0, 0, 1, 1], [], []>} : vector<16x128xbf16>, vector<128x8xbf16>, vector<16x8xf32> -> vector<16x8xf32>
        %c2_157 = arith.constant 2 : index
        %c0_158 = arith.constant 0 : index
        %c0_159 = arith.constant 0 : index
        %198 = vector.load %arg13[%c2_157, %c0_158, %c0_159] : memref<4x128x8xbf16, #tpu.memory_space<vmem>>, vector<1x128x8xbf16>
        %199 = vector.shape_cast %198 : vector<1x128x8xbf16> to vector<128x8xbf16>
        %cst_160 = arith.constant dense<0.000000e+00> : vector<16x8xf32>
        %200 = tpu.matmul %191, %199, %cst_160 {dimension_numbers = #tpu.dot_dimension_numbers<[1], [0], [0], [1], [0, 0, 1, 1], [], []>} : vector<16x128xbf16>, vector<128x8xbf16>, vector<16x8xf32> -> vector<16x8xf32>
        %c3_161 = arith.constant 3 : index
        %c0_162 = arith.constant 0 : index
        %c0_163 = arith.constant 0 : index
        %201 = vector.load %arg13[%c3_161, %c0_162, %c0_163] : memref<4x128x8xbf16, #tpu.memory_space<vmem>>, vector<1x128x8xbf16>
        %202 = vector.shape_cast %201 : vector<1x128x8xbf16> to vector<128x8xbf16>
        %cst_164 = arith.constant dense<0.000000e+00> : vector<16x8xf32>
        %203 = tpu.matmul %191, %202, %cst_164 {dimension_numbers = #tpu.dot_dimension_numbers<[1], [0], [0], [1], [0, 0, 1, 1], [], []>} : vector<16x128xbf16>, vector<128x8xbf16>, vector<16x8xf32> -> vector<16x8xf32>
        %204 = tpu.concatenate %194, %197, %200, %203 in 0 : vector<16x8xf32>, vector<16x8xf32>, vector<16x8xf32>, vector<16x8xf32> -> vector<64x8xf32>
        %205 = vector.broadcast %37 : f32 to vector<64x8xf32>
        %206 = arith.mulf %204, %205 : vector<64x8xf32>
        %c0_165 = arith.constant 0 : index
        %c0_166 = arith.constant 0 : index
        %207 = vector.load %arg23[%c0_165, %c0_166] : memref<32x64xf32, #tpu.memory_space<vmem>>, vector<32x64xf32>
        %c0_167 = arith.constant 0 : index
        %c0_168 = arith.constant 0 : index
        %208 = vector.load %arg14[%c0_167, %c0_168] : memref<32x64xf32, #tpu.memory_space<vmem>>, vector<32x64xf32>
        %209 = vector.broadcast %0 : f32 to vector<32x64xf32>
        %210 = arith.mulf %209, %207 : vector<32x64xf32>
        %211 = arith.addf %208, %210 : vector<32x64xf32>
        %cst_169 = arith.constant dense<0.000000e+00> : vector<32x8xf32>
        %212 = tpu.matmul %211, %206, %cst_169 {dimension_numbers = #tpu.dot_dimension_numbers<[1], [0], [0], [1], [0, 0, 1, 1], [], []>} : vector<32x64xf32>, vector<64x8xf32>, vector<32x8xf32> -> vector<32x8xf32>
        %c0_170 = arith.constant 0 : index
        %c0_171 = arith.constant 0 : index
        %213 = vector.load %arg15[%c0_170, %c0_171] : memref<32x1xf32, #tpu.memory_space<vmem>>, vector<32x1xf32>
        %214 = vector.broadcast %213 : vector<32x1xf32> to vector<32x8xf32>
        %215 = arith.addf %212, %214 : vector<32x8xf32>
        %c0_172 = arith.constant 0 : index
        %c0_173 = arith.constant 0 : index
        %216 = vector.load %arg22[%c0_172, %c0_173] : memref<32x8xf32, #tpu.memory_space<vmem>>, vector<32x8xf32>
        %c0_174 = arith.constant 0 : index
        %c0_175 = arith.constant 0 : index
        %217 = vector.load %arg30[%c0_174, %c0_175] : memref<32x8xf32, #tpu.memory_space<vmem>>, vector<32x8xf32>
        %cst_176 = arith.constant 1.000000e+00 : f32
        %218 = vector.broadcast %cst_176 : f32 to vector<32x8xf32>
        %219 = arith.subf %218, %217 : vector<32x8xf32>
        %220 = arith.mulf %216, %219 : vector<32x8xf32>
        %cst_177 = arith.constant 7.500000e-01 : f32
        %221 = vector.broadcast %cst_177 : f32 to vector<32x8xf32>
        %222 = arith.mulf %220, %221 : vector<32x8xf32>
        %223 = arith.addf %222, %215 : vector<32x8xf32>
        %cst_178 = arith.constant 4.500000e-01 : f32
        %224 = vector.broadcast %cst_178 : f32 to vector<32x8xf32>
        %225 = arith.cmpf ogt, %223, %224 : vector<32x8xf32>
        %226 = arith.extui %225 : vector<32x8xi1> to vector<32x8xi32>
        %227 = arith.sitofp %226 : vector<32x8xi32> to vector<32x8xf32>
        %c0_179 = arith.constant 0 : index
        %c0_180 = arith.constant 0 : index
        %228 = vector.load %arg22[%c0_179, %c0_180] : memref<32x8xf32, #tpu.memory_space<vmem>>, vector<32x8xf32>
        tpu.vector_store %arg22[%c0_179, %c0_180], %223 {strides = array<i32>} : memref<32x8xf32, #tpu.memory_space<vmem>>, vector<32x8xf32>,
        %c0_181 = arith.constant 0 : index
        %c0_182 = arith.constant 0 : index
        %229 = vector.load %arg30[%c0_181, %c0_182] : memref<32x8xf32, #tpu.memory_space<vmem>>, vector<32x8xf32>
        tpu.vector_store %arg30[%c0_181, %c0_182], %227 {strides = array<i32>} : memref<32x8xf32, #tpu.memory_space<vmem>>, vector<32x8xf32>,
        %c0_183 = arith.constant 0 : index
        %c0_184 = arith.constant 0 : index
        %230 = vector.load %arg16[%c0_183, %c0_184] : memref<64x1xf32, #tpu.memory_space<vmem>>, vector<64x1xf32>
        %231 = vector.broadcast %230 : vector<64x1xf32> to vector<64x8xf32>
        %232 = arith.mulf %206, %231 : vector<64x8xf32>
        %cst_185 = arith.constant 2.22222233 : f32
        %233 = vector.broadcast %cst_185 : f32 to vector<32x8xf32>
        %234 = arith.mulf %223, %233 : vector<32x8xf32>
        %c0_186 = arith.constant 0 : index
        %c0_187 = arith.constant 0 : index
        %235 = vector.load %arg17[%c0_186, %c0_187] : memref<32x1xf32, #tpu.memory_space<vmem>>, vector<32x1xf32>
        %236 = vector.broadcast %235 : vector<32x1xf32> to vector<32x8xf32>
        %237 = arith.subf %234, %236 : vector<32x8xf32>
        %cst_188 = arith.constant dense<0.000000e+00> : vector<32x64xf32>
        %238 = tpu.matmul %237, %232, %cst_188 {dimension_numbers = #tpu.dot_dimension_numbers<[1], [1], [0], [0], [0, 0, 1, 0], [], []>} : vector<32x8xf32>, vector<64x8xf32>, vector<32x64xf32> -> vector<32x64xf32>
        %cst_189 = arith.constant 1.250000e-01 : f32
        %239 = vector.broadcast %cst_189 : f32 to vector<32x64xf32>
        %240 = arith.mulf %238, %239 : vector<32x64xf32>
        %cst_190 = arith.constant 0.899999976 : f32
        %241 = vector.broadcast %cst_190 : f32 to vector<32x64xf32>
        %242 = arith.mulf %241, %207 : vector<32x64xf32>
        %243 = arith.subf %242, %240 : vector<32x64xf32>
        %cst_191 = arith.constant -4.000000e+00 : f32
        %cst_192 = arith.constant 4.000000e+00 : f32
        %244 = vector.broadcast %cst_191 : f32 to vector<32x64xf32>
        %245 = arith.maximumf %244, %243 : vector<32x64xf32>
        %246 = vector.broadcast %cst_192 : f32 to vector<32x64xf32>
        %247 = arith.minimumf %246, %245 : vector<32x64xf32>
        %c0_193 = arith.constant 0 : index
        %c0_194 = arith.constant 0 : index
        %248 = vector.load %arg23[%c0_193, %c0_194] : memref<32x64xf32, #tpu.memory_space<vmem>>, vector<32x64xf32>
        tpu.vector_store %arg23[%c0_193, %c0_194], %247 {strides = array<i32>} : memref<32x64xf32, #tpu.memory_space<vmem>>, vector<32x64xf32>,
        %c0_195 = arith.constant 0 : index
        %c0_196 = arith.constant 0 : index
        %249 = vector.load %arg19[%c0_195, %c0_196] : memref<10x32xf32, #tpu.memory_space<vmem>>, vector<10x32xf32>
        %cst_197 = arith.constant dense<0.000000e+00> : vector<10x8xf32>
        %250 = tpu.matmul %249, %227, %cst_197 {dimension_numbers = #tpu.dot_dimension_numbers<[1], [0], [0], [1], [0, 0, 1, 1], [], []>} : vector<10x32xf32>, vector<32x8xf32>, vector<10x8xf32> -> vector<10x8xf32>
        %251 = vector.broadcast %37 : f32 to vector<10x8xf32>
        %252 = arith.mulf %251, %250 : vector<10x8xf32>
        %c0_198 = arith.constant 0 : index
        %c0_199 = arith.constant 0 : index
        %253 = vector.load %arg20[%c0_198, %c0_199] : memref<10x1xf32, #tpu.memory_space<vmem>>, vector<10x1xf32>
        %254 = vector.broadcast %253 : vector<10x1xf32> to vector<10x8xf32>
        %255 = arith.addf %252, %254 : vector<10x8xf32>
        %c0_200 = arith.constant 0 : index
        %c0_201 = arith.constant 0 : index
        %256 = vector.load %arg21[%c0_200, %c0_201] : memref<10x8xf32, #tpu.memory_space<vmem>>, vector<10x8xf32>
        %c0_202 = arith.constant 0 : index
        %c0_203 = arith.constant 0 : index
        %257 = vector.load %arg31[%c0_202, %c0_203] : memref<10x8xf32, #tpu.memory_space<vmem>>, vector<10x8xf32>
        %cst_204 = arith.constant 1.000000e+00 : f32
        %258 = vector.broadcast %cst_204 : f32 to vector<10x8xf32>
        %259 = arith.subf %258, %257 : vector<10x8xf32>
        %260 = arith.mulf %256, %259 : vector<10x8xf32>
        %cst_205 = arith.constant 7.500000e-01 : f32
        %261 = vector.broadcast %cst_205 : f32 to vector<10x8xf32>
        %262 = arith.mulf %260, %261 : vector<10x8xf32>
        %263 = arith.addf %262, %255 : vector<10x8xf32>
        %cst_206 = arith.constant 4.500000e-01 : f32
        %264 = vector.broadcast %cst_206 : f32 to vector<10x8xf32>
        %265 = arith.cmpf ogt, %263, %264 : vector<10x8xf32>
        %266 = arith.extui %265 : vector<10x8xi1> to vector<10x8xi32>
        %267 = arith.sitofp %266 : vector<10x8xi32> to vector<10x8xf32>
        %c0_207 = arith.constant 0 : index
        %c0_208 = arith.constant 0 : index
        %268 = vector.load %arg21[%c0_207, %c0_208] : memref<10x8xf32, #tpu.memory_space<vmem>>, vector<10x8xf32>
        tpu.vector_store %arg21[%c0_207, %c0_208], %263 {strides = array<i32>} : memref<10x8xf32, #tpu.memory_space<vmem>>, vector<10x8xf32>,
        %c0_209 = arith.constant 0 : index
        %c0_210 = arith.constant 0 : index
        %269 = vector.load %arg31[%c0_209, %c0_210] : memref<10x8xf32, #tpu.memory_space<vmem>>, vector<10x8xf32>
        tpu.vector_store %arg31[%c0_209, %c0_210], %267 {strides = array<i32>} : memref<10x8xf32, #tpu.memory_space<vmem>>, vector<10x8xf32>,
        %cst_211 = arith.constant dense<0.000000e+00> : vector<8xf32>
        %270 = vector.multi_reduction <add>, %267, %cst_211 [0] : vector<10x8xf32> to vector<8xf32>
        %271 = vector.shape_cast %270 : vector<8xf32> to vector<1x8xf32>
        %cst_212 = arith.constant 5.000000e-01 : f32
        %272 = vector.broadcast %cst_212 : f32 to vector<1x8xf32>
        %273 = arith.cmpf ogt, %271, %272 : vector<1x8xf32>
        %274 = arith.extui %273 : vector<1x8xi1> to vector<1x8xi32>
        %275 = arith.sitofp %274 : vector<1x8xi32> to vector<1x8xf32>
        %276 = vector.shape_cast %275 : vector<1x8xf32> to vector<1x1x8xf32>
        %cst_213 = arith.constant dense<0.000000e+00> : vector<1xf32>
        %277 = vector.multi_reduction <add>, %276, %cst_213 [1, 2] : vector<1x1x8xf32> to vector<1xf32>
        %278 = vector.shape_cast %277 : vector<1xf32> to vector<1x1x1xf32>
        %279 = vector.extract %278[0, 0, 0] : f32 from vector<1x1x1xf32>
        %cst_214 = arith.constant 1.250000e-01 : f32
        %280 = arith.mulf %279, %cst_214 : f32
        %cst_215 = arith.constant 0.899999976 : f32
        %281 = arith.cmpf ogt, %280, %cst_215 : f32
        %c0_i32_216 = arith.constant 0 : i32
        %282 = arith.cmpi sgt, %arg34, %c0_i32_216 : i32
        %283 = arith.andi %281, %282 : i1
        %284 = arith.extui %283 : i1 to i32
        %c0_217 = arith.constant 0 : index
        %285 = memref.load %arg33[%c0_217] : memref<1xi32, #tpu.memory_space<smem>>
        memref.store %284, %arg33[%c0_217] : memref<1xi32, #tpu.memory_space<smem>>
      } else {
      }
    }
    %c4_i32_45 = arith.constant 4 : i32
    return
  }
}

</mosaic_0001>

<llo_original>
// kernel: snn_forward.1
$region0: #{snn_forward.1}
  #allocation0 [shape = 'u32[]', space=smem, size = 0x4, offset = 0x4, fixed_abs, tag = 'smem constant byte address 0x4 - core index']
  #allocation1 [shape = 'u32[144,128]{1,0:T(1,128)}', space=vmem, size = 0x12000, scoped, tag = 'internal scratch']
  #allocation2 [shape = 'f32[8,2048]{1,0:T(8,128)}', space=vmem, size = 0x10000, scoped, tag = 'scratch operand']
  #allocation3 [shape = 'f32[8,2048]{1,0:T(8,128)}', space=vmem, size = 0x10000, scoped, tag = 'scratch operand']
  #allocation4 [shape = 'f32[16,512]{1,0:T(8,128)}', space=vmem, size = 0x8000, scoped, tag = 'scratch operand']
  #allocation5 [shape = 'f32[16,512]{1,0:T(8,128)}', space=vmem, size = 0x8000, scoped, tag = 'scratch operand']
  #allocation6 [shape = 'f32[16,128]{1,0:T(8,128)}', space=vmem, size = 0x2000, scoped, tag = 'scratch operand']
  #allocation7 [shape = 'f32[16,128]{1,0:T(8,128)}', space=vmem, size = 0x2000, scoped, tag = 'scratch operand']
  #allocation8 [shape = 'f32[32,8]{1,0:T(8,128)}', space=vmem, size = 0x4000, scoped, tag = 'scratch operand']
  #allocation9 [shape = 'f32[10,8]{1,0:T(8,128)}', space=vmem, size = 0x2000, scoped, tag = 'scratch operand']
  #allocation10 [shape = 'f32[8,2048]{1,0:T(8,128)}', space=vmem, size = 0x10000, scoped, tag = 'scratch operand']
  #allocation11 [shape = 's32[1]{0:T(128)}', space=smem, size = 0x200, scoped, tag = 'scratch operand']
  #allocation12 [shape = 'f32[1,1]{1,0:T(1,128)S(6)}', space=smem, size = 0x200, scoped, tag = 'scoped memory for snn_forward.1']
  %s0 = inlined_call_operand.<no memory space> [shape: f32[1,1], index: 0, kind: input, shape index: {}]
  %s1 = inlined_call_operand.vmem [shape: f32[4], index: 1, kind: input, shape index: {}]
  %s2 = inlined_call_operand.vmem [shape: f32[9,2048], index: 2, kind: input, shape index: {}]
  %s3 = inlined_call_operand.vmem [shape: f32[8,9], index: 3, kind: input, shape index: {}]
  %s4 = inlined_call_operand.vmem [shape: f32[8,1], index: 4, kind: input, shape index: {}]
  %s5 = inlined_call_operand.vmem [shape: bf16[2048,512], index: 5, kind: input, shape index: {}]
  %s6 = inlined_call_operand.vmem [shape: f32[9,1,512], index: 6, kind: input, shape index: {}]
  %s7 = inlined_call_operand.vmem [shape: f32[16,72], index: 7, kind: input, shape index: {}]
  %s8 = inlined_call_operand.vmem [shape: f32[16,1], index: 8, kind: input, shape index: {}]
  %s9 = inlined_call_operand.vmem [shape: bf16[512,128], index: 9, kind: input, shape index: {}]
  %s10 = inlined_call_operand.vmem [shape: f32[9,1,128], index: 10, kind: input, shape index: {}]
  %s11 = inlined_call_operand.vmem [shape: f32[16,144], index: 11, kind: input, shape index: {}]
  %s12 = inlined_call_operand.vmem [shape: f32[16,1], index: 12, kind: input, shape index: {}]
  %s13 = inlined_call_operand.vmem [shape: bf16[4,128,8], index: 13, kind: input, shape index: {}]
  %s14 = inlined_call_operand.vmem [shape: f32[32,64], index: 14, kind: input, shape index: {}]
  %s15 = inlined_call_operand.vmem [shape: f32[32,1], index: 15, kind: input, shape index: {}]
  %s16 = inlined_call_operand.vmem [shape: f32[64,1], index: 16, kind: input, shape index: {}]
  %s17 = inlined_call_operand.vmem [shape: f32[32,1], index: 17, kind: input, shape index: {}]
  %s18 = inlined_call_operand.vmem [shape: f32[32,64], index: 18, kind: input, shape index: {}]
  %s19 = inlined_call_operand.vmem [shape: f32[10,32], index: 19, kind: input, shape index: {}]
  %s20 = inlined_call_operand.vmem [shape: f32[10,1], index: 20, kind: input, shape index: {}]
  %s21 = inlined_call_operand.vmem [shape: f32[10,8], index: 21, kind: output, shape index: {0}]
  %s22 = inlined_call_operand.vmem [shape: f32[32,8], index: 22, kind: output, shape index: {1}]
  %s23 = inlined_call_operand.vmem [shape: f32[32,64], index: 23, kind: output, shape index: {2}]
  %24 = xla_tuple %s21, %s22, %s23
  %s25 = sld [smem:[#allocation0]]
  $region125: #{snn_forward.1} parent=0
    _
  %s27 = ssub.s32 1, %s25
  %s28 = scalar_select 0, %s27, %s25
  %29 = sst [smem:[#allocation12]] %s0
  $region1: #{snn_forward.1} parent=0
    #allocation13 [shape = 'u8[512]{0}', space=smem, size = 0x200, scoped, tag = 'input window, operand 1, single buffered']
    #allocation14 [shape = 's32[1]{0}', space=sflag, size = 0x4, scoped, tag = 'scoped memory for snn_forward.1']
    %30 = vsyncpa [#allocation14], 0
    // Predicated region
    $region2: #{snn_forward.1} parent=1 // pred_check
      _
    $region3: #{snn_forward.1} parent=1 // pred_check_branch
      %32 = sbr.rel (0) target = $region5
    $region4: #{snn_forward.1} parent=1 // pred_region
      _
    $region5: #{snn_forward.1} parent=1 // pred_fallthru
      _
    // Predicated region
    $region6: #{snn_forward.1} parent=1 // pred_check
      _
    $region7: #{snn_forward.1} parent=1 // pred_check_branch
      %34 = sbr.rel (0) target = $region9
    $region8: #{snn_forward.1} parent=1 // pred_region
      %s36 = ssub.s32 16, 16
      %37 = vsyncadd [#allocation14], %s36
      %s39 = sshll.u32 %s1, 4
      %s40 = int_to_ptr.vmem [resolvable:$true] %s39
      %42 = dma.vmem_to_smem %s40, 16, [#allocation13], [#allocation14]
    $region9: #{snn_forward.1} parent=1 // pred_fallthru
      _
    // Predicated region
    $region10: #{snn_forward.1} parent=1 // pred_check
      _
    $region11: #{snn_forward.1} parent=1 // pred_check_branch
      %44 = sbr.rel (0) target = $region13
    $region12: #{snn_forward.1} parent=1 // pred_region
      _
    $region13: #{snn_forward.1} parent=1 // pred_fallthru
      _
    // Predicated region
    $region14: #{snn_forward.1} parent=1 // pred_check
      _
    $region15: #{snn_forward.1} parent=1 // pred_check_branch
      %46 = sbr.rel (0) target = $region17
    $region16: #{snn_forward.1} parent=1 // pred_region
      _
    $region17: #{snn_forward.1} parent=1 // pred_fallthru
      _
    // Predicated region
    $region18: #{snn_forward.1} parent=1 // pred_check
      _
    $region19: #{snn_forward.1} parent=1 // pred_check_branch
      %48 = sbr.rel (0) target = $region21
    $region20: #{snn_forward.1} parent=1 // pred_region
      _
    $region21: #{snn_forward.1} parent=1 // pred_fallthru
      _
    // Predicated region
    $region22: #{snn_forward.1} parent=1 // pred_check
      _
    $region23: #{snn_forward.1} parent=1 // pred_check_branch
      %50 = sbr.rel (0) target = $region25
    $region24: #{snn_forward.1} parent=1 // pred_region
      _
    $region25: #{snn_forward.1} parent=1 // pred_fallthru
      _
    // Predicated region
    $region26: #{snn_forward.1} parent=1 // pred_check
      _
    $region27: #{snn_forward.1} parent=1 // pred_check_branch
      %52 = sbr.rel (0) target = $region29
    $region28: #{snn_forward.1} parent=1 // pred_region
      _
    $region29: #{snn_forward.1} parent=1 // pred_fallthru
      _
    // Predicated region
    $region30: #{snn_forward.1} parent=1 // pred_check
      _
    $region31: #{snn_forward.1} parent=1 // pred_check_branch
      %54 = sbr.rel (0) target = $region33
    $region32: #{snn_forward.1} parent=1 // pred_region
      _
    $region33: #{snn_forward.1} parent=1 // pred_fallthru
      _
    // Predicated region
    $region34: #{snn_forward.1} parent=1 // pred_check
      _
    $region35: #{snn_forward.1} parent=1 // pred_check_branch
      %56 = sbr.rel (0) target = $region37
    $region36: #{snn_forward.1} parent=1 // pred_region
      _
    $region37: #{snn_forward.1} parent=1 // pred_fallthru
      _
    // Predicated region
    $region38: #{snn_forward.1} parent=1 // pred_check
      _
    $region39: #{snn_forward.1} parent=1 // pred_check_branch
      %58 = sbr.rel (0) target = $region41
    $region40: #{snn_forward.1} parent=1 // pred_region
      _
    $region41: #{snn_forward.1} parent=1 // pred_fallthru
      _
    // Predicated region
    $region42: #{snn_forward.1} parent=1 // pred_check
      _
    $region43: #{snn_forward.1} parent=1 // pred_check_branch
      %60 = sbr.rel (0) target = $region45
    $region44: #{snn_forward.1} parent=1 // pred_region
      _
    $region45: #{snn_forward.1} parent=1 // pred_fallthru
      _
    // Predicated region
    $region46: #{snn_forward.1} parent=1 // pred_check
      _
    $region47: #{snn_forward.1} parent=1 // pred_check_branch
      %62 = sbr.rel (0) target = $region49
    $region48: #{snn_forward.1} parent=1 // pred_region
      _
    $region49: #{snn_forward.1} parent=1 // pred_fallthru
      _
    // Predicated region
    $region50: #{snn_forward.1} parent=1 // pred_check
      _
    $region51: #{snn_forward.1} parent=1 // pred_check_branch
      %64 = sbr.rel (0) target = $region53
    $region52: #{snn_forward.1} parent=1 // pred_region
      _
    $region53: #{snn_forward.1} parent=1 // pred_fallthru
      _
    // Predicated region
    $region54: #{snn_forward.1} parent=1 // pred_check
      _
    $region55: #{snn_forward.1} parent=1 // pred_check_branch
      %66 = sbr.rel (0) target = $region57
    $region56: #{snn_forward.1} parent=1 // pred_region
      _
    $region57: #{snn_forward.1} parent=1 // pred_fallthru
      _
    // Predicated region
    $region58: #{snn_forward.1} parent=1 // pred_check
      _
    $region59: #{snn_forward.1} parent=1 // pred_check_branch
      %68 = sbr.rel (0) target = $region61
    $region60: #{snn_forward.1} parent=1 // pred_region
      _
    $region61: #{snn_forward.1} parent=1 // pred_fallthru
      _
    // Predicated region
    $region62: #{snn_forward.1} parent=1 // pred_check
      _
    $region63: #{snn_forward.1} parent=1 // pred_check_branch
      %70 = sbr.rel (0) target = $region65
    $region64: #{snn_forward.1} parent=1 // pred_region
      _
    $region65: #{snn_forward.1} parent=1 // pred_fallthru
      _
    // Predicated region
    $region66: #{snn_forward.1} parent=1 // pred_check
      _
    $region67: #{snn_forward.1} parent=1 // pred_check_branch
      %72 = sbr.rel (0) target = $region69
    $region68: #{snn_forward.1} parent=1 // pred_region
      _
    $region69: #{snn_forward.1} parent=1 // pred_fallthru
      _
    // Predicated region
    $region70: #{snn_forward.1} parent=1 // pred_check
      _
    $region71: #{snn_forward.1} parent=1 // pred_check_branch
      %74 = sbr.rel (0) target = $region73
    $region72: #{snn_forward.1} parent=1 // pred_region
      _
    $region73: #{snn_forward.1} parent=1 // pred_fallthru
      _
    // Predicated region
    $region74: #{snn_forward.1} parent=1 // pred_check
      _
    $region75: #{snn_forward.1} parent=1 // pred_check_branch
      %76 = sbr.rel (0) target = $region77
    $region76: #{snn_forward.1} parent=1 // pred_region
      _
    $region77: #{snn_forward.1} parent=1 // pred_fallthru
      _
    // Predicated region
    $region78: #{snn_forward.1} parent=1 // pred_check
      _
    $region79: #{snn_forward.1} parent=1 // pred_check_branch
      %78 = sbr.rel (0) target = $region81
    $region80: #{snn_forward.1} parent=1 // pred_region
      _
    $region81: #{snn_forward.1} parent=1 // pred_fallthru
      _
    // Predicated region
    $region82: #{snn_forward.1} parent=1 // pred_check
      _
    $region83: #{snn_forward.1} parent=1 // pred_check_branch
      %80 = sbr.rel (0) target = $region85
    $region84: #{snn_forward.1} parent=1 // pred_region
      _
    $region85: #{snn_forward.1} parent=1 // pred_fallthru
      _
    // Predicated region
    $region86: #{snn_forward.1} parent=1 // pred_check
      _
    $region87: #{snn_forward.1} parent=1 // pred_check_branch
      %82 = sbr.rel (0) target = $region89
    $region88: #{snn_forward.1} parent=1 // pred_region
      %83 = dma.done [#allocation14], 16
    $region89: #{snn_forward.1} parent=1 // pred_fallthru
      _
    %84 = sfence
    %s86 = sld [smem:[#allocation12]]
    %87 = vst [vmem:[#allocation2] sm:$0xff] 0.0
    %88 = vst [vmem:[#allocation2 + $0x8] sm:$0xff] 0.0
    %89 = vst [vmem:[#allocation2 + $0x10] sm:$0xff] 0.0
    %90 = vst [vmem:[#allocation2 + $0x18] sm:$0xff] 0.0
    %91 = vst [vmem:[#allocation2 + $0x20] sm:$0xff] 0.0
    %92 = vst [vmem:[#allocation2 + $0x28] sm:$0xff] 0.0
    %93 = vst [vmem:[#allocation2 + $0x30] sm:$0xff] 0.0
    %94 = vst [vmem:[#allocation2 + $0x38] sm:$0xff] 0.0
    %95 = vst [vmem:[#allocation2 + $0x40] sm:$0xff] 0.0
    %96 = vst [vmem:[#allocation2 + $0x48] sm:$0xff] 0.0
    %97 = vst [vmem:[#allocation2 + $0x50] sm:$0xff] 0.0
    %98 = vst [vmem:[#allocation2 + $0x58] sm:$0xff] 0.0
    %99 = vst [vmem:[#allocation2 + $0x60] sm:$0xff] 0.0
    %100 = vst [vmem:[#allocation2 + $0x68] sm:$0xff] 0.0
    %101 = vst [vmem:[#allocation2 + $0x70] sm:$0xff] 0.0
    %102 = vst [vmem:[#allocation2 + $0x78] sm:$0xff] 0.0
    %103 = vst [vmem:[#allocation3] sm:$0xff] 0.0
    %104 = vst [vmem:[#allocation3 + $0x8] sm:$0xff] 0.0
    %105 = vst [vmem:[#allocation3 + $0x10] sm:$0xff] 0.0
    %106 = vst [vmem:[#allocation3 + $0x18] sm:$0xff] 0.0
    %107 = vst [vmem:[#allocation3 + $0x20] sm:$0xff] 0.0
    %108 = vst [vmem:[#allocation3 + $0x28] sm:$0xff] 0.0
    %109 = vst [vmem:[#allocation3 + $0x30] sm:$0xff] 0.0
    %110 = vst [vmem:[#allocation3 + $0x38] sm:$0xff] 0.0
    %111 = vst [vmem:[#allocation3 + $0x40] sm:$0xff] 0.0
    %112 = vst [vmem:[#allocation3 + $0x48] sm:$0xff] 0.0
    %113 = vst [vmem:[#allocation3 + $0x50] sm:$0xff] 0.0
    %114 = vst [vmem:[#allocation3 + $0x58] sm:$0xff] 0.0
    %115 = vst [vmem:[#allocation3 + $0x60] sm:$0xff] 0.0
    %116 = vst [vmem:[#allocation3 + $0x68] sm:$0xff] 0.0
    %117 = vst [vmem:[#allocation3 + $0x70] sm:$0xff] 0.0
    %118 = vst [vmem:[#allocation3 + $0x78] sm:$0xff] 0.0
    %119 = vst [vmem:[#allocation4] sm:$0xff] 0.0
    %120 = vst [vmem:[#allocation4 + $0x8] sm:$0xff] 0.0
    %121 = vst [vmem:[#allocation4 + $0x10] sm:$0xff] 0.0
    %122 = vst [vmem:[#allocation4 + $0x18] sm:$0xff] 0.0
    %123 = vst [vmem:[#allocation4 + $0x20] sm:$0xff] 0.0
    %124 = vst [vmem:[#allocation4 + $0x28] sm:$0xff] 0.0
    %125 = vst [vmem:[#allocation4 + $0x30] sm:$0xff] 0.0
    %126 = vst [vmem:[#allocation4 + $0x38] sm:$0xff] 0.0
    %127 = vst [vmem:[#allocation5] sm:$0xff] 0.0
    %128 = vst [vmem:[#allocation5 + $0x8] sm:$0xff] 0.0
    %129 = vst [vmem:[#allocation5 + $0x10] sm:$0xff] 0.0
    %130 = vst [vmem:[#allocation5 + $0x18] sm:$0xff] 0.0
    %131 = vst [vmem:[#allocation5 + $0x20] sm:$0xff] 0.0
    %132 = vst [vmem:[#allocation5 + $0x28] sm:$0xff] 0.0
    %133 = vst [vmem:[#allocation5 + $0x30] sm:$0xff] 0.0
    %134 = vst [vmem:[#allocation5 + $0x38] sm:$0xff] 0.0
    %135 = vst [vmem:[#allocation6] sm:$0xff] 0.0
    %136 = vst [vmem:[#allocation6 + $0x8] sm:$0xff] 0.0
    %137 = vst [vmem:[#allocation7] sm:$0xff] 0.0
    %138 = vst [vmem:[#allocation7 + $0x8] sm:$0xff] 0.0
    %vm139 = vcmask 64512
    %140 = vst.msk [vmem:[#allocation8] sm:$0xff] %vm139, 0.0
    %141 = vst.msk [vmem:[#allocation8 + $0x8] sm:$0xff] %vm139, 0.0
    %142 = vst.msk [vmem:[#allocation8 + $0x10] sm:$0xff] %vm139, 0.0
    %143 = vst.msk [vmem:[#allocation8 + $0x18] sm:$0xff] %vm139, 0.0
    %144 = vst.msk [vmem:[#allocation9] sm:$0xff] %vm139, 0.0
    %vm145 = vcmask 58368
    %146 = vst.msk [vmem:[#allocation9 + $0x8] sm:$0x3] %vm145, 0.0
    %147 = vst.msk [vmem:[%s22] sm:$0xff] %vm139, 0.0
    %148 = vst.msk [vmem:[%s22 + $0x8] sm:$0xff] %vm139, 0.0
    %149 = vst.msk [vmem:[%s22 + $0x10] sm:$0xff] %vm139, 0.0
    %150 = vst.msk [vmem:[%s22 + $0x18] sm:$0xff] %vm139, 0.0
    %151 = vst.msk [vmem:[%s21] sm:$0xff] %vm139, 0.0
    %152 = vst.msk [vmem:[%s21 + $0x8] sm:$0x3] %vm145, 0.0
    %v153 = vld [vmem:[%s18] sm:$0xff]
    %v154 = vld [vmem:[%s18 + $0x8] sm:$0xff]
    %v155 = vld [vmem:[%s18 + $0x10] sm:$0xff]
    %v156 = vld [vmem:[%s18 + $0x18] sm:$0xff]
    %vm157 = vcmask 523264
    %158 = vst.msk [vmem:[%s23] sm:$0xff] %vm157, %v153
    %159 = vst.msk [vmem:[%s23 + $0x8] sm:$0xff] %vm157, %v154
    %160 = vst.msk [vmem:[%s23 + $0x10] sm:$0xff] %vm157, %v155
    %161 = vst.msk [vmem:[%s23 + $0x18] sm:$0xff] %vm157, %v156
    %s162 = scalar_lea.smem [#allocation11], 0
    %163 = sst [smem:[%s162]] 0
    %v164 = vld [vmem:[%s3] sm:$0xff]
    %v165 = vld [vmem:[%s2] sm:$0xff]
    %v166 = vld [vmem:[%s2 + $0x8] sm:$0xff]
    %v167 = vld [vmem:[%s2 + $0x10] sm:$0xff]
    %v168 = vld [vmem:[%s2 + $0x18] sm:$0xff]
    %v169 = vld [vmem:[%s2 + $0x20] sm:$0xff]
    %v170 = vld [vmem:[%s2 + $0x28] sm:$0xff]
    %v171 = vld [vmem:[%s2 + $0x30] sm:$0xff]
    %v172 = vld [vmem:[%s2 + $0x38] sm:$0xff]
    %v173 = vld [vmem:[%s2 + $0x40] sm:$0xff]
    %v174 = vld [vmem:[%s2 + $0x48] sm:$0xff]
    %v175 = vld [vmem:[%s2 + $0x50] sm:$0xff]
    %v176 = vld [vmem:[%s2 + $0x58] sm:$0xff]
    %v177 = vld [vmem:[%s2 + $0x60] sm:$0xff]
    %v178 = vld [vmem:[%s2 + $0x68] sm:$0xff]
    %v179 = vld [vmem:[%s2 + $0x70] sm:$0xff]
    %v180 = vld [vmem:[%s2 + $0x78] sm:$0xff]
    %v181 = vld [vmem:[%s2 + $0x80] sm:$0x1]
    %v182 = vld [vmem:[%s2 + $0x88] sm:$0x1]
    %v183 = vld [vmem:[%s2 + $0x90] sm:$0x1]
    %v184 = vld [vmem:[%s2 + $0x98] sm:$0x1]
    %v185 = vld [vmem:[%s2 + $0xa0] sm:$0x1]
    %v186 = vld [vmem:[%s2 + $0xa8] sm:$0x1]
    %v187 = vld [vmem:[%s2 + $0xb0] sm:$0x1]
    %v188 = vld [vmem:[%s2 + $0xb8] sm:$0x1]
    %v189 = vld [vmem:[%s2 + $0xc0] sm:$0x1]
    %v190 = vld [vmem:[%s2 + $0xc8] sm:$0x1]
    %v191 = vld [vmem:[%s2 + $0xd0] sm:$0x1]
    %v192 = vld [vmem:[%s2 + $0xd8] sm:$0x1]
    %v193 = vld [vmem:[%s2 + $0xe0] sm:$0x1]
    %v194 = vld [vmem:[%s2 + $0xe8] sm:$0x1]
    %v195 = vld [vmem:[%s2 + $0xf0] sm:$0x1]
    %v196 = vld [vmem:[%s2 + $0xf8] sm:$0x1]
    %v197 = vld [vmem:[%s4] sm:$0xff]
    %199 = vset.pattern.permute.xlu0 0
    %200 = vperm.xlu0 %199, %v197
    %v201 = vpop.permute.xlu0 %200
    %vm203 = vcmask 72704
    %v205 = vsel %vm203, %v164, 0
    %vm207 = vcmask 1040384
    %v209 = vsel %vm207, %v181, 0
    %v212 = vsel %vm207, %v182, 0
    %v215 = vsel %vm207, %v183, 0
    %v218 = vsel %vm207, %v184, 0
    %v221 = vsel %vm207, %v185, 0
    %v224 = vsel %vm207, %v186, 0
    %v227 = vsel %vm207, %v187, 0
    %v230 = vsel %vm207, %v188, 0
    %v233 = vsel %vm207, %v189, 0
    %v236 = vsel %vm207, %v190, 0
    %v239 = vsel %vm207, %v191, 0
    %v242 = vsel %vm207, %v192, 0
    %v245 = vsel %vm207, %v193, 0
    %v248 = vsel %vm207, %v194, 0
    %v251 = vsel %vm207, %v195, 0
    %v254 = vsel %vm207, %v196, 0
    %256 = vmatprep.subr.mxu0 %v166
    %257 = vmatpush1.msra.mxu0 %v165
    %258 = vmatprep.subr.mxu0 %v212
    %259 = vmatpush1.msra.mxu0 %v209
    %260 = vmatprep.subr.mxu0 0.0
    %261 = vmatpush1.msra.mxu0 0.0
    %262 = vmatprep.subr.mxu0 0.0
    %263 = vmatpush1.msra.mxu0 0.0
    %264 = vmatprep.subr.mxu0 0.0
    %265 = vmatpush1.msra.mxu0 0.0
    %266 = vmatprep.subr.mxu0 0.0
    %267 = vmatpush1.msra.mxu0 0.0
    %268 = vmatprep.subr.mxu0 0.0
    %269 = vmatpush1.msra.mxu0 0.0
    %270 = vmatprep.subr.mxu0 0.0
    %271 = vmatpush1.msra.mxu0 0.0
    %272 = vmatprep.subr.mxu0 0.0
    %273 = vmatpush1.msra.mxu0 0.0
    %274 = vmatprep.subr.mxu0 0.0
    %275 = vmatpush1.msra.mxu0 0.0
    %276 = vmatprep.subr.mxu0 0.0
    %277 = vmatpush1.msra.mxu0 0.0
    %278 = vmatprep.subr.mxu0 0.0
    %279 = vmatpush1.msra.mxu0 0.0
    %280 = vmatprep.subr.mxu0 0.0
    %281 = vmatpush1.msra.mxu0 0.0
    %282 = vmatprep.subr.mxu0 0.0
    %283 = vmatpush1.msra.mxu0 0.0
    %284 = vmatprep.subr.mxu0 0.0
    %285 = vmatpush1.msra.mxu0 0.0
    %286 = vmatprep.subr.mxu0 0.0
    %287 = vmatpush1.msra.mxu0 0.0
    %288 = vmatprep.subr.mxu0 0.0
    %289 = vmatpush1.msra.mxu0 0.0
    %290 = vmatprep.subr.mxu0 0.0
    %291 = vmatpush1.msra.mxu0 0.0
    %292 = vmatprep.subr.mxu0 0.0
    %293 = vmatpush1.msra.mxu0 0.0
    %294 = vmatprep.subr.mxu0 0.0
    %295 = vmatpush1.msra.mxu0 0.0
    %296 = vmatprep.subr.mxu0 0.0
    %297 = vmatpush1.msra.mxu0 0.0
    %298 = vmatprep.subr.mxu0 0.0
    %299 = vmatpush1.msra.mxu0 0.0
    %300 = vmatprep.subr.mxu0 0.0
    %301 = vmatpush1.msra.mxu0 0.0
    %302 = vmatprep.subr.mxu0 0.0
    %303 = vmatpush1.msra.mxu0 0.0
    %304 = vmatprep.subr.mxu0 0.0
    %305 = vmatpush1.msra.mxu0 0.0
    %306 = vmatprep.subr.mxu0 0.0
    %307 = vmatpush1.msra.mxu0 0.0
    %308 = vmatprep.subr.mxu0 0.0
    %309 = vmatpush1.msra.mxu0 0.0
    %310 = vmatprep.subr.mxu0 0.0
    %311 = vmatpush1.msra.mxu0 0.0
    %312 = vmatprep.subr.mxu0 0.0
    %313 = vmatpush1.msra.mxu0 0.0
    %314 = vmatprep.subr.mxu0 0.0
    %315 = vmatpush1.msra.mxu0 0.0
    %316 = vmatprep.subr.mxu0 0.0
    %317 = vmatpush1.msra.mxu0 0.0
    %318 = vmatprep.subr.mxu0 0.0
    %319 = vmatpush1.msra.mxu0 0.0
    %320 = vmatprep.mubr.f32.mxu0 0.0
    %321 = vmatmul.mubr.f32.gmra.mrb[0].mxu0 %v205
    %v322 = vpop.f32.mrb[0].mxu0
    %v323 = vadd.f32 %v201, %v322
    %v324 = vpop.f32.mrb[0].mxu0
    %v325 = vadd.f32 %v201, %v324
    %326 = vdwg.mxu0
    %327 = vmatprep.subr.mxu0 %v168
    %328 = vmatpush1.msra.mxu0 %v167
    %329 = vmatprep.subr.mxu0 %v218
    %330 = vmatpush1.msra.mxu0 %v215
    %331 = vmatprep.subr.mxu0 0.0
    %332 = vmatpush1.msra.mxu0 0.0
    %333 = vmatprep.subr.mxu0 0.0
    %334 = vmatpush1.msra.mxu0 0.0
    %335 = vmatprep.subr.mxu0 0.0
    %336 = vmatpush1.msra.mxu0 0.0
    %337 = vmatprep.subr.mxu0 0.0
    %338 = vmatpush1.msra.mxu0 0.0
    %339 = vmatprep.subr.mxu0 0.0
    %340 = vmatpush1.msra.mxu0 0.0
    %341 = vmatprep.subr.mxu0 0.0
    %342 = vmatpush1.msra.mxu0 0.0
    %343 = vmatprep.subr.mxu0 0.0
    %344 = vmatpush1.msra.mxu0 0.0
    %345 = vmatprep.subr.mxu0 0.0
    %346 = vmatpush1.msra.mxu0 0.0
    %347 = vmatprep.subr.mxu0 0.0
    %348 = vmatpush1.msra.mxu0 0.0
    %349 = vmatprep.subr.mxu0 0.0
    %350 = vmatpush1.msra.mxu0 0.0
    %351 = vmatprep.subr.mxu0 0.0
    %352 = vmatpush1.msra.mxu0 0.0
    %353 = vmatprep.subr.mxu0 0.0
    %354 = vmatpush1.msra.mxu0 0.0
    %355 = vmatprep.subr.mxu0 0.0
    %356 = vmatpush1.msra.mxu0 0.0
    %357 = vmatprep.subr.mxu0 0.0
    %358 = vmatpush1.msra.mxu0 0.0
    %359 = vmatprep.subr.mxu0 0.0
    %360 = vmatpush1.msra.mxu0 0.0
    %361 = vmatprep.subr.mxu0 0.0
    %362 = vmatpush1.msra.mxu0 0.0
    %363 = vmatprep.subr.mxu0 0.0
    %364 = vmatpush1.msra.mxu0 0.0
    %365 = vmatprep.subr.mxu0 0.0
    %366 = vmatpush1.msra.mxu0 0.0
    %367 = vmatprep.subr.mxu0 0.0
    %368 = vmatpush1.msra.mxu0 0.0
    %369 = vmatprep.subr.mxu0 0.0
    %370 = vmatpush1.msra.mxu0 0.0
    %371 = vmatprep.subr.mxu0 0.0
    %372 = vmatpush1.msra.mxu0 0.0
    %373 = vmatprep.subr.mxu0 0.0
    %374 = vmatpush1.msra.mxu0 0.0
    %375 = vmatprep.subr.mxu0 0.0
    %376 = vmatpush1.msra.mxu0 0.0
    %377 = vmatprep.subr.mxu0 0.0
    %378 = vmatpush1.msra.mxu0 0.0
    %379 = vmatprep.subr.mxu0 0.0
    %380 = vmatpush1.msra.mxu0 0.0
    %381 = vmatprep.subr.mxu0 0.0
    %382 = vmatpush1.msra.mxu0 0.0
    %383 = vmatprep.subr.mxu0 0.0
    %384 = vmatpush1.msra.mxu0 0.0
    %385 = vmatprep.subr.mxu0 0.0
    %386 = vmatpush1.msra.mxu0 0.0
    %387 = vmatprep.subr.mxu0 0.0
    %388 = vmatpush1.msra.mxu0 0.0
    %389 = vmatprep.subr.mxu0 0.0
    %390 = vmatpush1.msra.mxu0 0.0
    %391 = vmatprep.mubr.f32.mxu0 0.0
    %392 = vmatmul.mubr.f32.gmra.mrb[0].mxu0 %v205
    %v393 = vpop.f32.mrb[0].mxu0
    %v394 = vadd.f32 %v201, %v393
    %v395 = vpop.f32.mrb[0].mxu0
    %v396 = vadd.f32 %v201, %v395
    %397 = vdwg.mxu0
    %398 = vmatprep.subr.mxu0 %v170
    %399 = vmatpush1.msra.mxu0 %v169
    %400 = vmatprep.subr.mxu0 %v224
    %401 = vmatpush1.msra.mxu0 %v221
    %402 = vmatprep.subr.mxu0 0.0
    %403 = vmatpush1.msra.mxu0 0.0
    %404 = vmatprep.subr.mxu0 0.0
    %405 = vmatpush1.msra.mxu0 0.0
    %406 = vmatprep.subr.mxu0 0.0
    %407 = vmatpush1.msra.mxu0 0.0
    %408 = vmatprep.subr.mxu0 0.0
    %409 = vmatpush1.msra.mxu0 0.0
    %410 = vmatprep.subr.mxu0 0.0
    %411 = vmatpush1.msra.mxu0 0.0
    %412 = vmatprep.subr.mxu0 0.0
    %413 = vmatpush1.msra.mxu0 0.0
    %414 = vmatprep.subr.mxu0 0.0
    %415 = vmatpush1.msra.mxu0 0.0
    %416 = vmatprep.subr.mxu0 0.0
    %417 = vmatpush1.msra.mxu0 0.0
    %418 = vmatprep.subr.mxu0 0.0
    %419 = vmatpush1.msra.mxu0 0.0
    %420 = vmatprep.subr.mxu0 0.0
    %421 = vmatpush1.msra.mxu0 0.0
    %422 = vmatprep.subr.mxu0 0.0
    %423 = vmatpush1.msra.mxu0 0.0
    %424 = vmatprep.subr.mxu0 0.0
    %425 = vmatpush1.msra.mxu0 0.0
    %426 = vmatprep.subr.mxu0 0.0
    %427 = vmatpush1.msra.mxu0 0.0
    %428 = vmatprep.subr.mxu0 0.0
    %429 = vmatpush1.msra.mxu0 0.0
    %430 = vmatprep.subr.mxu0 0.0
    %431 = vmatpush1.msra.mxu0 0.0
    %432 = vmatprep.subr.mxu0 0.0
    %433 = vmatpush1.msra.mxu0 0.0
    %434 = vmatprep.subr.mxu0 0.0
    %435 = vmatpush1.msra.mxu0 0.0
    %436 = vmatprep.subr.mxu0 0.0
    %437 = vmatpush1.msra.mxu0 0.0
    %438 = vmatprep.subr.mxu0 0.0
    %439 = vmatpush1.msra.mxu0 0.0
    %440 = vmatprep.subr.mxu0 0.0
    %441 = vmatpush1.msra.mxu0 0.0
    %442 = vmatprep.subr.mxu0 0.0
    %443 = vmatpush1.msra.mxu0 0.0
    %444 = vmatprep.subr.mxu0 0.0
    %445 = vmatpush1.msra.mxu0 0.0
    %446 = vmatprep.subr.mxu0 0.0
    %447 = vmatpush1.msra.mxu0 0.0
    %448 = vmatprep.subr.mxu0 0.0
    %449 = vmatpush1.msra.mxu0 0.0
    %450 = vmatprep.subr.mxu0 0.0
    %451 = vmatpush1.msra.mxu0 0.0
    %452 = vmatprep.subr.mxu0 0.0
    %453 = vmatpush1.msra.mxu0 0.0
    %454 = vmatprep.subr.mxu0 0.0
    %455 = vmatpush1.msra.mxu0 0.0
    %456 = vmatprep.subr.mxu0 0.0
    %457 = vmatpush1.msra.mxu0 0.0
    %458 = vmatprep.subr.mxu0 0.0
    %459 = vmatpush1.msra.mxu0 0.0
    %460 = vmatprep.subr.mxu0 0.0
    %461 = vmatpush1.msra.mxu0 0.0
    %462 = vmatprep.mubr.f32.mxu0 0.0
    %463 = vmatmul.mubr.f32.gmra.mrb[0].mxu0 %v205
    %v464 = vpop.f32.mrb[0].mxu0
    %v465 = vadd.f32 %v201, %v464
    %v466 = vpop.f32.mrb[0].mxu0
    %v467 = vadd.f32 %v201, %v466
    %468 = vdwg.mxu0
    %469 = vmatprep.subr.mxu0 %v172
    %470 = vmatpush1.msra.mxu0 %v171
    %471 = vmatprep.subr.mxu0 %v230
    %472 = vmatpush1.msra.mxu0 %v227
    %473 = vmatprep.subr.mxu0 0.0
    %474 = vmatpush1.msra.mxu0 0.0
    %475 = vmatprep.subr.mxu0 0.0
    %476 = vmatpush1.msra.mxu0 0.0
    %477 = vmatprep.subr.mxu0 0.0
    %478 = vmatpush1.msra.mxu0 0.0
    %479 = vmatprep.subr.mxu0 0.0
    %480 = vmatpush1.msra.mxu0 0.0
    %481 = vmatprep.subr.mxu0 0.0
    %482 = vmatpush1.msra.mxu0 0.0
    %483 = vmatprep.subr.mxu0 0.0
    %484 = vmatpush1.msra.mxu0 0.0
    %485 = vmatprep.subr.mxu0 0.0
    %486 = vmatpush1.msra.mxu0 0.0
    %487 = vmatprep.subr.mxu0 0.0
    %488 = vmatpush1.msra.mxu0 0.0
    %489 = vmatprep.subr.mxu0 0.0
    %490 = vmatpush1.msra.mxu0 0.0
    %491 = vmatprep.subr.mxu0 0.0
    %492 = vmatpush1.msra.mxu0 0.0
    %493 = vmatprep.subr.mxu0 0.0
    %494 = vmatpush1.msra.mxu0 0.0
    %495 = vmatprep.subr.mxu0 0.0
    %496 = vmatpush1.msra.mxu0 0.0
    %497 = vmatprep.subr.mxu0 0.0
    %498 = vmatpush1.msra.mxu0 0.0
    %499 = vmatprep.subr.mxu0 0.0
    %500 = vmatpush1.msra.mxu0 0.0
    %501 = vmatprep.subr.mxu0 0.0
    %502 = vmatpush1.msra.mxu0 0.0
    %503 = vmatprep.subr.mxu0 0.0
    %504 = vmatpush1.msra.mxu0 0.0
    %505 = vmatprep.subr.mxu0 0.0
    %506 = vmatpush1.msra.mxu0 0.0
    %507 = vmatprep.subr.mxu0 0.0
    %508 = vmatpush1.msra.mxu0 0.0
    %509 = vmatprep.subr.mxu0 0.0
    %510 = vmatpush1.msra.mxu0 0.0
    %511 = vmatprep.subr.mxu0 0.0
    %512 = vmatpush1.msra.mxu0 0.0
    %513 = vmatprep.subr.mxu0 0.0
    %514 = vmatpush1.msra.mxu0 0.0
    %515 = vmatprep.subr.mxu0 0.0
    %516 = vmatpush1.msra.mxu0 0.0
    %517 = vmatprep.subr.mxu0 0.0
    %518 = vmatpush1.msra.mxu0 0.0
    %519 = vmatprep.subr.mxu0 0.0
    %520 = vmatpush1.msra.mxu0 0.0
    %521 = vmatprep.subr.mxu0 0.0
    %522 = vmatpush1.msra.mxu0 0.0
    %523 = vmatprep.subr.mxu0 0.0
    %524 = vmatpush1.msra.mxu0 0.0
    %525 = vmatprep.subr.mxu0 0.0
    %526 = vmatpush1.msra.mxu0 0.0
    %527 = vmatprep.subr.mxu0 0.0
    %528 = vmatpush1.msra.mxu0 0.0
    %529 = vmatprep.subr.mxu0 0.0
    %530 = vmatpush1.msra.mxu0 0.0
    %531 = vmatprep.subr.mxu0 0.0
    %532 = vmatpush1.msra.mxu0 0.0
    %533 = vmatprep.mubr.f32.mxu0 0.0
    %534 = vmatmul.mubr.f32.gmra.mrb[0].mxu0 %v205
    %v535 = vpop.f32.mrb[0].mxu0
    %v536 = vadd.f32 %v201, %v535
    %v537 = vpop.f32.mrb[0].mxu0
    %v538 = vadd.f32 %v201, %v537
    %539 = vdwg.mxu0
    %540 = vmatprep.subr.mxu0 %v174
    %541 = vmatpush1.msra.mxu0 %v173
    %542 = vmatprep.subr.mxu0 %v236
    %543 = vmatpush1.msra.mxu0 %v233
    %544 = vmatprep.subr.mxu0 0.0
    %545 = vmatpush1.msra.mxu0 0.0
    %546 = vmatprep.subr.mxu0 0.0
    %547 = vmatpush1.msra.mxu0 0.0
    %548 = vmatprep.subr.mxu0 0.0
    %549 = vmatpush1.msra.mxu0 0.0
    %550 = vmatprep.subr.mxu0 0.0
    %551 = vmatpush1.msra.mxu0 0.0
    %552 = vmatprep.subr.mxu0 0.0
    %553 = vmatpush1.msra.mxu0 0.0
    %554 = vmatprep.subr.mxu0 0.0
    %555 = vmatpush1.msra.mxu0 0.0
    %556 = vmatprep.subr.mxu0 0.0
    %557 = vmatpush1.msra.mxu0 0.0
    %558 = vmatprep.subr.mxu0 0.0
    %559 = vmatpush1.msra.mxu0 0.0
    %560 = vmatprep.subr.mxu0 0.0
    %561 = vmatpush1.msra.mxu0 0.0
    %562 = vmatprep.subr.mxu0 0.0
    %563 = vmatpush1.msra.mxu0 0.0
    %564 = vmatprep.subr.mxu0 0.0
    %565 = vmatpush1.msra.mxu0 0.0
    %566 = vmatprep.subr.mxu0 0.0
    %567 = vmatpush1.msra.mxu0 0.0
    %568 = vmatprep.subr.mxu0 0.0
    %569 = vmatpush1.msra.mxu0 0.0
    %570 = vmatprep.subr.mxu0 0.0
    %571 = vmatpush1.msra.mxu0 0.0
    %572 = vmatprep.subr.mxu0 0.0
    %573 = vmatpush1.msra.mxu0 0.0
    %574 = vmatprep.subr.mxu0 0.0
    %575 = vmatpush1.msra.mxu0 0.0
    %576 = vmatprep.subr.mxu0 0.0
    %577 = vmatpush1.msra.mxu0 0.0
    %578 = vmatprep.subr.mxu0 0.0
    %579 = vmatpush1.msra.mxu0 0.0
    %580 = vmatprep.subr.mxu0 0.0
    %581 = vmatpush1.msra.mxu0 0.0
    %582 = vmatprep.subr.mxu0 0.0
    %583 = vmatpush1.msra.mxu0 0.0
    %584 = vmatprep.subr.mxu0 0.0
    %585 = vmatpush1.msra.mxu0 0.0
    %586 = vmatprep.subr.mxu0 0.0
    %587 = vmatpush1.msra.mxu0 0.0
    %588 = vmatprep.subr.mxu0 0.0
    %589 = vmatpush1.msra.mxu0 0.0
    %590 = vmatprep.subr.mxu0 0.0
    %591 = vmatpush1.msra.mxu0 0.0
    %592 = vmatprep.subr.mxu0 0.0
    %593 = vmatpush1.msra.mxu0 0.0
    %594 = vmatprep.subr.mxu0 0.0
    %595 = vmatpush1.msra.mxu0 0.0
    %596 = vmatprep.subr.mxu0 0.0
    %597 = vmatpush1.msra.mxu0 0.0
    %598 = vmatprep.subr.mxu0 0.0
    %599 = vmatpush1.msra.mxu0 0.0
    %600 = vmatprep.subr.mxu0 0.0
    %601 = vmatpush1.msra.mxu0 0.0
    %602 = vmatprep.subr.mxu0 0.0
    %603 = vmatpush1.msra.mxu0 0.0
    %604 = vmatprep.mubr.f32.mxu0 0.0
    %605 = vmatmul.mubr.f32.gmra.mrb[0].mxu0 %v205
    %v606 = vpop.f32.mrb[0].mxu0
    %v607 = vadd.f32 %v201, %v606
    %v608 = vpop.f32.mrb[0].mxu0
    %v609 = vadd.f32 %v201, %v608
    %610 = vdwg.mxu0
    %611 = vmatprep.subr.mxu0 %v176
    %612 = vmatpush1.msra.mxu0 %v175
    %613 = vmatprep.subr.mxu0 %v242
    %614 = vmatpush1.msra.mxu0 %v239
    %615 = vmatprep.subr.mxu0 0.0
    %616 = vmatpush1.msra.mxu0 0.0
    %617 = vmatprep.subr.mxu0 0.0
    %618 = vmatpush1.msra.mxu0 0.0
    %619 = vmatprep.subr.mxu0 0.0
    %620 = vmatpush1.msra.mxu0 0.0
    %621 = vmatprep.subr.mxu0 0.0
    %622 = vmatpush1.msra.mxu0 0.0
    %623 = vmatprep.subr.mxu0 0.0
    %624 = vmatpush1.msra.mxu0 0.0
    %625 = vmatprep.subr.mxu0 0.0
    %626 = vmatpush1.msra.mxu0 0.0
    %627 = vmatprep.subr.mxu0 0.0
    %628 = vmatpush1.msra.mxu0 0.0
    %629 = vmatprep.subr.mxu0 0.0
    %630 = vmatpush1.msra.mxu0 0.0
    %631 = vmatprep.subr.mxu0 0.0
    %632 = vmatpush1.msra.mxu0 0.0
    %633 = vmatprep.subr.mxu0 0.0
    %634 = vmatpush1.msra.mxu0 0.0
    %635 = vmatprep.subr.mxu0 0.0
    %636 = vmatpush1.msra.mxu0 0.0
    %637 = vmatprep.subr.mxu0 0.0
    %638 = vmatpush1.msra.mxu0 0.0
    %639 = vmatprep.subr.mxu0 0.0
    %640 = vmatpush1.msra.mxu0 0.0
    %641 = vmatprep.subr.mxu0 0.0
    %642 = vmatpush1.msra.mxu0 0.0
    %643 = vmatprep.subr.mxu0 0.0
    %644 = vmatpush1.msra.mxu0 0.0
    %645 = vmatprep.subr.mxu0 0.0
    %646 = vmatpush1.msra.mxu0 0.0
    %647 = vmatprep.subr.mxu0 0.0
    %648 = vmatpush1.msra.mxu0 0.0
    %649 = vmatprep.subr.mxu0 0.0
    %650 = vmatpush1.msra.mxu0 0.0
    %651 = vmatprep.subr.mxu0 0.0
    %652 = vmatpush1.msra.mxu0 0.0
    %653 = vmatprep.subr.mxu0 0.0
    %654 = vmatpush1.msra.mxu0 0.0
    %655 = vmatprep.subr.mxu0 0.0
    %656 = vmatpush1.msra.mxu0 0.0
    %657 = vmatprep.subr.mxu0 0.0
    %658 = vmatpush1.msra.mxu0 0.0
    %659 = vmatprep.subr.mxu0 0.0
    %660 = vmatpush1.msra.mxu0 0.0
    %661 = vmatprep.subr.mxu0 0.0
    %662 = vmatpush1.msra.mxu0 0.0
    %663 = vmatprep.subr.mxu0 0.0
    %664 = vmatpush1.msra.mxu0 0.0
    %665 = vmatprep.subr.mxu0 0.0
    %666 = vmatpush1.msra.mxu0 0.0
    %667 = vmatprep.subr.mxu0 0.0
    %668 = vmatpush1.msra.mxu0 0.0
    %669 = vmatprep.subr.mxu0 0.0
    %670 = vmatpush1.msra.mxu0 0.0
    %671 = vmatprep.subr.mxu0 0.0
    %672 = vmatpush1.msra.mxu0 0.0
    %673 = vmatprep.subr.mxu0 0.0
    %674 = vmatpush1.msra.mxu0 0.0
    %675 = vmatprep.mubr.f32.mxu0 0.0
    %676 = vmatmul.mubr.f32.gmra.mrb[0].mxu0 %v205
    %v677 = vpop.f32.mrb[0].mxu0
    %v678 = vadd.f32 %v201, %v677
    %v679 = vpop.f32.mrb[0].mxu0
    %v680 = vadd.f32 %v201, %v679
    %681 = vdwg.mxu0
    %682 = vmatprep.subr.mxu0 %v178
    %683 = vmatpush1.msra.mxu0 %v177
    %684 = vmatprep.subr.mxu0 %v248
    %685 = vmatpush1.msra.mxu0 %v245
    %686 = vmatprep.subr.mxu0 0.0
    %687 = vmatpush1.msra.mxu0 0.0
    %688 = vmatprep.subr.mxu0 0.0
    %689 = vmatpush1.msra.mxu0 0.0
    %690 = vmatprep.subr.mxu0 0.0
    %691 = vmatpush1.msra.mxu0 0.0
    %692 = vmatprep.subr.mxu0 0.0
    %693 = vmatpush1.msra.mxu0 0.0
    %694 = vmatprep.subr.mxu0 0.0
    %695 = vmatpush1.msra.mxu0 0.0
    %696 = vmatprep.subr.mxu0 0.0
    %697 = vmatpush1.msra.mxu0 0.0
    %698 = vmatprep.subr.mxu0 0.0
    %699 = vmatpush1.msra.mxu0 0.0
    %700 = vmatprep.subr.mxu0 0.0
    %701 = vmatpush1.msra.mxu0 0.0
    %702 = vmatprep.subr.mxu0 0.0
    %703 = vmatpush1.msra.mxu0 0.0
    %704 = vmatprep.subr.mxu0 0.0
    %705 = vmatpush1.msra.mxu0 0.0
    %706 = vmatprep.subr.mxu0 0.0
    %707 = vmatpush1.msra.mxu0 0.0
    %708 = vmatprep.subr.mxu0 0.0
    %709 = vmatpush1.msra.mxu0 0.0
    %710 = vmatprep.subr.mxu0 0.0
    %711 = vmatpush1.msra.mxu0 0.0
    %712 = vmatprep.subr.mxu0 0.0
    %713 = vmatpush1.msra.mxu0 0.0
    %714 = vmatprep.subr.mxu0 0.0
    %715 = vmatpush1.msra.mxu0 0.0
    %716 = vmatprep.subr.mxu0 0.0
    %717 = vmatpush1.msra.mxu0 0.0
    %718 = vmatprep.subr.mxu0 0.0
    %719 = vmatpush1.msra.mxu0 0.0
    %720 = vmatprep.subr.mxu0 0.0
    %721 = vmatpush1.msra.mxu0 0.0
    %722 = vmatprep.subr.mxu0 0.0
    %723 = vmatpush1.msra.mxu0 0.0
    %724 = vmatprep.subr.mxu0 0.0
    %725 = vmatpush1.msra.mxu0 0.0
    %726 = vmatprep.subr.mxu0 0.0
    %727 = vmatpush1.msra.mxu0 0.0
    %728 = vmatprep.subr.mxu0 0.0
    %729 = vmatpush1.msra.mxu0 0.0
    %730 = vmatprep.subr.mxu0 0.0
    %731 = vmatpush1.msra.mxu0 0.0
    %732 = vmatprep.subr.mxu0 0.0
    %733 = vmatpush1.msra.mxu0 0.0
    %734 = vmatprep.subr.mxu0 0.0
    %735 = vmatpush1.msra.mxu0 0.0
    %736 = vmatprep.subr.mxu0 0.0
    %737 = vmatpush1.msra.mxu0 0.0
    %738 = vmatprep.subr.mxu0 0.0
    %739 = vmatpush1.msra.mxu0 0.0
    %740 = vmatprep.subr.mxu0 0.0
    %741 = vmatpush1.msra.mxu0 0.0
    %742 = vmatprep.subr.mxu0 0.0
    %743 = vmatpush1.msra.mxu0 0.0
    %744 = vmatprep.subr.mxu0 0.0
    %745 = vmatpush1.msra.mxu0 0.0
    %746 = vmatprep.mubr.f32.mxu0 0.0
    %747 = vmatmul.mubr.f32.gmra.mrb[0].mxu0 %v205
    %v748 = vpop.f32.mrb[0].mxu0
    %v749 = vadd.f32 %v201, %v748
    %v750 = vpop.f32.mrb[0].mxu0
    %v751 = vadd.f32 %v201, %v750
    %752 = vdwg.mxu0
    %753 = vmatprep.subr.mxu0 %v180
    %754 = vmatpush1.msra.mxu0 %v179
    %755 = vmatprep.subr.mxu0 %v254
    %756 = vmatpush1.msra.mxu0 %v251
    %757 = vmatprep.subr.mxu0 0.0
    %758 = vmatpush1.msra.mxu0 0.0
    %759 = vmatprep.subr.mxu0 0.0
    %760 = vmatpush1.msra.mxu0 0.0
    %761 = vmatprep.subr.mxu0 0.0
    %762 = vmatpush1.msra.mxu0 0.0
    %763 = vmatprep.subr.mxu0 0.0
    %764 = vmatpush1.msra.mxu0 0.0
    %765 = vmatprep.subr.mxu0 0.0
    %766 = vmatpush1.msra.mxu0 0.0
    %767 = vmatprep.subr.mxu0 0.0
    %768 = vmatpush1.msra.mxu0 0.0
    %769 = vmatprep.subr.mxu0 0.0
    %770 = vmatpush1.msra.mxu0 0.0
    %771 = vmatprep.subr.mxu0 0.0
    %772 = vmatpush1.msra.mxu0 0.0
    %773 = vmatprep.subr.mxu0 0.0
    %774 = vmatpush1.msra.mxu0 0.0
    %775 = vmatprep.subr.mxu0 0.0
    %776 = vmatpush1.msra.mxu0 0.0
    %777 = vmatprep.subr.mxu0 0.0
    %778 = vmatpush1.msra.mxu0 0.0
    %779 = vmatprep.subr.mxu0 0.0
    %780 = vmatpush1.msra.mxu0 0.0
    %781 = vmatprep.subr.mxu0 0.0
    %782 = vmatpush1.msra.mxu0 0.0
    %783 = vmatprep.subr.mxu0 0.0
    %784 = vmatpush1.msra.mxu0 0.0
    %785 = vmatprep.subr.mxu0 0.0
    %786 = vmatpush1.msra.mxu0 0.0
    %787 = vmatprep.subr.mxu0 0.0
    %788 = vmatpush1.msra.mxu0 0.0
    %789 = vmatprep.subr.mxu0 0.0
    %790 = vmatpush1.msra.mxu0 0.0
    %791 = vmatprep.subr.mxu0 0.0
    %792 = vmatpush1.msra.mxu0 0.0
    %793 = vmatprep.subr.mxu0 0.0
    %794 = vmatpush1.msra.mxu0 0.0
    %795 = vmatprep.subr.mxu0 0.0
    %796 = vmatpush1.msra.mxu0 0.0
    %797 = vmatprep.subr.mxu0 0.0
    %798 = vmatpush1.msra.mxu0 0.0
    %799 = vmatprep.subr.mxu0 0.0
    %800 = vmatpush1.msra.mxu0 0.0
    %801 = vmatprep.subr.mxu0 0.0
    %802 = vmatpush1.msra.mxu0 0.0
    %803 = vmatprep.subr.mxu0 0.0
    %804 = vmatpush1.msra.mxu0 0.0
    %805 = vmatprep.subr.mxu0 0.0
    %806 = vmatpush1.msra.mxu0 0.0
    %807 = vmatprep.subr.mxu0 0.0
    %808 = vmatpush1.msra.mxu0 0.0
    %809 = vmatprep.subr.mxu0 0.0
    %810 = vmatpush1.msra.mxu0 0.0
    %811 = vmatprep.subr.mxu0 0.0
    %812 = vmatpush1.msra.mxu0 0.0
    %813 = vmatprep.subr.mxu0 0.0
    %814 = vmatpush1.msra.mxu0 0.0
    %815 = vmatprep.subr.mxu0 0.0
    %816 = vmatpush1.msra.mxu0 0.0
    %817 = vmatprep.mubr.f32.mxu0 0.0
    %818 = vmatmul.mubr.f32.gmra.mrb[0].mxu0 %v205
    %v819 = vpop.f32.mrb[0].mxu0
    %v820 = vadd.f32 %v201, %v819
    %v821 = vpop.f32.mrb[0].mxu0
    %v822 = vadd.f32 %v201, %v821
    %823 = vdwg.mxu0
    %824 = vst [vmem:[#allocation10] sm:$0xff] %v323
    %825 = vst [vmem:[#allocation10 + $0x8] sm:$0xff] %v325
    %826 = vst [vmem:[#allocation10 + $0x10] sm:$0xff] %v394
    %827 = vst [vmem:[#allocation10 + $0x18] sm:$0xff] %v396
    %828 = vst [vmem:[#allocation10 + $0x20] sm:$0xff] %v465
    %829 = vst [vmem:[#allocation10 + $0x28] sm:$0xff] %v467
    %830 = vst [vmem:[#allocation10 + $0x30] sm:$0xff] %v536
    %831 = vst [vmem:[#allocation10 + $0x38] sm:$0xff] %v538
    %832 = vst [vmem:[#allocation10 + $0x40] sm:$0xff] %v607
    %833 = vst [vmem:[#allocation10 + $0x48] sm:$0xff] %v609
    %834 = vst [vmem:[#allocation10 + $0x50] sm:$0xff] %v678
    %835 = vst [vmem:[#allocation10 + $0x58] sm:$0xff] %v680
    %836 = vst [vmem:[#allocation10 + $0x60] sm:$0xff] %v749
    %837 = vst [vmem:[#allocation10 + $0x68] sm:$0xff] %v751
    %838 = vst [vmem:[#allocation10 + $0x70] sm:$0xff] %v820
    %839 = vst [vmem:[#allocation10 + $0x78] sm:$0xff] %v822
    loop: start=0, step=1, limit=4
    $region90: #{snn_forward.1} parent=1 // loop_pre_header
      _
    $region91: #{snn_forward.1} parent=1 // loop_header
      %s841 = sphi 0, %s845
      %p842 = scmp.ge.s32.totalorder %s841, 4
    $region92: #{snn_forward.1} parent=1 // loop_header_branch
      %844 = sbr.rel (%p842) target = $region96
    $region93: #{snn_forward.1} parent=1 // loop_body
      %s846 = sld [smem:[#allocation11]]
      %p847 = scmp.eq.s32.totalorder %s846, 0
      // Predicated region
      $region97: #{snn_forward.1} parent=93 // pred_check
        %p848 = pneg %p847
      $region98: #{snn_forward.1} parent=93 // pred_check_branch
        %850 = sbr.rel (%p848) target = $region100
      $region99: #{snn_forward.1} parent=93 // pred_region
        %s851 = sld [smem:[#allocation13 + %s841]]
        %v852 = vld [vmem:[#allocation10] sm:$0xff]
        %v853 = vld [vmem:[#allocation10 + $0x8] sm:$0xff]
        %v854 = vld [vmem:[#allocation10 + $0x10] sm:$0xff]
        %v855 = vld [vmem:[#allocation10 + $0x18] sm:$0xff]
        %v856 = vld [vmem:[#allocation10 + $0x20] sm:$0xff]
        %v857 = vld [vmem:[#allocation10 + $0x28] sm:$0xff]
        %v858 = vld [vmem:[#allocation10 + $0x30] sm:$0xff]
        %v859 = vld [vmem:[#allocation10 + $0x38] sm:$0xff]
        %v860 = vld [vmem:[#allocation10 + $0x40] sm:$0xff]
        %v861 = vld [vmem:[#allocation10 + $0x48] sm:$0xff]
        %v862 = vld [vmem:[#allocation10 + $0x50] sm:$0xff]
        %v863 = vld [vmem:[#allocation10 + $0x58] sm:$0xff]
        %v864 = vld [vmem:[#allocation10 + $0x60] sm:$0xff]
        %v865 = vld [vmem:[#allocation10 + $0x68] sm:$0xff]
        %v866 = vld [vmem:[#allocation10 + $0x70] sm:$0xff]
        %v867 = vld [vmem:[#allocation10 + $0x78] sm:$0xff]
        %v868 = vld [vmem:[#allocation2] sm:$0xff]
        %v869 = vld [vmem:[#allocation2 + $0x8] sm:$0xff]
        %v870 = vld [vmem:[#allocation2 + $0x10] sm:$0xff]
        %v871 = vld [vmem:[#allocation2 + $0x18] sm:$0xff]
        %v872 = vld [vmem:[#allocation2 + $0x20] sm:$0xff]
        %v873 = vld [vmem:[#allocation2 + $0x28] sm:$0xff]
        %v874 = vld [vmem:[#allocation2 + $0x30] sm:$0xff]
        %v875 = vld [vmem:[#allocation2 + $0x38] sm:$0xff]
        %v876 = vld [vmem:[#allocation2 + $0x40] sm:$0xff]
        %v877 = vld [vmem:[#allocation2 + $0x48] sm:$0xff]
        %v878 = vld [vmem:[#allocation2 + $0x50] sm:$0xff]
        %v879 = vld [vmem:[#allocation2 + $0x58] sm:$0xff]
        %v880 = vld [vmem:[#allocation2 + $0x60] sm:$0xff]
        %v881 = vld [vmem:[#allocation2 + $0x68] sm:$0xff]
        %v882 = vld [vmem:[#allocation2 + $0x70] sm:$0xff]
        %v883 = vld [vmem:[#allocation2 + $0x78] sm:$0xff]
        %v884 = vld [vmem:[#allocation3] sm:$0xff]
        %v885 = vld [vmem:[#allocation3 + $0x8] sm:$0xff]
        %v886 = vld [vmem:[#allocation3 + $0x10] sm:$0xff]
        %v887 = vld [vmem:[#allocation3 + $0x18] sm:$0xff]
        %v888 = vld [vmem:[#allocation3 + $0x20] sm:$0xff]
        %v889 = vld [vmem:[#allocation3 + $0x28] sm:$0xff]
        %v890 = vld [vmem:[#allocation3 + $0x30] sm:$0xff]
        %v891 = vld [vmem:[#allocation3 + $0x38] sm:$0xff]
        %v892 = vld [vmem:[#allocation3 + $0x40] sm:$0xff]
        %v893 = vld [vmem:[#allocation3 + $0x48] sm:$0xff]
        %v894 = vld [vmem:[#allocation3 + $0x50] sm:$0xff]
        %v895 = vld [vmem:[#allocation3 + $0x58] sm:$0xff]
        %v896 = vld [vmem:[#allocation3 + $0x60] sm:$0xff]
        %v897 = vld [vmem:[#allocation3 + $0x68] sm:$0xff]
        %v898 = vld [vmem:[#allocation3 + $0x70] sm:$0xff]
        %v899 = vld [vmem:[#allocation3 + $0x78] sm:$0xff]
        %v900 = vsub.f32 1.0, %v884
        %v901 = vsub.f32 1.0, %v885
        %v902 = vsub.f32 1.0, %v886
        %v903 = vsub.f32 1.0, %v887
        %v904 = vsub.f32 1.0, %v888
        %v905 = vsub.f32 1.0, %v889
        %v906 = vsub.f32 1.0, %v890
        %v907 = vsub.f32 1.0, %v891
        %v908 = vsub.f32 1.0, %v892
        %v909 = vsub.f32 1.0, %v893
        %v910 = vsub.f32 1.0, %v894
        %v911 = vsub.f32 1.0, %v895
        %v912 = vsub.f32 1.0, %v896
        %v913 = vsub.f32 1.0, %v897
        %v914 = vsub.f32 1.0, %v898
        %v915 = vsub.f32 1.0, %v899
        %v916 = vmul.f32 %v868, %v900
        %v917 = vmul.f32 %v869, %v901
        %v918 = vmul.f32 %v870, %v902
        %v919 = vmul.f32 %v871, %v903
        %v920 = vmul.f32 %v872, %v904
        %v921 = vmul.f32 %v873, %v905
        %v922 = vmul.f32 %v874, %v906
        %v923 = vmul.f32 %v875, %v907
        %v924 = vmul.f32 %v876, %v908
        %v925 = vmul.f32 %v877, %v909
        %v926 = vmul.f32 %v878, %v910
        %v927 = vmul.f32 %v879, %v911
        %v928 = vmul.f32 %v880, %v912
        %v929 = vmul.f32 %v881, %v913
        %v930 = vmul.f32 %v882, %v914
        %v931 = vmul.f32 %v883, %v915
        %v932 = vmul.f32 %v916, 0.75
        %v933 = vmul.f32 %v917, 0.75
        %v934 = vmul.f32 %v918, 0.75
        %v935 = vmul.f32 %v919, 0.75
        %v936 = vmul.f32 %v920, 0.75
        %v937 = vmul.f32 %v921, 0.75
        %v938 = vmul.f32 %v922, 0.75
        %v939 = vmul.f32 %v923, 0.75
        %v940 = vmul.f32 %v924, 0.75
        %v941 = vmul.f32 %v925, 0.75
        %v942 = vmul.f32 %v926, 0.75
        %v943 = vmul.f32 %v927, 0.75
        %v944 = vmul.f32 %v928, 0.75
        %v945 = vmul.f32 %v929, 0.75
        %v946 = vmul.f32 %v930, 0.75
        %v947 = vmul.f32 %v931, 0.75
        %v948 = vadd.f32 %v932, %v852
        %v949 = vadd.f32 %v933, %v853
        %v950 = vadd.f32 %v934, %v854
        %v951 = vadd.f32 %v935, %v855
        %v952 = vadd.f32 %v936, %v856
        %v953 = vadd.f32 %v937, %v857
        %v954 = vadd.f32 %v938, %v858
        %v955 = vadd.f32 %v939, %v859
        %v956 = vadd.f32 %v940, %v860
        %v957 = vadd.f32 %v941, %v861
        %v958 = vadd.f32 %v942, %v862
        %v959 = vadd.f32 %v943, %v863
        %v960 = vadd.f32 %v944, %v864
        %v961 = vadd.f32 %v945, %v865
        %v962 = vadd.f32 %v946, %v866
        %v963 = vadd.f32 %v947, %v867
        %vm964 = vcmp.gt.f32.partialorder %v948, 0.45
        %vm965 = vcmp.gt.f32.partialorder %v949, 0.45
        %vm966 = vcmp.gt.f32.partialorder %v950, 0.45
        %vm967 = vcmp.gt.f32.partialorder %v951, 0.45
        %vm968 = vcmp.gt.f32.partialorder %v952, 0.45
        %vm969 = vcmp.gt.f32.partialorder %v953, 0.45
        %vm970 = vcmp.gt.f32.partialorder %v954, 0.45
        %vm971 = vcmp.gt.f32.partialorder %v955, 0.45
        %vm972 = vcmp.gt.f32.partialorder %v956, 0.45
        %vm973 = vcmp.gt.f32.partialorder %v957, 0.45
        %vm974 = vcmp.gt.f32.partialorder %v958, 0.45
        %vm975 = vcmp.gt.f32.partialorder %v959, 0.45
        %vm976 = vcmp.gt.f32.partialorder %v960, 0.45
        %vm977 = vcmp.gt.f32.partialorder %v961, 0.45
        %vm978 = vcmp.gt.f32.partialorder %v962, 0.45
        %vm979 = vcmp.gt.f32.partialorder %v963, 0.45
        %v980 = vsel %vm964, 1, 0
        %v981 = vsel %vm965, 1, 0
        %v982 = vsel %vm966, 1, 0
        %v983 = vsel %vm967, 1, 0
        %v984 = vsel %vm968, 1, 0
        %v985 = vsel %vm969, 1, 0
        %v986 = vsel %vm970, 1, 0
        %v987 = vsel %vm971, 1, 0
        %v988 = vsel %vm972, 1, 0
        %v989 = vsel %vm973, 1, 0
        %v990 = vsel %vm974, 1, 0
        %v991 = vsel %vm975, 1, 0
        %v992 = vsel %vm976, 1, 0
        %v993 = vsel %vm977, 1, 0
        %v994 = vsel %vm978, 1, 0
        %v995 = vsel %vm979, 1, 0
        %v996 = vcvt.s32.f32 %v980
        %v997 = vcvt.s32.f32 %v981
        %v998 = vcvt.s32.f32 %v982
        %v999 = vcvt.s32.f32 %v983
        %v1000 = vcvt.s32.f32 %v984
        %v1001 = vcvt.s32.f32 %v985
        %v1002 = vcvt.s32.f32 %v986
        %v1003 = vcvt.s32.f32 %v987
        %v1004 = vcvt.s32.f32 %v988
        %v1005 = vcvt.s32.f32 %v989
        %v1006 = vcvt.s32.f32 %v990
        %v1007 = vcvt.s32.f32 %v991
        %v1008 = vcvt.s32.f32 %v992
        %v1009 = vcvt.s32.f32 %v993
        %v1010 = vcvt.s32.f32 %v994
        %v1011 = vcvt.s32.f32 %v995
        %1012 = vst [vmem:[#allocation2] sm:$0xff] %v948
        %1013 = vst [vmem:[#allocation2 + $0x8] sm:$0xff] %v949
        %1014 = vst [vmem:[#allocation2 + $0x10] sm:$0xff] %v950
        %1015 = vst [vmem:[#allocation2 + $0x18] sm:$0xff] %v951
        %1016 = vst [vmem:[#allocation2 + $0x20] sm:$0xff] %v952
        %1017 = vst [vmem:[#allocation2 + $0x28] sm:$0xff] %v953
        %1018 = vst [vmem:[#allocation2 + $0x30] sm:$0xff] %v954
        %1019 = vst [vmem:[#allocation2 + $0x38] sm:$0xff] %v955
        %1020 = vst [vmem:[#allocation2 + $0x40] sm:$0xff] %v956
        %1021 = vst [vmem:[#allocation2 + $0x48] sm:$0xff] %v957
        %1022 = vst [vmem:[#allocation2 + $0x50] sm:$0xff] %v958
        %1023 = vst [vmem:[#allocation2 + $0x58] sm:$0xff] %v959
        %1024 = vst [vmem:[#allocation2 + $0x60] sm:$0xff] %v960
        %1025 = vst [vmem:[#allocation2 + $0x68] sm:$0xff] %v961
        %1026 = vst [vmem:[#allocation2 + $0x70] sm:$0xff] %v962
        %1027 = vst [vmem:[#allocation2 + $0x78] sm:$0xff] %v963
        %1028 = vst [vmem:[#allocation3] sm:$0xff] %v996
        %1029 = vst [vmem:[#allocation3 + $0x8] sm:$0xff] %v997
        %1030 = vst [vmem:[#allocation3 + $0x10] sm:$0xff] %v998
        %1031 = vst [vmem:[#allocation3 + $0x18] sm:$0xff] %v999
        %1032 = vst [vmem:[#allocation3 + $0x20] sm:$0xff] %v1000
        %1033 = vst [vmem:[#allocation3 + $0x28] sm:$0xff] %v1001
        %1034 = vst [vmem:[#allocation3 + $0x30] sm:$0xff] %v1002
        %1035 = vst [vmem:[#allocation3 + $0x38] sm:$0xff] %v1003
        %1036 = vst [vmem:[#allocation3 + $0x40] sm:$0xff] %v1004
        %1037 = vst [vmem:[#allocation3 + $0x48] sm:$0xff] %v1005
        %1038 = vst [vmem:[#allocation3 + $0x50] sm:$0xff] %v1006
        %1039 = vst [vmem:[#allocation3 + $0x58] sm:$0xff] %v1007
        %1040 = vst [vmem:[#allocation3 + $0x60] sm:$0xff] %v1008
        %1041 = vst [vmem:[#allocation3 + $0x68] sm:$0xff] %v1009
        %1042 = vst [vmem:[#allocation3 + $0x70] sm:$0xff] %v1010
        %1043 = vst [vmem:[#allocation3 + $0x78] sm:$0xff] %v1011
        %v1044 = vpack.c.bf16 %v996, %v996
        %v1045 = vpack.c.bf16 %v997, %v997
        %v1046 = vpack.c.bf16 %v998, %v998
        %v1047 = vpack.c.bf16 %v999, %v999
        %v1048 = vpack.c.bf16 %v1000, %v1000
        %v1049 = vpack.c.bf16 %v1001, %v1001
        %v1050 = vpack.c.bf16 %v1002, %v1002
        %v1051 = vpack.c.bf16 %v1003, %v1003
        %v1052 = vpack.c.bf16 %v1004, %v1004
        %v1053 = vpack.c.bf16 %v1005, %v1005
        %v1054 = vpack.c.bf16 %v1006, %v1006
        %v1055 = vpack.c.bf16 %v1007, %v1007
        %v1056 = vpack.c.bf16 %v1008, %v1008
        %v1057 = vpack.c.bf16 %v1009, %v1009
        %v1058 = vpack.c.bf16 %v1010, %v1010
        %v1059 = vpack.c.bf16 %v1011, %v1011
        %v1060 = vld [vmem:[%s5] sm:$0xff]
        %v1061 = vld [vmem:[%s5 + $0x8] sm:$0xff]
        %v1062 = vld [vmem:[%s5 + $0x10] sm:$0xff]
        %v1063 = vld [vmem:[%s5 + $0x18] sm:$0xff]
        %v1064 = vld [vmem:[%s5 + $0x20] sm:$0xff]
        %v1065 = vld [vmem:[%s5 + $0x28] sm:$0xff]
        %v1066 = vld [vmem:[%s5 + $0x30] sm:$0xff]
        %v1067 = vld [vmem:[%s5 + $0x38] sm:$0xff]
        %v1068 = vld [vmem:[%s5 + $0x40] sm:$0xff]
        %v1069 = vld [vmem:[%s5 + $0x48] sm:$0xff]
        %v1070 = vld [vmem:[%s5 + $0x50] sm:$0xff]
        %v1071 = vld [vmem:[%s5 + $0x58] sm:$0xff]
        %v1072 = vld [vmem:[%s5 + $0x60] sm:$0xff]
        %v1073 = vld [vmem:[%s5 + $0x68] sm:$0xff]
        %v1074 = vld [vmem:[%s5 + $0x70] sm:$0xff]
        %v1075 = vld [vmem:[%s5 + $0x78] sm:$0xff]
        %v1076 = vld [vmem:[%s5 + $0x80] sm:$0xff]
        %v1077 = vld [vmem:[%s5 + $0x88] sm:$0xff]
        %v1078 = vld [vmem:[%s5 + $0x90] sm:$0xff]
        %v1079 = vld [vmem:[%s5 + $0x98] sm:$0xff]
        %v1080 = vld [vmem:[%s5 + $0xa0] sm:$0xff]
        %v1081 = vld [vmem:[%s5 + $0xa8] sm:$0xff]
        %v1082 = vld [vmem:[%s5 + $0xb0] sm:$0xff]
        %v1083 = vld [vmem:[%s5 + $0xb8] sm:$0xff]
        %v1084 = vld [vmem:[%s5 + $0xc0] sm:$0xff]
        %v1085 = vld [vmem:[%s5 + $0xc8] sm:$0xff]
        %v1086 = vld [vmem:[%s5 + $0xd0] sm:$0xff]
        %v1087 = vld [vmem:[%s5 + $0xd8] sm:$0xff]
        %v1088 = vld [vmem:[%s5 + $0xe0] sm:$0xff]
        %v1089 = vld [vmem:[%s5 + $0xe8] sm:$0xff]
        %v1090 = vld [vmem:[%s5 + $0xf0] sm:$0xff]
        %v1091 = vld [vmem:[%s5 + $0xf8] sm:$0xff]
        %v1092 = vld [vmem:[%s5 + $0x100] sm:$0xff]
        %v1093 = vld [vmem:[%s5 + $0x108] sm:$0xff]
        %v1094 = vld [vmem:[%s5 + $0x110] sm:$0xff]
        %v1095 = vld [vmem:[%s5 + $0x118] sm:$0xff]
        %v1096 = vld [vmem:[%s5 + $0x120] sm:$0xff]
        %v1097 = vld [vmem:[%s5 + $0x128] sm:$0xff]
        %v1098 = vld [vmem:[%s5 + $0x130] sm:$0xff]
        %v1099 = vld [vmem:[%s5 + $0x138] sm:$0xff]
        %v1100 = vld [vmem:[%s5 + $0x140] sm:$0xff]
        %v1101 = vld [vmem:[%s5 + $0x148] sm:$0xff]
        %v1102 = vld [vmem:[%s5 + $0x150] sm:$0xff]
        %v1103 = vld [vmem:[%s5 + $0x158] sm:$0xff]
        %v1104 = vld [vmem:[%s5 + $0x160] sm:$0xff]
        %v1105 = vld [vmem:[%s5 + $0x168] sm:$0xff]
        %v1106 = vld [vmem:[%s5 + $0x170] sm:$0xff]
        %v1107 = vld [vmem:[%s5 + $0x178] sm:$0xff]
        %v1108 = vld [vmem:[%s5 + $0x180] sm:$0xff]
        %v1109 = vld [vmem:[%s5 + $0x188] sm:$0xff]
        %v1110 = vld [vmem:[%s5 + $0x190] sm:$0xff]
        %v1111 = vld [vmem:[%s5 + $0x198] sm:$0xff]
        %v1112 = vld [vmem:[%s5 + $0x1a0] sm:$0xff]
        %v1113 = vld [vmem:[%s5 + $0x1a8] sm:$0xff]
        %v1114 = vld [vmem:[%s5 + $0x1b0] sm:$0xff]
        %v1115 = vld [vmem:[%s5 + $0x1b8] sm:$0xff]
        %v1116 = vld [vmem:[%s5 + $0x1c0] sm:$0xff]
        %v1117 = vld [vmem:[%s5 + $0x1c8] sm:$0xff]
        %v1118 = vld [vmem:[%s5 + $0x1d0] sm:$0xff]
        %v1119 = vld [vmem:[%s5 + $0x1d8] sm:$0xff]
        %v1120 = vld [vmem:[%s5 + $0x1e0] sm:$0xff]
        %v1121 = vld [vmem:[%s5 + $0x1e8] sm:$0xff]
        %v1122 = vld [vmem:[%s5 + $0x1f0] sm:$0xff]
        %v1123 = vld [vmem:[%s5 + $0x1f8] sm:$0xff]
        %v1124 = vld [vmem:[%s5 + $0x200] sm:$0xff]
        %v1125 = vld [vmem:[%s5 + $0x208] sm:$0xff]
        %v1126 = vld [vmem:[%s5 + $0x210] sm:$0xff]
        %v1127 = vld [vmem:[%s5 + $0x218] sm:$0xff]
        %v1128 = vld [vmem:[%s5 + $0x220] sm:$0xff]
        %v1129 = vld [vmem:[%s5 + $0x228] sm:$0xff]
        %v1130 = vld [vmem:[%s5 + $0x230] sm:$0xff]
        %v1131 = vld [vmem:[%s5 + $0x238] sm:$0xff]
        %v1132 = vld [vmem:[%s5 + $0x240] sm:$0xff]
        %v1133 = vld [vmem:[%s5 + $0x248] sm:$0xff]
        %v1134 = vld [vmem:[%s5 + $0x250] sm:$0xff]
        %v1135 = vld [vmem:[%s5 + $0x258] sm:$0xff]
        %v1136 = vld [vmem:[%s5 + $0x260] sm:$0xff]
        %v1137 = vld [vmem:[%s5 + $0x268] sm:$0xff]
        %v1138 = vld [vmem:[%s5 + $0x270] sm:$0xff]
        %v1139 = vld [vmem:[%s5 + $0x278] sm:$0xff]
        %v1140 = vld [vmem:[%s5 + $0x280] sm:$0xff]
        %v1141 = vld [vmem:[%s5 + $0x288] sm:$0xff]
        %v1142 = vld [vmem:[%s5 + $0x290] sm:$0xff]
        %v1143 = vld [vmem:[%s5 + $0x298] sm:$0xff]
        %v1144 = vld [vmem:[%s5 + $0x2a0] sm:$0xff]
        %v1145 = vld [vmem:[%s5 + $0x2a8] sm:$0xff]
        %v1146 = vld [vmem:[%s5 + $0x2b0] sm:$0xff]
        %v1147 = vld [vmem:[%s5 + $0x2b8] sm:$0xff]
        %v1148 = vld [vmem:[%s5 + $0x2c0] sm:$0xff]
        %v1149 = vld [vmem:[%s5 + $0x2c8] sm:$0xff]
        %v1150 = vld [vmem:[%s5 + $0x2d0] sm:$0xff]
        %v1151 = vld [vmem:[%s5 + $0x2d8] sm:$0xff]
        %v1152 = vld [vmem:[%s5 + $0x2e0] sm:$0xff]
        %v1153 = vld [vmem:[%s5 + $0x2e8] sm:$0xff]
        %v1154 = vld [vmem:[%s5 + $0x2f0] sm:$0xff]
        %v1155 = vld [vmem:[%s5 + $0x2f8] sm:$0xff]
        %v1156 = vld [vmem:[%s5 + $0x300] sm:$0xff]
        %v1157 = vld [vmem:[%s5 + $0x308] sm:$0xff]
        %v1158 = vld [vmem:[%s5 + $0x310] sm:$0xff]
        %v1159 = vld [vmem:[%s5 + $0x318] sm:$0xff]
        %v1160 = vld [vmem:[%s5 + $0x320] sm:$0xff]
        %v1161 = vld [vmem:[%s5 + $0x328] sm:$0xff]
        %v1162 = vld [vmem:[%s5 + $0x330] sm:$0xff]
        %v1163 = vld [vmem:[%s5 + $0x338] sm:$0xff]
        %v1164 = vld [vmem:[%s5 + $0x340] sm:$0xff]
        %v1165 = vld [vmem:[%s5 + $0x348] sm:$0xff]
        %v1166 = vld [vmem:[%s5 + $0x350] sm:$0xff]
        %v1167 = vld [vmem:[%s5 + $0x358] sm:$0xff]
        %v1168 = vld [vmem:[%s5 + $0x360] sm:$0xff]
        %v1169 = vld [vmem:[%s5 + $0x368] sm:$0xff]
        %v1170 = vld [vmem:[%s5 + $0x370] sm:$0xff]
        %v1171 = vld [vmem:[%s5 + $0x378] sm:$0xff]
        %v1172 = vld [vmem:[%s5 + $0x380] sm:$0xff]
        %v1173 = vld [vmem:[%s5 + $0x388] sm:$0xff]
        %v1174 = vld [vmem:[%s5 + $0x390] sm:$0xff]
        %v1175 = vld [vmem:[%s5 + $0x398] sm:$0xff]
        %v1176 = vld [vmem:[%s5 + $0x3a0] sm:$0xff]
        %v1177 = vld [vmem:[%s5 + $0x3a8] sm:$0xff]
        %v1178 = vld [vmem:[%s5 + $0x3b0] sm:$0xff]
        %v1179 = vld [vmem:[%s5 + $0x3b8] sm:$0xff]
        %v1180 = vld [vmem:[%s5 + $0x3c0] sm:$0xff]
        %v1181 = vld [vmem:[%s5 + $0x3c8] sm:$0xff]
        %v1182 = vld [vmem:[%s5 + $0x3d0] sm:$0xff]
        %v1183 = vld [vmem:[%s5 + $0x3d8] sm:$0xff]
        %v1184 = vld [vmem:[%s5 + $0x3e0] sm:$0xff]
        %v1185 = vld [vmem:[%s5 + $0x3e8] sm:$0xff]
        %v1186 = vld [vmem:[%s5 + $0x3f0] sm:$0xff]
        %v1187 = vld [vmem:[%s5 + $0x3f8] sm:$0xff]
        %v1188 = vld [vmem:[%s5 + $0x400] sm:$0xff]
        %v1189 = vld [vmem:[%s5 + $0x408] sm:$0xff]
        %v1190 = vld [vmem:[%s5 + $0x410] sm:$0xff]
        %v1191 = vld [vmem:[%s5 + $0x418] sm:$0xff]
        %v1192 = vld [vmem:[%s5 + $0x420] sm:$0xff]
        %v1193 = vld [vmem:[%s5 + $0x428] sm:$0xff]
        %v1194 = vld [vmem:[%s5 + $0x430] sm:$0xff]
        %v1195 = vld [vmem:[%s5 + $0x438] sm:$0xff]
        %v1196 = vld [vmem:[%s5 + $0x440] sm:$0xff]
        %v1197 = vld [vmem:[%s5 + $0x448] sm:$0xff]
        %v1198 = vld [vmem:[%s5 + $0x450] sm:$0xff]
        %v1199 = vld [vmem:[%s5 + $0x458] sm:$0xff]
        %v1200 = vld [vmem:[%s5 + $0x460] sm:$0xff]
        %v1201 = vld [vmem:[%s5 + $0x468] sm:$0xff]
        %v1202 = vld [vmem:[%s5 + $0x470] sm:$0xff]
        %v1203 = vld [vmem:[%s5 + $0x478] sm:$0xff]
        %v1204 = vld [vmem:[%s5 + $0x480] sm:$0xff]
        %v1205 = vld [vmem:[%s5 + $0x488] sm:$0xff]
        %v1206 = vld [vmem:[%s5 + $0x490] sm:$0xff]
        %v1207 = vld [vmem:[%s5 + $0x498] sm:$0xff]
        %v1208 = vld [vmem:[%s5 + $0x4a0] sm:$0xff]
        %v1209 = vld [vmem:[%s5 + $0x4a8] sm:$0xff]
        %v1210 = vld [vmem:[%s5 + $0x4b0] sm:$0xff]
        %v1211 = vld [vmem:[%s5 + $0x4b8] sm:$0xff]
        %v1212 = vld [vmem:[%s5 + $0x4c0] sm:$0xff]
        %v1213 = vld [vmem:[%s5 + $0x4c8] sm:$0xff]
        %v1214 = vld [vmem:[%s5 + $0x4d0] sm:$0xff]
        %v1215 = vld [vmem:[%s5 + $0x4d8] sm:$0xff]
        %v1216 = vld [vmem:[%s5 + $0x4e0] sm:$0xff]
        %v1217 = vld [vmem:[%s5 + $0x4e8] sm:$0xff]
        %v1218 = vld [vmem:[%s5 + $0x4f0] sm:$0xff]
        %v1219 = vld [vmem:[%s5 + $0x4f8] sm:$0xff]
        %v1220 = vld [vmem:[%s5 + $0x500] sm:$0xff]
        %v1221 = vld [vmem:[%s5 + $0x508] sm:$0xff]
        %v1222 = vld [vmem:[%s5 + $0x510] sm:$0xff]
        %v1223 = vld [vmem:[%s5 + $0x518] sm:$0xff]
        %v1224 = vld [vmem:[%s5 + $0x520] sm:$0xff]
        %v1225 = vld [vmem:[%s5 + $0x528] sm:$0xff]
        %v1226 = vld [vmem:[%s5 + $0x530] sm:$0xff]
        %v1227 = vld [vmem:[%s5 + $0x538] sm:$0xff]
        %v1228 = vld [vmem:[%s5 + $0x540] sm:$0xff]
        %v1229 = vld [vmem:[%s5 + $0x548] sm:$0xff]
        %v1230 = vld [vmem:[%s5 + $0x550] sm:$0xff]
        %v1231 = vld [vmem:[%s5 + $0x558] sm:$0xff]
        %v1232 = vld [vmem:[%s5 + $0x560] sm:$0xff]
        %v1233 = vld [vmem:[%s5 + $0x568] sm:$0xff]
        %v1234 = vld [vmem:[%s5 + $0x570] sm:$0xff]
        %v1235 = vld [vmem:[%s5 + $0x578] sm:$0xff]
        %v1236 = vld [vmem:[%s5 + $0x580] sm:$0xff]
        %v1237 = vld [vmem:[%s5 + $0x588] sm:$0xff]
        %v1238 = vld [vmem:[%s5 + $0x590] sm:$0xff]
        %v1239 = vld [vmem:[%s5 + $0x598] sm:$0xff]
        %v1240 = vld [vmem:[%s5 + $0x5a0] sm:$0xff]
        %v1241 = vld [vmem:[%s5 + $0x5a8] sm:$0xff]
        %v1242 = vld [vmem:[%s5 + $0x5b0] sm:$0xff]
        %v1243 = vld [vmem:[%s5 + $0x5b8] sm:$0xff]
        %v1244 = vld [vmem:[%s5 + $0x5c0] sm:$0xff]
        %v1245 = vld [vmem:[%s5 + $0x5c8] sm:$0xff]
        %v1246 = vld [vmem:[%s5 + $0x5d0] sm:$0xff]
        %v1247 = vld [vmem:[%s5 + $0x5d8] sm:$0xff]
        %v1248 = vld [vmem:[%s5 + $0x5e0] sm:$0xff]
        %v1249 = vld [vmem:[%s5 + $0x5e8] sm:$0xff]
        %v1250 = vld [vmem:[%s5 + $0x5f0] sm:$0xff]
        %v1251 = vld [vmem:[%s5 + $0x5f8] sm:$0xff]
        %v1252 = vld [vmem:[%s5 + $0x600] sm:$0xff]
        %v1253 = vld [vmem:[%s5 + $0x608] sm:$0xff]
        %v1254 = vld [vmem:[%s5 + $0x610] sm:$0xff]
        %v1255 = vld [vmem:[%s5 + $0x618] sm:$0xff]
        %v1256 = vld [vmem:[%s5 + $0x620] sm:$0xff]
        %v1257 = vld [vmem:[%s5 + $0x628] sm:$0xff]
        %v1258 = vld [vmem:[%s5 + $0x630] sm:$0xff]
        %v1259 = vld [vmem:[%s5 + $0x638] sm:$0xff]
        %v1260 = vld [vmem:[%s5 + $0x640] sm:$0xff]
        %v1261 = vld [vmem:[%s5 + $0x648] sm:$0xff]
        %v1262 = vld [vmem:[%s5 + $0x650] sm:$0xff]
        %v1263 = vld [vmem:[%s5 + $0x658] sm:$0xff]
        %v1264 = vld [vmem:[%s5 + $0x660] sm:$0xff]
        %v1265 = vld [vmem:[%s5 + $0x668] sm:$0xff]
        %v1266 = vld [vmem:[%s5 + $0x670] sm:$0xff]
        %v1267 = vld [vmem:[%s5 + $0x678] sm:$0xff]
        %v1268 = vld [vmem:[%s5 + $0x680] sm:$0xff]
        %v1269 = vld [vmem:[%s5 + $0x688] sm:$0xff]
        %v1270 = vld [vmem:[%s5 + $0x690] sm:$0xff]
        %v1271 = vld [vmem:[%s5 + $0x698] sm:$0xff]
        %v1272 = vld [vmem:[%s5 + $0x6a0] sm:$0xff]
        %v1273 = vld [vmem:[%s5 + $0x6a8] sm:$0xff]
        %v1274 = vld [vmem:[%s5 + $0x6b0] sm:$0xff]
        %v1275 = vld [vmem:[%s5 + $0x6b8] sm:$0xff]
        %v1276 = vld [vmem:[%s5 + $0x6c0] sm:$0xff]
        %v1277 = vld [vmem:[%s5 + $0x6c8] sm:$0xff]
        %v1278 = vld [vmem:[%s5 + $0x6d0] sm:$0xff]
        %v1279 = vld [vmem:[%s5 + $0x6d8] sm:$0xff]
        %v1280 = vld [vmem:[%s5 + $0x6e0] sm:$0xff]
        %v1281 = vld [vmem:[%s5 + $0x6e8] sm:$0xff]
        %v1282 = vld [vmem:[%s5 + $0x6f0] sm:$0xff]
        %v1283 = vld [vmem:[%s5 + $0x6f8] sm:$0xff]
        %v1284 = vld [vmem:[%s5 + $0x700] sm:$0xff]
        %v1285 = vld [vmem:[%s5 + $0x708] sm:$0xff]
        %v1286 = vld [vmem:[%s5 + $0x710] sm:$0xff]
        %v1287 = vld [vmem:[%s5 + $0x718] sm:$0xff]
        %v1288 = vld [vmem:[%s5 + $0x720] sm:$0xff]
        %v1289 = vld [vmem:[%s5 + $0x728] sm:$0xff]
        %v1290 = vld [vmem:[%s5 + $0x730] sm:$0xff]
        %v1291 = vld [vmem:[%s5 + $0x738] sm:$0xff]
        %v1292 = vld [vmem:[%s5 + $0x740] sm:$0xff]
        %v1293 = vld [vmem:[%s5 + $0x748] sm:$0xff]
        %v1294 = vld [vmem:[%s5 + $0x750] sm:$0xff]
        %v1295 = vld [vmem:[%s5 + $0x758] sm:$0xff]
        %v1296 = vld [vmem:[%s5 + $0x760] sm:$0xff]
        %v1297 = vld [vmem:[%s5 + $0x768] sm:$0xff]
        %v1298 = vld [vmem:[%s5 + $0x770] sm:$0xff]
        %v1299 = vld [vmem:[%s5 + $0x778] sm:$0xff]
        %v1300 = vld [vmem:[%s5 + $0x780] sm:$0xff]
        %v1301 = vld [vmem:[%s5 + $0x788] sm:$0xff]
        %v1302 = vld [vmem:[%s5 + $0x790] sm:$0xff]
        %v1303 = vld [vmem:[%s5 + $0x798] sm:$0xff]
        %v1304 = vld [vmem:[%s5 + $0x7a0] sm:$0xff]
        %v1305 = vld [vmem:[%s5 + $0x7a8] sm:$0xff]
        %v1306 = vld [vmem:[%s5 + $0x7b0] sm:$0xff]
        %v1307 = vld [vmem:[%s5 + $0x7b8] sm:$0xff]
        %v1308 = vld [vmem:[%s5 + $0x7c0] sm:$0xff]
        %v1309 = vld [vmem:[%s5 + $0x7c8] sm:$0xff]
        %v1310 = vld [vmem:[%s5 + $0x7d0] sm:$0xff]
        %v1311 = vld [vmem:[%s5 + $0x7d8] sm:$0xff]
        %v1312 = vld [vmem:[%s5 + $0x7e0] sm:$0xff]
        %v1313 = vld [vmem:[%s5 + $0x7e8] sm:$0xff]
        %v1314 = vld [vmem:[%s5 + $0x7f0] sm:$0xff]
        %v1315 = vld [vmem:[%s5 + $0x7f8] sm:$0xff]
        %v1316 = vld [vmem:[%s5 + $0x800] sm:$0xff]
        %v1317 = vld [vmem:[%s5 + $0x808] sm:$0xff]
        %v1318 = vld [vmem:[%s5 + $0x810] sm:$0xff]
        %v1319 = vld [vmem:[%s5 + $0x818] sm:$0xff]
        %v1320 = vld [vmem:[%s5 + $0x820] sm:$0xff]
        %v1321 = vld [vmem:[%s5 + $0x828] sm:$0xff]
        %v1322 = vld [vmem:[%s5 + $0x830] sm:$0xff]
        %v1323 = vld [vmem:[%s5 + $0x838] sm:$0xff]
        %v1324 = vld [vmem:[%s5 + $0x840] sm:$0xff]
        %v1325 = vld [vmem:[%s5 + $0x848] sm:$0xff]
        %v1326 = vld [vmem:[%s5 + $0x850] sm:$0xff]
        %v1327 = vld [vmem:[%s5 + $0x858] sm:$0xff]
        %v1328 = vld [vmem:[%s5 + $0x860] sm:$0xff]
        %v1329 = vld [vmem:[%s5 + $0x868] sm:$0xff]
        %v1330 = vld [vmem:[%s5 + $0x870] sm:$0xff]
        %v1331 = vld [vmem:[%s5 + $0x878] sm:$0xff]
        %v1332 = vld [vmem:[%s5 + $0x880] sm:$0xff]
        %v1333 = vld [vmem:[%s5 + $0x888] sm:$0xff]
        %v1334 = vld [vmem:[%s5 + $0x890] sm:$0xff]
        %v1335 = vld [vmem:[%s5 + $0x898] sm:$0xff]
        %v1336 = vld [vmem:[%s5 + $0x8a0] sm:$0xff]
        %v1337 = vld [vmem:[%s5 + $0x8a8] sm:$0xff]
        %v1338 = vld [vmem:[%s5 + $0x8b0] sm:$0xff]
        %v1339 = vld [vmem:[%s5 + $0x8b8] sm:$0xff]
        %v1340 = vld [vmem:[%s5 + $0x8c0] sm:$0xff]
        %v1341 = vld [vmem:[%s5 + $0x8c8] sm:$0xff]
        %v1342 = vld [vmem:[%s5 + $0x8d0] sm:$0xff]
        %v1343 = vld [vmem:[%s5 + $0x8d8] sm:$0xff]
        %v1344 = vld [vmem:[%s5 + $0x8e0] sm:$0xff]
        %v1345 = vld [vmem:[%s5 + $0x8e8] sm:$0xff]
        %v1346 = vld [vmem:[%s5 + $0x8f0] sm:$0xff]
        %v1347 = vld [vmem:[%s5 + $0x8f8] sm:$0xff]
        %v1348 = vld [vmem:[%s5 + $0x900] sm:$0xff]
        %v1349 = vld [vmem:[%s5 + $0x908] sm:$0xff]
        %v1350 = vld [vmem:[%s5 + $0x910] sm:$0xff]
        %v1351 = vld [vmem:[%s5 + $0x918] sm:$0xff]
        %v1352 = vld [vmem:[%s5 + $0x920] sm:$0xff]
        %v1353 = vld [vmem:[%s5 + $0x928] sm:$0xff]
        %v1354 = vld [vmem:[%s5 + $0x930] sm:$0xff]
        %v1355 = vld [vmem:[%s5 + $0x938] sm:$0xff]
        %v1356 = vld [vmem:[%s5 + $0x940] sm:$0xff]
        %v1357 = vld [vmem:[%s5 + $0x948] sm:$0xff]
        %v1358 = vld [vmem:[%s5 + $0x950] sm:$0xff]
        %v1359 = vld [vmem:[%s5 + $0x958] sm:$0xff]
        %v1360 = vld [vmem:[%s5 + $0x960] sm:$0xff]
        %v1361 = vld [vmem:[%s5 + $0x968] sm:$0xff]
        %v1362 = vld [vmem:[%s5 + $0x970] sm:$0xff]
        %v1363 = vld [vmem:[%s5 + $0x978] sm:$0xff]
        %v1364 = vld [vmem:[%s5 + $0x980] sm:$0xff]
        %v1365 = vld [vmem:[%s5 + $0x988] sm:$0xff]
        %v1366 = vld [vmem:[%s5 + $0x990] sm:$0xff]
        %v1367 = vld [vmem:[%s5 + $0x998] sm:$0xff]
        %v1368 = vld [vmem:[%s5 + $0x9a0] sm:$0xff]
        %v1369 = vld [vmem:[%s5 + $0x9a8] sm:$0xff]
        %v1370 = vld [vmem:[%s5 + $0x9b0] sm:$0xff]
        %v1371 = vld [vmem:[%s5 + $0x9b8] sm:$0xff]
        %v1372 = vld [vmem:[%s5 + $0x9c0] sm:$0xff]
        %v1373 = vld [vmem:[%s5 + $0x9c8] sm:$0xff]
        %v1374 = vld [vmem:[%s5 + $0x9d0] sm:$0xff]
        %v1375 = vld [vmem:[%s5 + $0x9d8] sm:$0xff]
        %v1376 = vld [vmem:[%s5 + $0x9e0] sm:$0xff]
        %v1377 = vld [vmem:[%s5 + $0x9e8] sm:$0xff]
        %v1378 = vld [vmem:[%s5 + $0x9f0] sm:$0xff]
        %v1379 = vld [vmem:[%s5 + $0x9f8] sm:$0xff]
        %v1380 = vld [vmem:[%s5 + $0xa00] sm:$0xff]
        %v1381 = vld [vmem:[%s5 + $0xa08] sm:$0xff]
        %v1382 = vld [vmem:[%s5 + $0xa10] sm:$0xff]
        %v1383 = vld [vmem:[%s5 + $0xa18] sm:$0xff]
        %v1384 = vld [vmem:[%s5 + $0xa20] sm:$0xff]
        %v1385 = vld [vmem:[%s5 + $0xa28] sm:$0xff]
        %v1386 = vld [vmem:[%s5 + $0xa30] sm:$0xff]
        %v1387 = vld [vmem:[%s5 + $0xa38] sm:$0xff]
        %v1388 = vld [vmem:[%s5 + $0xa40] sm:$0xff]
        %v1389 = vld [vmem:[%s5 + $0xa48] sm:$0xff]
        %v1390 = vld [vmem:[%s5 + $0xa50] sm:$0xff]
        %v1391 = vld [vmem:[%s5 + $0xa58] sm:$0xff]
        %v1392 = vld [vmem:[%s5 + $0xa60] sm:$0xff]
        %v1393 = vld [vmem:[%s5 + $0xa68] sm:$0xff]
        %v1394 = vld [vmem:[%s5 + $0xa70] sm:$0xff]
        %v1395 = vld [vmem:[%s5 + $0xa78] sm:$0xff]
        %v1396 = vld [vmem:[%s5 + $0xa80] sm:$0xff]
        %v1397 = vld [vmem:[%s5 + $0xa88] sm:$0xff]
        %v1398 = vld [vmem:[%s5 + $0xa90] sm:$0xff]
        %v1399 = vld [vmem:[%s5 + $0xa98] sm:$0xff]
        %v1400 = vld [vmem:[%s5 + $0xaa0] sm:$0xff]
        %v1401 = vld [vmem:[%s5 + $0xaa8] sm:$0xff]
        %v1402 = vld [vmem:[%s5 + $0xab0] sm:$0xff]
        %v1403 = vld [vmem:[%s5 + $0xab8] sm:$0xff]
        %v1404 = vld [vmem:[%s5 + $0xac0] sm:$0xff]
        %v1405 = vld [vmem:[%s5 + $0xac8] sm:$0xff]
        %v1406 = vld [vmem:[%s5 + $0xad0] sm:$0xff]
        %v1407 = vld [vmem:[%s5 + $0xad8] sm:$0xff]
        %v1408 = vld [vmem:[%s5 + $0xae0] sm:$0xff]
        %v1409 = vld [vmem:[%s5 + $0xae8] sm:$0xff]
        %v1410 = vld [vmem:[%s5 + $0xaf0] sm:$0xff]
        %v1411 = vld [vmem:[%s5 + $0xaf8] sm:$0xff]
        %v1412 = vld [vmem:[%s5 + $0xb00] sm:$0xff]
        %v1413 = vld [vmem:[%s5 + $0xb08] sm:$0xff]
        %v1414 = vld [vmem:[%s5 + $0xb10] sm:$0xff]
        %v1415 = vld [vmem:[%s5 + $0xb18] sm:$0xff]
        %v1416 = vld [vmem:[%s5 + $0xb20] sm:$0xff]
        %v1417 = vld [vmem:[%s5 + $0xb28] sm:$0xff]
        %v1418 = vld [vmem:[%s5 + $0xb30] sm:$0xff]
        %v1419 = vld [vmem:[%s5 + $0xb38] sm:$0xff]
        %v1420 = vld [vmem:[%s5 + $0xb40] sm:$0xff]
        %v1421 = vld [vmem:[%s5 + $0xb48] sm:$0xff]
        %v1422 = vld [vmem:[%s5 + $0xb50] sm:$0xff]
        %v1423 = vld [vmem:[%s5 + $0xb58] sm:$0xff]
        %v1424 = vld [vmem:[%s5 + $0xb60] sm:$0xff]
        %v1425 = vld [vmem:[%s5 + $0xb68] sm:$0xff]
        %v1426 = vld [vmem:[%s5 + $0xb70] sm:$0xff]
        %v1427 = vld [vmem:[%s5 + $0xb78] sm:$0xff]
        %v1428 = vld [vmem:[%s5 + $0xb80] sm:$0xff]
        %v1429 = vld [vmem:[%s5 + $0xb88] sm:$0xff]
        %v1430 = vld [vmem:[%s5 + $0xb90] sm:$0xff]
        %v1431 = vld [vmem:[%s5 + $0xb98] sm:$0xff]
        %v1432 = vld [vmem:[%s5 + $0xba0] sm:$0xff]
        %v1433 = vld [vmem:[%s5 + $0xba8] sm:$0xff]
        %v1434 = vld [vmem:[%s5 + $0xbb0] sm:$0xff]
        %v1435 = vld [vmem:[%s5 + $0xbb8] sm:$0xff]
        %v1436 = vld [vmem:[%s5 + $0xbc0] sm:$0xff]
        %v1437 = vld [vmem:[%s5 + $0xbc8] sm:$0xff]
        %v1438 = vld [vmem:[%s5 + $0xbd0] sm:$0xff]
        %v1439 = vld [vmem:[%s5 + $0xbd8] sm:$0xff]
        %v1440 = vld [vmem:[%s5 + $0xbe0] sm:$0xff]
        %v1441 = vld [vmem:[%s5 + $0xbe8] sm:$0xff]
        %v1442 = vld [vmem:[%s5 + $0xbf0] sm:$0xff]
        %v1443 = vld [vmem:[%s5 + $0xbf8] sm:$0xff]
        %v1444 = vld [vmem:[%s5 + $0xc00] sm:$0xff]
        %v1445 = vld [vmem:[%s5 + $0xc08] sm:$0xff]
        %v1446 = vld [vmem:[%s5 + $0xc10] sm:$0xff]
        %v1447 = vld [vmem:[%s5 + $0xc18] sm:$0xff]
        %v1448 = vld [vmem:[%s5 + $0xc20] sm:$0xff]
        %v1449 = vld [vmem:[%s5 + $0xc28] sm:$0xff]
        %v1450 = vld [vmem:[%s5 + $0xc30] sm:$0xff]
        %v1451 = vld [vmem:[%s5 + $0xc38] sm:$0xff]
        %v1452 = vld [vmem:[%s5 + $0xc40] sm:$0xff]
        %v1453 = vld [vmem:[%s5 + $0xc48] sm:$0xff]
        %v1454 = vld [vmem:[%s5 + $0xc50] sm:$0xff]
        %v1455 = vld [vmem:[%s5 + $0xc58] sm:$0xff]
        %v1456 = vld [vmem:[%s5 + $0xc60] sm:$0xff]
        %v1457 = vld [vmem:[%s5 + $0xc68] sm:$0xff]
        %v1458 = vld [vmem:[%s5 + $0xc70] sm:$0xff]
        %v1459 = vld [vmem:[%s5 + $0xc78] sm:$0xff]
        %v1460 = vld [vmem:[%s5 + $0xc80] sm:$0xff]
        %v1461 = vld [vmem:[%s5 + $0xc88] sm:$0xff]
        %v1462 = vld [vmem:[%s5 + $0xc90] sm:$0xff]
        %v1463 = vld [vmem:[%s5 + $0xc98] sm:$0xff]
        %v1464 = vld [vmem:[%s5 + $0xca0] sm:$0xff]
        %v1465 = vld [vmem:[%s5 + $0xca8] sm:$0xff]
        %v1466 = vld [vmem:[%s5 + $0xcb0] sm:$0xff]
        %v1467 = vld [vmem:[%s5 + $0xcb8] sm:$0xff]
        %v1468 = vld [vmem:[%s5 + $0xcc0] sm:$0xff]
        %v1469 = vld [vmem:[%s5 + $0xcc8] sm:$0xff]
        %v1470 = vld [vmem:[%s5 + $0xcd0] sm:$0xff]
        %v1471 = vld [vmem:[%s5 + $0xcd8] sm:$0xff]
        %v1472 = vld [vmem:[%s5 + $0xce0] sm:$0xff]
        %v1473 = vld [vmem:[%s5 + $0xce8] sm:$0xff]
        %v1474 = vld [vmem:[%s5 + $0xcf0] sm:$0xff]
        %v1475 = vld [vmem:[%s5 + $0xcf8] sm:$0xff]
        %v1476 = vld [vmem:[%s5 + $0xd00] sm:$0xff]
        %v1477 = vld [vmem:[%s5 + $0xd08] sm:$0xff]
        %v1478 = vld [vmem:[%s5 + $0xd10] sm:$0xff]
        %v1479 = vld [vmem:[%s5 + $0xd18] sm:$0xff]
        %v1480 = vld [vmem:[%s5 + $0xd20] sm:$0xff]
        %v1481 = vld [vmem:[%s5 + $0xd28] sm:$0xff]
        %v1482 = vld [vmem:[%s5 + $0xd30] sm:$0xff]
        %v1483 = vld [vmem:[%s5 + $0xd38] sm:$0xff]
        %v1484 = vld [vmem:[%s5 + $0xd40] sm:$0xff]
        %v1485 = vld [vmem:[%s5 + $0xd48] sm:$0xff]
        %v1486 = vld [vmem:[%s5 + $0xd50] sm:$0xff]
        %v1487 = vld [vmem:[%s5 + $0xd58] sm:$0xff]
        %v1488 = vld [vmem:[%s5 + $0xd60] sm:$0xff]
        %v1489 = vld [vmem:[%s5 + $0xd68] sm:$0xff]
        %v1490 = vld [vmem:[%s5 + $0xd70] sm:$0xff]
        %v1491 = vld [vmem:[%s5 + $0xd78] sm:$0xff]
        %v1492 = vld [vmem:[%s5 + $0xd80] sm:$0xff]
        %v1493 = vld [vmem:[%s5 + $0xd88] sm:$0xff]
        %v1494 = vld [vmem:[%s5 + $0xd90] sm:$0xff]
        %v1495 = vld [vmem:[%s5 + $0xd98] sm:$0xff]
        %v1496 = vld [vmem:[%s5 + $0xda0] sm:$0xff]
        %v1497 = vld [vmem:[%s5 + $0xda8] sm:$0xff]
        %v1498 = vld [vmem:[%s5 + $0xdb0] sm:$0xff]
        %v1499 = vld [vmem:[%s5 + $0xdb8] sm:$0xff]
        %v1500 = vld [vmem:[%s5 + $0xdc0] sm:$0xff]
        %v1501 = vld [vmem:[%s5 + $0xdc8] sm:$0xff]
        %v1502 = vld [vmem:[%s5 + $0xdd0] sm:$0xff]
        %v1503 = vld [vmem:[%s5 + $0xdd8] sm:$0xff]
        %v1504 = vld [vmem:[%s5 + $0xde0] sm:$0xff]
        %v1505 = vld [vmem:[%s5 + $0xde8] sm:$0xff]
        %v1506 = vld [vmem:[%s5 + $0xdf0] sm:$0xff]
        %v1507 = vld [vmem:[%s5 + $0xdf8] sm:$0xff]
        %v1508 = vld [vmem:[%s5 + $0xe00] sm:$0xff]
        %v1509 = vld [vmem:[%s5 + $0xe08] sm:$0xff]
        %v1510 = vld [vmem:[%s5 + $0xe10] sm:$0xff]
        %v1511 = vld [vmem:[%s5 + $0xe18] sm:$0xff]
        %v1512 = vld [vmem:[%s5 + $0xe20] sm:$0xff]
        %v1513 = vld [vmem:[%s5 + $0xe28] sm:$0xff]
        %v1514 = vld [vmem:[%s5 + $0xe30] sm:$0xff]
        %v1515 = vld [vmem:[%s5 + $0xe38] sm:$0xff]
        %v1516 = vld [vmem:[%s5 + $0xe40] sm:$0xff]
        %v1517 = vld [vmem:[%s5 + $0xe48] sm:$0xff]
        %v1518 = vld [vmem:[%s5 + $0xe50] sm:$0xff]
        %v1519 = vld [vmem:[%s5 + $0xe58] sm:$0xff]
        %v1520 = vld [vmem:[%s5 + $0xe60] sm:$0xff]
        %v1521 = vld [vmem:[%s5 + $0xe68] sm:$0xff]
        %v1522 = vld [vmem:[%s5 + $0xe70] sm:$0xff]
        %v1523 = vld [vmem:[%s5 + $0xe78] sm:$0xff]
        %v1524 = vld [vmem:[%s5 + $0xe80] sm:$0xff]
        %v1525 = vld [vmem:[%s5 + $0xe88] sm:$0xff]
        %v1526 = vld [vmem:[%s5 + $0xe90] sm:$0xff]
        %v1527 = vld [vmem:[%s5 + $0xe98] sm:$0xff]
        %v1528 = vld [vmem:[%s5 + $0xea0] sm:$0xff]
        %v1529 = vld [vmem:[%s5 + $0xea8] sm:$0xff]
        %v1530 = vld [vmem:[%s5 + $0xeb0] sm:$0xff]
        %v1531 = vld [vmem:[%s5 + $0xeb8] sm:$0xff]
        %v1532 = vld [vmem:[%s5 + $0xec0] sm:$0xff]
        %v1533 = vld [vmem:[%s5 + $0xec8] sm:$0xff]
        %v1534 = vld [vmem:[%s5 + $0xed0] sm:$0xff]
        %v1535 = vld [vmem:[%s5 + $0xed8] sm:$0xff]
        %v1536 = vld [vmem:[%s5 + $0xee0] sm:$0xff]
        %v1537 = vld [vmem:[%s5 + $0xee8] sm:$0xff]
        %v1538 = vld [vmem:[%s5 + $0xef0] sm:$0xff]
        %v1539 = vld [vmem:[%s5 + $0xef8] sm:$0xff]
        %v1540 = vld [vmem:[%s5 + $0xf00] sm:$0xff]
        %v1541 = vld [vmem:[%s5 + $0xf08] sm:$0xff]
        %v1542 = vld [vmem:[%s5 + $0xf10] sm:$0xff]
        %v1543 = vld [vmem:[%s5 + $0xf18] sm:$0xff]
        %v1544 = vld [vmem:[%s5 + $0xf20] sm:$0xff]
        %v1545 = vld [vmem:[%s5 + $0xf28] sm:$0xff]
        %v1546 = vld [vmem:[%s5 + $0xf30] sm:$0xff]
        %v1547 = vld [vmem:[%s5 + $0xf38] sm:$0xff]
        %v1548 = vld [vmem:[%s5 + $0xf40] sm:$0xff]
        %v1549 = vld [vmem:[%s5 + $0xf48] sm:$0xff]
        %v1550 = vld [vmem:[%s5 + $0xf50] sm:$0xff]
        %v1551 = vld [vmem:[%s5 + $0xf58] sm:$0xff]
        %v1552 = vld [vmem:[%s5 + $0xf60] sm:$0xff]
        %v1553 = vld [vmem:[%s5 + $0xf68] sm:$0xff]
        %v1554 = vld [vmem:[%s5 + $0xf70] sm:$0xff]
        %v1555 = vld [vmem:[%s5 + $0xf78] sm:$0xff]
        %v1556 = vld [vmem:[%s5 + $0xf80] sm:$0xff]
        %v1557 = vld [vmem:[%s5 + $0xf88] sm:$0xff]
        %v1558 = vld [vmem:[%s5 + $0xf90] sm:$0xff]
        %v1559 = vld [vmem:[%s5 + $0xf98] sm:$0xff]
        %v1560 = vld [vmem:[%s5 + $0xfa0] sm:$0xff]
        %v1561 = vld [vmem:[%s5 + $0xfa8] sm:$0xff]
        %v1562 = vld [vmem:[%s5 + $0xfb0] sm:$0xff]
        %v1563 = vld [vmem:[%s5 + $0xfb8] sm:$0xff]
        %v1564 = vld [vmem:[%s5 + $0xfc0] sm:$0xff]
        %v1565 = vld [vmem:[%s5 + $0xfc8] sm:$0xff]
        %v1566 = vld [vmem:[%s5 + $0xfd0] sm:$0xff]
        %v1567 = vld [vmem:[%s5 + $0xfd8] sm:$0xff]
        %v1568 = vld [vmem:[%s5 + $0xfe0] sm:$0xff]
        %v1569 = vld [vmem:[%s5 + $0xfe8] sm:$0xff]
        %v1570 = vld [vmem:[%s5 + $0xff0] sm:$0xff]
        %v1571 = vld [vmem:[%s5 + $0xff8] sm:$0xff]
        %v2084 = vunpack.c.l.b16 %v1060
        %v2085 = vunpack.c.h.b16 %v1060
        %v2086 = vunpack.c.l.b16 %v1061
        %v2087 = vunpack.c.h.b16 %v1061
        %v2088 = vunpack.c.l.b16 %v1062
        %v2089 = vunpack.c.h.b16 %v1062
        %v2090 = vunpack.c.l.b16 %v1063
        %v2091 = vunpack.c.h.b16 %v1063
        %v2092 = vunpack.c.l.b16 %v1064
        %v2093 = vunpack.c.h.b16 %v1064
        %v2094 = vunpack.c.l.b16 %v1065
        %v2095 = vunpack.c.h.b16 %v1065
        %v2096 = vunpack.c.l.b16 %v1066
        %v2097 = vunpack.c.h.b16 %v1066
        %v2098 = vunpack.c.l.b16 %v1067
        %v2099 = vunpack.c.h.b16 %v1067
        %v2100 = vunpack.c.l.b16 %v1068
        %v2101 = vunpack.c.h.b16 %v1068
        %v2102 = vunpack.c.l.b16 %v1069
        %v2103 = vunpack.c.h.b16 %v1069
        %v2104 = vunpack.c.l.b16 %v1070
        %v2105 = vunpack.c.h.b16 %v1070
        %v2106 = vunpack.c.l.b16 %v1071
        %v2107 = vunpack.c.h.b16 %v1071
        %v2108 = vunpack.c.l.b16 %v1072
        %v2109 = vunpack.c.h.b16 %v1072
        %v2110 = vunpack.c.l.b16 %v1073
        %v2111 = vunpack.c.h.b16 %v1073
        %v2112 = vunpack.c.l.b16 %v1074
        %v2113 = vunpack.c.h.b16 %v1074
        %v2114 = vunpack.c.l.b16 %v1075
        %v2115 = vunpack.c.h.b16 %v1075
        %v2116 = vunpack.c.l.b16 %v1076
        %v2117 = vunpack.c.h.b16 %v1076
        %v2118 = vunpack.c.l.b16 %v1077
        %v2119 = vunpack.c.h.b16 %v1077
        %v2120 = vunpack.c.l.b16 %v1078
        %v2121 = vunpack.c.h.b16 %v1078
        %v2122 = vunpack.c.l.b16 %v1079
        %v2123 = vunpack.c.h.b16 %v1079
        %v2124 = vunpack.c.l.b16 %v1080
        %v2125 = vunpack.c.h.b16 %v1080
        %v2126 = vunpack.c.l.b16 %v1081
        %v2127 = vunpack.c.h.b16 %v1081
        %v2128 = vunpack.c.l.b16 %v1082
        %v2129 = vunpack.c.h.b16 %v1082
        %v2130 = vunpack.c.l.b16 %v1083
        %v2131 = vunpack.c.h.b16 %v1083
        %v2132 = vunpack.c.l.b16 %v1084
        %v2133 = vunpack.c.h.b16 %v1084
        %v2134 = vunpack.c.l.b16 %v1085
        %v2135 = vunpack.c.h.b16 %v1085
        %v2136 = vunpack.c.l.b16 %v1086
        %v2137 = vunpack.c.h.b16 %v1086
        %v2138 = vunpack.c.l.b16 %v1087
        %v2139 = vunpack.c.h.b16 %v1087
        %v2140 = vunpack.c.l.b16 %v1088
        %v2141 = vunpack.c.h.b16 %v1088
        %v2142 = vunpack.c.l.b16 %v1089
        %v2143 = vunpack.c.h.b16 %v1089
        %v2144 = vunpack.c.l.b16 %v1090
        %v2145 = vunpack.c.h.b16 %v1090
        %v2146 = vunpack.c.l.b16 %v1091
        %v2147 = vunpack.c.h.b16 %v1091
        %v2148 = vunpack.c.l.b16 %v1092
        %v2149 = vunpack.c.h.b16 %v1092
        %v2150 = vunpack.c.l.b16 %v1093
        %v2151 = vunpack.c.h.b16 %v1093
        %v2152 = vunpack.c.l.b16 %v1094
        %v2153 = vunpack.c.h.b16 %v1094
        %v2154 = vunpack.c.l.b16 %v1095
        %v2155 = vunpack.c.h.b16 %v1095
        %v2156 = vunpack.c.l.b16 %v1096
        %v2157 = vunpack.c.h.b16 %v1096
        %v2158 = vunpack.c.l.b16 %v1097
        %v2159 = vunpack.c.h.b16 %v1097
        %v2160 = vunpack.c.l.b16 %v1098
        %v2161 = vunpack.c.h.b16 %v1098
        %v2162 = vunpack.c.l.b16 %v1099
        %v2163 = vunpack.c.h.b16 %v1099
        %v2164 = vunpack.c.l.b16 %v1100
        %v2165 = vunpack.c.h.b16 %v1100
        %v2166 = vunpack.c.l.b16 %v1101
        %v2167 = vunpack.c.h.b16 %v1101
        %v2168 = vunpack.c.l.b16 %v1102
        %v2169 = vunpack.c.h.b16 %v1102
        %v2170 = vunpack.c.l.b16 %v1103
        %v2171 = vunpack.c.h.b16 %v1103
        %v2172 = vunpack.c.l.b16 %v1104
        %v2173 = vunpack.c.h.b16 %v1104
        %v2174 = vunpack.c.l.b16 %v1105
        %v2175 = vunpack.c.h.b16 %v1105
        %v2176 = vunpack.c.l.b16 %v1106
        %v2177 = vunpack.c.h.b16 %v1106
        %v2178 = vunpack.c.l.b16 %v1107
        %v2179 = vunpack.c.h.b16 %v1107
        %v2180 = vunpack.c.l.b16 %v1108
        %v2181 = vunpack.c.h.b16 %v1108
        %v2182 = vunpack.c.l.b16 %v1109
        %v2183 = vunpack.c.h.b16 %v1109
        %v2184 = vunpack.c.l.b16 %v1110
        %v2185 = vunpack.c.h.b16 %v1110
        %v2186 = vunpack.c.l.b16 %v1111
        %v2187 = vunpack.c.h.b16 %v1111
        %v2188 = vunpack.c.l.b16 %v1112
        %v2189 = vunpack.c.h.b16 %v1112
        %v2190 = vunpack.c.l.b16 %v1113
        %v2191 = vunpack.c.h.b16 %v1113
        %v2192 = vunpack.c.l.b16 %v1114
        %v2193 = vunpack.c.h.b16 %v1114
        %v2194 = vunpack.c.l.b16 %v1115
        %v2195 = vunpack.c.h.b16 %v1115
        %v2196 = vunpack.c.l.b16 %v1116
        %v2197 = vunpack.c.h.b16 %v1116
        %v2198 = vunpack.c.l.b16 %v1117
        %v2199 = vunpack.c.h.b16 %v1117
        %v2200 = vunpack.c.l.b16 %v1118
        %v2201 = vunpack.c.h.b16 %v1118
        %v2202 = vunpack.c.l.b16 %v1119
        %v2203 = vunpack.c.h.b16 %v1119
        %v2204 = vunpack.c.l.b16 %v1120
        %v2205 = vunpack.c.h.b16 %v1120
        %v2206 = vunpack.c.l.b16 %v1121
        %v2207 = vunpack.c.h.b16 %v1121
        %v2208 = vunpack.c.l.b16 %v1122
        %v2209 = vunpack.c.h.b16 %v1122
        %v2210 = vunpack.c.l.b16 %v1123
        %v2211 = vunpack.c.h.b16 %v1123
        %v2212 = vunpack.c.l.b16 %v1124
        %v2213 = vunpack.c.h.b16 %v1124
        %v2214 = vunpack.c.l.b16 %v1125
        %v2215 = vunpack.c.h.b16 %v1125
        %v2216 = vunpack.c.l.b16 %v1126
        %v2217 = vunpack.c.h.b16 %v1126
        %v2218 = vunpack.c.l.b16 %v1127
        %v2219 = vunpack.c.h.b16 %v1127
        %v2220 = vunpack.c.l.b16 %v1128
        %v2221 = vunpack.c.h.b16 %v1128
        %v2222 = vunpack.c.l.b16 %v1129
        %v2223 = vunpack.c.h.b16 %v1129
        %v2224 = vunpack.c.l.b16 %v1130
        %v2225 = vunpack.c.h.b16 %v1130
        %v2226 = vunpack.c.l.b16 %v1131
        %v2227 = vunpack.c.h.b16 %v1131
        %v2228 = vunpack.c.l.b16 %v1132
        %v2229 = vunpack.c.h.b16 %v1132
        %v2230 = vunpack.c.l.b16 %v1133
        %v2231 = vunpack.c.h.b16 %v1133
        %v2232 = vunpack.c.l.b16 %v1134
        %v2233 = vunpack.c.h.b16 %v1134
        %v2234 = vunpack.c.l.b16 %v1135
        %v2235 = vunpack.c.h.b16 %v1135
        %v2236 = vunpack.c.l.b16 %v1136
        %v2237 = vunpack.c.h.b16 %v1136
        %v2238 = vunpack.c.l.b16 %v1137
        %v2239 = vunpack.c.h.b16 %v1137
        %v2240 = vunpack.c.l.b16 %v1138
        %v2241 = vunpack.c.h.b16 %v1138
        %v2242 = vunpack.c.l.b16 %v1139
        %v2243 = vunpack.c.h.b16 %v1139
        %v2244 = vunpack.c.l.b16 %v1140
        %v2245 = vunpack.c.h.b16 %v1140
        %v2246 = vunpack.c.l.b16 %v1141
        %v2247 = vunpack.c.h.b16 %v1141
        %v2248 = vunpack.c.l.b16 %v1142
        %v2249 = vunpack.c.h.b16 %v1142
        %v2250 = vunpack.c.l.b16 %v1143
        %v2251 = vunpack.c.h.b16 %v1143
        %v2252 = vunpack.c.l.b16 %v1144
        %v2253 = vunpack.c.h.b16 %v1144
        %v2254 = vunpack.c.l.b16 %v1145
        %v2255 = vunpack.c.h.b16 %v1145
        %v2256 = vunpack.c.l.b16 %v1146
        %v2257 = vunpack.c.h.b16 %v1146
        %v2258 = vunpack.c.l.b16 %v1147
        %v2259 = vunpack.c.h.b16 %v1147
        %v2260 = vunpack.c.l.b16 %v1148
        %v2261 = vunpack.c.h.b16 %v1148
        %v2262 = vunpack.c.l.b16 %v1149
        %v2263 = vunpack.c.h.b16 %v1149
        %v2264 = vunpack.c.l.b16 %v1150
        %v2265 = vunpack.c.h.b16 %v1150
        %v2266 = vunpack.c.l.b16 %v1151
        %v2267 = vunpack.c.h.b16 %v1151
        %v2268 = vunpack.c.l.b16 %v1152
        %v2269 = vunpack.c.h.b16 %v1152
        %v2270 = vunpack.c.l.b16 %v1153
        %v2271 = vunpack.c.h.b16 %v1153
        %v2272 = vunpack.c.l.b16 %v1154
        %v2273 = vunpack.c.h.b16 %v1154
        %v2274 = vunpack.c.l.b16 %v1155
        %v2275 = vunpack.c.h.b16 %v1155
        %v2276 = vunpack.c.l.b16 %v1156
        %v2277 = vunpack.c.h.b16 %v1156
        %v2278 = vunpack.c.l.b16 %v1157
        %v2279 = vunpack.c.h.b16 %v1157
        %v2280 = vunpack.c.l.b16 %v1158
        %v2281 = vunpack.c.h.b16 %v1158
        %v2282 = vunpack.c.l.b16 %v1159
        %v2283 = vunpack.c.h.b16 %v1159
        %v2284 = vunpack.c.l.b16 %v1160
        %v2285 = vunpack.c.h.b16 %v1160
        %v2286 = vunpack.c.l.b16 %v1161
        %v2287 = vunpack.c.h.b16 %v1161
        %v2288 = vunpack.c.l.b16 %v1162
        %v2289 = vunpack.c.h.b16 %v1162
        %v2290 = vunpack.c.l.b16 %v1163
        %v2291 = vunpack.c.h.b16 %v1163
        %v2292 = vunpack.c.l.b16 %v1164
        %v2293 = vunpack.c.h.b16 %v1164
        %v2294 = vunpack.c.l.b16 %v1165
        %v2295 = vunpack.c.h.b16 %v1165
        %v2296 = vunpack.c.l.b16 %v1166
        %v2297 = vunpack.c.h.b16 %v1166
        %v2298 = vunpack.c.l.b16 %v1167
        %v2299 = vunpack.c.h.b16 %v1167
        %v2300 = vunpack.c.l.b16 %v1168
        %v2301 = vunpack.c.h.b16 %v1168
        %v2302 = vunpack.c.l.b16 %v1169
        %v2303 = vunpack.c.h.b16 %v1169
        %v2304 = vunpack.c.l.b16 %v1170
        %v2305 = vunpack.c.h.b16 %v1170
        %v2306 = vunpack.c.l.b16 %v1171
        %v2307 = vunpack.c.h.b16 %v1171
        %v2308 = vunpack.c.l.b16 %v1172
        %v2309 = vunpack.c.h.b16 %v1172
        %v2310 = vunpack.c.l.b16 %v1173
        %v2311 = vunpack.c.h.b16 %v1173
        %v2312 = vunpack.c.l.b16 %v1174
        %v2313 = vunpack.c.h.b16 %v1174
        %v2314 = vunpack.c.l.b16 %v1175
        %v2315 = vunpack.c.h.b16 %v1175
        %v2316 = vunpack.c.l.b16 %v1176
        %v2317 = vunpack.c.h.b16 %v1176
        %v2318 = vunpack.c.l.b16 %v1177
        %v2319 = vunpack.c.h.b16 %v1177
        %v2320 = vunpack.c.l.b16 %v1178
        %v2321 = vunpack.c.h.b16 %v1178
        %v2322 = vunpack.c.l.b16 %v1179
        %v2323 = vunpack.c.h.b16 %v1179
        %v2324 = vunpack.c.l.b16 %v1180
        %v2325 = vunpack.c.h.b16 %v1180
        %v2326 = vunpack.c.l.b16 %v1181
        %v2327 = vunpack.c.h.b16 %v1181
        %v2328 = vunpack.c.l.b16 %v1182
        %v2329 = vunpack.c.h.b16 %v1182
        %v2330 = vunpack.c.l.b16 %v1183
        %v2331 = vunpack.c.h.b16 %v1183
        %v2332 = vunpack.c.l.b16 %v1184
        %v2333 = vunpack.c.h.b16 %v1184
        %v2334 = vunpack.c.l.b16 %v1185
        %v2335 = vunpack.c.h.b16 %v1185
        %v2336 = vunpack.c.l.b16 %v1186
        %v2337 = vunpack.c.h.b16 %v1186
        %v2338 = vunpack.c.l.b16 %v1187
        %v2339 = vunpack.c.h.b16 %v1187
        %v2340 = vunpack.c.l.b16 %v1188
        %v2341 = vunpack.c.h.b16 %v1188
        %v2342 = vunpack.c.l.b16 %v1189
        %v2343 = vunpack.c.h.b16 %v1189
        %v2344 = vunpack.c.l.b16 %v1190
        %v2345 = vunpack.c.h.b16 %v1190
        %v2346 = vunpack.c.l.b16 %v1191
        %v2347 = vunpack.c.h.b16 %v1191
        %v2348 = vunpack.c.l.b16 %v1192
        %v2349 = vunpack.c.h.b16 %v1192
        %v2350 = vunpack.c.l.b16 %v1193
        %v2351 = vunpack.c.h.b16 %v1193
        %v2352 = vunpack.c.l.b16 %v1194
        %v2353 = vunpack.c.h.b16 %v1194
        %v2354 = vunpack.c.l.b16 %v1195
        %v2355 = vunpack.c.h.b16 %v1195
        %v2356 = vunpack.c.l.b16 %v1196
        %v2357 = vunpack.c.h.b16 %v1196
        %v2358 = vunpack.c.l.b16 %v1197
        %v2359 = vunpack.c.h.b16 %v1197
        %v2360 = vunpack.c.l.b16 %v1198
        %v2361 = vunpack.c.h.b16 %v1198
        %v2362 = vunpack.c.l.b16 %v1199
        %v2363 = vunpack.c.h.b16 %v1199
        %v2364 = vunpack.c.l.b16 %v1200
        %v2365 = vunpack.c.h.b16 %v1200
        %v2366 = vunpack.c.l.b16 %v1201
        %v2367 = vunpack.c.h.b16 %v1201
        %v2368 = vunpack.c.l.b16 %v1202
        %v2369 = vunpack.c.h.b16 %v1202
        %v2370 = vunpack.c.l.b16 %v1203
        %v2371 = vunpack.c.h.b16 %v1203
        %v2372 = vunpack.c.l.b16 %v1204
        %v2373 = vunpack.c.h.b16 %v1204
        %v2374 = vunpack.c.l.b16 %v1205
        %v2375 = vunpack.c.h.b16 %v1205
        %v2376 = vunpack.c.l.b16 %v1206
        %v2377 = vunpack.c.h.b16 %v1206
        %v2378 = vunpack.c.l.b16 %v1207
        %v2379 = vunpack.c.h.b16 %v1207
        %v2380 = vunpack.c.l.b16 %v1208
        %v2381 = vunpack.c.h.b16 %v1208
        %v2382 = vunpack.c.l.b16 %v1209
        %v2383 = vunpack.c.h.b16 %v1209
        %v2384 = vunpack.c.l.b16 %v1210
        %v2385 = vunpack.c.h.b16 %v1210
        %v2386 = vunpack.c.l.b16 %v1211
        %v2387 = vunpack.c.h.b16 %v1211
        %v2388 = vunpack.c.l.b16 %v1212
        %v2389 = vunpack.c.h.b16 %v1212
        %v2390 = vunpack.c.l.b16 %v1213
        %v2391 = vunpack.c.h.b16 %v1213
        %v2392 = vunpack.c.l.b16 %v1214
        %v2393 = vunpack.c.h.b16 %v1214
        %v2394 = vunpack.c.l.b16 %v1215
        %v2395 = vunpack.c.h.b16 %v1215
        %v2396 = vunpack.c.l.b16 %v1216
        %v2397 = vunpack.c.h.b16 %v1216
        %v2398 = vunpack.c.l.b16 %v1217
        %v2399 = vunpack.c.h.b16 %v1217
        %v2400 = vunpack.c.l.b16 %v1218
        %v2401 = vunpack.c.h.b16 %v1218
        %v2402 = vunpack.c.l.b16 %v1219
        %v2403 = vunpack.c.h.b16 %v1219
        %v2404 = vunpack.c.l.b16 %v1220
        %v2405 = vunpack.c.h.b16 %v1220
        %v2406 = vunpack.c.l.b16 %v1221
        %v2407 = vunpack.c.h.b16 %v1221
        %v2408 = vunpack.c.l.b16 %v1222
        %v2409 = vunpack.c.h.b16 %v1222
        %v2410 = vunpack.c.l.b16 %v1223
        %v2411 = vunpack.c.h.b16 %v1223
        %v2412 = vunpack.c.l.b16 %v1224
        %v2413 = vunpack.c.h.b16 %v1224
        %v2414 = vunpack.c.l.b16 %v1225
        %v2415 = vunpack.c.h.b16 %v1225
        %v2416 = vunpack.c.l.b16 %v1226
        %v2417 = vunpack.c.h.b16 %v1226
        %v2418 = vunpack.c.l.b16 %v1227
        %v2419 = vunpack.c.h.b16 %v1227
        %v2420 = vunpack.c.l.b16 %v1228
        %v2421 = vunpack.c.h.b16 %v1228
        %v2422 = vunpack.c.l.b16 %v1229
        %v2423 = vunpack.c.h.b16 %v1229
        %v2424 = vunpack.c.l.b16 %v1230
        %v2425 = vunpack.c.h.b16 %v1230
        %v2426 = vunpack.c.l.b16 %v1231
        %v2427 = vunpack.c.h.b16 %v1231
        %v2428 = vunpack.c.l.b16 %v1232
        %v2429 = vunpack.c.h.b16 %v1232
        %v2430 = vunpack.c.l.b16 %v1233
        %v2431 = vunpack.c.h.b16 %v1233
        %v2432 = vunpack.c.l.b16 %v1234
        %v2433 = vunpack.c.h.b16 %v1234
        %v2434 = vunpack.c.l.b16 %v1235
        %v2435 = vunpack.c.h.b16 %v1235
        %v2436 = vunpack.c.l.b16 %v1236
        %v2437 = vunpack.c.h.b16 %v1236
        %v2438 = vunpack.c.l.b16 %v1237
        %v2439 = vunpack.c.h.b16 %v1237
        %v2440 = vunpack.c.l.b16 %v1238
        %v2441 = vunpack.c.h.b16 %v1238
        %v2442 = vunpack.c.l.b16 %v1239
        %v2443 = vunpack.c.h.b16 %v1239
        %v2444 = vunpack.c.l.b16 %v1240
        %v2445 = vunpack.c.h.b16 %v1240
        %v2446 = vunpack.c.l.b16 %v1241
        %v2447 = vunpack.c.h.b16 %v1241
        %v2448 = vunpack.c.l.b16 %v1242
        %v2449 = vunpack.c.h.b16 %v1242
        %v2450 = vunpack.c.l.b16 %v1243
        %v2451 = vunpack.c.h.b16 %v1243
        %v2452 = vunpack.c.l.b16 %v1244
        %v2453 = vunpack.c.h.b16 %v1244
        %v2454 = vunpack.c.l.b16 %v1245
        %v2455 = vunpack.c.h.b16 %v1245
        %v2456 = vunpack.c.l.b16 %v1246
        %v2457 = vunpack.c.h.b16 %v1246
        %v2458 = vunpack.c.l.b16 %v1247
        %v2459 = vunpack.c.h.b16 %v1247
        %v2460 = vunpack.c.l.b16 %v1248
        %v2461 = vunpack.c.h.b16 %v1248
        %v2462 = vunpack.c.l.b16 %v1249
        %v2463 = vunpack.c.h.b16 %v1249
        %v2464 = vunpack.c.l.b16 %v1250
        %v2465 = vunpack.c.h.b16 %v1250
        %v2466 = vunpack.c.l.b16 %v1251
        %v2467 = vunpack.c.h.b16 %v1251
        %v2468 = vunpack.c.l.b16 %v1252
        %v2469 = vunpack.c.h.b16 %v1252
        %v2470 = vunpack.c.l.b16 %v1253
        %v2471 = vunpack.c.h.b16 %v1253
        %v2472 = vunpack.c.l.b16 %v1254
        %v2473 = vunpack.c.h.b16 %v1254
        %v2474 = vunpack.c.l.b16 %v1255
        %v2475 = vunpack.c.h.b16 %v1255
        %v2476 = vunpack.c.l.b16 %v1256
        %v2477 = vunpack.c.h.b16 %v1256
        %v2478 = vunpack.c.l.b16 %v1257
        %v2479 = vunpack.c.h.b16 %v1257
        %v2480 = vunpack.c.l.b16 %v1258
        %v2481 = vunpack.c.h.b16 %v1258
        %v2482 = vunpack.c.l.b16 %v1259
        %v2483 = vunpack.c.h.b16 %v1259
        %v2484 = vunpack.c.l.b16 %v1260
        %v2485 = vunpack.c.h.b16 %v1260
        %v2486 = vunpack.c.l.b16 %v1261
        %v2487 = vunpack.c.h.b16 %v1261
        %v2488 = vunpack.c.l.b16 %v1262
        %v2489 = vunpack.c.h.b16 %v1262
        %v2490 = vunpack.c.l.b16 %v1263
        %v2491 = vunpack.c.h.b16 %v1263
        %v2492 = vunpack.c.l.b16 %v1264
        %v2493 = vunpack.c.h.b16 %v1264
        %v2494 = vunpack.c.l.b16 %v1265
        %v2495 = vunpack.c.h.b16 %v1265
        %v2496 = vunpack.c.l.b16 %v1266
        %v2497 = vunpack.c.h.b16 %v1266
        %v2498 = vunpack.c.l.b16 %v1267
        %v2499 = vunpack.c.h.b16 %v1267
        %v2500 = vunpack.c.l.b16 %v1268
        %v2501 = vunpack.c.h.b16 %v1268
        %v2502 = vunpack.c.l.b16 %v1269
        %v2503 = vunpack.c.h.b16 %v1269
        %v2504 = vunpack.c.l.b16 %v1270
        %v2505 = vunpack.c.h.b16 %v1270
        %v2506 = vunpack.c.l.b16 %v1271
        %v2507 = vunpack.c.h.b16 %v1271
        %v2508 = vunpack.c.l.b16 %v1272
        %v2509 = vunpack.c.h.b16 %v1272
        %v2510 = vunpack.c.l.b16 %v1273
        %v2511 = vunpack.c.h.b16 %v1273
        %v2512 = vunpack.c.l.b16 %v1274
        %v2513 = vunpack.c.h.b16 %v1274
        %v2514 = vunpack.c.l.b16 %v1275
        %v2515 = vunpack.c.h.b16 %v1275
        %v2516 = vunpack.c.l.b16 %v1276
        %v2517 = vunpack.c.h.b16 %v1276
        %v2518 = vunpack.c.l.b16 %v1277
        %v2519 = vunpack.c.h.b16 %v1277
        %v2520 = vunpack.c.l.b16 %v1278
        %v2521 = vunpack.c.h.b16 %v1278
        %v2522 = vunpack.c.l.b16 %v1279
        %v2523 = vunpack.c.h.b16 %v1279
        %v2524 = vunpack.c.l.b16 %v1280
        %v2525 = vunpack.c.h.b16 %v1280
        %v2526 = vunpack.c.l.b16 %v1281
        %v2527 = vunpack.c.h.b16 %v1281
        %v2528 = vunpack.c.l.b16 %v1282
        %v2529 = vunpack.c.h.b16 %v1282
        %v2530 = vunpack.c.l.b16 %v1283
        %v2531 = vunpack.c.h.b16 %v1283
        %v2532 = vunpack.c.l.b16 %v1284
        %v2533 = vunpack.c.h.b16 %v1284
        %v2534 = vunpack.c.l.b16 %v1285
        %v2535 = vunpack.c.h.b16 %v1285
        %v2536 = vunpack.c.l.b16 %v1286
        %v2537 = vunpack.c.h.b16 %v1286
        %v2538 = vunpack.c.l.b16 %v1287
        %v2539 = vunpack.c.h.b16 %v1287
        %v2540 = vunpack.c.l.b16 %v1288
        %v2541 = vunpack.c.h.b16 %v1288
        %v2542 = vunpack.c.l.b16 %v1289
        %v2543 = vunpack.c.h.b16 %v1289
        %v2544 = vunpack.c.l.b16 %v1290
        %v2545 = vunpack.c.h.b16 %v1290
        %v2546 = vunpack.c.l.b16 %v1291
        %v2547 = vunpack.c.h.b16 %v1291
        %v2548 = vunpack.c.l.b16 %v1292
        %v2549 = vunpack.c.h.b16 %v1292
        %v2550 = vunpack.c.l.b16 %v1293
        %v2551 = vunpack.c.h.b16 %v1293
        %v2552 = vunpack.c.l.b16 %v1294
        %v2553 = vunpack.c.h.b16 %v1294
        %v2554 = vunpack.c.l.b16 %v1295
        %v2555 = vunpack.c.h.b16 %v1295
        %v2556 = vunpack.c.l.b16 %v1296
        %v2557 = vunpack.c.h.b16 %v1296
        %v2558 = vunpack.c.l.b16 %v1297
        %v2559 = vunpack.c.h.b16 %v1297
        %v2560 = vunpack.c.l.b16 %v1298
        %v2561 = vunpack.c.h.b16 %v1298
        %v2562 = vunpack.c.l.b16 %v1299
        %v2563 = vunpack.c.h.b16 %v1299
        %v2564 = vunpack.c.l.b16 %v1300
        %v2565 = vunpack.c.h.b16 %v1300
        %v2566 = vunpack.c.l.b16 %v1301
        %v2567 = vunpack.c.h.b16 %v1301
        %v2568 = vunpack.c.l.b16 %v1302
        %v2569 = vunpack.c.h.b16 %v1302
        %v2570 = vunpack.c.l.b16 %v1303
        %v2571 = vunpack.c.h.b16 %v1303
        %v2572 = vunpack.c.l.b16 %v1304
        %v2573 = vunpack.c.h.b16 %v1304
        %v2574 = vunpack.c.l.b16 %v1305
        %v2575 = vunpack.c.h.b16 %v1305
        %v2576 = vunpack.c.l.b16 %v1306
        %v2577 = vunpack.c.h.b16 %v1306
        %v2578 = vunpack.c.l.b16 %v1307
        %v2579 = vunpack.c.h.b16 %v1307
        %v2580 = vunpack.c.l.b16 %v1308
        %v2581 = vunpack.c.h.b16 %v1308
        %v2582 = vunpack.c.l.b16 %v1309
        %v2583 = vunpack.c.h.b16 %v1309
        %v2584 = vunpack.c.l.b16 %v1310
        %v2585 = vunpack.c.h.b16 %v1310
        %v2586 = vunpack.c.l.b16 %v1311
        %v2587 = vunpack.c.h.b16 %v1311
        %v2588 = vunpack.c.l.b16 %v1312
        %v2589 = vunpack.c.h.b16 %v1312
        %v2590 = vunpack.c.l.b16 %v1313
        %v2591 = vunpack.c.h.b16 %v1313
        %v2592 = vunpack.c.l.b16 %v1314
        %v2593 = vunpack.c.h.b16 %v1314
        %v2594 = vunpack.c.l.b16 %v1315
        %v2595 = vunpack.c.h.b16 %v1315
        %v2596 = vunpack.c.l.b16 %v1316
        %v2597 = vunpack.c.h.b16 %v1316
        %v2598 = vunpack.c.l.b16 %v1317
        %v2599 = vunpack.c.h.b16 %v1317
        %v2600 = vunpack.c.l.b16 %v1318
        %v2601 = vunpack.c.h.b16 %v1318
        %v2602 = vunpack.c.l.b16 %v1319
        %v2603 = vunpack.c.h.b16 %v1319
        %v2604 = vunpack.c.l.b16 %v1320
        %v2605 = vunpack.c.h.b16 %v1320
        %v2606 = vunpack.c.l.b16 %v1321
        %v2607 = vunpack.c.h.b16 %v1321
        %v2608 = vunpack.c.l.b16 %v1322
        %v2609 = vunpack.c.h.b16 %v1322
        %v2610 = vunpack.c.l.b16 %v1323
        %v2611 = vunpack.c.h.b16 %v1323
        %v2612 = vunpack.c.l.b16 %v1324
        %v2613 = vunpack.c.h.b16 %v1324
        %v2614 = vunpack.c.l.b16 %v1325
        %v2615 = vunpack.c.h.b16 %v1325
        %v2616 = vunpack.c.l.b16 %v1326
        %v2617 = vunpack.c.h.b16 %v1326
        %v2618 = vunpack.c.l.b16 %v1327
        %v2619 = vunpack.c.h.b16 %v1327
        %v2620 = vunpack.c.l.b16 %v1328
        %v2621 = vunpack.c.h.b16 %v1328
        %v2622 = vunpack.c.l.b16 %v1329
        %v2623 = vunpack.c.h.b16 %v1329
        %v2624 = vunpack.c.l.b16 %v1330
        %v2625 = vunpack.c.h.b16 %v1330
        %v2626 = vunpack.c.l.b16 %v1331
        %v2627 = vunpack.c.h.b16 %v1331
        %v2628 = vunpack.c.l.b16 %v1332
        %v2629 = vunpack.c.h.b16 %v1332
        %v2630 = vunpack.c.l.b16 %v1333
        %v2631 = vunpack.c.h.b16 %v1333
        %v2632 = vunpack.c.l.b16 %v1334
        %v2633 = vunpack.c.h.b16 %v1334
        %v2634 = vunpack.c.l.b16 %v1335
        %v2635 = vunpack.c.h.b16 %v1335
        %v2636 = vunpack.c.l.b16 %v1336
        %v2637 = vunpack.c.h.b16 %v1336
        %v2638 = vunpack.c.l.b16 %v1337
        %v2639 = vunpack.c.h.b16 %v1337
        %v2640 = vunpack.c.l.b16 %v1338
        %v2641 = vunpack.c.h.b16 %v1338
        %v2642 = vunpack.c.l.b16 %v1339
        %v2643 = vunpack.c.h.b16 %v1339
        %v2644 = vunpack.c.l.b16 %v1340
        %v2645 = vunpack.c.h.b16 %v1340
        %v2646 = vunpack.c.l.b16 %v1341
        %v2647 = vunpack.c.h.b16 %v1341
        %v2648 = vunpack.c.l.b16 %v1342
        %v2649 = vunpack.c.h.b16 %v1342
        %v2650 = vunpack.c.l.b16 %v1343
        %v2651 = vunpack.c.h.b16 %v1343
        %v2652 = vunpack.c.l.b16 %v1344
        %v2653 = vunpack.c.h.b16 %v1344
        %v2654 = vunpack.c.l.b16 %v1345
        %v2655 = vunpack.c.h.b16 %v1345
        %v2656 = vunpack.c.l.b16 %v1346
        %v2657 = vunpack.c.h.b16 %v1346
        %v2658 = vunpack.c.l.b16 %v1347
        %v2659 = vunpack.c.h.b16 %v1347
        %v2660 = vunpack.c.l.b16 %v1348
        %v2661 = vunpack.c.h.b16 %v1348
        %v2662 = vunpack.c.l.b16 %v1349
        %v2663 = vunpack.c.h.b16 %v1349
        %v2664 = vunpack.c.l.b16 %v1350
        %v2665 = vunpack.c.h.b16 %v1350
        %v2666 = vunpack.c.l.b16 %v1351
        %v2667 = vunpack.c.h.b16 %v1351
        %v2668 = vunpack.c.l.b16 %v1352
        %v2669 = vunpack.c.h.b16 %v1352
        %v2670 = vunpack.c.l.b16 %v1353
        %v2671 = vunpack.c.h.b16 %v1353
        %v2672 = vunpack.c.l.b16 %v1354
        %v2673 = vunpack.c.h.b16 %v1354
        %v2674 = vunpack.c.l.b16 %v1355
        %v2675 = vunpack.c.h.b16 %v1355
        %v2676 = vunpack.c.l.b16 %v1356
        %v2677 = vunpack.c.h.b16 %v1356
        %v2678 = vunpack.c.l.b16 %v1357
        %v2679 = vunpack.c.h.b16 %v1357
        %v2680 = vunpack.c.l.b16 %v1358
        %v2681 = vunpack.c.h.b16 %v1358
        %v2682 = vunpack.c.l.b16 %v1359
        %v2683 = vunpack.c.h.b16 %v1359
        %v2684 = vunpack.c.l.b16 %v1360
        %v2685 = vunpack.c.h.b16 %v1360
        %v2686 = vunpack.c.l.b16 %v1361
        %v2687 = vunpack.c.h.b16 %v1361
        %v2688 = vunpack.c.l.b16 %v1362
        %v2689 = vunpack.c.h.b16 %v1362
        %v2690 = vunpack.c.l.b16 %v1363
        %v2691 = vunpack.c.h.b16 %v1363
        %v2692 = vunpack.c.l.b16 %v1364
        %v2693 = vunpack.c.h.b16 %v1364
        %v2694 = vunpack.c.l.b16 %v1365
        %v2695 = vunpack.c.h.b16 %v1365
        %v2696 = vunpack.c.l.b16 %v1366
        %v2697 = vunpack.c.h.b16 %v1366
        %v2698 = vunpack.c.l.b16 %v1367
        %v2699 = vunpack.c.h.b16 %v1367
        %v2700 = vunpack.c.l.b16 %v1368
        %v2701 = vunpack.c.h.b16 %v1368
        %v2702 = vunpack.c.l.b16 %v1369
        %v2703 = vunpack.c.h.b16 %v1369
        %v2704 = vunpack.c.l.b16 %v1370
        %v2705 = vunpack.c.h.b16 %v1370
        %v2706 = vunpack.c.l.b16 %v1371
        %v2707 = vunpack.c.h.b16 %v1371
        %v2708 = vunpack.c.l.b16 %v1372
        %v2709 = vunpack.c.h.b16 %v1372
        %v2710 = vunpack.c.l.b16 %v1373
        %v2711 = vunpack.c.h.b16 %v1373
        %v2712 = vunpack.c.l.b16 %v1374
        %v2713 = vunpack.c.h.b16 %v1374
        %v2714 = vunpack.c.l.b16 %v1375
        %v2715 = vunpack.c.h.b16 %v1375
        %v2716 = vunpack.c.l.b16 %v1376
        %v2717 = vunpack.c.h.b16 %v1376
        %v2718 = vunpack.c.l.b16 %v1377
        %v2719 = vunpack.c.h.b16 %v1377
        %v2720 = vunpack.c.l.b16 %v1378
        %v2721 = vunpack.c.h.b16 %v1378
        %v2722 = vunpack.c.l.b16 %v1379
        %v2723 = vunpack.c.h.b16 %v1379
        %v2724 = vunpack.c.l.b16 %v1380
        %v2725 = vunpack.c.h.b16 %v1380
        %v2726 = vunpack.c.l.b16 %v1381
        %v2727 = vunpack.c.h.b16 %v1381
        %v2728 = vunpack.c.l.b16 %v1382
        %v2729 = vunpack.c.h.b16 %v1382
        %v2730 = vunpack.c.l.b16 %v1383
        %v2731 = vunpack.c.h.b16 %v1383
        %v2732 = vunpack.c.l.b16 %v1384
        %v2733 = vunpack.c.h.b16 %v1384
        %v2734 = vunpack.c.l.b16 %v1385
        %v2735 = vunpack.c.h.b16 %v1385
        %v2736 = vunpack.c.l.b16 %v1386
        %v2737 = vunpack.c.h.b16 %v1386
        %v2738 = vunpack.c.l.b16 %v1387
        %v2739 = vunpack.c.h.b16 %v1387
        %v2740 = vunpack.c.l.b16 %v1388
        %v2741 = vunpack.c.h.b16 %v1388
        %v2742 = vunpack.c.l.b16 %v1389
        %v2743 = vunpack.c.h.b16 %v1389
        %v2744 = vunpack.c.l.b16 %v1390
        %v2745 = vunpack.c.h.b16 %v1390
        %v2746 = vunpack.c.l.b16 %v1391
        %v2747 = vunpack.c.h.b16 %v1391
        %v2748 = vunpack.c.l.b16 %v1392
        %v2749 = vunpack.c.h.b16 %v1392
        %v2750 = vunpack.c.l.b16 %v1393
        %v2751 = vunpack.c.h.b16 %v1393
        %v2752 = vunpack.c.l.b16 %v1394
        %v2753 = vunpack.c.h.b16 %v1394
        %v2754 = vunpack.c.l.b16 %v1395
        %v2755 = vunpack.c.h.b16 %v1395
        %v2756 = vunpack.c.l.b16 %v1396
        %v2757 = vunpack.c.h.b16 %v1396
        %v2758 = vunpack.c.l.b16 %v1397
        %v2759 = vunpack.c.h.b16 %v1397
        %v2760 = vunpack.c.l.b16 %v1398
        %v2761 = vunpack.c.h.b16 %v1398
        %v2762 = vunpack.c.l.b16 %v1399
        %v2763 = vunpack.c.h.b16 %v1399
        %v2764 = vunpack.c.l.b16 %v1400
        %v2765 = vunpack.c.h.b16 %v1400
        %v2766 = vunpack.c.l.b16 %v1401
        %v2767 = vunpack.c.h.b16 %v1401
        %v2768 = vunpack.c.l.b16 %v1402
        %v2769 = vunpack.c.h.b16 %v1402
        %v2770 = vunpack.c.l.b16 %v1403
        %v2771 = vunpack.c.h.b16 %v1403
        %v2772 = vunpack.c.l.b16 %v1404
        %v2773 = vunpack.c.h.b16 %v1404
        %v2774 = vunpack.c.l.b16 %v1405
        %v2775 = vunpack.c.h.b16 %v1405
        %v2776 = vunpack.c.l.b16 %v1406
        %v2777 = vunpack.c.h.b16 %v1406
        %v2778 = vunpack.c.l.b16 %v1407
        %v2779 = vunpack.c.h.b16 %v1407
        %v2780 = vunpack.c.l.b16 %v1408
        %v2781 = vunpack.c.h.b16 %v1408
        %v2782 = vunpack.c.l.b16 %v1409
        %v2783 = vunpack.c.h.b16 %v1409
        %v2784 = vunpack.c.l.b16 %v1410
        %v2785 = vunpack.c.h.b16 %v1410
        %v2786 = vunpack.c.l.b16 %v1411
        %v2787 = vunpack.c.h.b16 %v1411
        %v2788 = vunpack.c.l.b16 %v1412
        %v2789 = vunpack.c.h.b16 %v1412
        %v2790 = vunpack.c.l.b16 %v1413
        %v2791 = vunpack.c.h.b16 %v1413
        %v2792 = vunpack.c.l.b16 %v1414
        %v2793 = vunpack.c.h.b16 %v1414
        %v2794 = vunpack.c.l.b16 %v1415
        %v2795 = vunpack.c.h.b16 %v1415
        %v2796 = vunpack.c.l.b16 %v1416
        %v2797 = vunpack.c.h.b16 %v1416
        %v2798 = vunpack.c.l.b16 %v1417
        %v2799 = vunpack.c.h.b16 %v1417
        %v2800 = vunpack.c.l.b16 %v1418
        %v2801 = vunpack.c.h.b16 %v1418
        %v2802 = vunpack.c.l.b16 %v1419
        %v2803 = vunpack.c.h.b16 %v1419
        %v2804 = vunpack.c.l.b16 %v1420
        %v2805 = vunpack.c.h.b16 %v1420
        %v2806 = vunpack.c.l.b16 %v1421
        %v2807 = vunpack.c.h.b16 %v1421
        %v2808 = vunpack.c.l.b16 %v1422
        %v2809 = vunpack.c.h.b16 %v1422
        %v2810 = vunpack.c.l.b16 %v1423
        %v2811 = vunpack.c.h.b16 %v1423
        %v2812 = vunpack.c.l.b16 %v1424
        %v2813 = vunpack.c.h.b16 %v1424
        %v2814 = vunpack.c.l.b16 %v1425
        %v2815 = vunpack.c.h.b16 %v1425
        %v2816 = vunpack.c.l.b16 %v1426
        %v2817 = vunpack.c.h.b16 %v1426
        %v2818 = vunpack.c.l.b16 %v1427
        %v2819 = vunpack.c.h.b16 %v1427
        %v2820 = vunpack.c.l.b16 %v1428
        %v2821 = vunpack.c.h.b16 %v1428
        %v2822 = vunpack.c.l.b16 %v1429
        %v2823 = vunpack.c.h.b16 %v1429
        %v2824 = vunpack.c.l.b16 %v1430
        %v2825 = vunpack.c.h.b16 %v1430
        %v2826 = vunpack.c.l.b16 %v1431
        %v2827 = vunpack.c.h.b16 %v1431
        %v2828 = vunpack.c.l.b16 %v1432
        %v2829 = vunpack.c.h.b16 %v1432
        %v2830 = vunpack.c.l.b16 %v1433
        %v2831 = vunpack.c.h.b16 %v1433
        %v2832 = vunpack.c.l.b16 %v1434
        %v2833 = vunpack.c.h.b16 %v1434
        %v2834 = vunpack.c.l.b16 %v1435
        %v2835 = vunpack.c.h.b16 %v1435
        %v2836 = vunpack.c.l.b16 %v1436
        %v2837 = vunpack.c.h.b16 %v1436
        %v2838 = vunpack.c.l.b16 %v1437
        %v2839 = vunpack.c.h.b16 %v1437
        %v2840 = vunpack.c.l.b16 %v1438
        %v2841 = vunpack.c.h.b16 %v1438
        %v2842 = vunpack.c.l.b16 %v1439
        %v2843 = vunpack.c.h.b16 %v1439
        %v2844 = vunpack.c.l.b16 %v1440
        %v2845 = vunpack.c.h.b16 %v1440
        %v2846 = vunpack.c.l.b16 %v1441
        %v2847 = vunpack.c.h.b16 %v1441
        %v2848 = vunpack.c.l.b16 %v1442
        %v2849 = vunpack.c.h.b16 %v1442
        %v2850 = vunpack.c.l.b16 %v1443
        %v2851 = vunpack.c.h.b16 %v1443
        %v2852 = vunpack.c.l.b16 %v1444
        %v2853 = vunpack.c.h.b16 %v1444
        %v2854 = vunpack.c.l.b16 %v1445
        %v2855 = vunpack.c.h.b16 %v1445
        %v2856 = vunpack.c.l.b16 %v1446
        %v2857 = vunpack.c.h.b16 %v1446
        %v2858 = vunpack.c.l.b16 %v1447
        %v2859 = vunpack.c.h.b16 %v1447
        %v2860 = vunpack.c.l.b16 %v1448
        %v2861 = vunpack.c.h.b16 %v1448
        %v2862 = vunpack.c.l.b16 %v1449
        %v2863 = vunpack.c.h.b16 %v1449
        %v2864 = vunpack.c.l.b16 %v1450
        %v2865 = vunpack.c.h.b16 %v1450
        %v2866 = vunpack.c.l.b16 %v1451
        %v2867 = vunpack.c.h.b16 %v1451
        %v2868 = vunpack.c.l.b16 %v1452
        %v2869 = vunpack.c.h.b16 %v1452
        %v2870 = vunpack.c.l.b16 %v1453
        %v2871 = vunpack.c.h.b16 %v1453
        %v2872 = vunpack.c.l.b16 %v1454
        %v2873 = vunpack.c.h.b16 %v1454
        %v2874 = vunpack.c.l.b16 %v1455
        %v2875 = vunpack.c.h.b16 %v1455
        %v2876 = vunpack.c.l.b16 %v1456
        %v2877 = vunpack.c.h.b16 %v1456
        %v2878 = vunpack.c.l.b16 %v1457
        %v2879 = vunpack.c.h.b16 %v1457
        %v2880 = vunpack.c.l.b16 %v1458
        %v2881 = vunpack.c.h.b16 %v1458
        %v2882 = vunpack.c.l.b16 %v1459
        %v2883 = vunpack.c.h.b16 %v1459
        %v2884 = vunpack.c.l.b16 %v1460
        %v2885 = vunpack.c.h.b16 %v1460
        %v2886 = vunpack.c.l.b16 %v1461
        %v2887 = vunpack.c.h.b16 %v1461
        %v2888 = vunpack.c.l.b16 %v1462
        %v2889 = vunpack.c.h.b16 %v1462
        %v2890 = vunpack.c.l.b16 %v1463
        %v2891 = vunpack.c.h.b16 %v1463
        %v2892 = vunpack.c.l.b16 %v1464
        %v2893 = vunpack.c.h.b16 %v1464
        %v2894 = vunpack.c.l.b16 %v1465
        %v2895 = vunpack.c.h.b16 %v1465
        %v2896 = vunpack.c.l.b16 %v1466
        %v2897 = vunpack.c.h.b16 %v1466
        %v2898 = vunpack.c.l.b16 %v1467
        %v2899 = vunpack.c.h.b16 %v1467
        %v2900 = vunpack.c.l.b16 %v1468
        %v2901 = vunpack.c.h.b16 %v1468
        %v2902 = vunpack.c.l.b16 %v1469
        %v2903 = vunpack.c.h.b16 %v1469
        %v2904 = vunpack.c.l.b16 %v1470
        %v2905 = vunpack.c.h.b16 %v1470
        %v2906 = vunpack.c.l.b16 %v1471
        %v2907 = vunpack.c.h.b16 %v1471
        %v2908 = vunpack.c.l.b16 %v1472
        %v2909 = vunpack.c.h.b16 %v1472
        %v2910 = vunpack.c.l.b16 %v1473
        %v2911 = vunpack.c.h.b16 %v1473
        %v2912 = vunpack.c.l.b16 %v1474
        %v2913 = vunpack.c.h.b16 %v1474
        %v2914 = vunpack.c.l.b16 %v1475
        %v2915 = vunpack.c.h.b16 %v1475
        %v2916 = vunpack.c.l.b16 %v1476
        %v2917 = vunpack.c.h.b16 %v1476
        %v2918 = vunpack.c.l.b16 %v1477
        %v2919 = vunpack.c.h.b16 %v1477
        %v2920 = vunpack.c.l.b16 %v1478
        %v2921 = vunpack.c.h.b16 %v1478
        %v2922 = vunpack.c.l.b16 %v1479
        %v2923 = vunpack.c.h.b16 %v1479
        %v2924 = vunpack.c.l.b16 %v1480
        %v2925 = vunpack.c.h.b16 %v1480
        %v2926 = vunpack.c.l.b16 %v1481
        %v2927 = vunpack.c.h.b16 %v1481
        %v2928 = vunpack.c.l.b16 %v1482
        %v2929 = vunpack.c.h.b16 %v1482
        %v2930 = vunpack.c.l.b16 %v1483
        %v2931 = vunpack.c.h.b16 %v1483
        %v2932 = vunpack.c.l.b16 %v1484
        %v2933 = vunpack.c.h.b16 %v1484
        %v2934 = vunpack.c.l.b16 %v1485
        %v2935 = vunpack.c.h.b16 %v1485
        %v2936 = vunpack.c.l.b16 %v1486
        %v2937 = vunpack.c.h.b16 %v1486
        %v2938 = vunpack.c.l.b16 %v1487
        %v2939 = vunpack.c.h.b16 %v1487
        %v2940 = vunpack.c.l.b16 %v1488
        %v2941 = vunpack.c.h.b16 %v1488
        %v2942 = vunpack.c.l.b16 %v1489
        %v2943 = vunpack.c.h.b16 %v1489
        %v2944 = vunpack.c.l.b16 %v1490
        %v2945 = vunpack.c.h.b16 %v1490
        %v2946 = vunpack.c.l.b16 %v1491
        %v2947 = vunpack.c.h.b16 %v1491
        %v2948 = vunpack.c.l.b16 %v1492
        %v2949 = vunpack.c.h.b16 %v1492
        %v2950 = vunpack.c.l.b16 %v1493
        %v2951 = vunpack.c.h.b16 %v1493
        %v2952 = vunpack.c.l.b16 %v1494
        %v2953 = vunpack.c.h.b16 %v1494
        %v2954 = vunpack.c.l.b16 %v1495
        %v2955 = vunpack.c.h.b16 %v1495
        %v2956 = vunpack.c.l.b16 %v1496
        %v2957 = vunpack.c.h.b16 %v1496
        %v2958 = vunpack.c.l.b16 %v1497
        %v2959 = vunpack.c.h.b16 %v1497
        %v2960 = vunpack.c.l.b16 %v1498
        %v2961 = vunpack.c.h.b16 %v1498
        %v2962 = vunpack.c.l.b16 %v1499
        %v2963 = vunpack.c.h.b16 %v1499
        %v2964 = vunpack.c.l.b16 %v1500
        %v2965 = vunpack.c.h.b16 %v1500
        %v2966 = vunpack.c.l.b16 %v1501
        %v2967 = vunpack.c.h.b16 %v1501
        %v2968 = vunpack.c.l.b16 %v1502
        %v2969 = vunpack.c.h.b16 %v1502
        %v2970 = vunpack.c.l.b16 %v1503
        %v2971 = vunpack.c.h.b16 %v1503
        %v2972 = vunpack.c.l.b16 %v1504
        %v2973 = vunpack.c.h.b16 %v1504
        %v2974 = vunpack.c.l.b16 %v1505
        %v2975 = vunpack.c.h.b16 %v1505
        %v2976 = vunpack.c.l.b16 %v1506
        %v2977 = vunpack.c.h.b16 %v1506
        %v2978 = vunpack.c.l.b16 %v1507
        %v2979 = vunpack.c.h.b16 %v1507
        %v2980 = vunpack.c.l.b16 %v1508
        %v2981 = vunpack.c.h.b16 %v1508
        %v2982 = vunpack.c.l.b16 %v1509
        %v2983 = vunpack.c.h.b16 %v1509
        %v2984 = vunpack.c.l.b16 %v1510
        %v2985 = vunpack.c.h.b16 %v1510
        %v2986 = vunpack.c.l.b16 %v1511
        %v2987 = vunpack.c.h.b16 %v1511
        %v2988 = vunpack.c.l.b16 %v1512
        %v2989 = vunpack.c.h.b16 %v1512
        %v2990 = vunpack.c.l.b16 %v1513
        %v2991 = vunpack.c.h.b16 %v1513
        %v2992 = vunpack.c.l.b16 %v1514
        %v2993 = vunpack.c.h.b16 %v1514
        %v2994 = vunpack.c.l.b16 %v1515
        %v2995 = vunpack.c.h.b16 %v1515
        %v2996 = vunpack.c.l.b16 %v1516
        %v2997 = vunpack.c.h.b16 %v1516
        %v2998 = vunpack.c.l.b16 %v1517
        %v2999 = vunpack.c.h.b16 %v1517
        %v3000 = vunpack.c.l.b16 %v1518
        %v3001 = vunpack.c.h.b16 %v1518
        %v3002 = vunpack.c.l.b16 %v1519
        %v3003 = vunpack.c.h.b16 %v1519
        %v3004 = vunpack.c.l.b16 %v1520
        %v3005 = vunpack.c.h.b16 %v1520
        %v3006 = vunpack.c.l.b16 %v1521
        %v3007 = vunpack.c.h.b16 %v1521
        %v3008 = vunpack.c.l.b16 %v1522
        %v3009 = vunpack.c.h.b16 %v1522
        %v3010 = vunpack.c.l.b16 %v1523
        %v3011 = vunpack.c.h.b16 %v1523
        %v3012 = vunpack.c.l.b16 %v1524
        %v3013 = vunpack.c.h.b16 %v1524
        %v3014 = vunpack.c.l.b16 %v1525
        %v3015 = vunpack.c.h.b16 %v1525
        %v3016 = vunpack.c.l.b16 %v1526
        %v3017 = vunpack.c.h.b16 %v1526
        %v3018 = vunpack.c.l.b16 %v1527
        %v3019 = vunpack.c.h.b16 %v1527
        %v3020 = vunpack.c.l.b16 %v1528
        %v3021 = vunpack.c.h.b16 %v1528
        %v3022 = vunpack.c.l.b16 %v1529
        %v3023 = vunpack.c.h.b16 %v1529
        %v3024 = vunpack.c.l.b16 %v1530
        %v3025 = vunpack.c.h.b16 %v1530
        %v3026 = vunpack.c.l.b16 %v1531
        %v3027 = vunpack.c.h.b16 %v1531
        %v3028 = vunpack.c.l.b16 %v1532
        %v3029 = vunpack.c.h.b16 %v1532
        %v3030 = vunpack.c.l.b16 %v1533
        %v3031 = vunpack.c.h.b16 %v1533
        %v3032 = vunpack.c.l.b16 %v1534
        %v3033 = vunpack.c.h.b16 %v1534
        %v3034 = vunpack.c.l.b16 %v1535
        %v3035 = vunpack.c.h.b16 %v1535
        %v3036 = vunpack.c.l.b16 %v1536
        %v3037 = vunpack.c.h.b16 %v1536
        %v3038 = vunpack.c.l.b16 %v1537
        %v3039 = vunpack.c.h.b16 %v1537
        %v3040 = vunpack.c.l.b16 %v1538
        %v3041 = vunpack.c.h.b16 %v1538
        %v3042 = vunpack.c.l.b16 %v1539
        %v3043 = vunpack.c.h.b16 %v1539
        %v3044 = vunpack.c.l.b16 %v1540
        %v3045 = vunpack.c.h.b16 %v1540
        %v3046 = vunpack.c.l.b16 %v1541
        %v3047 = vunpack.c.h.b16 %v1541
        %v3048 = vunpack.c.l.b16 %v1542
        %v3049 = vunpack.c.h.b16 %v1542
        %v3050 = vunpack.c.l.b16 %v1543
        %v3051 = vunpack.c.h.b16 %v1543
        %v3052 = vunpack.c.l.b16 %v1544
        %v3053 = vunpack.c.h.b16 %v1544
        %v3054 = vunpack.c.l.b16 %v1545
        %v3055 = vunpack.c.h.b16 %v1545
        %v3056 = vunpack.c.l.b16 %v1546
        %v3057 = vunpack.c.h.b16 %v1546
        %v3058 = vunpack.c.l.b16 %v1547
        %v3059 = vunpack.c.h.b16 %v1547
        %v3060 = vunpack.c.l.b16 %v1548
        %v3061 = vunpack.c.h.b16 %v1548
        %v3062 = vunpack.c.l.b16 %v1549
        %v3063 = vunpack.c.h.b16 %v1549
        %v3064 = vunpack.c.l.b16 %v1550
        %v3065 = vunpack.c.h.b16 %v1550
        %v3066 = vunpack.c.l.b16 %v1551
        %v3067 = vunpack.c.h.b16 %v1551
        %v3068 = vunpack.c.l.b16 %v1552
        %v3069 = vunpack.c.h.b16 %v1552
        %v3070 = vunpack.c.l.b16 %v1553
        %v3071 = vunpack.c.h.b16 %v1553
        %v3072 = vunpack.c.l.b16 %v1554
        %v3073 = vunpack.c.h.b16 %v1554
        %v3074 = vunpack.c.l.b16 %v1555
        %v3075 = vunpack.c.h.b16 %v1555
        %v3076 = vunpack.c.l.b16 %v1556
        %v3077 = vunpack.c.h.b16 %v1556
        %v3078 = vunpack.c.l.b16 %v1557
        %v3079 = vunpack.c.h.b16 %v1557
        %v3080 = vunpack.c.l.b16 %v1558
        %v3081 = vunpack.c.h.b16 %v1558
        %v3082 = vunpack.c.l.b16 %v1559
        %v3083 = vunpack.c.h.b16 %v1559
        %v3084 = vunpack.c.l.b16 %v1560
        %v3085 = vunpack.c.h.b16 %v1560
        %v3086 = vunpack.c.l.b16 %v1561
        %v3087 = vunpack.c.h.b16 %v1561
        %v3088 = vunpack.c.l.b16 %v1562
        %v3089 = vunpack.c.h.b16 %v1562
        %v3090 = vunpack.c.l.b16 %v1563
        %v3091 = vunpack.c.h.b16 %v1563
        %v3092 = vunpack.c.l.b16 %v1564
        %v3093 = vunpack.c.h.b16 %v1564
        %v3094 = vunpack.c.l.b16 %v1565
        %v3095 = vunpack.c.h.b16 %v1565
        %v3096 = vunpack.c.l.b16 %v1566
        %v3097 = vunpack.c.h.b16 %v1566
        %v3098 = vunpack.c.l.b16 %v1567
        %v3099 = vunpack.c.h.b16 %v1567
        %v3100 = vunpack.c.l.b16 %v1568
        %v3101 = vunpack.c.h.b16 %v1568
        %v3102 = vunpack.c.l.b16 %v1569
        %v3103 = vunpack.c.h.b16 %v1569
        %v3104 = vunpack.c.l.b16 %v1570
        %v3105 = vunpack.c.h.b16 %v1570
        %v3106 = vunpack.c.l.b16 %v1571
        %v3107 = vunpack.c.h.b16 %v1571
        %v3108 = vpack.c.b16 %v2088, %v2084
        %v3109 = vpack.c.b16 %v2089, %v2085
        %v3110 = vpack.c.b16 %v2090, %v2086
        %v3111 = vpack.c.b16 %v2091, %v2087
        %v3112 = vpack.c.b16 %v2096, %v2092
        %v3113 = vpack.c.b16 %v2097, %v2093
        %v3114 = vpack.c.b16 %v2098, %v2094
        %v3115 = vpack.c.b16 %v2099, %v2095
        %v3116 = vpack.c.b16 %v2104, %v2100
        %v3117 = vpack.c.b16 %v2105, %v2101
        %v3118 = vpack.c.b16 %v2106, %v2102
        %v3119 = vpack.c.b16 %v2107, %v2103
        %v3120 = vpack.c.b16 %v2112, %v2108
        %v3121 = vpack.c.b16 %v2113, %v2109
        %v3122 = vpack.c.b16 %v2114, %v2110
        %v3123 = vpack.c.b16 %v2115, %v2111
        %v3124 = vpack.c.b16 %v2120, %v2116
        %v3125 = vpack.c.b16 %v2121, %v2117
        %v3126 = vpack.c.b16 %v2122, %v2118
        %v3127 = vpack.c.b16 %v2123, %v2119
        %v3128 = vpack.c.b16 %v2128, %v2124
        %v3129 = vpack.c.b16 %v2129, %v2125
        %v3130 = vpack.c.b16 %v2130, %v2126
        %v3131 = vpack.c.b16 %v2131, %v2127
        %v3132 = vpack.c.b16 %v2136, %v2132
        %v3133 = vpack.c.b16 %v2137, %v2133
        %v3134 = vpack.c.b16 %v2138, %v2134
        %v3135 = vpack.c.b16 %v2139, %v2135
        %v3136 = vpack.c.b16 %v2144, %v2140
        %v3137 = vpack.c.b16 %v2145, %v2141
        %v3138 = vpack.c.b16 %v2146, %v2142
        %v3139 = vpack.c.b16 %v2147, %v2143
        %v3140 = vpack.c.b16 %v2152, %v2148
        %v3141 = vpack.c.b16 %v2153, %v2149
        %v3142 = vpack.c.b16 %v2154, %v2150
        %v3143 = vpack.c.b16 %v2155, %v2151
        %v3144 = vpack.c.b16 %v2160, %v2156
        %v3145 = vpack.c.b16 %v2161, %v2157
        %v3146 = vpack.c.b16 %v2162, %v2158
        %v3147 = vpack.c.b16 %v2163, %v2159
        %v3148 = vpack.c.b16 %v2168, %v2164
        %v3149 = vpack.c.b16 %v2169, %v2165
        %v3150 = vpack.c.b16 %v2170, %v2166
        %v3151 = vpack.c.b16 %v2171, %v2167
        %v3152 = vpack.c.b16 %v2176, %v2172
        %v3153 = vpack.c.b16 %v2177, %v2173
        %v3154 = vpack.c.b16 %v2178, %v2174
        %v3155 = vpack.c.b16 %v2179, %v2175
        %v3156 = vpack.c.b16 %v2184, %v2180
        %v3157 = vpack.c.b16 %v2185, %v2181
        %v3158 = vpack.c.b16 %v2186, %v2182
        %v3159 = vpack.c.b16 %v2187, %v2183
        %v3160 = vpack.c.b16 %v2192, %v2188
        %v3161 = vpack.c.b16 %v2193, %v2189
        %v3162 = vpack.c.b16 %v2194, %v2190
        %v3163 = vpack.c.b16 %v2195, %v2191
        %v3164 = vpack.c.b16 %v2200, %v2196
        %v3165 = vpack.c.b16 %v2201, %v2197
        %v3166 = vpack.c.b16 %v2202, %v2198
        %v3167 = vpack.c.b16 %v2203, %v2199
        %v3168 = vpack.c.b16 %v2208, %v2204
        %v3169 = vpack.c.b16 %v2209, %v2205
        %v3170 = vpack.c.b16 %v2210, %v2206
        %v3171 = vpack.c.b16 %v2211, %v2207
        %v3172 = vpack.c.b16 %v2216, %v2212
        %v3173 = vpack.c.b16 %v2217, %v2213
        %v3174 = vpack.c.b16 %v2218, %v2214
        %v3175 = vpack.c.b16 %v2219, %v2215
        %v3176 = vpack.c.b16 %v2224, %v2220
        %v3177 = vpack.c.b16 %v2225, %v2221
        %v3178 = vpack.c.b16 %v2226, %v2222
        %v3179 = vpack.c.b16 %v2227, %v2223
        %v3180 = vpack.c.b16 %v2232, %v2228
        %v3181 = vpack.c.b16 %v2233, %v2229
        %v3182 = vpack.c.b16 %v2234, %v2230
        %v3183 = vpack.c.b16 %v2235, %v2231
        %v3184 = vpack.c.b16 %v2240, %v2236
        %v3185 = vpack.c.b16 %v2241, %v2237
        %v3186 = vpack.c.b16 %v2242, %v2238
        %v3187 = vpack.c.b16 %v2243, %v2239
        %v3188 = vpack.c.b16 %v2248, %v2244
        %v3189 = vpack.c.b16 %v2249, %v2245
        %v3190 = vpack.c.b16 %v2250, %v2246
        %v3191 = vpack.c.b16 %v2251, %v2247
        %v3192 = vpack.c.b16 %v2256, %v2252
        %v3193 = vpack.c.b16 %v2257, %v2253
        %v3194 = vpack.c.b16 %v2258, %v2254
        %v3195 = vpack.c.b16 %v2259, %v2255
        %v3196 = vpack.c.b16 %v2264, %v2260
        %v3197 = vpack.c.b16 %v2265, %v2261
        %v3198 = vpack.c.b16 %v2266, %v2262
        %v3199 = vpack.c.b16 %v2267, %v2263
        %v3200 = vpack.c.b16 %v2272, %v2268
        %v3201 = vpack.c.b16 %v2273, %v2269
        %v3202 = vpack.c.b16 %v2274, %v2270
        %v3203 = vpack.c.b16 %v2275, %v2271
        %v3204 = vpack.c.b16 %v2280, %v2276
        %v3205 = vpack.c.b16 %v2281, %v2277
        %v3206 = vpack.c.b16 %v2282, %v2278
        %v3207 = vpack.c.b16 %v2283, %v2279
        %v3208 = vpack.c.b16 %v2288, %v2284
        %v3209 = vpack.c.b16 %v2289, %v2285
        %v3210 = vpack.c.b16 %v2290, %v2286
        %v3211 = vpack.c.b16 %v2291, %v2287
        %v3212 = vpack.c.b16 %v2296, %v2292
        %v3213 = vpack.c.b16 %v2297, %v2293
        %v3214 = vpack.c.b16 %v2298, %v2294
        %v3215 = vpack.c.b16 %v2299, %v2295
        %v3216 = vpack.c.b16 %v2304, %v2300
        %v3217 = vpack.c.b16 %v2305, %v2301
        %v3218 = vpack.c.b16 %v2306, %v2302
        %v3219 = vpack.c.b16 %v2307, %v2303
        %v3220 = vpack.c.b16 %v2312, %v2308
        %v3221 = vpack.c.b16 %v2313, %v2309
        %v3222 = vpack.c.b16 %v2314, %v2310
        %v3223 = vpack.c.b16 %v2315, %v2311
        %v3224 = vpack.c.b16 %v2320, %v2316
        %v3225 = vpack.c.b16 %v2321, %v2317
        %v3226 = vpack.c.b16 %v2322, %v2318
        %v3227 = vpack.c.b16 %v2323, %v2319
        %v3228 = vpack.c.b16 %v2328, %v2324
        %v3229 = vpack.c.b16 %v2329, %v2325
        %v3230 = vpack.c.b16 %v2330, %v2326
        %v3231 = vpack.c.b16 %v2331, %v2327
        %v3232 = vpack.c.b16 %v2336, %v2332
        %v3233 = vpack.c.b16 %v2337, %v2333
        %v3234 = vpack.c.b16 %v2338, %v2334
        %v3235 = vpack.c.b16 %v2339, %v2335
        %v3236 = vpack.c.b16 %v2344, %v2340
        %v3237 = vpack.c.b16 %v2345, %v2341
        %v3238 = vpack.c.b16 %v2346, %v2342
        %v3239 = vpack.c.b16 %v2347, %v2343
        %v3240 = vpack.c.b16 %v2352, %v2348
        %v3241 = vpack.c.b16 %v2353, %v2349
        %v3242 = vpack.c.b16 %v2354, %v2350
        %v3243 = vpack.c.b16 %v2355, %v2351
        %v3244 = vpack.c.b16 %v2360, %v2356
        %v3245 = vpack.c.b16 %v2361, %v2357
        %v3246 = vpack.c.b16 %v2362, %v2358
        %v3247 = vpack.c.b16 %v2363, %v2359
        %v3248 = vpack.c.b16 %v2368, %v2364
        %v3249 = vpack.c.b16 %v2369, %v2365
        %v3250 = vpack.c.b16 %v2370, %v2366
        %v3251 = vpack.c.b16 %v2371, %v2367
        %v3252 = vpack.c.b16 %v2376, %v2372
        %v3253 = vpack.c.b16 %v2377, %v2373
        %v3254 = vpack.c.b16 %v2378, %v2374
        %v3255 = vpack.c.b16 %v2379, %v2375
        %v3256 = vpack.c.b16 %v2384, %v2380
        %v3257 = vpack.c.b16 %v2385, %v2381
        %v3258 = vpack.c.b16 %v2386, %v2382
        %v3259 = vpack.c.b16 %v2387, %v2383
        %v3260 = vpack.c.b16 %v2392, %v2388
        %v3261 = vpack.c.b16 %v2393, %v2389
        %v3262 = vpack.c.b16 %v2394, %v2390
        %v3263 = vpack.c.b16 %v2395, %v2391
        %v3264 = vpack.c.b16 %v2400, %v2396
        %v3265 = vpack.c.b16 %v2401, %v2397
        %v3266 = vpack.c.b16 %v2402, %v2398
        %v3267 = vpack.c.b16 %v2403, %v2399
        %v3268 = vpack.c.b16 %v2408, %v2404
        %v3269 = vpack.c.b16 %v2409, %v2405
        %v3270 = vpack.c.b16 %v2410, %v2406
        %v3271 = vpack.c.b16 %v2411, %v2407
        %v3272 = vpack.c.b16 %v2416, %v2412
        %v3273 = vpack.c.b16 %v2417, %v2413
        %v3274 = vpack.c.b16 %v2418, %v2414
        %v3275 = vpack.c.b16 %v2419, %v2415
        %v3276 = vpack.c.b16 %v2424, %v2420
        %v3277 = vpack.c.b16 %v2425, %v2421
        %v3278 = vpack.c.b16 %v2426, %v2422
        %v3279 = vpack.c.b16 %v2427, %v2423
        %v3280 = vpack.c.b16 %v2432, %v2428
        %v3281 = vpack.c.b16 %v2433, %v2429
        %v3282 = vpack.c.b16 %v2434, %v2430
        %v3283 = vpack.c.b16 %v2435, %v2431
        %v3284 = vpack.c.b16 %v2440, %v2436
        %v3285 = vpack.c.b16 %v2441, %v2437
        %v3286 = vpack.c.b16 %v2442, %v2438
        %v3287 = vpack.c.b16 %v2443, %v2439
        %v3288 = vpack.c.b16 %v2448, %v2444
        %v3289 = vpack.c.b16 %v2449, %v2445
        %v3290 = vpack.c.b16 %v2450, %v2446
        %v3291 = vpack.c.b16 %v2451, %v2447
        %v3292 = vpack.c.b16 %v2456, %v2452
        %v3293 = vpack.c.b16 %v2457, %v2453
        %v3294 = vpack.c.b16 %v2458, %v2454
        %v3295 = vpack.c.b16 %v2459, %v2455
        %v3296 = vpack.c.b16 %v2464, %v2460
        %v3297 = vpack.c.b16 %v2465, %v2461
        %v3298 = vpack.c.b16 %v2466, %v2462
        %v3299 = vpack.c.b16 %v2467, %v2463
        %v3300 = vpack.c.b16 %v2472, %v2468
        %v3301 = vpack.c.b16 %v2473, %v2469
        %v3302 = vpack.c.b16 %v2474, %v2470
        %v3303 = vpack.c.b16 %v2475, %v2471
        %v3304 = vpack.c.b16 %v2480, %v2476
        %v3305 = vpack.c.b16 %v2481, %v2477
        %v3306 = vpack.c.b16 %v2482, %v2478
        %v3307 = vpack.c.b16 %v2483, %v2479
        %v3308 = vpack.c.b16 %v2488, %v2484
        %v3309 = vpack.c.b16 %v2489, %v2485
        %v3310 = vpack.c.b16 %v2490, %v2486
        %v3311 = vpack.c.b16 %v2491, %v2487
        %v3312 = vpack.c.b16 %v2496, %v2492
        %v3313 = vpack.c.b16 %v2497, %v2493
        %v3314 = vpack.c.b16 %v2498, %v2494
        %v3315 = vpack.c.b16 %v2499, %v2495
        %v3316 = vpack.c.b16 %v2504, %v2500
        %v3317 = vpack.c.b16 %v2505, %v2501
        %v3318 = vpack.c.b16 %v2506, %v2502
        %v3319 = vpack.c.b16 %v2507, %v2503
        %v3320 = vpack.c.b16 %v2512, %v2508
        %v3321 = vpack.c.b16 %v2513, %v2509
        %v3322 = vpack.c.b16 %v2514, %v2510
        %v3323 = vpack.c.b16 %v2515, %v2511
        %v3324 = vpack.c.b16 %v2520, %v2516
        %v3325 = vpack.c.b16 %v2521, %v2517
        %v3326 = vpack.c.b16 %v2522, %v2518
        %v3327 = vpack.c.b16 %v2523, %v2519
        %v3328 = vpack.c.b16 %v2528, %v2524
        %v3329 = vpack.c.b16 %v2529, %v2525
        %v3330 = vpack.c.b16 %v2530, %v2526
        %v3331 = vpack.c.b16 %v2531, %v2527
        %v3332 = vpack.c.b16 %v2536, %v2532
        %v3333 = vpack.c.b16 %v2537, %v2533
        %v3334 = vpack.c.b16 %v2538, %v2534
        %v3335 = vpack.c.b16 %v2539, %v2535
        %v3336 = vpack.c.b16 %v2544, %v2540
        %v3337 = vpack.c.b16 %v2545, %v2541
        %v3338 = vpack.c.b16 %v2546, %v2542
        %v3339 = vpack.c.b16 %v2547, %v2543
        %v3340 = vpack.c.b16 %v2552, %v2548
        %v3341 = vpack.c.b16 %v2553, %v2549
        %v3342 = vpack.c.b16 %v2554, %v2550
        %v3343 = vpack.c.b16 %v2555, %v2551
        %v3344 = vpack.c.b16 %v2560, %v2556
        %v3345 = vpack.c.b16 %v2561, %v2557
        %v3346 = vpack.c.b16 %v2562, %v2558
        %v3347 = vpack.c.b16 %v2563, %v2559
        %v3348 = vpack.c.b16 %v2568, %v2564
        %v3349 = vpack.c.b16 %v2569, %v2565
        %v3350 = vpack.c.b16 %v2570, %v2566
        %v3351 = vpack.c.b16 %v2571, %v2567
        %v3352 = vpack.c.b16 %v2576, %v2572
        %v3353 = vpack.c.b16 %v2577, %v2573
        %v3354 = vpack.c.b16 %v2578, %v2574
        %v3355 = vpack.c.b16 %v2579, %v2575
        %v3356 = vpack.c.b16 %v2584, %v2580
        %v3357 = vpack.c.b16 %v2585, %v2581
        %v3358 = vpack.c.b16 %v2586, %v2582
        %v3359 = vpack.c.b16 %v2587, %v2583
        %v3360 = vpack.c.b16 %v2592, %v2588
        %v3361 = vpack.c.b16 %v2593, %v2589
        %v3362 = vpack.c.b16 %v2594, %v2590
        %v3363 = vpack.c.b16 %v2595, %v2591
        %v3364 = vpack.c.b16 %v2600, %v2596
        %v3365 = vpack.c.b16 %v2601, %v2597
        %v3366 = vpack.c.b16 %v2602, %v2598
        %v3367 = vpack.c.b16 %v2603, %v2599
        %v3368 = vpack.c.b16 %v2608, %v2604
        %v3369 = vpack.c.b16 %v2609, %v2605
        %v3370 = vpack.c.b16 %v2610, %v2606
        %v3371 = vpack.c.b16 %v2611, %v2607
        %v3372 = vpack.c.b16 %v2616, %v2612
        %v3373 = vpack.c.b16 %v2617, %v2613
        %v3374 = vpack.c.b16 %v2618, %v2614
        %v3375 = vpack.c.b16 %v2619, %v2615
        %v3376 = vpack.c.b16 %v2624, %v2620
        %v3377 = vpack.c.b16 %v2625, %v2621
        %v3378 = vpack.c.b16 %v2626, %v2622
        %v3379 = vpack.c.b16 %v2627, %v2623
        %v3380 = vpack.c.b16 %v2632, %v2628
        %v3381 = vpack.c.b16 %v2633, %v2629
        %v3382 = vpack.c.b16 %v2634, %v2630
        %v3383 = vpack.c.b16 %v2635, %v2631
        %v3384 = vpack.c.b16 %v2640, %v2636
        %v3385 = vpack.c.b16 %v2641, %v2637
        %v3386 = vpack.c.b16 %v2642, %v2638
        %v3387 = vpack.c.b16 %v2643, %v2639
        %v3388 = vpack.c.b16 %v2648, %v2644
        %v3389 = vpack.c.b16 %v2649, %v2645
        %v3390 = vpack.c.b16 %v2650, %v2646
        %v3391 = vpack.c.b16 %v2651, %v2647
        %v3392 = vpack.c.b16 %v2656, %v2652
        %v3393 = vpack.c.b16 %v2657, %v2653
        %v3394 = vpack.c.b16 %v2658, %v2654
        %v3395 = vpack.c.b16 %v2659, %v2655
        %v3396 = vpack.c.b16 %v2664, %v2660
        %v3397 = vpack.c.b16 %v2665, %v2661
        %v3398 = vpack.c.b16 %v2666, %v2662
        %v3399 = vpack.c.b16 %v2667, %v2663
        %v3400 = vpack.c.b16 %v2672, %v2668
        %v3401 = vpack.c.b16 %v2673, %v2669
        %v3402 = vpack.c.b16 %v2674, %v2670
        %v3403 = vpack.c.b16 %v2675, %v2671
        %v3404 = vpack.c.b16 %v2680, %v2676
        %v3405 = vpack.c.b16 %v2681, %v2677
        %v3406 = vpack.c.b16 %v2682, %v2678
        %v3407 = vpack.c.b16 %v2683, %v2679
        %v3408 = vpack.c.b16 %v2688, %v2684
        %v3409 = vpack.c.b16 %v2689, %v2685
        %v3410 = vpack.c.b16 %v2690, %v2686
        %v3411 = vpack.c.b16 %v2691, %v2687
        %v3412 = vpack.c.b16 %v2696, %v2692
        %v3413 = vpack.c.b16 %v2697, %v2693
        %v3414 = vpack.c.b16 %v2698, %v2694
        %v3415 = vpack.c.b16 %v2699, %v2695
        %v3416 = vpack.c.b16 %v2704, %v2700
        %v3417 = vpack.c.b16 %v2705, %v2701
        %v3418 = vpack.c.b16 %v2706, %v2702
        %v3419 = vpack.c.b16 %v2707, %v2703
        %v3420 = vpack.c.b16 %v2712, %v2708
        %v3421 = vpack.c.b16 %v2713, %v2709
        %v3422 = vpack.c.b16 %v2714, %v2710
        %v3423 = vpack.c.b16 %v2715, %v2711
        %v3424 = vpack.c.b16 %v2720, %v2716
        %v3425 = vpack.c.b16 %v2721, %v2717
        %v3426 = vpack.c.b16 %v2722, %v2718
        %v3427 = vpack.c.b16 %v2723, %v2719
        %v3428 = vpack.c.b16 %v2728, %v2724
        %v3429 = vpack.c.b16 %v2729, %v2725
        %v3430 = vpack.c.b16 %v2730, %v2726
        %v3431 = vpack.c.b16 %v2731, %v2727
        %v3432 = vpack.c.b16 %v2736, %v2732
        %v3433 = vpack.c.b16 %v2737, %v2733
        %v3434 = vpack.c.b16 %v2738, %v2734
        %v3435 = vpack.c.b16 %v2739, %v2735
        %v3436 = vpack.c.b16 %v2744, %v2740
        %v3437 = vpack.c.b16 %v2745, %v2741
        %v3438 = vpack.c.b16 %v2746, %v2742
        %v3439 = vpack.c.b16 %v2747, %v2743
        %v3440 = vpack.c.b16 %v2752, %v2748
        %v3441 = vpack.c.b16 %v2753, %v2749
        %v3442 = vpack.c.b16 %v2754, %v2750
        %v3443 = vpack.c.b16 %v2755, %v2751
        %v3444 = vpack.c.b16 %v2760, %v2756
        %v3445 = vpack.c.b16 %v2761, %v2757
        %v3446 = vpack.c.b16 %v2762, %v2758
        %v3447 = vpack.c.b16 %v2763, %v2759
        %v3448 = vpack.c.b16 %v2768, %v2764
        %v3449 = vpack.c.b16 %v2769, %v2765
        %v3450 = vpack.c.b16 %v2770, %v2766
        %v3451 = vpack.c.b16 %v2771, %v2767
        %v3452 = vpack.c.b16 %v2776, %v2772
        %v3453 = vpack.c.b16 %v2777, %v2773
        %v3454 = vpack.c.b16 %v2778, %v2774
        %v3455 = vpack.c.b16 %v2779, %v2775
        %v3456 = vpack.c.b16 %v2784, %v2780
        %v3457 = vpack.c.b16 %v2785, %v2781
        %v3458 = vpack.c.b16 %v2786, %v2782
        %v3459 = vpack.c.b16 %v2787, %v2783
        %v3460 = vpack.c.b16 %v2792, %v2788
        %v3461 = vpack.c.b16 %v2793, %v2789
        %v3462 = vpack.c.b16 %v2794, %v2790
        %v3463 = vpack.c.b16 %v2795, %v2791
        %v3464 = vpack.c.b16 %v2800, %v2796
        %v3465 = vpack.c.b16 %v2801, %v2797
        %v3466 = vpack.c.b16 %v2802, %v2798
        %v3467 = vpack.c.b16 %v2803, %v2799
        %v3468 = vpack.c.b16 %v2808, %v2804
        %v3469 = vpack.c.b16 %v2809, %v2805
        %v3470 = vpack.c.b16 %v2810, %v2806
        %v3471 = vpack.c.b16 %v2811, %v2807
        %v3472 = vpack.c.b16 %v2816, %v2812
        %v3473 = vpack.c.b16 %v2817, %v2813
        %v3474 = vpack.c.b16 %v2818, %v2814
        %v3475 = vpack.c.b16 %v2819, %v2815
        %v3476 = vpack.c.b16 %v2824, %v2820
        %v3477 = vpack.c.b16 %v2825, %v2821
        %v3478 = vpack.c.b16 %v2826, %v2822
        %v3479 = vpack.c.b16 %v2827, %v2823
        %v3480 = vpack.c.b16 %v2832, %v2828
        %v3481 = vpack.c.b16 %v2833, %v2829
        %v3482 = vpack.c.b16 %v2834, %v2830
        %v3483 = vpack.c.b16 %v2835, %v2831
        %v3484 = vpack.c.b16 %v2840, %v2836
        %v3485 = vpack.c.b16 %v2841, %v2837
        %v3486 = vpack.c.b16 %v2842, %v2838
        %v3487 = vpack.c.b16 %v2843, %v2839
        %v3488 = vpack.c.b16 %v2848, %v2844
        %v3489 = vpack.c.b16 %v2849, %v2845
        %v3490 = vpack.c.b16 %v2850, %v2846
        %v3491 = vpack.c.b16 %v2851, %v2847
        %v3492 = vpack.c.b16 %v2856, %v2852
        %v3493 = vpack.c.b16 %v2857, %v2853
        %v3494 = vpack.c.b16 %v2858, %v2854
        %v3495 = vpack.c.b16 %v2859, %v2855
        %v3496 = vpack.c.b16 %v2864, %v2860
        %v3497 = vpack.c.b16 %v2865, %v2861
        %v3498 = vpack.c.b16 %v2866, %v2862
        %v3499 = vpack.c.b16 %v2867, %v2863
        %v3500 = vpack.c.b16 %v2872, %v2868
        %v3501 = vpack.c.b16 %v2873, %v2869
        %v3502 = vpack.c.b16 %v2874, %v2870
        %v3503 = vpack.c.b16 %v2875, %v2871
        %v3504 = vpack.c.b16 %v2880, %v2876
        %v3505 = vpack.c.b16 %v2881, %v2877
        %v3506 = vpack.c.b16 %v2882, %v2878
        %v3507 = vpack.c.b16 %v2883, %v2879
        %v3508 = vpack.c.b16 %v2888, %v2884
        %v3509 = vpack.c.b16 %v2889, %v2885
        %v3510 = vpack.c.b16 %v2890, %v2886
        %v3511 = vpack.c.b16 %v2891, %v2887
        %v3512 = vpack.c.b16 %v2896, %v2892
        %v3513 = vpack.c.b16 %v2897, %v2893
        %v3514 = vpack.c.b16 %v2898, %v2894
        %v3515 = vpack.c.b16 %v2899, %v2895
        %v3516 = vpack.c.b16 %v2904, %v2900
        %v3517 = vpack.c.b16 %v2905, %v2901
        %v3518 = vpack.c.b16 %v2906, %v2902
        %v3519 = vpack.c.b16 %v2907, %v2903
        %v3520 = vpack.c.b16 %v2912, %v2908
        %v3521 = vpack.c.b16 %v2913, %v2909
        %v3522 = vpack.c.b16 %v2914, %v2910
        %v3523 = vpack.c.b16 %v2915, %v2911
        %v3524 = vpack.c.b16 %v2920, %v2916
        %v3525 = vpack.c.b16 %v2921, %v2917
        %v3526 = vpack.c.b16 %v2922, %v2918
        %v3527 = vpack.c.b16 %v2923, %v2919
        %v3528 = vpack.c.b16 %v2928, %v2924
        %v3529 = vpack.c.b16 %v2929, %v2925
        %v3530 = vpack.c.b16 %v2930, %v2926
        %v3531 = vpack.c.b16 %v2931, %v2927
        %v3532 = vpack.c.b16 %v2936, %v2932
        %v3533 = vpack.c.b16 %v2937, %v2933
        %v3534 = vpack.c.b16 %v2938, %v2934
        %v3535 = vpack.c.b16 %v2939, %v2935
        %v3536 = vpack.c.b16 %v2944, %v2940
        %v3537 = vpack.c.b16 %v2945, %v2941
        %v3538 = vpack.c.b16 %v2946, %v2942
        %v3539 = vpack.c.b16 %v2947, %v2943
        %v3540 = vpack.c.b16 %v2952, %v2948
        %v3541 = vpack.c.b16 %v2953, %v2949
        %v3542 = vpack.c.b16 %v2954, %v2950
        %v3543 = vpack.c.b16 %v2955, %v2951
        %v3544 = vpack.c.b16 %v2960, %v2956
        %v3545 = vpack.c.b16 %v2961, %v2957
        %v3546 = vpack.c.b16 %v2962, %v2958
        %v3547 = vpack.c.b16 %v2963, %v2959
        %v3548 = vpack.c.b16 %v2968, %v2964
        %v3549 = vpack.c.b16 %v2969, %v2965
        %v3550 = vpack.c.b16 %v2970, %v2966
        %v3551 = vpack.c.b16 %v2971, %v2967
        %v3552 = vpack.c.b16 %v2976, %v2972
        %v3553 = vpack.c.b16 %v2977, %v2973
        %v3554 = vpack.c.b16 %v2978, %v2974
        %v3555 = vpack.c.b16 %v2979, %v2975
        %v3556 = vpack.c.b16 %v2984, %v2980
        %v3557 = vpack.c.b16 %v2985, %v2981
        %v3558 = vpack.c.b16 %v2986, %v2982
        %v3559 = vpack.c.b16 %v2987, %v2983
        %v3560 = vpack.c.b16 %v2992, %v2988
        %v3561 = vpack.c.b16 %v2993, %v2989
        %v3562 = vpack.c.b16 %v2994, %v2990
        %v3563 = vpack.c.b16 %v2995, %v2991
        %v3564 = vpack.c.b16 %v3000, %v2996
        %v3565 = vpack.c.b16 %v3001, %v2997
        %v3566 = vpack.c.b16 %v3002, %v2998
        %v3567 = vpack.c.b16 %v3003, %v2999
        %v3568 = vpack.c.b16 %v3008, %v3004
        %v3569 = vpack.c.b16 %v3009, %v3005
        %v3570 = vpack.c.b16 %v3010, %v3006
        %v3571 = vpack.c.b16 %v3011, %v3007
        %v3572 = vpack.c.b16 %v3016, %v3012
        %v3573 = vpack.c.b16 %v3017, %v3013
        %v3574 = vpack.c.b16 %v3018, %v3014
        %v3575 = vpack.c.b16 %v3019, %v3015
        %v3576 = vpack.c.b16 %v3024, %v3020
        %v3577 = vpack.c.b16 %v3025, %v3021
        %v3578 = vpack.c.b16 %v3026, %v3022
        %v3579 = vpack.c.b16 %v3027, %v3023
        %v3580 = vpack.c.b16 %v3032, %v3028
        %v3581 = vpack.c.b16 %v3033, %v3029
        %v3582 = vpack.c.b16 %v3034, %v3030
        %v3583 = vpack.c.b16 %v3035, %v3031
        %v3584 = vpack.c.b16 %v3040, %v3036
        %v3585 = vpack.c.b16 %v3041, %v3037
        %v3586 = vpack.c.b16 %v3042, %v3038
        %v3587 = vpack.c.b16 %v3043, %v3039
        %v3588 = vpack.c.b16 %v3048, %v3044
        %v3589 = vpack.c.b16 %v3049, %v3045
        %v3590 = vpack.c.b16 %v3050, %v3046
        %v3591 = vpack.c.b16 %v3051, %v3047
        %v3592 = vpack.c.b16 %v3056, %v3052
        %v3593 = vpack.c.b16 %v3057, %v3053
        %v3594 = vpack.c.b16 %v3058, %v3054
        %v3595 = vpack.c.b16 %v3059, %v3055
        %v3596 = vpack.c.b16 %v3064, %v3060
        %v3597 = vpack.c.b16 %v3065, %v3061
        %v3598 = vpack.c.b16 %v3066, %v3062
        %v3599 = vpack.c.b16 %v3067, %v3063
        %v3600 = vpack.c.b16 %v3072, %v3068
        %v3601 = vpack.c.b16 %v3073, %v3069
        %v3602 = vpack.c.b16 %v3074, %v3070
        %v3603 = vpack.c.b16 %v3075, %v3071
        %v3604 = vpack.c.b16 %v3080, %v3076
        %v3605 = vpack.c.b16 %v3081, %v3077
        %v3606 = vpack.c.b16 %v3082, %v3078
        %v3607 = vpack.c.b16 %v3083, %v3079
        %v3608 = vpack.c.b16 %v3088, %v3084
        %v3609 = vpack.c.b16 %v3089, %v3085
        %v3610 = vpack.c.b16 %v3090, %v3086
        %v3611 = vpack.c.b16 %v3091, %v3087
        %v3612 = vpack.c.b16 %v3096, %v3092
        %v3613 = vpack.c.b16 %v3097, %v3093
        %v3614 = vpack.c.b16 %v3098, %v3094
        %v3615 = vpack.c.b16 %v3099, %v3095
        %v3616 = vpack.c.b16 %v3104, %v3100
        %v3617 = vpack.c.b16 %v3105, %v3101
        %v3618 = vpack.c.b16 %v3106, %v3102
        %v3619 = vpack.c.b16 %v3107, %v3103
        %4132 = vmatprep.subr.bf16.mxu0 %v3109
        %4133 = vmatpush1.bf16.msra.mxu0 %v3108
        %4134 = vmatprep.subr.bf16.mxu0 %v3113
        %4135 = vmatpush1.bf16.msra.mxu0 %v3112
        %4136 = vmatprep.subr.bf16.mxu0 %v3117
        %4137 = vmatpush1.bf16.msra.mxu0 %v3116
        %4138 = vmatprep.subr.bf16.mxu0 %v3121
        %4139 = vmatpush1.bf16.msra.mxu0 %v3120
        %4140 = vmatprep.subr.bf16.mxu0 %v3125
        %4141 = vmatpush1.bf16.msra.mxu0 %v3124
        %4142 = vmatprep.subr.bf16.mxu0 %v3129
        %4143 = vmatpush1.bf16.msra.mxu0 %v3128
        %4144 = vmatprep.subr.bf16.mxu0 %v3133
        %4145 = vmatpush1.bf16.msra.mxu0 %v3132
        %4146 = vmatprep.subr.bf16.mxu0 %v3137
        %4147 = vmatpush1.bf16.msra.mxu0 %v3136
        %4148 = vmatprep.subr.bf16.mxu0 %v3141
        %4149 = vmatpush1.bf16.msra.mxu0 %v3140
        %4150 = vmatprep.subr.bf16.mxu0 %v3145
        %4151 = vmatpush1.bf16.msra.mxu0 %v3144
        %4152 = vmatprep.subr.bf16.mxu0 %v3149
        %4153 = vmatpush1.bf16.msra.mxu0 %v3148
        %4154 = vmatprep.subr.bf16.mxu0 %v3153
        %4155 = vmatpush1.bf16.msra.mxu0 %v3152
        %4156 = vmatprep.subr.bf16.mxu0 %v3157
        %4157 = vmatpush1.bf16.msra.mxu0 %v3156
        %4158 = vmatprep.subr.bf16.mxu0 %v3161
        %4159 = vmatpush1.bf16.msra.mxu0 %v3160
        %4160 = vmatprep.subr.bf16.mxu0 %v3165
        %4161 = vmatpush1.bf16.msra.mxu0 %v3164
        %4162 = vmatprep.subr.bf16.mxu0 %v3169
        %4163 = vmatpush1.bf16.msra.mxu0 %v3168
        %4164 = vmatprep.mubr.bf16.mxu0 %v1045
        %4165 = vmatmul.mubr.bf16.gmra.mrb[0].mxu0 %v1044
        %v4166 = vpop.f32.mrb[0].mxu0
        %v4167 = vadd.f32 0.0, %v4166
        %v4168 = vpop.f32.mrb[0].mxu0
        %v4169 = vadd.f32 0.0, %v4168
        %v4170 = vpop.f32.mrb[0].mxu0
        %v4171 = vpop.f32.mrb[0].mxu0
        %4172 = vdwg.mxu0
        %4173 = vmatprep.subr.bf16.mxu0 %v3173
        %4174 = vmatpush1.bf16.msra.mxu0 %v3172
        %4175 = vmatprep.subr.bf16.mxu0 %v3177
        %4176 = vmatpush1.bf16.msra.mxu0 %v3176
        %4177 = vmatprep.subr.bf16.mxu0 %v3181
        %4178 = vmatpush1.bf16.msra.mxu0 %v3180
        %4179 = vmatprep.subr.bf16.mxu0 %v3185
        %4180 = vmatpush1.bf16.msra.mxu0 %v3184
        %4181 = vmatprep.subr.bf16.mxu0 %v3189
        %4182 = vmatpush1.bf16.msra.mxu0 %v3188
        %4183 = vmatprep.subr.bf16.mxu0 %v3193
        %4184 = vmatpush1.bf16.msra.mxu0 %v3192
        %4185 = vmatprep.subr.bf16.mxu0 %v3197
        %4186 = vmatpush1.bf16.msra.mxu0 %v3196
        %4187 = vmatprep.subr.bf16.mxu0 %v3201
        %4188 = vmatpush1.bf16.msra.mxu0 %v3200
        %4189 = vmatprep.subr.bf16.mxu0 %v3205
        %4190 = vmatpush1.bf16.msra.mxu0 %v3204
        %4191 = vmatprep.subr.bf16.mxu0 %v3209
        %4192 = vmatpush1.bf16.msra.mxu0 %v3208
        %4193 = vmatprep.subr.bf16.mxu0 %v3213
        %4194 = vmatpush1.bf16.msra.mxu0 %v3212
        %4195 = vmatprep.subr.bf16.mxu0 %v3217
        %4196 = vmatpush1.bf16.msra.mxu0 %v3216
        %4197 = vmatprep.subr.bf16.mxu0 %v3221
        %4198 = vmatpush1.bf16.msra.mxu0 %v3220
        %4199 = vmatprep.subr.bf16.mxu0 %v3225
        %4200 = vmatpush1.bf16.msra.mxu0 %v3224
        %4201 = vmatprep.subr.bf16.mxu0 %v3229
        %4202 = vmatpush1.bf16.msra.mxu0 %v3228
        %4203 = vmatprep.subr.bf16.mxu0 %v3233
        %4204 = vmatpush1.bf16.msra.mxu0 %v3232
        %4205 = vmatprep.mubr.bf16.mxu0 %v1047
        %4206 = vmatmul.mubr.bf16.gmra.mrb[0].mxu0 %v1046
        %v4207 = vpop.f32.mrb[0].mxu0
        %v4208 = vadd.f32 %v4167, %v4207
        %v4209 = vpop.f32.mrb[0].mxu0
        %v4210 = vadd.f32 %v4169, %v4209
        %v4211 = vpop.f32.mrb[0].mxu0
        %v4212 = vpop.f32.mrb[0].mxu0
        %4213 = vdwg.mxu0
        %4214 = vmatprep.subr.bf16.mxu0 %v3237
        %4215 = vmatpush1.bf16.msra.mxu0 %v3236
        %4216 = vmatprep.subr.bf16.mxu0 %v3241
        %4217 = vmatpush1.bf16.msra.mxu0 %v3240
        %4218 = vmatprep.subr.bf16.mxu0 %v3245
        %4219 = vmatpush1.bf16.msra.mxu0 %v3244
        %4220 = vmatprep.subr.bf16.mxu0 %v3249
        %4221 = vmatpush1.bf16.msra.mxu0 %v3248
        %4222 = vmatprep.subr.bf16.mxu0 %v3253
        %4223 = vmatpush1.bf16.msra.mxu0 %v3252
        %4224 = vmatprep.subr.bf16.mxu0 %v3257
        %4225 = vmatpush1.bf16.msra.mxu0 %v3256
        %4226 = vmatprep.subr.bf16.mxu0 %v3261
        %4227 = vmatpush1.bf16.msra.mxu0 %v3260
        %4228 = vmatprep.subr.bf16.mxu0 %v3265
        %4229 = vmatpush1.bf16.msra.mxu0 %v3264
        %4230 = vmatprep.subr.bf16.mxu0 %v3269
        %4231 = vmatpush1.bf16.msra.mxu0 %v3268
        %4232 = vmatprep.subr.bf16.mxu0 %v3273
        %4233 = vmatpush1.bf16.msra.mxu0 %v3272
        %4234 = vmatprep.subr.bf16.mxu0 %v3277
        %4235 = vmatpush1.bf16.msra.mxu0 %v3276
        %4236 = vmatprep.subr.bf16.mxu0 %v3281
        %4237 = vmatpush1.bf16.msra.mxu0 %v3280
        %4238 = vmatprep.subr.bf16.mxu0 %v3285
        %4239 = vmatpush1.bf16.msra.mxu0 %v3284
        %4240 = vmatprep.subr.bf16.mxu0 %v3289
        %4241 = vmatpush1.bf16.msra.mxu0 %v3288
        %4242 = vmatprep.subr.bf16.mxu0 %v3293
        %4243 = vmatpush1.bf16.msra.mxu0 %v3292
        %4244 = vmatprep.subr.bf16.mxu0 %v3297
        %4245 = vmatpush1.bf16.msra.mxu0 %v3296
        %4246 = vmatprep.mubr.bf16.mxu0 %v1049
        %4247 = vmatmul.mubr.bf16.gmra.mrb[0].mxu0 %v1048
        %v4248 = vpop.f32.mrb[0].mxu0
        %v4249 = vadd.f32 %v4208, %v4248
        %v4250 = vpop.f32.mrb[0].mxu0
        %v4251 = vadd.f32 %v4210, %v4250
        %v4252 = vpop.f32.mrb[0].mxu0
        %v4253 = vpop.f32.mrb[0].mxu0
        %4254 = vdwg.mxu0
        %4255 = vmatprep.subr.bf16.mxu0 %v3301
        %4256 = vmatpush1.bf16.msra.mxu0 %v3300
        %4257 = vmatprep.subr.bf16.mxu0 %v3305
        %4258 = vmatpush1.bf16.msra.mxu0 %v3304
        %4259 = vmatprep.subr.bf16.mxu0 %v3309
        %4260 = vmatpush1.bf16.msra.mxu0 %v3308
        %4261 = vmatprep.subr.bf16.mxu0 %v3313
        %4262 = vmatpush1.bf16.msra.mxu0 %v3312
        %4263 = vmatprep.subr.bf16.mxu0 %v3317
        %4264 = vmatpush1.bf16.msra.mxu0 %v3316
        %4265 = vmatprep.subr.bf16.mxu0 %v3321
        %4266 = vmatpush1.bf16.msra.mxu0 %v3320
        %4267 = vmatprep.subr.bf16.mxu0 %v3325
        %4268 = vmatpush1.bf16.msra.mxu0 %v3324
        %4269 = vmatprep.subr.bf16.mxu0 %v3329
        %4270 = vmatpush1.bf16.msra.mxu0 %v3328
        %4271 = vmatprep.subr.bf16.mxu0 %v3333
        %4272 = vmatpush1.bf16.msra.mxu0 %v3332
        %4273 = vmatprep.subr.bf16.mxu0 %v3337
        %4274 = vmatpush1.bf16.msra.mxu0 %v3336
        %4275 = vmatprep.subr.bf16.mxu0 %v3341
        %4276 = vmatpush1.bf16.msra.mxu0 %v3340
        %4277 = vmatprep.subr.bf16.mxu0 %v3345
        %4278 = vmatpush1.bf16.msra.mxu0 %v3344
        %4279 = vmatprep.subr.bf16.mxu0 %v3349
        %4280 = vmatpush1.bf16.msra.mxu0 %v3348
        %4281 = vmatprep.subr.bf16.mxu0 %v3353
        %4282 = vmatpush1.bf16.msra.mxu0 %v3352
        %4283 = vmatprep.subr.bf16.mxu0 %v3357
        %4284 = vmatpush1.bf16.msra.mxu0 %v3356
        %4285 = vmatprep.subr.bf16.mxu0 %v3361
        %4286 = vmatpush1.bf16.msra.mxu0 %v3360
        %4287 = vmatprep.mubr.bf16.mxu0 %v1051
        %4288 = vmatmul.mubr.bf16.gmra.mrb[0].mxu0 %v1050
        %v4289 = vpop.f32.mrb[0].mxu0
        %v4290 = vadd.f32 %v4249, %v4289
        %v4291 = vpop.f32.mrb[0].mxu0
        %v4292 = vadd.f32 %v4251, %v4291
        %v4293 = vpop.f32.mrb[0].mxu0
        %v4294 = vpop.f32.mrb[0].mxu0
        %4295 = vdwg.mxu0
        %4296 = vmatprep.subr.bf16.mxu0 %v3365
        %4297 = vmatpush1.bf16.msra.mxu0 %v3364
        %4298 = vmatprep.subr.bf16.mxu0 %v3369
        %4299 = vmatpush1.bf16.msra.mxu0 %v3368
        %4300 = vmatprep.subr.bf16.mxu0 %v3373
        %4301 = vmatpush1.bf16.msra.mxu0 %v3372
        %4302 = vmatprep.subr.bf16.mxu0 %v3377
        %4303 = vmatpush1.bf16.msra.mxu0 %v3376
        %4304 = vmatprep.subr.bf16.mxu0 %v3381
        %4305 = vmatpush1.bf16.msra.mxu0 %v3380
        %4306 = vmatprep.subr.bf16.mxu0 %v3385
        %4307 = vmatpush1.bf16.msra.mxu0 %v3384
        %4308 = vmatprep.subr.bf16.mxu0 %v3389
        %4309 = vmatpush1.bf16.msra.mxu0 %v3388
        %4310 = vmatprep.subr.bf16.mxu0 %v3393
        %4311 = vmatpush1.bf16.msra.mxu0 %v3392
        %4312 = vmatprep.subr.bf16.mxu0 %v3397
        %4313 = vmatpush1.bf16.msra.mxu0 %v3396
        %4314 = vmatprep.subr.bf16.mxu0 %v3401
        %4315 = vmatpush1.bf16.msra.mxu0 %v3400
        %4316 = vmatprep.subr.bf16.mxu0 %v3405
        %4317 = vmatpush1.bf16.msra.mxu0 %v3404
        %4318 = vmatprep.subr.bf16.mxu0 %v3409
        %4319 = vmatpush1.bf16.msra.mxu0 %v3408
        %4320 = vmatprep.subr.bf16.mxu0 %v3413
        %4321 = vmatpush1.bf16.msra.mxu0 %v3412
        %4322 = vmatprep.subr.bf16.mxu0 %v3417
        %4323 = vmatpush1.bf16.msra.mxu0 %v3416
        %4324 = vmatprep.subr.bf16.mxu0 %v3421
        %4325 = vmatpush1.bf16.msra.mxu0 %v3420
        %4326 = vmatprep.subr.bf16.mxu0 %v3425
        %4327 = vmatpush1.bf16.msra.mxu0 %v3424
        %4328 = vmatprep.mubr.bf16.mxu0 %v1053
        %4329 = vmatmul.mubr.bf16.gmra.mrb[0].mxu0 %v1052
        %v4330 = vpop.f32.mrb[0].mxu0
        %v4331 = vadd.f32 %v4290, %v4330
        %v4332 = vpop.f32.mrb[0].mxu0
        %v4333 = vadd.f32 %v4292, %v4332
        %v4334 = vpop.f32.mrb[0].mxu0
        %v4335 = vpop.f32.mrb[0].mxu0
        %4336 = vdwg.mxu0
        %4337 = vmatprep.subr.bf16.mxu0 %v3429
        %4338 = vmatpush1.bf16.msra.mxu0 %v3428
        %4339 = vmatprep.subr.bf16.mxu0 %v3433
        %4340 = vmatpush1.bf16.msra.mxu0 %v3432
        %4341 = vmatprep.subr.bf16.mxu0 %v3437
        %4342 = vmatpush1.bf16.msra.mxu0 %v3436
        %4343 = vmatprep.subr.bf16.mxu0 %v3441
        %4344 = vmatpush1.bf16.msra.mxu0 %v3440
        %4345 = vmatprep.subr.bf16.mxu0 %v3445
        %4346 = vmatpush1.bf16.msra.mxu0 %v3444
        %4347 = vmatprep.subr.bf16.mxu0 %v3449
        %4348 = vmatpush1.bf16.msra.mxu0 %v3448
        %4349 = vmatprep.subr.bf16.mxu0 %v3453
        %4350 = vmatpush1.bf16.msra.mxu0 %v3452
        %4351 = vmatprep.subr.bf16.mxu0 %v3457
        %4352 = vmatpush1.bf16.msra.mxu0 %v3456
        %4353 = vmatprep.subr.bf16.mxu0 %v3461
        %4354 = vmatpush1.bf16.msra.mxu0 %v3460
        %4355 = vmatprep.subr.bf16.mxu0 %v3465
        %4356 = vmatpush1.bf16.msra.mxu0 %v3464
        %4357 = vmatprep.subr.bf16.mxu0 %v3469
        %4358 = vmatpush1.bf16.msra.mxu0 %v3468
        %4359 = vmatprep.subr.bf16.mxu0 %v3473
        %4360 = vmatpush1.bf16.msra.mxu0 %v3472
        %4361 = vmatprep.subr.bf16.mxu0 %v3477
        %4362 = vmatpush1.bf16.msra.mxu0 %v3476
        %4363 = vmatprep.subr.bf16.mxu0 %v3481
        %4364 = vmatpush1.bf16.msra.mxu0 %v3480
        %4365 = vmatprep.subr.bf16.mxu0 %v3485
        %4366 = vmatpush1.bf16.msra.mxu0 %v3484
        %4367 = vmatprep.subr.bf16.mxu0 %v3489
        %4368 = vmatpush1.bf16.msra.mxu0 %v3488
        %4369 = vmatprep.mubr.bf16.mxu0 %v1055
        %4370 = vmatmul.mubr.bf16.gmra.mrb[0].mxu0 %v1054
        %v4371 = vpop.f32.mrb[0].mxu0
        %v4372 = vadd.f32 %v4331, %v4371
        %v4373 = vpop.f32.mrb[0].mxu0
        %v4374 = vadd.f32 %v4333, %v4373
        %v4375 = vpop.f32.mrb[0].mxu0
        %v4376 = vpop.f32.mrb[0].mxu0
        %4377 = vdwg.mxu0
        %4378 = vmatprep.subr.bf16.mxu0 %v3493
        %4379 = vmatpush1.bf16.msra.mxu0 %v3492
        %4380 = vmatprep.subr.bf16.mxu0 %v3497
        %4381 = vmatpush1.bf16.msra.mxu0 %v3496
        %4382 = vmatprep.subr.bf16.mxu0 %v3501
        %4383 = vmatpush1.bf16.msra.mxu0 %v3500
        %4384 = vmatprep.subr.bf16.mxu0 %v3505
        %4385 = vmatpush1.bf16.msra.mxu0 %v3504
        %4386 = vmatprep.subr.bf16.mxu0 %v3509
        %4387 = vmatpush1.bf16.msra.mxu0 %v3508
        %4388 = vmatprep.subr.bf16.mxu0 %v3513
        %4389 = vmatpush1.bf16.msra.mxu0 %v3512
        %4390 = vmatprep.subr.bf16.mxu0 %v3517
        %4391 = vmatpush1.bf16.msra.mxu0 %v3516
        %4392 = vmatprep.subr.bf16.mxu0 %v3521
        %4393 = vmatpush1.bf16.msra.mxu0 %v3520
        %4394 = vmatprep.subr.bf16.mxu0 %v3525
        %4395 = vmatpush1.bf16.msra.mxu0 %v3524
        %4396 = vmatprep.subr.bf16.mxu0 %v3529
        %4397 = vmatpush1.bf16.msra.mxu0 %v3528
        %4398 = vmatprep.subr.bf16.mxu0 %v3533
        %4399 = vmatpush1.bf16.msra.mxu0 %v3532
        %4400 = vmatprep.subr.bf16.mxu0 %v3537
        %4401 = vmatpush1.bf16.msra.mxu0 %v3536
        %4402 = vmatprep.subr.bf16.mxu0 %v3541
        %4403 = vmatpush1.bf16.msra.mxu0 %v3540
        %4404 = vmatprep.subr.bf16.mxu0 %v3545
        %4405 = vmatpush1.bf16.msra.mxu0 %v3544
        %4406 = vmatprep.subr.bf16.mxu0 %v3549
        %4407 = vmatpush1.bf16.msra.mxu0 %v3548
        %4408 = vmatprep.subr.bf16.mxu0 %v3553
        %4409 = vmatpush1.bf16.msra.mxu0 %v3552
        %4410 = vmatprep.mubr.bf16.mxu0 %v1057
        %4411 = vmatmul.mubr.bf16.gmra.mrb[0].mxu0 %v1056
        %v4412 = vpop.f32.mrb[0].mxu0
        %v4413 = vadd.f32 %v4372, %v4412
        %v4414 = vpop.f32.mrb[0].mxu0
        %v4415 = vadd.f32 %v4374, %v4414
        %v4416 = vpop.f32.mrb[0].mxu0
        %v4417 = vpop.f32.mrb[0].mxu0
        %4418 = vdwg.mxu0
        %4419 = vmatprep.subr.bf16.mxu0 %v3557
        %4420 = vmatpush1.bf16.msra.mxu0 %v3556
        %4421 = vmatprep.subr.bf16.mxu0 %v3561
        %4422 = vmatpush1.bf16.msra.mxu0 %v3560
        %4423 = vmatprep.subr.bf16.mxu0 %v3565
        %4424 = vmatpush1.bf16.msra.mxu0 %v3564
        %4425 = vmatprep.subr.bf16.mxu0 %v3569
        %4426 = vmatpush1.bf16.msra.mxu0 %v3568
        %4427 = vmatprep.subr.bf16.mxu0 %v3573
        %4428 = vmatpush1.bf16.msra.mxu0 %v3572
        %4429 = vmatprep.subr.bf16.mxu0 %v3577
        %4430 = vmatpush1.bf16.msra.mxu0 %v3576
        %4431 = vmatprep.subr.bf16.mxu0 %v3581
        %4432 = vmatpush1.bf16.msra.mxu0 %v3580
        %4433 = vmatprep.subr.bf16.mxu0 %v3585
        %4434 = vmatpush1.bf16.msra.mxu0 %v3584
        %4435 = vmatprep.subr.bf16.mxu0 %v3589
        %4436 = vmatpush1.bf16.msra.mxu0 %v3588
        %4437 = vmatprep.subr.bf16.mxu0 %v3593
        %4438 = vmatpush1.bf16.msra.mxu0 %v3592
        %4439 = vmatprep.subr.bf16.mxu0 %v3597
        %4440 = vmatpush1.bf16.msra.mxu0 %v3596
        %4441 = vmatprep.subr.bf16.mxu0 %v3601
        %4442 = vmatpush1.bf16.msra.mxu0 %v3600
        %4443 = vmatprep.subr.bf16.mxu0 %v3605
        %4444 = vmatpush1.bf16.msra.mxu0 %v3604
        %4445 = vmatprep.subr.bf16.mxu0 %v3609
        %4446 = vmatpush1.bf16.msra.mxu0 %v3608
        %4447 = vmatprep.subr.bf16.mxu0 %v3613
        %4448 = vmatpush1.bf16.msra.mxu0 %v3612
        %4449 = vmatprep.subr.bf16.mxu0 %v3617
        %4450 = vmatpush1.bf16.msra.mxu0 %v3616
        %4451 = vmatprep.mubr.bf16.mxu0 %v1059
        %4452 = vmatmul.mubr.bf16.gmra.mrb[0].mxu0 %v1058
        %v4453 = vpop.f32.mrb[0].mxu0
        %v4454 = vadd.f32 %v4413, %v4453
        %v4455 = vpop.f32.mrb[0].mxu0
        %v4456 = vadd.f32 %v4415, %v4455
        %v4457 = vpop.f32.mrb[0].mxu0
        %v4458 = vpop.f32.mrb[0].mxu0
        %4459 = vdwg.mxu0
        %4460 = vmatprep.subr.bf16.mxu0 %v3111
        %4461 = vmatpush1.bf16.msra.mxu0 %v3110
        %4462 = vmatprep.subr.bf16.mxu0 %v3115
        %4463 = vmatpush1.bf16.msra.mxu0 %v3114
        %4464 = vmatprep.subr.bf16.mxu0 %v3119
        %4465 = vmatpush1.bf16.msra.mxu0 %v3118
        %4466 = vmatprep.subr.bf16.mxu0 %v3123
        %4467 = vmatpush1.bf16.msra.mxu0 %v3122
        %4468 = vmatprep.subr.bf16.mxu0 %v3127
        %4469 = vmatpush1.bf16.msra.mxu0 %v3126
        %4470 = vmatprep.subr.bf16.mxu0 %v3131
        %4471 = vmatpush1.bf16.msra.mxu0 %v3130
        %4472 = vmatprep.subr.bf16.mxu0 %v3135
        %4473 = vmatpush1.bf16.msra.mxu0 %v3134
        %4474 = vmatprep.subr.bf16.mxu0 %v3139
        %4475 = vmatpush1.bf16.msra.mxu0 %v3138
        %4476 = vmatprep.subr.bf16.mxu0 %v3143
        %4477 = vmatpush1.bf16.msra.mxu0 %v3142
        %4478 = vmatprep.subr.bf16.mxu0 %v3147
        %4479 = vmatpush1.bf16.msra.mxu0 %v3146
        %4480 = vmatprep.subr.bf16.mxu0 %v3151
        %4481 = vmatpush1.bf16.msra.mxu0 %v3150
        %4482 = vmatprep.subr.bf16.mxu0 %v3155
        %4483 = vmatpush1.bf16.msra.mxu0 %v3154
        %4484 = vmatprep.subr.bf16.mxu0 %v3159
        %4485 = vmatpush1.bf16.msra.mxu0 %v3158
        %4486 = vmatprep.subr.bf16.mxu0 %v3163
        %4487 = vmatpush1.bf16.msra.mxu0 %v3162
        %4488 = vmatprep.subr.bf16.mxu0 %v3167
        %4489 = vmatpush1.bf16.msra.mxu0 %v3166
        %4490 = vmatprep.subr.bf16.mxu0 %v3171
        %4491 = vmatpush1.bf16.msra.mxu0 %v3170
        %4492 = vmatprep.mubr.bf16.mxu0 %v1045
        %4493 = vmatmul.mubr.bf16.gmra.mrb[0].mxu0 %v1044
        %v4494 = vpop.f32.mrb[0].mxu0
        %v4495 = vadd.f32 0.0, %v4494
        %v4496 = vpop.f32.mrb[0].mxu0
        %v4497 = vadd.f32 0.0, %v4496
        %v4498 = vpop.f32.mrb[0].mxu0
        %v4499 = vpop.f32.mrb[0].mxu0
        %4500 = vdwg.mxu0
        %4501 = vmatprep.subr.bf16.mxu0 %v3175
        %4502 = vmatpush1.bf16.msra.mxu0 %v3174
        %4503 = vmatprep.subr.bf16.mxu0 %v3179
        %4504 = vmatpush1.bf16.msra.mxu0 %v3178
        %4505 = vmatprep.subr.bf16.mxu0 %v3183
        %4506 = vmatpush1.bf16.msra.mxu0 %v3182
        %4507 = vmatprep.subr.bf16.mxu0 %v3187
        %4508 = vmatpush1.bf16.msra.mxu0 %v3186
        %4509 = vmatprep.subr.bf16.mxu0 %v3191
        %4510 = vmatpush1.bf16.msra.mxu0 %v3190
        %4511 = vmatprep.subr.bf16.mxu0 %v3195
        %4512 = vmatpush1.bf16.msra.mxu0 %v3194
        %4513 = vmatprep.subr.bf16.mxu0 %v3199
        %4514 = vmatpush1.bf16.msra.mxu0 %v3198
        %4515 = vmatprep.subr.bf16.mxu0 %v3203
        %4516 = vmatpush1.bf16.msra.mxu0 %v3202
        %4517 = vmatprep.subr.bf16.mxu0 %v3207
        %4518 = vmatpush1.bf16.msra.mxu0 %v3206
        %4519 = vmatprep.subr.bf16.mxu0 %v3211
        %4520 = vmatpush1.bf16.msra.mxu0 %v3210
        %4521 = vmatprep.subr.bf16.mxu0 %v3215
        %4522 = vmatpush1.bf16.msra.mxu0 %v3214
        %4523 = vmatprep.subr.bf16.mxu0 %v3219
        %4524 = vmatpush1.bf16.msra.mxu0 %v3218
        %4525 = vmatprep.subr.bf16.mxu0 %v3223
        %4526 = vmatpush1.bf16.msra.mxu0 %v3222
        %4527 = vmatprep.subr.bf16.mxu0 %v3227
        %4528 = vmatpush1.bf16.msra.mxu0 %v3226
        %4529 = vmatprep.subr.bf16.mxu0 %v3231
        %4530 = vmatpush1.bf16.msra.mxu0 %v3230
        %4531 = vmatprep.subr.bf16.mxu0 %v3235
        %4532 = vmatpush1.bf16.msra.mxu0 %v3234
        %4533 = vmatprep.mubr.bf16.mxu0 %v1047
        %4534 = vmatmul.mubr.bf16.gmra.mrb[0].mxu0 %v1046
        %v4535 = vpop.f32.mrb[0].mxu0
        %v4536 = vadd.f32 %v4495, %v4535
        %v4537 = vpop.f32.mrb[0].mxu0
        %v4538 = vadd.f32 %v4497, %v4537
        %v4539 = vpop.f32.mrb[0].mxu0
        %v4540 = vpop.f32.mrb[0].mxu0
        %4541 = vdwg.mxu0
        %4542 = vmatprep.subr.bf16.mxu0 %v3239
        %4543 = vmatpush1.bf16.msra.mxu0 %v3238
        %4544 = vmatprep.subr.bf16.mxu0 %v3243
        %4545 = vmatpush1.bf16.msra.mxu0 %v3242
        %4546 = vmatprep.subr.bf16.mxu0 %v3247
        %4547 = vmatpush1.bf16.msra.mxu0 %v3246
        %4548 = vmatprep.subr.bf16.mxu0 %v3251
        %4549 = vmatpush1.bf16.msra.mxu0 %v3250
        %4550 = vmatprep.subr.bf16.mxu0 %v3255
        %4551 = vmatpush1.bf16.msra.mxu0 %v3254
        %4552 = vmatprep.subr.bf16.mxu0 %v3259
        %4553 = vmatpush1.bf16.msra.mxu0 %v3258
        %4554 = vmatprep.subr.bf16.mxu0 %v3263
        %4555 = vmatpush1.bf16.msra.mxu0 %v3262
        %4556 = vmatprep.subr.bf16.mxu0 %v3267
        %4557 = vmatpush1.bf16.msra.mxu0 %v3266
        %4558 = vmatprep.subr.bf16.mxu0 %v3271
        %4559 = vmatpush1.bf16.msra.mxu0 %v3270
        %4560 = vmatprep.subr.bf16.mxu0 %v3275
        %4561 = vmatpush1.bf16.msra.mxu0 %v3274
        %4562 = vmatprep.subr.bf16.mxu0 %v3279
        %4563 = vmatpush1.bf16.msra.mxu0 %v3278
        %4564 = vmatprep.subr.bf16.mxu0 %v3283
        %4565 = vmatpush1.bf16.msra.mxu0 %v3282
        %4566 = vmatprep.subr.bf16.mxu0 %v3287
        %4567 = vmatpush1.bf16.msra.mxu0 %v3286
        %4568 = vmatprep.subr.bf16.mxu0 %v3291
        %4569 = vmatpush1.bf16.msra.mxu0 %v3290
        %4570 = vmatprep.subr.bf16.mxu0 %v3295
        %4571 = vmatpush1.bf16.msra.mxu0 %v3294
        %4572 = vmatprep.subr.bf16.mxu0 %v3299
        %4573 = vmatpush1.bf16.msra.mxu0 %v3298
        %4574 = vmatprep.mubr.bf16.mxu0 %v1049
        %4575 = vmatmul.mubr.bf16.gmra.mrb[0].mxu0 %v1048
        %v4576 = vpop.f32.mrb[0].mxu0
        %v4577 = vadd.f32 %v4536, %v4576
        %v4578 = vpop.f32.mrb[0].mxu0
        %v4579 = vadd.f32 %v4538, %v4578
        %v4580 = vpop.f32.mrb[0].mxu0
        %v4581 = vpop.f32.mrb[0].mxu0
        %4582 = vdwg.mxu0
        %4583 = vmatprep.subr.bf16.mxu0 %v3303
        %4584 = vmatpush1.bf16.msra.mxu0 %v3302
        %4585 = vmatprep.subr.bf16.mxu0 %v3307
        %4586 = vmatpush1.bf16.msra.mxu0 %v3306
        %4587 = vmatprep.subr.bf16.mxu0 %v3311
        %4588 = vmatpush1.bf16.msra.mxu0 %v3310
        %4589 = vmatprep.subr.bf16.mxu0 %v3315
        %4590 = vmatpush1.bf16.msra.mxu0 %v3314
        %4591 = vmatprep.subr.bf16.mxu0 %v3319
        %4592 = vmatpush1.bf16.msra.mxu0 %v3318
        %4593 = vmatprep.subr.bf16.mxu0 %v3323
        %4594 = vmatpush1.bf16.msra.mxu0 %v3322
        %4595 = vmatprep.subr.bf16.mxu0 %v3327
        %4596 = vmatpush1.bf16.msra.mxu0 %v3326
        %4597 = vmatprep.subr.bf16.mxu0 %v3331
        %4598 = vmatpush1.bf16.msra.mxu0 %v3330
        %4599 = vmatprep.subr.bf16.mxu0 %v3335
        %4600 = vmatpush1.bf16.msra.mxu0 %v3334
        %4601 = vmatprep.subr.bf16.mxu0 %v3339
        %4602 = vmatpush1.bf16.msra.mxu0 %v3338
        %4603 = vmatprep.subr.bf16.mxu0 %v3343
        %4604 = vmatpush1.bf16.msra.mxu0 %v3342
        %4605 = vmatprep.subr.bf16.mxu0 %v3347
        %4606 = vmatpush1.bf16.msra.mxu0 %v3346
        %4607 = vmatprep.subr.bf16.mxu0 %v3351
        %4608 = vmatpush1.bf16.msra.mxu0 %v3350
        %4609 = vmatprep.subr.bf16.mxu0 %v3355
        %4610 = vmatpush1.bf16.msra.mxu0 %v3354
        %4611 = vmatprep.subr.bf16.mxu0 %v3359
        %4612 = vmatpush1.bf16.msra.mxu0 %v3358
        %4613 = vmatprep.subr.bf16.mxu0 %v3363
        %4614 = vmatpush1.bf16.msra.mxu0 %v3362
        %4615 = vmatprep.mubr.bf16.mxu0 %v1051
        %4616 = vmatmul.mubr.bf16.gmra.mrb[0].mxu0 %v1050
        %v4617 = vpop.f32.mrb[0].mxu0
        %v4618 = vadd.f32 %v4577, %v4617
        %v4619 = vpop.f32.mrb[0].mxu0
        %v4620 = vadd.f32 %v4579, %v4619
        %v4621 = vpop.f32.mrb[0].mxu0
        %v4622 = vpop.f32.mrb[0].mxu0
        %4623 = vdwg.mxu0
        %4624 = vmatprep.subr.bf16.mxu0 %v3367
        %4625 = vmatpush1.bf16.msra.mxu0 %v3366
        %4626 = vmatprep.subr.bf16.mxu0 %v3371
        %4627 = vmatpush1.bf16.msra.mxu0 %v3370
        %4628 = vmatprep.subr.bf16.mxu0 %v3375
        %4629 = vmatpush1.bf16.msra.mxu0 %v3374
        %4630 = vmatprep.subr.bf16.mxu0 %v3379
        %4631 = vmatpush1.bf16.msra.mxu0 %v3378
        %4632 = vmatprep.subr.bf16.mxu0 %v3383
        %4633 = vmatpush1.bf16.msra.mxu0 %v3382
        %4634 = vmatprep.subr.bf16.mxu0 %v3387
        %4635 = vmatpush1.bf16.msra.mxu0 %v3386
        %4636 = vmatprep.subr.bf16.mxu0 %v3391
        %4637 = vmatpush1.bf16.msra.mxu0 %v3390
        %4638 = vmatprep.subr.bf16.mxu0 %v3395
        %4639 = vmatpush1.bf16.msra.mxu0 %v3394
        %4640 = vmatprep.subr.bf16.mxu0 %v3399
        %4641 = vmatpush1.bf16.msra.mxu0 %v3398
        %4642 = vmatprep.subr.bf16.mxu0 %v3403
        %4643 = vmatpush1.bf16.msra.mxu0 %v3402
        %4644 = vmatprep.subr.bf16.mxu0 %v3407
        %4645 = vmatpush1.bf16.msra.mxu0 %v3406
        %4646 = vmatprep.subr.bf16.mxu0 %v3411
        %4647 = vmatpush1.bf16.msra.mxu0 %v3410
        %4648 = vmatprep.subr.bf16.mxu0 %v3415
        %4649 = vmatpush1.bf16.msra.mxu0 %v3414
        %4650 = vmatprep.subr.bf16.mxu0 %v3419
        %4651 = vmatpush1.bf16.msra.mxu0 %v3418
        %4652 = vmatprep.subr.bf16.mxu0 %v3423
        %4653 = vmatpush1.bf16.msra.mxu0 %v3422
        %4654 = vmatprep.subr.bf16.mxu0 %v3427
        %4655 = vmatpush1.bf16.msra.mxu0 %v3426
        %4656 = vmatprep.mubr.bf16.mxu0 %v1053
        %4657 = vmatmul.mubr.bf16.gmra.mrb[0].mxu0 %v1052
        %v4658 = vpop.f32.mrb[0].mxu0
        %v4659 = vadd.f32 %v4618, %v4658
        %v4660 = vpop.f32.mrb[0].mxu0
        %v4661 = vadd.f32 %v4620, %v4660
        %v4662 = vpop.f32.mrb[0].mxu0
        %v4663 = vpop.f32.mrb[0].mxu0
        %4664 = vdwg.mxu0
        %4665 = vmatprep.subr.bf16.mxu0 %v3431
        %4666 = vmatpush1.bf16.msra.mxu0 %v3430
        %4667 = vmatprep.subr.bf16.mxu0 %v3435
        %4668 = vmatpush1.bf16.msra.mxu0 %v3434
        %4669 = vmatprep.subr.bf16.mxu0 %v3439
        %4670 = vmatpush1.bf16.msra.mxu0 %v3438
        %4671 = vmatprep.subr.bf16.mxu0 %v3443
        %4672 = vmatpush1.bf16.msra.mxu0 %v3442
        %4673 = vmatprep.subr.bf16.mxu0 %v3447
        %4674 = vmatpush1.bf16.msra.mxu0 %v3446
        %4675 = vmatprep.subr.bf16.mxu0 %v3451
        %4676 = vmatpush1.bf16.msra.mxu0 %v3450
        %4677 = vmatprep.subr.bf16.mxu0 %v3455
        %4678 = vmatpush1.bf16.msra.mxu0 %v3454
        %4679 = vmatprep.subr.bf16.mxu0 %v3459
        %4680 = vmatpush1.bf16.msra.mxu0 %v3458
        %4681 = vmatprep.subr.bf16.mxu0 %v3463
        %4682 = vmatpush1.bf16.msra.mxu0 %v3462
        %4683 = vmatprep.subr.bf16.mxu0 %v3467
        %4684 = vmatpush1.bf16.msra.mxu0 %v3466
        %4685 = vmatprep.subr.bf16.mxu0 %v3471
        %4686 = vmatpush1.bf16.msra.mxu0 %v3470
        %4687 = vmatprep.subr.bf16.mxu0 %v3475
        %4688 = vmatpush1.bf16.msra.mxu0 %v3474
        %4689 = vmatprep.subr.bf16.mxu0 %v3479
        %4690 = vmatpush1.bf16.msra.mxu0 %v3478
        %4691 = vmatprep.subr.bf16.mxu0 %v3483
        %4692 = vmatpush1.bf16.msra.mxu0 %v3482
        %4693 = vmatprep.subr.bf16.mxu0 %v3487
        %4694 = vmatpush1.bf16.msra.mxu0 %v3486
        %4695 = vmatprep.subr.bf16.mxu0 %v3491
        %4696 = vmatpush1.bf16.msra.mxu0 %v3490
        %4697 = vmatprep.mubr.bf16.mxu0 %v1055
        %4698 = vmatmul.mubr.bf16.gmra.mrb[0].mxu0 %v1054
        %v4699 = vpop.f32.mrb[0].mxu0
        %v4700 = vadd.f32 %v4659, %v4699
        %v4701 = vpop.f32.mrb[0].mxu0
        %v4702 = vadd.f32 %v4661, %v4701
        %v4703 = vpop.f32.mrb[0].mxu0
        %v4704 = vpop.f32.mrb[0].mxu0
        %4705 = vdwg.mxu0
        %4706 = vmatprep.subr.bf16.mxu0 %v3495
        %4707 = vmatpush1.bf16.msra.mxu0 %v3494
        %4708 = vmatprep.subr.bf16.mxu0 %v3499
        %4709 = vmatpush1.bf16.msra.mxu0 %v3498
        %4710 = vmatprep.subr.bf16.mxu0 %v3503
        %4711 = vmatpush1.bf16.msra.mxu0 %v3502
        %4712 = vmatprep.subr.bf16.mxu0 %v3507
        %4713 = vmatpush1.bf16.msra.mxu0 %v3506
        %4714 = vmatprep.subr.bf16.mxu0 %v3511
        %4715 = vmatpush1.bf16.msra.mxu0 %v3510
        %4716 = vmatprep.subr.bf16.mxu0 %v3515
        %4717 = vmatpush1.bf16.msra.mxu0 %v3514
        %4718 = vmatprep.subr.bf16.mxu0 %v3519
        %4719 = vmatpush1.bf16.msra.mxu0 %v3518
        %4720 = vmatprep.subr.bf16.mxu0 %v3523
        %4721 = vmatpush1.bf16.msra.mxu0 %v3522
        %4722 = vmatprep.subr.bf16.mxu0 %v3527
        %4723 = vmatpush1.bf16.msra.mxu0 %v3526
        %4724 = vmatprep.subr.bf16.mxu0 %v3531
        %4725 = vmatpush1.bf16.msra.mxu0 %v3530
        %4726 = vmatprep.subr.bf16.mxu0 %v3535
        %4727 = vmatpush1.bf16.msra.mxu0 %v3534
        %4728 = vmatprep.subr.bf16.mxu0 %v3539
        %4729 = vmatpush1.bf16.msra.mxu0 %v3538
        %4730 = vmatprep.subr.bf16.mxu0 %v3543
        %4731 = vmatpush1.bf16.msra.mxu0 %v3542
        %4732 = vmatprep.subr.bf16.mxu0 %v3547
        %4733 = vmatpush1.bf16.msra.mxu0 %v3546
        %4734 = vmatprep.subr.bf16.mxu0 %v3551
        %4735 = vmatpush1.bf16.msra.mxu0 %v3550
        %4736 = vmatprep.subr.bf16.mxu0 %v3555
        %4737 = vmatpush1.bf16.msra.mxu0 %v3554
        %4738 = vmatprep.mubr.bf16.mxu0 %v1057
        %4739 = vmatmul.mubr.bf16.gmra.mrb[0].mxu0 %v1056
        %v4740 = vpop.f32.mrb[0].mxu0
        %v4741 = vadd.f32 %v4700, %v4740
        %v4742 = vpop.f32.mrb[0].mxu0
        %v4743 = vadd.f32 %v4702, %v4742
        %v4744 = vpop.f32.mrb[0].mxu0
        %v4745 = vpop.f32.mrb[0].mxu0
        %4746 = vdwg.mxu0
        %4747 = vmatprep.subr.bf16.mxu0 %v3559
        %4748 = vmatpush1.bf16.msra.mxu0 %v3558
        %4749 = vmatprep.subr.bf16.mxu0 %v3563
        %4750 = vmatpush1.bf16.msra.mxu0 %v3562
        %4751 = vmatprep.subr.bf16.mxu0 %v3567
        %4752 = vmatpush1.bf16.msra.mxu0 %v3566
        %4753 = vmatprep.subr.bf16.mxu0 %v3571
        %4754 = vmatpush1.bf16.msra.mxu0 %v3570
        %4755 = vmatprep.subr.bf16.mxu0 %v3575
        %4756 = vmatpush1.bf16.msra.mxu0 %v3574
        %4757 = vmatprep.subr.bf16.mxu0 %v3579
        %4758 = vmatpush1.bf16.msra.mxu0 %v3578
        %4759 = vmatprep.subr.bf16.mxu0 %v3583
        %4760 = vmatpush1.bf16.msra.mxu0 %v3582
        %4761 = vmatprep.subr.bf16.mxu0 %v3587
        %4762 = vmatpush1.bf16.msra.mxu0 %v3586
        %4763 = vmatprep.subr.bf16.mxu0 %v3591
        %4764 = vmatpush1.bf16.msra.mxu0 %v3590
        %4765 = vmatprep.subr.bf16.mxu0 %v3595
        %4766 = vmatpush1.bf16.msra.mxu0 %v3594
        %4767 = vmatprep.subr.bf16.mxu0 %v3599
        %4768 = vmatpush1.bf16.msra.mxu0 %v3598
        %4769 = vmatprep.subr.bf16.mxu0 %v3603
        %4770 = vmatpush1.bf16.msra.mxu0 %v3602
        %4771 = vmatprep.subr.bf16.mxu0 %v3607
        %4772 = vmatpush1.bf16.msra.mxu0 %v3606
        %4773 = vmatprep.subr.bf16.mxu0 %v3611
        %4774 = vmatpush1.bf16.msra.mxu0 %v3610
        %4775 = vmatprep.subr.bf16.mxu0 %v3615
        %4776 = vmatpush1.bf16.msra.mxu0 %v3614
        %4777 = vmatprep.subr.bf16.mxu0 %v3619
        %4778 = vmatpush1.bf16.msra.mxu0 %v3618
        %4779 = vmatprep.mubr.bf16.mxu0 %v1059
        %4780 = vmatmul.mubr.bf16.gmra.mrb[0].mxu0 %v1058
        %v4781 = vpop.f32.mrb[0].mxu0
        %v4782 = vadd.f32 %v4741, %v4781
        %v4783 = vpop.f32.mrb[0].mxu0
        %v4784 = vadd.f32 %v4743, %v4783
        %v4785 = vpop.f32.mrb[0].mxu0
        %v4786 = vpop.f32.mrb[0].mxu0
        %4787 = vdwg.mxu0
        %4788 = vrot.lane.b32.xlu0 %v4454, 9
        %v4789 = vpop.permute.xlu0 %4788
        %4790 = vrot.lane.b32.xlu0 %v4456, 9
        %v4791 = vpop.permute.xlu0 %4790
        %4792 = vrot.lane.b32.xlu0 %v4782, 9
        %v4793 = vpop.permute.xlu0 %4792
        %4794 = vrot.lane.b32.xlu0 %v4784, 9
        %v4795 = vpop.permute.xlu0 %4794
        %v4796 = vlaneseq
        %v4797 = vand.u32 %v4796, 127
        %vm4798 = vcmp.lt.s32.totalorder %v4797, 9
        %v4799 = vsel %vm4798, %v4793, %v4795
        %v4800 = vsel %vm4798, %v4791, %v4793
        %v4801 = vsel %vm4798, %v4789, %v4791
        %v4802 = vsel %vm4798, %v4795, %v4789
        %v4803 = vld [vmem:[%s6] sm:$0xf]
        %v4805 = vlaneseq
        %v4806 = vshrl.u32 %v4805, 7
        %v4807 = vsub.s32 0, %v4806
        %v4808 = vrot.slane %v4803, %v4807
        %v4809 = vlaneseq
        %v4810 = vshrl.u32 %v4809, 7
        %v4811 = vsub.s32 1, %v4810
        %v4812 = vrot.slane %v4803, %v4811
        %v4813 = vlaneseq
        %v4814 = vshrl.u32 %v4813, 7
        %v4815 = vsub.s32 2, %v4814
        %v4816 = vrot.slane %v4803, %v4815
        %v4817 = vlaneseq
        %v4818 = vshrl.u32 %v4817, 7
        %v4819 = vsub.s32 3, %v4818
        %v4820 = vrot.slane %v4803, %v4819
        %v4825 = vmul.f32 %v4802, %v4808
        %v4826 = vmul.f32 %v4801, %v4812
        %v4827 = vmul.f32 %v4800, %v4816
        %v4828 = vmul.f32 %v4799, %v4820
        %4829 = vrot.lane.b32.xlu0 %v4454, 8
        %v4830 = vpop.permute.xlu0 %4829
        %4831 = vrot.lane.b32.xlu0 %v4456, 8
        %v4832 = vpop.permute.xlu0 %4831
        %4833 = vrot.lane.b32.xlu0 %v4782, 8
        %v4834 = vpop.permute.xlu0 %4833
        %4835 = vrot.lane.b32.xlu0 %v4784, 8
        %v4836 = vpop.permute.xlu0 %4835
        %vm4837 = vcmp.lt.s32.totalorder %v4797, 8
        %v4838 = vsel %vm4837, %v4834, %v4836
        %v4839 = vsel %vm4837, %v4832, %v4834
        %v4840 = vsel %vm4837, %v4830, %v4832
        %v4841 = vsel %vm4837, %v4836, %v4830
        %s4842 = scalar_lea.vmem %s6, 4
        %v4843 = vld [vmem:[%s4842] sm:$0xf]
        %v4845 = vlaneseq
        %v4846 = vshrl.u32 %v4845, 7
        %v4847 = vsub.s32 0, %v4846
        %v4848 = vrot.slane %v4843, %v4847
        %v4849 = vlaneseq
        %v4850 = vshrl.u32 %v4849, 7
        %v4851 = vsub.s32 1, %v4850
        %v4852 = vrot.slane %v4843, %v4851
        %v4853 = vlaneseq
        %v4854 = vshrl.u32 %v4853, 7
        %v4855 = vsub.s32 2, %v4854
        %v4856 = vrot.slane %v4843, %v4855
        %v4857 = vlaneseq
        %v4858 = vshrl.u32 %v4857, 7
        %v4859 = vsub.s32 3, %v4858
        %v4860 = vrot.slane %v4843, %v4859
        %v4865 = vmul.f32 %v4841, %v4848
        %v4866 = vmul.f32 %v4840, %v4852
        %v4867 = vmul.f32 %v4839, %v4856
        %v4868 = vmul.f32 %v4838, %v4860
        %4869 = vrot.lane.b32.xlu0 %v4454, 7
        %v4870 = vpop.permute.xlu0 %4869
        %4871 = vrot.lane.b32.xlu0 %v4456, 7
        %v4872 = vpop.permute.xlu0 %4871
        %4873 = vrot.lane.b32.xlu0 %v4782, 7
        %v4874 = vpop.permute.xlu0 %4873
        %4875 = vrot.lane.b32.xlu0 %v4784, 7
        %v4876 = vpop.permute.xlu0 %4875
        %vm4877 = vcmp.lt.s32.totalorder %v4797, 7
        %v4878 = vsel %vm4877, %v4874, %v4876
        %v4879 = vsel %vm4877, %v4872, %v4874
        %v4880 = vsel %vm4877, %v4870, %v4872
        %v4881 = vsel %vm4877, %v4876, %v4870
        %s4882 = scalar_lea.vmem %s6, 8
        %v4883 = vld [vmem:[%s4882] sm:$0xf]
        %v4885 = vlaneseq
        %v4886 = vshrl.u32 %v4885, 7
        %v4887 = vsub.s32 0, %v4886
        %v4888 = vrot.slane %v4883, %v4887
        %v4889 = vlaneseq
        %v4890 = vshrl.u32 %v4889, 7
        %v4891 = vsub.s32 1, %v4890
        %v4892 = vrot.slane %v4883, %v4891
        %v4893 = vlaneseq
        %v4894 = vshrl.u32 %v4893, 7
        %v4895 = vsub.s32 2, %v4894
        %v4896 = vrot.slane %v4883, %v4895
        %v4897 = vlaneseq
        %v4898 = vshrl.u32 %v4897, 7
        %v4899 = vsub.s32 3, %v4898
        %v4900 = vrot.slane %v4883, %v4899
        %v4905 = vmul.f32 %v4881, %v4888
        %v4906 = vmul.f32 %v4880, %v4892
        %v4907 = vmul.f32 %v4879, %v4896
        %v4908 = vmul.f32 %v4878, %v4900
        %4909 = vrot.lane.b32.xlu0 %v4454, 1
        %v4910 = vpop.permute.xlu0 %4909
        %4911 = vrot.lane.b32.xlu0 %v4456, 1
        %v4912 = vpop.permute.xlu0 %4911
        %4913 = vrot.lane.b32.xlu0 %v4782, 1
        %v4914 = vpop.permute.xlu0 %4913
        %4915 = vrot.lane.b32.xlu0 %v4784, 1
        %v4916 = vpop.permute.xlu0 %4915
        %vm4917 = vcmp.lt.s32.totalorder %v4797, 1
        %v4918 = vsel %vm4917, %v4914, %v4916
        %v4919 = vsel %vm4917, %v4912, %v4914
        %v4920 = vsel %vm4917, %v4910, %v4912
        %v4921 = vsel %vm4917, %v4916, %v4910
        %s4922 = scalar_lea.vmem %s6, 12
        %v4923 = vld [vmem:[%s4922] sm:$0xf]
        %v4925 = vlaneseq
        %v4926 = vshrl.u32 %v4925, 7
        %v4927 = vsub.s32 0, %v4926
        %v4928 = vrot.slane %v4923, %v4927
        %v4929 = vlaneseq
        %v4930 = vshrl.u32 %v4929, 7
        %v4931 = vsub.s32 1, %v4930
        %v4932 = vrot.slane %v4923, %v4931
        %v4933 = vlaneseq
        %v4934 = vshrl.u32 %v4933, 7
        %v4935 = vsub.s32 2, %v4934
        %v4936 = vrot.slane %v4923, %v4935
        %v4937 = vlaneseq
        %v4938 = vshrl.u32 %v4937, 7
        %v4939 = vsub.s32 3, %v4938
        %v4940 = vrot.slane %v4923, %v4939
        %v4945 = vmul.f32 %v4921, %v4928
        %v4946 = vmul.f32 %v4920, %v4932
        %v4947 = vmul.f32 %v4919, %v4936
        %v4948 = vmul.f32 %v4918, %v4940
        %s4949 = scalar_lea.vmem %s6, 16
        %v4950 = vld [vmem:[%s4949] sm:$0xf]
        %v4952 = vlaneseq
        %v4953 = vshrl.u32 %v4952, 7
        %v4954 = vsub.s32 0, %v4953
        %v4955 = vrot.slane %v4950, %v4954
        %v4956 = vlaneseq
        %v4957 = vshrl.u32 %v4956, 7
        %v4958 = vsub.s32 1, %v4957
        %v4959 = vrot.slane %v4950, %v4958
        %v4960 = vlaneseq
        %v4961 = vshrl.u32 %v4960, 7
        %v4962 = vsub.s32 2, %v4961
        %v4963 = vrot.slane %v4950, %v4962
        %v4964 = vlaneseq
        %v4965 = vshrl.u32 %v4964, 7
        %v4966 = vsub.s32 3, %v4965
        %v4967 = vrot.slane %v4950, %v4966
        %v4972 = vmul.f32 %v4454, %v4955
        %v4973 = vmul.f32 %v4456, %v4959
        %v4974 = vmul.f32 %v4782, %v4963
        %v4975 = vmul.f32 %v4784, %v4967
        %4976 = vrot.lane.b32.xlu0 %v4454, 127
        %v4977 = vpop.permute.xlu0 %4976
        %4978 = vrot.lane.b32.xlu0 %v4456, 127
        %v4979 = vpop.permute.xlu0 %4978
        %4980 = vrot.lane.b32.xlu0 %v4782, 127
        %v4981 = vpop.permute.xlu0 %4980
        %4982 = vrot.lane.b32.xlu0 %v4784, 127
        %v4983 = vpop.permute.xlu0 %4982
        %vm4984 = vcmp.lt.s32.totalorder %v4797, 127
        %v4985 = vsel %vm4984, %v4981, %v4983
        %v4986 = vsel %vm4984, %v4979, %v4981
        %v4987 = vsel %vm4984, %v4977, %v4979
        %v4988 = vsel %vm4984, %v4983, %v4977
        %s4989 = scalar_lea.vmem %s6, 20
        %v4990 = vld [vmem:[%s4989] sm:$0xf]
        %v4992 = vlaneseq
        %v4993 = vshrl.u32 %v4992, 7
        %v4994 = vsub.s32 0, %v4993
        %v4995 = vrot.slane %v4990, %v4994
        %v4996 = vlaneseq
        %v4997 = vshrl.u32 %v4996, 7
        %v4998 = vsub.s32 1, %v4997
        %v4999 = vrot.slane %v4990, %v4998
        %v5000 = vlaneseq
        %v5001 = vshrl.u32 %v5000, 7
        %v5002 = vsub.s32 2, %v5001
        %v5003 = vrot.slane %v4990, %v5002
        %v5004 = vlaneseq
        %v5005 = vshrl.u32 %v5004, 7
        %v5006 = vsub.s32 3, %v5005
        %v5007 = vrot.slane %v4990, %v5006
        %v5012 = vmul.f32 %v4987, %v4995
        %v5013 = vmul.f32 %v4986, %v4999
        %v5014 = vmul.f32 %v4985, %v5003
        %v5015 = vmul.f32 %v4988, %v5007
        %5016 = vrot.lane.b32.xlu0 %v4454, 121
        %v5017 = vpop.permute.xlu0 %5016
        %5018 = vrot.lane.b32.xlu0 %v4456, 121
        %v5019 = vpop.permute.xlu0 %5018
        %5020 = vrot.lane.b32.xlu0 %v4782, 121
        %v5021 = vpop.permute.xlu0 %5020
        %5022 = vrot.lane.b32.xlu0 %v4784, 121
        %v5023 = vpop.permute.xlu0 %5022
        %vm5024 = vcmp.lt.s32.totalorder %v4797, 121
        %v5025 = vsel %vm5024, %v5021, %v5023
        %v5026 = vsel %vm5024, %v5019, %v5021
        %v5027 = vsel %vm5024, %v5017, %v5019
        %v5028 = vsel %vm5024, %v5023, %v5017
        %s5029 = scalar_lea.vmem %s6, 24
        %v5030 = vld [vmem:[%s5029] sm:$0xf]
        %v5032 = vlaneseq
        %v5033 = vshrl.u32 %v5032, 7
        %v5034 = vsub.s32 0, %v5033
        %v5035 = vrot.slane %v5030, %v5034
        %v5036 = vlaneseq
        %v5037 = vshrl.u32 %v5036, 7
        %v5038 = vsub.s32 1, %v5037
        %v5039 = vrot.slane %v5030, %v5038
        %v5040 = vlaneseq
        %v5041 = vshrl.u32 %v5040, 7
        %v5042 = vsub.s32 2, %v5041
        %v5043 = vrot.slane %v5030, %v5042
        %v5044 = vlaneseq
        %v5045 = vshrl.u32 %v5044, 7
        %v5046 = vsub.s32 3, %v5045
        %v5047 = vrot.slane %v5030, %v5046
        %v5052 = vmul.f32 %v5027, %v5035
        %v5053 = vmul.f32 %v5026, %v5039
        %v5054 = vmul.f32 %v5025, %v5043
        %v5055 = vmul.f32 %v5028, %v5047
        %5056 = vrot.lane.b32.xlu0 %v4454, 120
        %v5057 = vpop.permute.xlu0 %5056
        %5058 = vrot.lane.b32.xlu0 %v4456, 120
        %v5059 = vpop.permute.xlu0 %5058
        %5060 = vrot.lane.b32.xlu0 %v4782, 120
        %v5061 = vpop.permute.xlu0 %5060
        %5062 = vrot.lane.b32.xlu0 %v4784, 120
        %v5063 = vpop.permute.xlu0 %5062
        %vm5064 = vcmp.lt.s32.totalorder %v4797, 120
        %v5065 = vsel %vm5064, %v5061, %v5063
        %v5066 = vsel %vm5064, %v5059, %v5061
        %v5067 = vsel %vm5064, %v5057, %v5059
        %v5068 = vsel %vm5064, %v5063, %v5057
        %s5069 = scalar_lea.vmem %s6, 28
        %v5070 = vld [vmem:[%s5069] sm:$0xf]
        %v5072 = vlaneseq
        %v5073 = vshrl.u32 %v5072, 7
        %v5074 = vsub.s32 0, %v5073
        %v5075 = vrot.slane %v5070, %v5074
        %v5076 = vlaneseq
        %v5077 = vshrl.u32 %v5076, 7
        %v5078 = vsub.s32 1, %v5077
        %v5079 = vrot.slane %v5070, %v5078
        %v5080 = vlaneseq
        %v5081 = vshrl.u32 %v5080, 7
        %v5082 = vsub.s32 2, %v5081
        %v5083 = vrot.slane %v5070, %v5082
        %v5084 = vlaneseq
        %v5085 = vshrl.u32 %v5084, 7
        %v5086 = vsub.s32 3, %v5085
        %v5087 = vrot.slane %v5070, %v5086
        %v5092 = vmul.f32 %v5067, %v5075
        %v5093 = vmul.f32 %v5066, %v5079
        %v5094 = vmul.f32 %v5065, %v5083
        %v5095 = vmul.f32 %v5068, %v5087
        %5096 = vrot.lane.b32.xlu0 %v4454, 119
        %v5097 = vpop.permute.xlu0 %5096
        %5098 = vrot.lane.b32.xlu0 %v4456, 119
        %v5099 = vpop.permute.xlu0 %5098
        %5100 = vrot.lane.b32.xlu0 %v4782, 119
        %v5101 = vpop.permute.xlu0 %5100
        %5102 = vrot.lane.b32.xlu0 %v4784, 119
        %v5103 = vpop.permute.xlu0 %5102
        %vm5104 = vcmp.lt.s32.totalorder %v4797, 119
        %v5105 = vsel %vm5104, %v5101, %v5103
        %v5106 = vsel %vm5104, %v5099, %v5101
        %v5107 = vsel %vm5104, %v5097, %v5099
        %v5108 = vsel %vm5104, %v5103, %v5097
        %s5109 = scalar_lea.vmem %s6, 32
        %v5110 = vld [vmem:[%s5109] sm:$0xf]
        %v5112 = vlaneseq
        %v5113 = vshrl.u32 %v5112, 7
        %v5114 = vsub.s32 0, %v5113
        %v5115 = vrot.slane %v5110, %v5114
        %v5116 = vlaneseq
        %v5117 = vshrl.u32 %v5116, 7
        %v5118 = vsub.s32 1, %v5117
        %v5119 = vrot.slane %v5110, %v5118
        %v5120 = vlaneseq
        %v5121 = vshrl.u32 %v5120, 7
        %v5122 = vsub.s32 2, %v5121
        %v5123 = vrot.slane %v5110, %v5122
        %v5124 = vlaneseq
        %v5125 = vshrl.u32 %v5124, 7
        %v5126 = vsub.s32 3, %v5125
        %v5127 = vrot.slane %v5110, %v5126
        %v5132 = vmul.f32 %v5107, %v5115
        %v5133 = vmul.f32 %v5106, %v5119
        %v5134 = vmul.f32 %v5105, %v5123
        %v5135 = vmul.f32 %v5108, %v5127
        %v5136 = vld [vmem:[%s7] sm:$0xff]
        %v5137 = vld [vmem:[%s7 + $0x8] sm:$0xff]
        %vm5138 = vcmask 588800
        %v5140 = vsel %vm5138, %v5136, 0
        %v5143 = vsel %vm5138, %v5137, 0
        %5145 = vmatprep.subr.mxu0 %v4826
        %5146 = vmatpush1.msra.mxu0 %v4825
        %5147 = vmatprep.subr.mxu0 %v4866
        %5148 = vmatpush1.msra.mxu0 %v4865
        %5149 = vmatprep.subr.mxu0 %v4906
        %5150 = vmatpush1.msra.mxu0 %v4905
        %5151 = vmatprep.subr.mxu0 %v4946
        %5152 = vmatpush1.msra.mxu0 %v4945
        %5153 = vmatprep.subr.mxu0 %v4973
        %5154 = vmatpush1.msra.mxu0 %v4972
        %5155 = vmatprep.subr.mxu0 %v5013
        %5156 = vmatpush1.msra.mxu0 %v5012
        %5157 = vmatprep.subr.mxu0 %v5053
        %5158 = vmatpush1.msra.mxu0 %v5052
        %5159 = vmatprep.subr.mxu0 %v5093
        %5160 = vmatpush1.msra.mxu0 %v5092
        %5161 = vmatprep.subr.mxu0 %v5133
        %5162 = vmatpush1.msra.mxu0 %v5132
        %5163 = vmatprep.subr.mxu0 0.0
        %5164 = vmatpush1.msra.mxu0 0.0
        %5165 = vmatprep.subr.mxu0 0.0
        %5166 = vmatpush1.msra.mxu0 0.0
        %5167 = vmatprep.subr.mxu0 0.0
        %5168 = vmatpush1.msra.mxu0 0.0
        %5169 = vmatprep.subr.mxu0 0.0
        %5170 = vmatpush1.msra.mxu0 0.0
        %5171 = vmatprep.subr.mxu0 0.0
        %5172 = vmatpush1.msra.mxu0 0.0
        %5173 = vmatprep.subr.mxu0 0.0
        %5174 = vmatpush1.msra.mxu0 0.0
        %5175 = vmatprep.subr.mxu0 0.0
        %5176 = vmatpush1.msra.mxu0 0.0
        %5177 = vmatprep.subr.mxu0 0.0
        %5178 = vmatpush1.msra.mxu0 0.0
        %5179 = vmatprep.subr.mxu0 0.0
        %5180 = vmatpush1.msra.mxu0 0.0
        %5181 = vmatprep.subr.mxu0 0.0
        %5182 = vmatpush1.msra.mxu0 0.0
        %5183 = vmatprep.subr.mxu0 0.0
        %5184 = vmatpush1.msra.mxu0 0.0
        %5185 = vmatprep.subr.mxu0 0.0
        %5186 = vmatpush1.msra.mxu0 0.0
        %5187 = vmatprep.subr.mxu0 0.0
        %5188 = vmatpush1.msra.mxu0 0.0
        %5189 = vmatprep.subr.mxu0 0.0
        %5190 = vmatpush1.msra.mxu0 0.0
        %5191 = vmatprep.subr.mxu0 0.0
        %5192 = vmatpush1.msra.mxu0 0.0
        %5193 = vmatprep.subr.mxu0 0.0
        %5194 = vmatpush1.msra.mxu0 0.0
        %5195 = vmatprep.subr.mxu0 0.0
        %5196 = vmatpush1.msra.mxu0 0.0
        %5197 = vmatprep.subr.mxu0 0.0
        %5198 = vmatpush1.msra.mxu0 0.0
        %5199 = vmatprep.subr.mxu0 0.0
        %5200 = vmatpush1.msra.mxu0 0.0
        %5201 = vmatprep.subr.mxu0 0.0
        %5202 = vmatpush1.msra.mxu0 0.0
        %5203 = vmatprep.subr.mxu0 0.0
        %5204 = vmatpush1.msra.mxu0 0.0
        %5205 = vmatprep.subr.mxu0 0.0
        %5206 = vmatpush1.msra.mxu0 0.0
        %5207 = vmatprep.subr.mxu0 0.0
        %5208 = vmatpush1.msra.mxu0 0.0
        %5209 = vmatprep.mubr.f32.mxu0 0.0
        %5210 = vmatmul.mubr.f32.gmra.mrb[0].mxu0 %v5140
        %v5211 = vpop.f32.mrb[0].mxu0
        %v5212 = vadd.f32 0.0, %v5211
        %v5213 = vpop.f32.mrb[0].mxu0
        %v5214 = vadd.f32 0.0, %v5213
        %5215 = vmatprep.mubr.f32.mxu0 0.0
        %5216 = vmatmul.mubr.f32.gmra.mrb[0].mxu0 %v5143
        %v5217 = vpop.f32.mrb[0].mxu0
        %v5218 = vadd.f32 0.0, %v5217
        %v5219 = vpop.f32.mrb[0].mxu0
        %v5220 = vadd.f32 0.0, %v5219
        %5221 = vdwg.mxu0
        %5222 = vmatprep.subr.mxu0 %v4828
        %5223 = vmatpush1.msra.mxu0 %v4827
        %5224 = vmatprep.subr.mxu0 %v4868
        %5225 = vmatpush1.msra.mxu0 %v4867
        %5226 = vmatprep.subr.mxu0 %v4908
        %5227 = vmatpush1.msra.mxu0 %v4907
        %5228 = vmatprep.subr.mxu0 %v4948
        %5229 = vmatpush1.msra.mxu0 %v4947
        %5230 = vmatprep.subr.mxu0 %v4975
        %5231 = vmatpush1.msra.mxu0 %v4974
        %5232 = vmatprep.subr.mxu0 %v5015
        %5233 = vmatpush1.msra.mxu0 %v5014
        %5234 = vmatprep.subr.mxu0 %v5055
        %5235 = vmatpush1.msra.mxu0 %v5054
        %5236 = vmatprep.subr.mxu0 %v5095
        %5237 = vmatpush1.msra.mxu0 %v5094
        %5238 = vmatprep.subr.mxu0 %v5135
        %5239 = vmatpush1.msra.mxu0 %v5134
        %5240 = vmatprep.subr.mxu0 0.0
        %5241 = vmatpush1.msra.mxu0 0.0
        %5242 = vmatprep.subr.mxu0 0.0
        %5243 = vmatpush1.msra.mxu0 0.0
        %5244 = vmatprep.subr.mxu0 0.0
        %5245 = vmatpush1.msra.mxu0 0.0
        %5246 = vmatprep.subr.mxu0 0.0
        %5247 = vmatpush1.msra.mxu0 0.0
        %5248 = vmatprep.subr.mxu0 0.0
        %5249 = vmatpush1.msra.mxu0 0.0
        %5250 = vmatprep.subr.mxu0 0.0
        %5251 = vmatpush1.msra.mxu0 0.0
        %5252 = vmatprep.subr.mxu0 0.0
        %5253 = vmatpush1.msra.mxu0 0.0
        %5254 = vmatprep.subr.mxu0 0.0
        %5255 = vmatpush1.msra.mxu0 0.0
        %5256 = vmatprep.subr.mxu0 0.0
        %5257 = vmatpush1.msra.mxu0 0.0
        %5258 = vmatprep.subr.mxu0 0.0
        %5259 = vmatpush1.msra.mxu0 0.0
        %5260 = vmatprep.subr.mxu0 0.0
        %5261 = vmatpush1.msra.mxu0 0.0
        %5262 = vmatprep.subr.mxu0 0.0
        %5263 = vmatpush1.msra.mxu0 0.0
        %5264 = vmatprep.subr.mxu0 0.0
        %5265 = vmatpush1.msra.mxu0 0.0
        %5266 = vmatprep.subr.mxu0 0.0
        %5267 = vmatpush1.msra.mxu0 0.0
        %5268 = vmatprep.subr.mxu0 0.0
        %5269 = vmatpush1.msra.mxu0 0.0
        %5270 = vmatprep.subr.mxu0 0.0
        %5271 = vmatpush1.msra.mxu0 0.0
        %5272 = vmatprep.subr.mxu0 0.0
        %5273 = vmatpush1.msra.mxu0 0.0
        %5274 = vmatprep.subr.mxu0 0.0
        %5275 = vmatpush1.msra.mxu0 0.0
        %5276 = vmatprep.subr.mxu0 0.0
        %5277 = vmatpush1.msra.mxu0 0.0
        %5278 = vmatprep.subr.mxu0 0.0
        %5279 = vmatpush1.msra.mxu0 0.0
        %5280 = vmatprep.subr.mxu0 0.0
        %5281 = vmatpush1.msra.mxu0 0.0
        %5282 = vmatprep.subr.mxu0 0.0
        %5283 = vmatpush1.msra.mxu0 0.0
        %5284 = vmatprep.subr.mxu0 0.0
        %5285 = vmatpush1.msra.mxu0 0.0
        %5286 = vmatprep.mubr.f32.mxu0 0.0
        %5287 = vmatmul.mubr.f32.gmra.mrb[0].mxu0 %v5140
        %v5288 = vpop.f32.mrb[0].mxu0
        %v5289 = vadd.f32 0.0, %v5288
        %v5290 = vpop.f32.mrb[0].mxu0
        %v5291 = vadd.f32 0.0, %v5290
        %5292 = vmatprep.mubr.f32.mxu0 0.0
        %5293 = vmatmul.mubr.f32.gmra.mrb[0].mxu0 %v5143
        %v5294 = vpop.f32.mrb[0].mxu0
        %v5295 = vadd.f32 0.0, %v5294
        %v5296 = vpop.f32.mrb[0].mxu0
        %v5297 = vadd.f32 0.0, %v5296
        %5298 = vdwg.mxu0
        %v5299 = vstv %s851
        %v5300 = vmul.f32 %v5299, %v5212
        %v5301 = vmul.f32 %v5299, %v5214
        %v5302 = vmul.f32 %v5299, %v5289
        %v5303 = vmul.f32 %v5299, %v5291
        %v5304 = vmul.f32 %v5299, %v5218
        %v5305 = vmul.f32 %v5299, %v5220
        %v5306 = vmul.f32 %v5299, %v5295
        %v5307 = vmul.f32 %v5299, %v5297
        %v5308 = vld [vmem:[%s8] sm:$0xff]
        %v5309 = vld [vmem:[%s8 + $0x8] sm:$0xff]
        %5311 = vset.pattern.permute.xlu0 0
        %5312 = vperm.xlu0 %5311, %v5308
        %v5313 = vpop.permute.xlu0 %5312
        %5316 = vset.pattern.permute.xlu0 0
        %5317 = vperm.xlu0 %5316, %v5309
        %v5318 = vpop.permute.xlu0 %5317
        %v5320 = vadd.f32 %v5300, %v5313
        %v5321 = vadd.f32 %v5301, %v5313
        %v5322 = vadd.f32 %v5302, %v5313
        %v5323 = vadd.f32 %v5303, %v5313
        %v5324 = vadd.f32 %v5304, %v5318
        %v5325 = vadd.f32 %v5305, %v5318
        %v5326 = vadd.f32 %v5306, %v5318
        %v5327 = vadd.f32 %v5307, %v5318
        %v5328 = vld [vmem:[#allocation4] sm:$0xff]
        %v5329 = vld [vmem:[#allocation4 + $0x8] sm:$0xff]
        %v5330 = vld [vmem:[#allocation4 + $0x10] sm:$0xff]
        %v5331 = vld [vmem:[#allocation4 + $0x18] sm:$0xff]
        %v5332 = vld [vmem:[#allocation4 + $0x20] sm:$0xff]
        %v5333 = vld [vmem:[#allocation4 + $0x28] sm:$0xff]
        %v5334 = vld [vmem:[#allocation4 + $0x30] sm:$0xff]
        %v5335 = vld [vmem:[#allocation4 + $0x38] sm:$0xff]
        %v5336 = vld [vmem:[#allocation5] sm:$0xff]
        %v5337 = vld [vmem:[#allocation5 + $0x8] sm:$0xff]
        %v5338 = vld [vmem:[#allocation5 + $0x10] sm:$0xff]
        %v5339 = vld [vmem:[#allocation5 + $0x18] sm:$0xff]
        %v5340 = vld [vmem:[#allocation5 + $0x20] sm:$0xff]
        %v5341 = vld [vmem:[#allocation5 + $0x28] sm:$0xff]
        %v5342 = vld [vmem:[#allocation5 + $0x30] sm:$0xff]
        %v5343 = vld [vmem:[#allocation5 + $0x38] sm:$0xff]
        %v5344 = vsub.f32 1.0, %v5336
        %v5345 = vsub.f32 1.0, %v5337
        %v5346 = vsub.f32 1.0, %v5338
        %v5347 = vsub.f32 1.0, %v5339
        %v5348 = vsub.f32 1.0, %v5340
        %v5349 = vsub.f32 1.0, %v5341
        %v5350 = vsub.f32 1.0, %v5342
        %v5351 = vsub.f32 1.0, %v5343
        %v5352 = vmul.f32 %v5328, %v5344
        %v5353 = vmul.f32 %v5329, %v5345
        %v5354 = vmul.f32 %v5330, %v5346
        %v5355 = vmul.f32 %v5331, %v5347
        %v5356 = vmul.f32 %v5332, %v5348
        %v5357 = vmul.f32 %v5333, %v5349
        %v5358 = vmul.f32 %v5334, %v5350
        %v5359 = vmul.f32 %v5335, %v5351
        %v5360 = vmul.f32 %v5352, 0.75
        %v5361 = vmul.f32 %v5353, 0.75
        %v5362 = vmul.f32 %v5354, 0.75
        %v5363 = vmul.f32 %v5355, 0.75
        %v5364 = vmul.f32 %v5356, 0.75
        %v5365 = vmul.f32 %v5357, 0.75
        %v5366 = vmul.f32 %v5358, 0.75
        %v5367 = vmul.f32 %v5359, 0.75
        %v5368 = vadd.f32 %v5360, %v5320
        %v5369 = vadd.f32 %v5361, %v5321
        %v5370 = vadd.f32 %v5362, %v5322
        %v5371 = vadd.f32 %v5363, %v5323
        %v5372 = vadd.f32 %v5364, %v5324
        %v5373 = vadd.f32 %v5365, %v5325
        %v5374 = vadd.f32 %v5366, %v5326
        %v5375 = vadd.f32 %v5367, %v5327
        %vm5376 = vcmp.gt.f32.partialorder %v5368, 0.45
        %vm5377 = vcmp.gt.f32.partialorder %v5369, 0.45
        %vm5378 = vcmp.gt.f32.partialorder %v5370, 0.45
        %vm5379 = vcmp.gt.f32.partialorder %v5371, 0.45
        %vm5380 = vcmp.gt.f32.partialorder %v5372, 0.45
        %vm5381 = vcmp.gt.f32.partialorder %v5373, 0.45
        %vm5382 = vcmp.gt.f32.partialorder %v5374, 0.45
        %vm5383 = vcmp.gt.f32.partialorder %v5375, 0.45
        %v5384 = vsel %vm5376, 1, 0
        %v5385 = vsel %vm5377, 1, 0
        %v5386 = vsel %vm5378, 1, 0
        %v5387 = vsel %vm5379, 1, 0
        %v5388 = vsel %vm5380, 1, 0
        %v5389 = vsel %vm5381, 1, 0
        %v5390 = vsel %vm5382, 1, 0
        %v5391 = vsel %vm5383, 1, 0
        %v5392 = vcvt.s32.f32 %v5384
        %v5393 = vcvt.s32.f32 %v5385
        %v5394 = vcvt.s32.f32 %v5386
        %v5395 = vcvt.s32.f32 %v5387
        %v5396 = vcvt.s32.f32 %v5388
        %v5397 = vcvt.s32.f32 %v5389
        %v5398 = vcvt.s32.f32 %v5390
        %v5399 = vcvt.s32.f32 %v5391
        %5400 = vst [vmem:[#allocation4] sm:$0xff] %v5368
        %5401 = vst [vmem:[#allocation4 + $0x8] sm:$0xff] %v5369
        %5402 = vst [vmem:[#allocation4 + $0x10] sm:$0xff] %v5370
        %5403 = vst [vmem:[#allocation4 + $0x18] sm:$0xff] %v5371
        %5404 = vst [vmem:[#allocation4 + $0x20] sm:$0xff] %v5372
        %5405 = vst [vmem:[#allocation4 + $0x28] sm:$0xff] %v5373
        %5406 = vst [vmem:[#allocation4 + $0x30] sm:$0xff] %v5374
        %5407 = vst [vmem:[#allocation4 + $0x38] sm:$0xff] %v5375
        %5408 = vst [vmem:[#allocation5] sm:$0xff] %v5392
        %5409 = vst [vmem:[#allocation5 + $0x8] sm:$0xff] %v5393
        %5410 = vst [vmem:[#allocation5 + $0x10] sm:$0xff] %v5394
        %5411 = vst [vmem:[#allocation5 + $0x18] sm:$0xff] %v5395
        %5412 = vst [vmem:[#allocation5 + $0x20] sm:$0xff] %v5396
        %5413 = vst [vmem:[#allocation5 + $0x28] sm:$0xff] %v5397
        %5414 = vst [vmem:[#allocation5 + $0x30] sm:$0xff] %v5398
        %5415 = vst [vmem:[#allocation5 + $0x38] sm:$0xff] %v5399
        %v5416 = vpack.c.bf16 %v5396, %v5392
        %v5417 = vpack.c.bf16 %v5397, %v5393
        %v5418 = vpack.c.bf16 %v5398, %v5394
        %v5419 = vpack.c.bf16 %v5399, %v5395
        %v5420 = vld [vmem:[%s9] sm:$0xf]
        %v5421 = vld [vmem:[%s9 + $0x4] sm:$0xf]
        %v5422 = vld [vmem:[%s9 + $0x8] sm:$0xf]
        %v5423 = vld [vmem:[%s9 + $0xc] sm:$0xf]
        %v5424 = vld [vmem:[%s9 + $0x10] sm:$0xf]
        %v5425 = vld [vmem:[%s9 + $0x14] sm:$0xf]
        %v5426 = vld [vmem:[%s9 + $0x18] sm:$0xf]
        %v5427 = vld [vmem:[%s9 + $0x1c] sm:$0xf]
        %v5428 = vld [vmem:[%s9 + $0x20] sm:$0xf]
        %v5429 = vld [vmem:[%s9 + $0x24] sm:$0xf]
        %v5430 = vld [vmem:[%s9 + $0x28] sm:$0xf]
        %v5431 = vld [vmem:[%s9 + $0x2c] sm:$0xf]
        %v5432 = vld [vmem:[%s9 + $0x30] sm:$0xf]
        %v5433 = vld [vmem:[%s9 + $0x34] sm:$0xf]
        %v5434 = vld [vmem:[%s9 + $0x38] sm:$0xf]
        %v5435 = vld [vmem:[%s9 + $0x3c] sm:$0xf]
        %v5436 = vld [vmem:[%s9 + $0x40] sm:$0xf]
        %v5437 = vld [vmem:[%s9 + $0x44] sm:$0xf]
        %v5438 = vld [vmem:[%s9 + $0x48] sm:$0xf]
        %v5439 = vld [vmem:[%s9 + $0x4c] sm:$0xf]
        %v5440 = vld [vmem:[%s9 + $0x50] sm:$0xf]
        %v5441 = vld [vmem:[%s9 + $0x54] sm:$0xf]
        %v5442 = vld [vmem:[%s9 + $0x58] sm:$0xf]
        %v5443 = vld [vmem:[%s9 + $0x5c] sm:$0xf]
        %v5444 = vld [vmem:[%s9 + $0x60] sm:$0xf]
        %v5445 = vld [vmem:[%s9 + $0x64] sm:$0xf]
        %v5446 = vld [vmem:[%s9 + $0x68] sm:$0xf]
        %v5447 = vld [vmem:[%s9 + $0x6c] sm:$0xf]
        %v5448 = vld [vmem:[%s9 + $0x70] sm:$0xf]
        %v5449 = vld [vmem:[%s9 + $0x74] sm:$0xf]
        %v5450 = vld [vmem:[%s9 + $0x78] sm:$0xf]
        %v5451 = vld [vmem:[%s9 + $0x7c] sm:$0xf]
        %v5452 = vld [vmem:[%s9 + $0x80] sm:$0xf]
        %v5453 = vld [vmem:[%s9 + $0x84] sm:$0xf]
        %v5454 = vld [vmem:[%s9 + $0x88] sm:$0xf]
        %v5455 = vld [vmem:[%s9 + $0x8c] sm:$0xf]
        %v5456 = vld [vmem:[%s9 + $0x90] sm:$0xf]
        %v5457 = vld [vmem:[%s9 + $0x94] sm:$0xf]
        %v5458 = vld [vmem:[%s9 + $0x98] sm:$0xf]
        %v5459 = vld [vmem:[%s9 + $0x9c] sm:$0xf]
        %v5460 = vld [vmem:[%s9 + $0xa0] sm:$0xf]
        %v5461 = vld [vmem:[%s9 + $0xa4] sm:$0xf]
        %v5462 = vld [vmem:[%s9 + $0xa8] sm:$0xf]
        %v5463 = vld [vmem:[%s9 + $0xac] sm:$0xf]
        %v5464 = vld [vmem:[%s9 + $0xb0] sm:$0xf]
        %v5465 = vld [vmem:[%s9 + $0xb4] sm:$0xf]
        %v5466 = vld [vmem:[%s9 + $0xb8] sm:$0xf]
        %v5467 = vld [vmem:[%s9 + $0xbc] sm:$0xf]
        %v5468 = vld [vmem:[%s9 + $0xc0] sm:$0xf]
        %v5469 = vld [vmem:[%s9 + $0xc4] sm:$0xf]
        %v5470 = vld [vmem:[%s9 + $0xc8] sm:$0xf]
        %v5471 = vld [vmem:[%s9 + $0xcc] sm:$0xf]
        %v5472 = vld [vmem:[%s9 + $0xd0] sm:$0xf]
        %v5473 = vld [vmem:[%s9 + $0xd4] sm:$0xf]
        %v5474 = vld [vmem:[%s9 + $0xd8] sm:$0xf]
        %v5475 = vld [vmem:[%s9 + $0xdc] sm:$0xf]
        %v5476 = vld [vmem:[%s9 + $0xe0] sm:$0xf]
        %v5477 = vld [vmem:[%s9 + $0xe4] sm:$0xf]
        %v5478 = vld [vmem:[%s9 + $0xe8] sm:$0xf]
        %v5479 = vld [vmem:[%s9 + $0xec] sm:$0xf]
        %v5480 = vld [vmem:[%s9 + $0xf0] sm:$0xf]
        %v5481 = vld [vmem:[%s9 + $0xf4] sm:$0xf]
        %v5482 = vld [vmem:[%s9 + $0xf8] sm:$0xf]
        %v5483 = vld [vmem:[%s9 + $0xfc] sm:$0xf]
        %v5548 = vunpack.c.l.b16 %v5420
        %v5549 = vunpack.c.l.b16 %v5421
        %v5550 = vunpack.c.l.b16 %v5422
        %v5551 = vunpack.c.l.b16 %v5423
        %v5552 = vunpack.c.l.b16 %v5424
        %v5553 = vunpack.c.l.b16 %v5425
        %v5554 = vunpack.c.l.b16 %v5426
        %v5555 = vunpack.c.l.b16 %v5427
        %v5556 = vunpack.c.l.b16 %v5428
        %v5557 = vunpack.c.l.b16 %v5429
        %v5558 = vunpack.c.l.b16 %v5430
        %v5559 = vunpack.c.l.b16 %v5431
        %v5560 = vunpack.c.l.b16 %v5432
        %v5561 = vunpack.c.l.b16 %v5433
        %v5562 = vunpack.c.l.b16 %v5434
        %v5563 = vunpack.c.l.b16 %v5435
        %v5564 = vunpack.c.l.b16 %v5436
        %v5565 = vunpack.c.l.b16 %v5437
        %v5566 = vunpack.c.l.b16 %v5438
        %v5567 = vunpack.c.l.b16 %v5439
        %v5568 = vunpack.c.l.b16 %v5440
        %v5569 = vunpack.c.l.b16 %v5441
        %v5570 = vunpack.c.l.b16 %v5442
        %v5571 = vunpack.c.l.b16 %v5443
        %v5572 = vunpack.c.l.b16 %v5444
        %v5573 = vunpack.c.l.b16 %v5445
        %v5574 = vunpack.c.l.b16 %v5446
        %v5575 = vunpack.c.l.b16 %v5447
        %v5576 = vunpack.c.l.b16 %v5448
        %v5577 = vunpack.c.l.b16 %v5449
        %v5578 = vunpack.c.l.b16 %v5450
        %v5579 = vunpack.c.l.b16 %v5451
        %v5580 = vunpack.c.l.b16 %v5452
        %v5581 = vunpack.c.l.b16 %v5453
        %v5582 = vunpack.c.l.b16 %v5454
        %v5583 = vunpack.c.l.b16 %v5455
        %v5584 = vunpack.c.l.b16 %v5456
        %v5585 = vunpack.c.l.b16 %v5457
        %v5586 = vunpack.c.l.b16 %v5458
        %v5587 = vunpack.c.l.b16 %v5459
        %v5588 = vunpack.c.l.b16 %v5460
        %v5589 = vunpack.c.l.b16 %v5461
        %v5590 = vunpack.c.l.b16 %v5462
        %v5591 = vunpack.c.l.b16 %v5463
        %v5592 = vunpack.c.l.b16 %v5464
        %v5593 = vunpack.c.l.b16 %v5465
        %v5594 = vunpack.c.l.b16 %v5466
        %v5595 = vunpack.c.l.b16 %v5467
        %v5596 = vunpack.c.l.b16 %v5468
        %v5597 = vunpack.c.l.b16 %v5469
        %v5598 = vunpack.c.l.b16 %v5470
        %v5599 = vunpack.c.l.b16 %v5471
        %v5600 = vunpack.c.l.b16 %v5472
        %v5601 = vunpack.c.l.b16 %v5473
        %v5602 = vunpack.c.l.b16 %v5474
        %v5603 = vunpack.c.l.b16 %v5475
        %v5604 = vunpack.c.l.b16 %v5476
        %v5605 = vunpack.c.l.b16 %v5477
        %v5606 = vunpack.c.l.b16 %v5478
        %v5607 = vunpack.c.l.b16 %v5479
        %v5608 = vunpack.c.l.b16 %v5480
        %v5609 = vunpack.c.l.b16 %v5481
        %v5610 = vunpack.c.l.b16 %v5482
        %v5611 = vunpack.c.l.b16 %v5483
        %v5612 = vpack.c.b16 %v5549, %v5548
        %v5613 = vpack.c.b16 %v5551, %v5550
        %v5614 = vpack.c.b16 %v5553, %v5552
        %v5615 = vpack.c.b16 %v5555, %v5554
        %v5616 = vpack.c.b16 %v5557, %v5556
        %v5617 = vpack.c.b16 %v5559, %v5558
        %v5618 = vpack.c.b16 %v5561, %v5560
        %v5619 = vpack.c.b16 %v5563, %v5562
        %v5620 = vpack.c.b16 %v5565, %v5564
        %v5621 = vpack.c.b16 %v5567, %v5566
        %v5622 = vpack.c.b16 %v5569, %v5568
        %v5623 = vpack.c.b16 %v5571, %v5570
        %v5624 = vpack.c.b16 %v5573, %v5572
        %v5625 = vpack.c.b16 %v5575, %v5574
        %v5626 = vpack.c.b16 %v5577, %v5576
        %v5627 = vpack.c.b16 %v5579, %v5578
        %v5628 = vpack.c.b16 %v5581, %v5580
        %v5629 = vpack.c.b16 %v5583, %v5582
        %v5630 = vpack.c.b16 %v5585, %v5584
        %v5631 = vpack.c.b16 %v5587, %v5586
        %v5632 = vpack.c.b16 %v5589, %v5588
        %v5633 = vpack.c.b16 %v5591, %v5590
        %v5634 = vpack.c.b16 %v5593, %v5592
        %v5635 = vpack.c.b16 %v5595, %v5594
        %v5636 = vpack.c.b16 %v5597, %v5596
        %v5637 = vpack.c.b16 %v5599, %v5598
        %v5638 = vpack.c.b16 %v5601, %v5600
        %v5639 = vpack.c.b16 %v5603, %v5602
        %v5640 = vpack.c.b16 %v5605, %v5604
        %v5641 = vpack.c.b16 %v5607, %v5606
        %v5642 = vpack.c.b16 %v5609, %v5608
        %v5643 = vpack.c.b16 %v5611, %v5610
        %5676 = vmatprep.subr.bf16.mxu0 0
        %5677 = vmatpush1.bf16.msra.mxu0 %v5612
        %5678 = vmatprep.subr.bf16.mxu0 0
        %5679 = vmatpush1.bf16.msra.mxu0 %v5613
        %5680 = vmatprep.subr.bf16.mxu0 0
        %5681 = vmatpush1.bf16.msra.mxu0 %v5614
        %5682 = vmatprep.subr.bf16.mxu0 0
        %5683 = vmatpush1.bf16.msra.mxu0 %v5615
        %5684 = vmatprep.subr.bf16.mxu0 0
        %5685 = vmatpush1.bf16.msra.mxu0 %v5616
        %5686 = vmatprep.subr.bf16.mxu0 0
        %5687 = vmatpush1.bf16.msra.mxu0 %v5617
        %5688 = vmatprep.subr.bf16.mxu0 0
        %5689 = vmatpush1.bf16.msra.mxu0 %v5618
        %5690 = vmatprep.subr.bf16.mxu0 0
        %5691 = vmatpush1.bf16.msra.mxu0 %v5619
        %5692 = vmatprep.subr.bf16.mxu0 0
        %5693 = vmatpush1.bf16.msra.mxu0 %v5620
        %5694 = vmatprep.subr.bf16.mxu0 0
        %5695 = vmatpush1.bf16.msra.mxu0 %v5621
        %5696 = vmatprep.subr.bf16.mxu0 0
        %5697 = vmatpush1.bf16.msra.mxu0 %v5622
        %5698 = vmatprep.subr.bf16.mxu0 0
        %5699 = vmatpush1.bf16.msra.mxu0 %v5623
        %5700 = vmatprep.subr.bf16.mxu0 0
        %5701 = vmatpush1.bf16.msra.mxu0 %v5624
        %5702 = vmatprep.subr.bf16.mxu0 0
        %5703 = vmatpush1.bf16.msra.mxu0 %v5625
        %5704 = vmatprep.subr.bf16.mxu0 0
        %5705 = vmatpush1.bf16.msra.mxu0 %v5626
        %5706 = vmatprep.subr.bf16.mxu0 0
        %5707 = vmatpush1.bf16.msra.mxu0 %v5627
        %5708 = vmatprep.mubr.bf16.mxu0 %v5417
        %5709 = vmatmul.mubr.bf16.gmra.mrb[0].mxu0 %v5416
        %v5710 = vpop.f32.mrb[0].mxu0
        %v5711 = vadd.f32 0.0, %v5710
        %v5712 = vpop.f32.mrb[0].mxu0
        %v5713 = vpop.f32.mrb[0].mxu0
        %v5714 = vadd.f32 0.0, %v5713
        %v5715 = vpop.f32.mrb[0].mxu0
        %5716 = vdwg.mxu0
        %5717 = vmatprep.subr.bf16.mxu0 0
        %5718 = vmatpush1.bf16.msra.mxu0 %v5628
        %5719 = vmatprep.subr.bf16.mxu0 0
        %5720 = vmatpush1.bf16.msra.mxu0 %v5629
        %5721 = vmatprep.subr.bf16.mxu0 0
        %5722 = vmatpush1.bf16.msra.mxu0 %v5630
        %5723 = vmatprep.subr.bf16.mxu0 0
        %5724 = vmatpush1.bf16.msra.mxu0 %v5631
        %5725 = vmatprep.subr.bf16.mxu0 0
        %5726 = vmatpush1.bf16.msra.mxu0 %v5632
        %5727 = vmatprep.subr.bf16.mxu0 0
        %5728 = vmatpush1.bf16.msra.mxu0 %v5633
        %5729 = vmatprep.subr.bf16.mxu0 0
        %5730 = vmatpush1.bf16.msra.mxu0 %v5634
        %5731 = vmatprep.subr.bf16.mxu0 0
        %5732 = vmatpush1.bf16.msra.mxu0 %v5635
        %5733 = vmatprep.subr.bf16.mxu0 0
        %5734 = vmatpush1.bf16.msra.mxu0 %v5636
        %5735 = vmatprep.subr.bf16.mxu0 0
        %5736 = vmatpush1.bf16.msra.mxu0 %v5637
        %5737 = vmatprep.subr.bf16.mxu0 0
        %5738 = vmatpush1.bf16.msra.mxu0 %v5638
        %5739 = vmatprep.subr.bf16.mxu0 0
        %5740 = vmatpush1.bf16.msra.mxu0 %v5639
        %5741 = vmatprep.subr.bf16.mxu0 0
        %5742 = vmatpush1.bf16.msra.mxu0 %v5640
        %5743 = vmatprep.subr.bf16.mxu0 0
        %5744 = vmatpush1.bf16.msra.mxu0 %v5641
        %5745 = vmatprep.subr.bf16.mxu0 0
        %5746 = vmatpush1.bf16.msra.mxu0 %v5642
        %5747 = vmatprep.subr.bf16.mxu0 0
        %5748 = vmatpush1.bf16.msra.mxu0 %v5643
        %5749 = vmatprep.mubr.bf16.mxu0 %v5419
        %5750 = vmatmul.mubr.bf16.gmra.mrb[0].mxu0 %v5418
        %v5751 = vpop.f32.mrb[0].mxu0
        %v5752 = vadd.f32 %v5711, %v5751
        %v5753 = vpop.f32.mrb[0].mxu0
        %v5754 = vpop.f32.mrb[0].mxu0
        %v5755 = vadd.f32 %v5714, %v5754
        %v5756 = vpop.f32.mrb[0].mxu0
        %5757 = vdwg.mxu0
        %5758 = vrot.lane.b32.xlu0 %v5752, 5
        %v5759 = vpop.permute.xlu0 %5758
        %5760 = vrot.lane.b32.xlu0 %v5755, 5
        %v5761 = vpop.permute.xlu0 %5760
        %v5762 = vld [vmem:[%s10] sm:$0x1]
        %v5764 = vlaneseq
        %v5765 = vshrl.u32 %v5764, 7
        %v5766 = vsub.s32 0, %v5765
        %v5767 = vrot.slane %v5762, %v5766
        %v5769 = vmul.f32 %v5759, %v5767
        %v5770 = vmul.f32 %v5761, %v5767
        %5771 = vrot.lane.b32.xlu0 %v5752, 4
        %v5772 = vpop.permute.xlu0 %5771
        %5773 = vrot.lane.b32.xlu0 %v5755, 4
        %v5774 = vpop.permute.xlu0 %5773
        %s5775 = scalar_lea.vmem %s10, 1
        %v5776 = vld [vmem:[%s5775] sm:$0x1]
        %v5778 = vlaneseq
        %v5779 = vshrl.u32 %v5778, 7
        %v5780 = vsub.s32 0, %v5779
        %v5781 = vrot.slane %v5776, %v5780
        %v5783 = vmul.f32 %v5772, %v5781
        %v5784 = vmul.f32 %v5774, %v5781
        %5785 = vrot.lane.b32.xlu0 %v5752, 3
        %v5786 = vpop.permute.xlu0 %5785
        %5787 = vrot.lane.b32.xlu0 %v5755, 3
        %v5788 = vpop.permute.xlu0 %5787
        %s5789 = scalar_lea.vmem %s10, 2
        %v5790 = vld [vmem:[%s5789] sm:$0x1]
        %v5792 = vlaneseq
        %v5793 = vshrl.u32 %v5792, 7
        %v5794 = vsub.s32 0, %v5793
        %v5795 = vrot.slane %v5790, %v5794
        %v5797 = vmul.f32 %v5786, %v5795
        %v5798 = vmul.f32 %v5788, %v5795
        %5799 = vrot.lane.b32.xlu0 %v5752, 1
        %v5800 = vpop.permute.xlu0 %5799
        %5801 = vrot.lane.b32.xlu0 %v5755, 1
        %v5802 = vpop.permute.xlu0 %5801
        %s5803 = scalar_lea.vmem %s10, 3
        %v5804 = vld [vmem:[%s5803] sm:$0x1]
        %v5806 = vlaneseq
        %v5807 = vshrl.u32 %v5806, 7
        %v5808 = vsub.s32 0, %v5807
        %v5809 = vrot.slane %v5804, %v5808
        %v5811 = vmul.f32 %v5800, %v5809
        %v5812 = vmul.f32 %v5802, %v5809
        %s5813 = scalar_lea.vmem %s10, 4
        %v5814 = vld [vmem:[%s5813] sm:$0x1]
        %v5816 = vlaneseq
        %v5817 = vshrl.u32 %v5816, 7
        %v5818 = vsub.s32 0, %v5817
        %v5819 = vrot.slane %v5814, %v5818
        %v5821 = vmul.f32 %v5752, %v5819
        %v5822 = vmul.f32 %v5755, %v5819
        %5823 = vrot.lane.b32.xlu0 %v5752, 127
        %v5824 = vpop.permute.xlu0 %5823
        %5825 = vrot.lane.b32.xlu0 %v5755, 127
        %v5826 = vpop.permute.xlu0 %5825
        %s5827 = scalar_lea.vmem %s10, 5
        %v5828 = vld [vmem:[%s5827] sm:$0x1]
        %v5830 = vlaneseq
        %v5831 = vshrl.u32 %v5830, 7
        %v5832 = vsub.s32 0, %v5831
        %v5833 = vrot.slane %v5828, %v5832
        %v5835 = vmul.f32 %v5824, %v5833
        %v5836 = vmul.f32 %v5826, %v5833
        %5837 = vrot.lane.b32.xlu0 %v5752, 125
        %v5838 = vpop.permute.xlu0 %5837
        %5839 = vrot.lane.b32.xlu0 %v5755, 125
        %v5840 = vpop.permute.xlu0 %5839
        %s5841 = scalar_lea.vmem %s10, 6
        %v5842 = vld [vmem:[%s5841] sm:$0x1]
        %v5844 = vlaneseq
        %v5845 = vshrl.u32 %v5844, 7
        %v5846 = vsub.s32 0, %v5845
        %v5847 = vrot.slane %v5842, %v5846
        %v5849 = vmul.f32 %v5838, %v5847
        %v5850 = vmul.f32 %v5840, %v5847
        %5851 = vrot.lane.b32.xlu0 %v5752, 124
        %v5852 = vpop.permute.xlu0 %5851
        %5853 = vrot.lane.b32.xlu0 %v5755, 124
        %v5854 = vpop.permute.xlu0 %5853
        %s5855 = scalar_lea.vmem %s10, 7
        %v5856 = vld [vmem:[%s5855] sm:$0x1]
        %v5858 = vlaneseq
        %v5859 = vshrl.u32 %v5858, 7
        %v5860 = vsub.s32 0, %v5859
        %v5861 = vrot.slane %v5856, %v5860
        %v5863 = vmul.f32 %v5852, %v5861
        %v5864 = vmul.f32 %v5854, %v5861
        %5865 = vrot.lane.b32.xlu0 %v5752, 123
        %v5866 = vpop.permute.xlu0 %5865
        %5867 = vrot.lane.b32.xlu0 %v5755, 123
        %v5868 = vpop.permute.xlu0 %5867
        %s5869 = scalar_lea.vmem %s10, 8
        %v5870 = vld [vmem:[%s5869] sm:$0x1]
        %v5872 = vlaneseq
        %v5873 = vshrl.u32 %v5872, 7
        %v5874 = vsub.s32 0, %v5873
        %v5875 = vrot.slane %v5870, %v5874
        %v5877 = vmul.f32 %v5866, %v5875
        %v5878 = vmul.f32 %v5868, %v5875
        %v5879 = vld [vmem:[%s11] sm:$0xff]
        %v5880 = vld [vmem:[%s11 + $0x8] sm:$0xff]
        %v5881 = vld [vmem:[%s11 + $0x10] sm:$0xff]
        %v5882 = vld [vmem:[%s11 + $0x18] sm:$0xff]
        %vm5883 = vcmask 130048
        %v5885 = vsel %vm5883, %v5880, 0
        %v5888 = vsel %vm5883, %v5882, 0
        %5890 = vmatprep.subr.mxu0 0.0
        %5891 = vmatpush1.msra.mxu0 %v5769
        %5892 = vmatprep.subr.mxu0 0.0
        %5893 = vmatpush1.msra.mxu0 %v5770
        %5894 = vmatprep.subr.mxu0 0.0
        %5895 = vmatpush1.msra.mxu0 %v5783
        %5896 = vmatprep.subr.mxu0 0.0
        %5897 = vmatpush1.msra.mxu0 %v5784
        %5898 = vmatprep.subr.mxu0 0.0
        %5899 = vmatpush1.msra.mxu0 %v5797
        %5900 = vmatprep.subr.mxu0 0.0
        %5901 = vmatpush1.msra.mxu0 %v5798
        %5902 = vmatprep.subr.mxu0 0.0
        %5903 = vmatpush1.msra.mxu0 %v5811
        %5904 = vmatprep.subr.mxu0 0.0
        %5905 = vmatpush1.msra.mxu0 %v5812
        %5906 = vmatprep.subr.mxu0 0.0
        %5907 = vmatpush1.msra.mxu0 %v5821
        %5908 = vmatprep.subr.mxu0 0.0
        %5909 = vmatpush1.msra.mxu0 %v5822
        %5910 = vmatprep.subr.mxu0 0.0
        %5911 = vmatpush1.msra.mxu0 %v5835
        %5912 = vmatprep.subr.mxu0 0.0
        %5913 = vmatpush1.msra.mxu0 %v5836
        %5914 = vmatprep.subr.mxu0 0.0
        %5915 = vmatpush1.msra.mxu0 %v5849
        %5916 = vmatprep.subr.mxu0 0.0
        %5917 = vmatpush1.msra.mxu0 %v5850
        %5918 = vmatprep.subr.mxu0 0.0
        %5919 = vmatpush1.msra.mxu0 %v5863
        %5920 = vmatprep.subr.mxu0 0.0
        %5921 = vmatpush1.msra.mxu0 %v5864
        %5922 = vmatprep.subr.mxu0 0.0
        %5923 = vmatpush1.msra.mxu0 %v5877
        %5924 = vmatprep.subr.mxu0 0.0
        %5925 = vmatpush1.msra.mxu0 %v5878
        %5926 = vmatprep.subr.mxu0 0.0
        %5927 = vmatpush1.msra.mxu0 0.0
        %5928 = vmatprep.subr.mxu0 0.0
        %5929 = vmatpush1.msra.mxu0 0.0
        %5930 = vmatprep.subr.mxu0 0.0
        %5931 = vmatpush1.msra.mxu0 0.0
        %5932 = vmatprep.subr.mxu0 0.0
        %5933 = vmatpush1.msra.mxu0 0.0
        %5934 = vmatprep.subr.mxu0 0.0
        %5935 = vmatpush1.msra.mxu0 0.0
        %5936 = vmatprep.subr.mxu0 0.0
        %5937 = vmatpush1.msra.mxu0 0.0
        %5938 = vmatprep.subr.mxu0 0.0
        %5939 = vmatpush1.msra.mxu0 0.0
        %5940 = vmatprep.subr.mxu0 0.0
        %5941 = vmatpush1.msra.mxu0 0.0
        %5942 = vmatprep.subr.mxu0 0.0
        %5943 = vmatpush1.msra.mxu0 0.0
        %5944 = vmatprep.subr.mxu0 0.0
        %5945 = vmatpush1.msra.mxu0 0.0
        %5946 = vmatprep.subr.mxu0 0.0
        %5947 = vmatpush1.msra.mxu0 0.0
        %5948 = vmatprep.subr.mxu0 0.0
        %5949 = vmatpush1.msra.mxu0 0.0
        %5950 = vmatprep.subr.mxu0 0.0
        %5951 = vmatpush1.msra.mxu0 0.0
        %5952 = vmatprep.subr.mxu0 0.0
        %5953 = vmatpush1.msra.mxu0 0.0
        %5954 = vmatprep.mubr.f32.mxu0 %v5885
        %5955 = vmatmul.mubr.f32.gmra.mrb[0].mxu0 %v5879
        %v5956 = vpop.f32.mrb[0].mxu0
        %v5957 = vadd.f32 0.0, %v5956
        %v5958 = vpop.f32.mrb[0].mxu0
        %5959 = vmatprep.mubr.f32.mxu0 %v5888
        %5960 = vmatmul.mubr.f32.gmra.mrb[0].mxu0 %v5881
        %v5961 = vpop.f32.mrb[0].mxu0
        %v5962 = vadd.f32 0.0, %v5961
        %v5963 = vpop.f32.mrb[0].mxu0
        %5964 = vdwg.mxu0
        %v5965 = vmul.f32 %v5299, %v5957
        %v5966 = vmul.f32 %v5299, %v5962
        %v5967 = vld [vmem:[%s12] sm:$0xff]
        %v5968 = vld [vmem:[%s12 + $0x8] sm:$0xff]
        %5970 = vset.pattern.permute.xlu0 0
        %5971 = vperm.xlu0 %5970, %v5967
        %v5972 = vpop.permute.xlu0 %5971
        %5975 = vset.pattern.permute.xlu0 0
        %5976 = vperm.xlu0 %5975, %v5968
        %v5977 = vpop.permute.xlu0 %5976
        %v5979 = vadd.f32 %v5965, %v5972
        %v5980 = vadd.f32 %v5966, %v5977
        %v5981 = vld [vmem:[#allocation6] sm:$0xff]
        %v5982 = vld [vmem:[#allocation6 + $0x8] sm:$0xff]
        %v5983 = vld [vmem:[#allocation7] sm:$0xff]
        %v5984 = vld [vmem:[#allocation7 + $0x8] sm:$0xff]
        %v5985 = vsub.f32 1.0, %v5983
        %v5986 = vsub.f32 1.0, %v5984
        %v5987 = vmul.f32 %v5981, %v5985
        %v5988 = vmul.f32 %v5982, %v5986
        %v5989 = vmul.f32 %v5987, 0.75
        %v5990 = vmul.f32 %v5988, 0.75
        %v5991 = vadd.f32 %v5989, %v5979
        %v5992 = vadd.f32 %v5990, %v5980
        %vm5993 = vcmp.gt.f32.partialorder %v5991, 0.45
        %vm5994 = vcmp.gt.f32.partialorder %v5992, 0.45
        %v5995 = vsel %vm5993, 1, 0
        %v5996 = vsel %vm5994, 1, 0
        %v5997 = vcvt.s32.f32 %v5995
        %v5998 = vcvt.s32.f32 %v5996
        %5999 = vst [vmem:[#allocation6] sm:$0xff] %v5991
        %6000 = vst [vmem:[#allocation6 + $0x8] sm:$0xff] %v5992
        %6001 = vst [vmem:[#allocation7] sm:$0xff] %v5997
        %6002 = vst [vmem:[#allocation7 + $0x8] sm:$0xff] %v5998
        %v6003 = vpack.c.bf16 %v5998, %v5997
        %v6004 = vld [vmem:[%s13] sm:$0xf]
        %v6005 = vld [vmem:[%s13 + $0x4] sm:$0xf]
        %v6006 = vld [vmem:[%s13 + $0x8] sm:$0xf]
        %v6007 = vld [vmem:[%s13 + $0xc] sm:$0xf]
        %v6008 = vld [vmem:[%s13 + $0x10] sm:$0xf]
        %v6009 = vld [vmem:[%s13 + $0x14] sm:$0xf]
        %v6010 = vld [vmem:[%s13 + $0x18] sm:$0xf]
        %v6011 = vld [vmem:[%s13 + $0x1c] sm:$0xf]
        %v6012 = vld [vmem:[%s13 + $0x20] sm:$0xf]
        %v6013 = vld [vmem:[%s13 + $0x24] sm:$0xf]
        %v6014 = vld [vmem:[%s13 + $0x28] sm:$0xf]
        %v6015 = vld [vmem:[%s13 + $0x2c] sm:$0xf]
        %v6016 = vld [vmem:[%s13 + $0x30] sm:$0xf]
        %v6017 = vld [vmem:[%s13 + $0x34] sm:$0xf]
        %v6018 = vld [vmem:[%s13 + $0x38] sm:$0xf]
        %v6019 = vld [vmem:[%s13 + $0x3c] sm:$0xf]
        %v6036 = vunpack.c.l.b16 %v6004
        %v6037 = vunpack.c.l.b16 %v6005
        %v6038 = vunpack.c.l.b16 %v6006
        %v6039 = vunpack.c.l.b16 %v6007
        %v6040 = vunpack.c.l.b16 %v6008
        %v6041 = vunpack.c.l.b16 %v6009
        %v6042 = vunpack.c.l.b16 %v6010
        %v6043 = vunpack.c.l.b16 %v6011
        %v6044 = vunpack.c.l.b16 %v6012
        %v6045 = vunpack.c.l.b16 %v6013
        %v6046 = vunpack.c.l.b16 %v6014
        %v6047 = vunpack.c.l.b16 %v6015
        %v6048 = vunpack.c.l.b16 %v6016
        %v6049 = vunpack.c.l.b16 %v6017
        %v6050 = vunpack.c.l.b16 %v6018
        %v6051 = vunpack.c.l.b16 %v6019
        %v6052 = vpack.c.b16 %v6037, %v6036
        %v6053 = vpack.c.b16 %v6039, %v6038
        %v6054 = vpack.c.b16 %v6041, %v6040
        %v6055 = vpack.c.b16 %v6043, %v6042
        %v6056 = vpack.c.b16 %v6045, %v6044
        %v6057 = vpack.c.b16 %v6047, %v6046
        %v6058 = vpack.c.b16 %v6049, %v6048
        %v6059 = vpack.c.b16 %v6051, %v6050
        %6068 = vmatprep.subr.bf16.mxu0 0
        %6069 = vmatpush1.bf16.msra.mxu0 %v6052
        %6070 = vmatprep.subr.bf16.mxu0 0
        %6071 = vmatpush1.bf16.msra.mxu0 %v6053
        %6072 = vmatprep.subr.bf16.mxu0 0
        %6073 = vmatpush1.bf16.msra.mxu0 %v6054
        %6074 = vmatprep.subr.bf16.mxu0 0
        %6075 = vmatpush1.bf16.msra.mxu0 %v6055
        %6076 = vmatprep.subr.bf16.mxu0 0
        %6077 = vmatpush1.bf16.msra.mxu0 %v6056
        %6078 = vmatprep.subr.bf16.mxu0 0
        %6079 = vmatpush1.bf16.msra.mxu0 %v6057
        %6080 = vmatprep.subr.bf16.mxu0 0
        %6081 = vmatpush1.bf16.msra.mxu0 %v6058
        %6082 = vmatprep.subr.bf16.mxu0 0
        %6083 = vmatpush1.bf16.msra.mxu0 %v6059
        %6084 = vmatprep.subr.bf16.mxu0 0
        %6085 = vmatpush1.bf16.msra.mxu0 0
        %6086 = vmatprep.subr.bf16.mxu0 0
        %6087 = vmatpush1.bf16.msra.mxu0 0
        %6088 = vmatprep.subr.bf16.mxu0 0
        %6089 = vmatpush1.bf16.msra.mxu0 0
        %6090 = vmatprep.subr.bf16.mxu0 0
        %6091 = vmatpush1.bf16.msra.mxu0 0
        %6092 = vmatprep.subr.bf16.mxu0 0
        %6093 = vmatpush1.bf16.msra.mxu0 0
        %6094 = vmatprep.subr.bf16.mxu0 0
        %6095 = vmatpush1.bf16.msra.mxu0 0
        %6096 = vmatprep.subr.bf16.mxu0 0
        %6097 = vmatpush1.bf16.msra.mxu0 0
        %6098 = vmatprep.subr.bf16.mxu0 0
        %6099 = vmatpush1.bf16.msra.mxu0 0
        %6100 = vmatprep.mubr.bf16.mxu0 0
        %6101 = vmatmul.mubr.bf16.gmra.mrb[0].mxu0 %v6003
        %v6102 = vpop.f32.mrb[0].mxu0
        %v6103 = vadd.f32 0.0, %v6102
        %v6104 = vpop.f32.mrb[0].mxu0
        %v6105 = vpop.f32.mrb[0].mxu0
        %v6106 = vadd.f32 0.0, %v6105
        %v6107 = vpop.f32.mrb[0].mxu0
        %6108 = vdwg.mxu0
        %s6109 = scalar_lea.vmem %s13, 64
        %v6110 = vld [vmem:[%s6109] sm:$0xf]
        %v6111 = vld [vmem:[%s6109 + $0x4] sm:$0xf]
        %v6112 = vld [vmem:[%s6109 + $0x8] sm:$0xf]
        %v6113 = vld [vmem:[%s6109 + $0xc] sm:$0xf]
        %v6114 = vld [vmem:[%s6109 + $0x10] sm:$0xf]
        %v6115 = vld [vmem:[%s6109 + $0x14] sm:$0xf]
        %v6116 = vld [vmem:[%s6109 + $0x18] sm:$0xf]
        %v6117 = vld [vmem:[%s6109 + $0x1c] sm:$0xf]
        %v6118 = vld [vmem:[%s6109 + $0x20] sm:$0xf]
        %v6119 = vld [vmem:[%s6109 + $0x24] sm:$0xf]
        %v6120 = vld [vmem:[%s6109 + $0x28] sm:$0xf]
        %v6121 = vld [vmem:[%s6109 + $0x2c] sm:$0xf]
        %v6122 = vld [vmem:[%s6109 + $0x30] sm:$0xf]
        %v6123 = vld [vmem:[%s6109 + $0x34] sm:$0xf]
        %v6124 = vld [vmem:[%s6109 + $0x38] sm:$0xf]
        %v6125 = vld [vmem:[%s6109 + $0x3c] sm:$0xf]
        %v6142 = vunpack.c.l.b16 %v6110
        %v6143 = vunpack.c.l.b16 %v6111
        %v6144 = vunpack.c.l.b16 %v6112
        %v6145 = vunpack.c.l.b16 %v6113
        %v6146 = vunpack.c.l.b16 %v6114
        %v6147 = vunpack.c.l.b16 %v6115
        %v6148 = vunpack.c.l.b16 %v6116
        %v6149 = vunpack.c.l.b16 %v6117
        %v6150 = vunpack.c.l.b16 %v6118
        %v6151 = vunpack.c.l.b16 %v6119
        %v6152 = vunpack.c.l.b16 %v6120
        %v6153 = vunpack.c.l.b16 %v6121
        %v6154 = vunpack.c.l.b16 %v6122
        %v6155 = vunpack.c.l.b16 %v6123
        %v6156 = vunpack.c.l.b16 %v6124
        %v6157 = vunpack.c.l.b16 %v6125
        %v6158 = vpack.c.b16 %v6143, %v6142
        %v6159 = vpack.c.b16 %v6145, %v6144
        %v6160 = vpack.c.b16 %v6147, %v6146
        %v6161 = vpack.c.b16 %v6149, %v6148
        %v6162 = vpack.c.b16 %v6151, %v6150
        %v6163 = vpack.c.b16 %v6153, %v6152
        %v6164 = vpack.c.b16 %v6155, %v6154
        %v6165 = vpack.c.b16 %v6157, %v6156
        %6174 = vmatprep.subr.bf16.mxu0 0
        %6175 = vmatpush1.bf16.msra.mxu0 %v6158
        %6176 = vmatprep.subr.bf16.mxu0 0
        %6177 = vmatpush1.bf16.msra.mxu0 %v6159
        %6178 = vmatprep.subr.bf16.mxu0 0
        %6179 = vmatpush1.bf16.msra.mxu0 %v6160
        %6180 = vmatprep.subr.bf16.mxu0 0
        %6181 = vmatpush1.bf16.msra.mxu0 %v6161
        %6182 = vmatprep.subr.bf16.mxu0 0
        %6183 = vmatpush1.bf16.msra.mxu0 %v6162
        %6184 = vmatprep.subr.bf16.mxu0 0
        %6185 = vmatpush1.bf16.msra.mxu0 %v6163
        %6186 = vmatprep.subr.bf16.mxu0 0
        %6187 = vmatpush1.bf16.msra.mxu0 %v6164
        %6188 = vmatprep.subr.bf16.mxu0 0
        %6189 = vmatpush1.bf16.msra.mxu0 %v6165
        %6190 = vmatprep.subr.bf16.mxu0 0
        %6191 = vmatpush1.bf16.msra.mxu0 0
        %6192 = vmatprep.subr.bf16.mxu0 0
        %6193 = vmatpush1.bf16.msra.mxu0 0
        %6194 = vmatprep.subr.bf16.mxu0 0
        %6195 = vmatpush1.bf16.msra.mxu0 0
        %6196 = vmatprep.subr.bf16.mxu0 0
        %6197 = vmatpush1.bf16.msra.mxu0 0
        %6198 = vmatprep.subr.bf16.mxu0 0
        %6199 = vmatpush1.bf16.msra.mxu0 0
        %6200 = vmatprep.subr.bf16.mxu0 0
        %6201 = vmatpush1.bf16.msra.mxu0 0
        %6202 = vmatprep.subr.bf16.mxu0 0
        %6203 = vmatpush1.bf16.msra.mxu0 0
        %6204 = vmatprep.subr.bf16.mxu0 0
        %6205 = vmatpush1.bf16.msra.mxu0 0
        %6206 = vmatprep.mubr.bf16.mxu0 0
        %6207 = vmatmul.mubr.bf16.gmra.mrb[0].mxu0 %v6003
        %v6208 = vpop.f32.mrb[0].mxu0
        %v6209 = vadd.f32 0.0, %v6208
        %v6210 = vpop.f32.mrb[0].mxu0
        %v6211 = vpop.f32.mrb[0].mxu0
        %v6212 = vadd.f32 0.0, %v6211
        %v6213 = vpop.f32.mrb[0].mxu0
        %6214 = vdwg.mxu0
        %s6215 = scalar_lea.vmem %s13, 128
        %v6216 = vld [vmem:[%s6215] sm:$0xf]
        %v6217 = vld [vmem:[%s6215 + $0x4] sm:$0xf]
        %v6218 = vld [vmem:[%s6215 + $0x8] sm:$0xf]
        %v6219 = vld [vmem:[%s6215 + $0xc] sm:$0xf]
        %v6220 = vld [vmem:[%s6215 + $0x10] sm:$0xf]
        %v6221 = vld [vmem:[%s6215 + $0x14] sm:$0xf]
        %v6222 = vld [vmem:[%s6215 + $0x18] sm:$0xf]
        %v6223 = vld [vmem:[%s6215 + $0x1c] sm:$0xf]
        %v6224 = vld [vmem:[%s6215 + $0x20] sm:$0xf]
        %v6225 = vld [vmem:[%s6215 + $0x24] sm:$0xf]
        %v6226 = vld [vmem:[%s6215 + $0x28] sm:$0xf]
        %v6227 = vld [vmem:[%s6215 + $0x2c] sm:$0xf]
        %v6228 = vld [vmem:[%s6215 + $0x30] sm:$0xf]
        %v6229 = vld [vmem:[%s6215 + $0x34] sm:$0xf]
        %v6230 = vld [vmem:[%s6215 + $0x38] sm:$0xf]
        %v6231 = vld [vmem:[%s6215 + $0x3c] sm:$0xf]
        %v6248 = vunpack.c.l.b16 %v6216
        %v6249 = vunpack.c.l.b16 %v6217
        %v6250 = vunpack.c.l.b16 %v6218
        %v6251 = vunpack.c.l.b16 %v6219
        %v6252 = vunpack.c.l.b16 %v6220
        %v6253 = vunpack.c.l.b16 %v6221
        %v6254 = vunpack.c.l.b16 %v6222
        %v6255 = vunpack.c.l.b16 %v6223
        %v6256 = vunpack.c.l.b16 %v6224
        %v6257 = vunpack.c.l.b16 %v6225
        %v6258 = vunpack.c.l.b16 %v6226
        %v6259 = vunpack.c.l.b16 %v6227
        %v6260 = vunpack.c.l.b16 %v6228
        %v6261 = vunpack.c.l.b16 %v6229
        %v6262 = vunpack.c.l.b16 %v6230
        %v6263 = vunpack.c.l.b16 %v6231
        %v6264 = vpack.c.b16 %v6249, %v6248
        %v6265 = vpack.c.b16 %v6251, %v6250
        %v6266 = vpack.c.b16 %v6253, %v6252
        %v6267 = vpack.c.b16 %v6255, %v6254
        %v6268 = vpack.c.b16 %v6257, %v6256
        %v6269 = vpack.c.b16 %v6259, %v6258
        %v6270 = vpack.c.b16 %v6261, %v6260
        %v6271 = vpack.c.b16 %v6263, %v6262
        %6280 = vmatprep.subr.bf16.mxu0 0
        %6281 = vmatpush1.bf16.msra.mxu0 %v6264
        %6282 = vmatprep.subr.bf16.mxu0 0
        %6283 = vmatpush1.bf16.msra.mxu0 %v6265
        %6284 = vmatprep.subr.bf16.mxu0 0
        %6285 = vmatpush1.bf16.msra.mxu0 %v6266
        %6286 = vmatprep.subr.bf16.mxu0 0
        %6287 = vmatpush1.bf16.msra.mxu0 %v6267
        %6288 = vmatprep.subr.bf16.mxu0 0
        %6289 = vmatpush1.bf16.msra.mxu0 %v6268
        %6290 = vmatprep.subr.bf16.mxu0 0
        %6291 = vmatpush1.bf16.msra.mxu0 %v6269
        %6292 = vmatprep.subr.bf16.mxu0 0
        %6293 = vmatpush1.bf16.msra.mxu0 %v6270
        %6294 = vmatprep.subr.bf16.mxu0 0
        %6295 = vmatpush1.bf16.msra.mxu0 %v6271
        %6296 = vmatprep.subr.bf16.mxu0 0
        %6297 = vmatpush1.bf16.msra.mxu0 0
        %6298 = vmatprep.subr.bf16.mxu0 0
        %6299 = vmatpush1.bf16.msra.mxu0 0
        %6300 = vmatprep.subr.bf16.mxu0 0
        %6301 = vmatpush1.bf16.msra.mxu0 0
        %6302 = vmatprep.subr.bf16.mxu0 0
        %6303 = vmatpush1.bf16.msra.mxu0 0
        %6304 = vmatprep.subr.bf16.mxu0 0
        %6305 = vmatpush1.bf16.msra.mxu0 0
        %6306 = vmatprep.subr.bf16.mxu0 0
        %6307 = vmatpush1.bf16.msra.mxu0 0
        %6308 = vmatprep.subr.bf16.mxu0 0
        %6309 = vmatpush1.bf16.msra.mxu0 0
        %6310 = vmatprep.subr.bf16.mxu0 0
        %6311 = vmatpush1.bf16.msra.mxu0 0
        %6312 = vmatprep.mubr.bf16.mxu0 0
        %6313 = vmatmul.mubr.bf16.gmra.mrb[0].mxu0 %v6003
        %v6314 = vpop.f32.mrb[0].mxu0
        %v6315 = vadd.f32 0.0, %v6314
        %v6316 = vpop.f32.mrb[0].mxu0
        %v6317 = vpop.f32.mrb[0].mxu0
        %v6318 = vadd.f32 0.0, %v6317
        %v6319 = vpop.f32.mrb[0].mxu0
        %6320 = vdwg.mxu0
        %s6321 = scalar_lea.vmem %s13, 192
        %v6322 = vld [vmem:[%s6321] sm:$0xf]
        %v6323 = vld [vmem:[%s6321 + $0x4] sm:$0xf]
        %v6324 = vld [vmem:[%s6321 + $0x8] sm:$0xf]
        %v6325 = vld [vmem:[%s6321 + $0xc] sm:$0xf]
        %v6326 = vld [vmem:[%s6321 + $0x10] sm:$0xf]
        %v6327 = vld [vmem:[%s6321 + $0x14] sm:$0xf]
        %v6328 = vld [vmem:[%s6321 + $0x18] sm:$0xf]
        %v6329 = vld [vmem:[%s6321 + $0x1c] sm:$0xf]
        %v6330 = vld [vmem:[%s6321 + $0x20] sm:$0xf]
        %v6331 = vld [vmem:[%s6321 + $0x24] sm:$0xf]
        %v6332 = vld [vmem:[%s6321 + $0x28] sm:$0xf]
        %v6333 = vld [vmem:[%s6321 + $0x2c] sm:$0xf]
        %v6334 = vld [vmem:[%s6321 + $0x30] sm:$0xf]
        %v6335 = vld [vmem:[%s6321 + $0x34] sm:$0xf]
        %v6336 = vld [vmem:[%s6321 + $0x38] sm:$0xf]
        %v6337 = vld [vmem:[%s6321 + $0x3c] sm:$0xf]
        %v6354 = vunpack.c.l.b16 %v6322
        %v6355 = vunpack.c.l.b16 %v6323
        %v6356 = vunpack.c.l.b16 %v6324
        %v6357 = vunpack.c.l.b16 %v6325
        %v6358 = vunpack.c.l.b16 %v6326
        %v6359 = vunpack.c.l.b16 %v6327
        %v6360 = vunpack.c.l.b16 %v6328
        %v6361 = vunpack.c.l.b16 %v6329
        %v6362 = vunpack.c.l.b16 %v6330
        %v6363 = vunpack.c.l.b16 %v6331
        %v6364 = vunpack.c.l.b16 %v6332
        %v6365 = vunpack.c.l.b16 %v6333
        %v6366 = vunpack.c.l.b16 %v6334
        %v6367 = vunpack.c.l.b16 %v6335
        %v6368 = vunpack.c.l.b16 %v6336
        %v6369 = vunpack.c.l.b16 %v6337
        %v6370 = vpack.c.b16 %v6355, %v6354
        %v6371 = vpack.c.b16 %v6357, %v6356
        %v6372 = vpack.c.b16 %v6359, %v6358
        %v6373 = vpack.c.b16 %v6361, %v6360
        %v6374 = vpack.c.b16 %v6363, %v6362
        %v6375 = vpack.c.b16 %v6365, %v6364
        %v6376 = vpack.c.b16 %v6367, %v6366
        %v6377 = vpack.c.b16 %v6369, %v6368
        %6386 = vmatprep.subr.bf16.mxu0 0
        %6387 = vmatpush1.bf16.msra.mxu0 %v6370
        %6388 = vmatprep.subr.bf16.mxu0 0
        %6389 = vmatpush1.bf16.msra.mxu0 %v6371
        %6390 = vmatprep.subr.bf16.mxu0 0
        %6391 = vmatpush1.bf16.msra.mxu0 %v6372
        %6392 = vmatprep.subr.bf16.mxu0 0
        %6393 = vmatpush1.bf16.msra.mxu0 %v6373
        %6394 = vmatprep.subr.bf16.mxu0 0
        %6395 = vmatpush1.bf16.msra.mxu0 %v6374
        %6396 = vmatprep.subr.bf16.mxu0 0
        %6397 = vmatpush1.bf16.msra.mxu0 %v6375
        %6398 = vmatprep.subr.bf16.mxu0 0
        %6399 = vmatpush1.bf16.msra.mxu0 %v6376
        %6400 = vmatprep.subr.bf16.mxu0 0
        %6401 = vmatpush1.bf16.msra.mxu0 %v6377
        %6402 = vmatprep.subr.bf16.mxu0 0
        %6403 = vmatpush1.bf16.msra.mxu0 0
        %6404 = vmatprep.subr.bf16.mxu0 0
        %6405 = vmatpush1.bf16.msra.mxu0 0
        %6406 = vmatprep.subr.bf16.mxu0 0
        %6407 = vmatpush1.bf16.msra.mxu0 0
        %6408 = vmatprep.subr.bf16.mxu0 0
        %6409 = vmatpush1.bf16.msra.mxu0 0
        %6410 = vmatprep.subr.bf16.mxu0 0
        %6411 = vmatpush1.bf16.msra.mxu0 0
        %6412 = vmatprep.subr.bf16.mxu0 0
        %6413 = vmatpush1.bf16.msra.mxu0 0
        %6414 = vmatprep.subr.bf16.mxu0 0
        %6415 = vmatpush1.bf16.msra.mxu0 0
        %6416 = vmatprep.subr.bf16.mxu0 0
        %6417 = vmatpush1.bf16.msra.mxu0 0
        %6418 = vmatprep.mubr.bf16.mxu0 0
        %6419 = vmatmul.mubr.bf16.gmra.mrb[0].mxu0 %v6003
        %v6420 = vpop.f32.mrb[0].mxu0
        %v6421 = vadd.f32 0.0, %v6420
        %v6422 = vpop.f32.mrb[0].mxu0
        %v6423 = vpop.f32.mrb[0].mxu0
        %v6424 = vadd.f32 0.0, %v6423
        %v6425 = vpop.f32.mrb[0].mxu0
        %6426 = vdwg.mxu0
        %v6427 = vmul.f32 %v6103, %v5299
        %v6428 = vmul.f32 %v6106, %v5299
        %v6429 = vmul.f32 %v6209, %v5299
        %v6430 = vmul.f32 %v6212, %v5299
        %v6431 = vmul.f32 %v6315, %v5299
        %v6432 = vmul.f32 %v6318, %v5299
        %v6433 = vmul.f32 %v6421, %v5299
        %v6434 = vmul.f32 %v6424, %v5299
        %v6435 = vld [vmem:[%s23] sm:$0xff]
        %v6436 = vld [vmem:[%s23 + $0x8] sm:$0xff]
        %v6437 = vld [vmem:[%s23 + $0x10] sm:$0xff]
        %v6438 = vld [vmem:[%s23 + $0x18] sm:$0xff]
        %v6439 = vld [vmem:[%s14] sm:$0xff]
        %v6440 = vld [vmem:[%s14 + $0x8] sm:$0xff]
        %v6441 = vld [vmem:[%s14 + $0x10] sm:$0xff]
        %v6442 = vld [vmem:[%s14 + $0x18] sm:$0xff]
        %v6443 = vstv %s86
        %v6444 = vmul.f32 %v6443, %v6435
        %v6445 = vmul.f32 %v6443, %v6436
        %v6446 = vmul.f32 %v6443, %v6437
        %v6447 = vmul.f32 %v6443, %v6438
        %v6448 = vadd.f32 %v6439, %v6444
        %v6449 = vadd.f32 %v6440, %v6445
        %v6450 = vadd.f32 %v6441, %v6446
        %v6451 = vadd.f32 %v6442, %v6447
        %v6452 = vld [vmem:[%s15] sm:$0xff]
        %v6453 = vld [vmem:[%s15 + $0x8] sm:$0xff]
        %v6454 = vld [vmem:[%s15 + $0x10] sm:$0xff]
        %v6455 = vld [vmem:[%s15 + $0x18] sm:$0xff]
        %6457 = vset.pattern.permute.xlu0 0
        %6458 = vperm.xlu0 %6457, %v6452
        %v6459 = vpop.permute.xlu0 %6458
        %6462 = vset.pattern.permute.xlu0 0
        %6463 = vperm.xlu0 %6462, %v6453
        %v6464 = vpop.permute.xlu0 %6463
        %6467 = vset.pattern.permute.xlu0 0
        %6468 = vperm.xlu0 %6467, %v6454
        %v6469 = vpop.permute.xlu0 %6468
        %6472 = vset.pattern.permute.xlu0 0
        %6473 = vperm.xlu0 %6472, %v6455
        %v6474 = vpop.permute.xlu0 %6473
        %v6477 = vsel %vm157, %v6448, 0
        %v6480 = vsel %vm157, %v6449, 0
        %v6483 = vsel %vm157, %v6450, 0
        %v6486 = vsel %vm157, %v6451, 0
        %6488 = vmatprep.subr.mxu0 0.0
        %6489 = vmatpush1.msra.mxu0 %v6427
        %6490 = vmatprep.subr.mxu0 0.0
        %6491 = vmatpush1.msra.mxu0 %v6428
        %6492 = vmatprep.subr.mxu0 0.0
        %6493 = vmatpush1.msra.mxu0 %v6429
        %6494 = vmatprep.subr.mxu0 0.0
        %6495 = vmatpush1.msra.mxu0 %v6430
        %6496 = vmatprep.subr.mxu0 0.0
        %6497 = vmatpush1.msra.mxu0 %v6431
        %6498 = vmatprep.subr.mxu0 0.0
        %6499 = vmatpush1.msra.mxu0 %v6432
        %6500 = vmatprep.subr.mxu0 0.0
        %6501 = vmatpush1.msra.mxu0 %v6433
        %6502 = vmatprep.subr.mxu0 0.0
        %6503 = vmatpush1.msra.mxu0 %v6434
        %6504 = vmatprep.subr.mxu0 0.0
        %6505 = vmatpush1.msra.mxu0 0.0
        %6506 = vmatprep.subr.mxu0 0.0
        %6507 = vmatpush1.msra.mxu0 0.0
        %6508 = vmatprep.subr.mxu0 0.0
        %6509 = vmatpush1.msra.mxu0 0.0
        %6510 = vmatprep.subr.mxu0 0.0
        %6511 = vmatpush1.msra.mxu0 0.0
        %6512 = vmatprep.subr.mxu0 0.0
        %6513 = vmatpush1.msra.mxu0 0.0
        %6514 = vmatprep.subr.mxu0 0.0
        %6515 = vmatpush1.msra.mxu0 0.0
        %6516 = vmatprep.subr.mxu0 0.0
        %6517 = vmatpush1.msra.mxu0 0.0
        %6518 = vmatprep.subr.mxu0 0.0
        %6519 = vmatpush1.msra.mxu0 0.0
        %6520 = vmatprep.subr.mxu0 0.0
        %6521 = vmatpush1.msra.mxu0 0.0
        %6522 = vmatprep.subr.mxu0 0.0
        %6523 = vmatpush1.msra.mxu0 0.0
        %6524 = vmatprep.subr.mxu0 0.0
        %6525 = vmatpush1.msra.mxu0 0.0
        %6526 = vmatprep.subr.mxu0 0.0
        %6527 = vmatpush1.msra.mxu0 0.0
        %6528 = vmatprep.subr.mxu0 0.0
        %6529 = vmatpush1.msra.mxu0 0.0
        %6530 = vmatprep.subr.mxu0 0.0
        %6531 = vmatpush1.msra.mxu0 0.0
        %6532 = vmatprep.subr.mxu0 0.0
        %6533 = vmatpush1.msra.mxu0 0.0
        %6534 = vmatprep.subr.mxu0 0.0
        %6535 = vmatpush1.msra.mxu0 0.0
        %6536 = vmatprep.subr.mxu0 0.0
        %6537 = vmatpush1.msra.mxu0 0.0
        %6538 = vmatprep.subr.mxu0 0.0
        %6539 = vmatpush1.msra.mxu0 0.0
        %6540 = vmatprep.subr.mxu0 0.0
        %6541 = vmatpush1.msra.mxu0 0.0
        %6542 = vmatprep.subr.mxu0 0.0
        %6543 = vmatpush1.msra.mxu0 0.0
        %6544 = vmatprep.subr.mxu0 0.0
        %6545 = vmatpush1.msra.mxu0 0.0
        %6546 = vmatprep.subr.mxu0 0.0
        %6547 = vmatpush1.msra.mxu0 0.0
        %6548 = vmatprep.subr.mxu0 0.0
        %6549 = vmatpush1.msra.mxu0 0.0
        %6550 = vmatprep.subr.mxu0 0.0
        %6551 = vmatpush1.msra.mxu0 0.0
        %6552 = vmatprep.mubr.f32.mxu0 0.0
        %6553 = vmatmul.mubr.f32.gmra.mrb[0].mxu0 %v6477
        %v6554 = vpop.f32.mrb[0].mxu0
        %v6555 = vadd.f32 %v6459, %v6554
        %v6556 = vpop.f32.mrb[0].mxu0
        %6557 = vmatprep.mubr.f32.mxu0 0.0
        %6558 = vmatmul.mubr.f32.gmra.mrb[0].mxu0 %v6480
        %v6559 = vpop.f32.mrb[0].mxu0
        %v6560 = vadd.f32 %v6464, %v6559
        %v6561 = vpop.f32.mrb[0].mxu0
        %6562 = vmatprep.mubr.f32.mxu0 0.0
        %6563 = vmatmul.mubr.f32.gmra.mrb[0].mxu0 %v6483
        %v6564 = vpop.f32.mrb[0].mxu0
        %v6565 = vadd.f32 %v6469, %v6564
        %v6566 = vpop.f32.mrb[0].mxu0
        %6567 = vmatprep.mubr.f32.mxu0 0.0
        %6568 = vmatmul.mubr.f32.gmra.mrb[0].mxu0 %v6486
        %v6569 = vpop.f32.mrb[0].mxu0
        %v6570 = vadd.f32 %v6474, %v6569
        %v6571 = vpop.f32.mrb[0].mxu0
        %6572 = vdwg.mxu0
        %v6573 = vld [vmem:[%s22] sm:$0xff]
        %v6574 = vld [vmem:[%s22 + $0x8] sm:$0xff]
        %v6575 = vld [vmem:[%s22 + $0x10] sm:$0xff]
        %v6576 = vld [vmem:[%s22 + $0x18] sm:$0xff]
        %v6577 = vld [vmem:[#allocation8] sm:$0xff]
        %v6578 = vld [vmem:[#allocation8 + $0x8] sm:$0xff]
        %v6579 = vld [vmem:[#allocation8 + $0x10] sm:$0xff]
        %v6580 = vld [vmem:[#allocation8 + $0x18] sm:$0xff]
        %v6581 = vsub.f32 1.0, %v6577
        %v6582 = vsub.f32 1.0, %v6578
        %v6583 = vsub.f32 1.0, %v6579
        %v6584 = vsub.f32 1.0, %v6580
        %v6585 = vmul.f32 %v6573, %v6581
        %v6586 = vmul.f32 %v6574, %v6582
        %v6587 = vmul.f32 %v6575, %v6583
        %v6588 = vmul.f32 %v6576, %v6584
        %v6589 = vmul.f32 %v6585, 0.75
        %v6590 = vmul.f32 %v6586, 0.75
        %v6591 = vmul.f32 %v6587, 0.75
        %v6592 = vmul.f32 %v6588, 0.75
        %v6593 = vadd.f32 %v6589, %v6555
        %v6594 = vadd.f32 %v6590, %v6560
        %v6595 = vadd.f32 %v6591, %v6565
        %v6596 = vadd.f32 %v6592, %v6570
        %vm6597 = vcmp.gt.f32.partialorder %v6593, 0.45
        %vm6598 = vcmp.gt.f32.partialorder %v6594, 0.45
        %vm6599 = vcmp.gt.f32.partialorder %v6595, 0.45
        %vm6600 = vcmp.gt.f32.partialorder %v6596, 0.45
        %v6601 = vsel %vm6597, 1, 0
        %v6602 = vsel %vm6598, 1, 0
        %v6603 = vsel %vm6599, 1, 0
        %v6604 = vsel %vm6600, 1, 0
        %v6605 = vcvt.s32.f32 %v6601
        %v6606 = vcvt.s32.f32 %v6602
        %v6607 = vcvt.s32.f32 %v6603
        %v6608 = vcvt.s32.f32 %v6604
        %6609 = vst.msk [vmem:[%s22] sm:$0xff] %vm139, %v6593
        %6610 = vst.msk [vmem:[%s22 + $0x8] sm:$0xff] %vm139, %v6594
        %6611 = vst.msk [vmem:[%s22 + $0x10] sm:$0xff] %vm139, %v6595
        %6612 = vst.msk [vmem:[%s22 + $0x18] sm:$0xff] %vm139, %v6596
        %6613 = vst.msk [vmem:[#allocation8] sm:$0xff] %vm139, %v6605
        %6614 = vst.msk [vmem:[#allocation8 + $0x8] sm:$0xff] %vm139, %v6606
        %6615 = vst.msk [vmem:[#allocation8 + $0x10] sm:$0xff] %vm139, %v6607
        %6616 = vst.msk [vmem:[#allocation8 + $0x18] sm:$0xff] %vm139, %v6608
        %v6617 = vld [vmem:[%s16] sm:$0xff]
        %v6618 = vld [vmem:[%s16 + $0x8] sm:$0xff]
        %v6619 = vld [vmem:[%s16 + $0x10] sm:$0xff]
        %v6620 = vld [vmem:[%s16 + $0x18] sm:$0xff]
        %v6621 = vld [vmem:[%s16 + $0x20] sm:$0xff]
        %v6622 = vld [vmem:[%s16 + $0x28] sm:$0xff]
        %v6623 = vld [vmem:[%s16 + $0x30] sm:$0xff]
        %v6624 = vld [vmem:[%s16 + $0x38] sm:$0xff]
        %6626 = vset.pattern.permute.xlu0 0
        %6627 = vperm.xlu0 %6626, %v6617
        %v6628 = vpop.permute.xlu0 %6627
        %6631 = vset.pattern.permute.xlu0 0
        %6632 = vperm.xlu0 %6631, %v6618
        %v6633 = vpop.permute.xlu0 %6632
        %6636 = vset.pattern.permute.xlu0 0
        %6637 = vperm.xlu0 %6636, %v6619
        %v6638 = vpop.permute.xlu0 %6637
        %6641 = vset.pattern.permute.xlu0 0
        %6642 = vperm.xlu0 %6641, %v6620
        %v6643 = vpop.permute.xlu0 %6642
        %6646 = vset.pattern.permute.xlu0 0
        %6647 = vperm.xlu0 %6646, %v6621
        %v6648 = vpop.permute.xlu0 %6647
        %6651 = vset.pattern.permute.xlu0 0
        %6652 = vperm.xlu0 %6651, %v6622
        %v6653 = vpop.permute.xlu0 %6652
        %6656 = vset.pattern.permute.xlu0 0
        %6657 = vperm.xlu0 %6656, %v6623
        %v6658 = vpop.permute.xlu0 %6657
        %6661 = vset.pattern.permute.xlu0 0
        %6662 = vperm.xlu0 %6661, %v6624
        %v6663 = vpop.permute.xlu0 %6662
        %v6665 = vmul.f32 %v6427, %v6628
        %v6666 = vmul.f32 %v6428, %v6633
        %v6667 = vmul.f32 %v6429, %v6638
        %v6668 = vmul.f32 %v6430, %v6643
        %v6669 = vmul.f32 %v6431, %v6648
        %v6670 = vmul.f32 %v6432, %v6653
        %v6671 = vmul.f32 %v6433, %v6658
        %v6672 = vmul.f32 %v6434, %v6663
        %v6673 = vmul.f32 %v6593, 2.2222223
        %v6674 = vmul.f32 %v6594, 2.2222223
        %v6675 = vmul.f32 %v6595, 2.2222223
        %v6676 = vmul.f32 %v6596, 2.2222223
        %v6677 = vld [vmem:[%s17] sm:$0xff]
        %v6678 = vld [vmem:[%s17 + $0x8] sm:$0xff]
        %v6679 = vld [vmem:[%s17 + $0x10] sm:$0xff]
        %v6680 = vld [vmem:[%s17 + $0x18] sm:$0xff]
        %6682 = vset.pattern.permute.xlu0 0
        %6683 = vperm.xlu0 %6682, %v6677
        %v6684 = vpop.permute.xlu0 %6683
        %6687 = vset.pattern.permute.xlu0 0
        %6688 = vperm.xlu0 %6687, %v6678
        %v6689 = vpop.permute.xlu0 %6688
        %6692 = vset.pattern.permute.xlu0 0
        %6693 = vperm.xlu0 %6692, %v6679
        %v6694 = vpop.permute.xlu0 %6693
        %6697 = vset.pattern.permute.xlu0 0
        %6698 = vperm.xlu0 %6697, %v6680
        %v6699 = vpop.permute.xlu0 %6698
        %v6701 = vsub.f32 %v6673, %v6684
        %v6702 = vsub.f32 %v6674, %v6689
        %v6703 = vsub.f32 %v6675, %v6694
        %v6704 = vsub.f32 %v6676, %v6699
        %v6706 = vsel %vm139, %v6701, 0
        %v6709 = vsel %vm139, %v6702, 0
        %v6712 = vsel %vm139, %v6703, 0
        %v6715 = vsel %vm139, %v6704, 0
        %v6718 = vsel %vm139, %v6665, 0
        %v6721 = vsel %vm139, %v6666, 0
        %v6724 = vsel %vm139, %v6667, 0
        %v6727 = vsel %vm139, %v6668, 0
        %v6730 = vsel %vm139, %v6669, 0
        %v6733 = vsel %vm139, %v6670, 0
        %v6736 = vsel %vm139, %v6671, 0
        %v6739 = vsel %vm139, %v6672, 0
        %6741 = vmatprep.subr.mxu0 0.0
        %6742 = vmatpush1.xpose.msra.mxu0 %v6718
        %6743 = vmatprep.subr.mxu0 0.0
        %6744 = vmatpush1.xpose.msra.mxu0 %v6721
        %6745 = vmatprep.subr.mxu0 0.0
        %6746 = vmatpush1.xpose.msra.mxu0 %v6724
        %6747 = vmatprep.subr.mxu0 0.0
        %6748 = vmatpush1.xpose.msra.mxu0 %v6727
        %6749 = vmatprep.subr.mxu0 0.0
        %6750 = vmatpush1.xpose.msra.mxu0 %v6730
        %6751 = vmatprep.subr.mxu0 0.0
        %6752 = vmatpush1.xpose.msra.mxu0 %v6733
        %6753 = vmatprep.subr.mxu0 0.0
        %6754 = vmatpush1.xpose.msra.mxu0 %v6736
        %6755 = vmatprep.subr.mxu0 0.0
        %6756 = vmatpush1.xpose.msra.mxu0 %v6739
        %6757 = vmatprep.subr.mxu0 0.0
        %6758 = vmatpush1.xpose.msra.mxu0 0.0
        %6759 = vmatprep.subr.mxu0 0.0
        %6760 = vmatpush1.xpose.msra.mxu0 0.0
        %6761 = vmatprep.subr.mxu0 0.0
        %6762 = vmatpush1.xpose.msra.mxu0 0.0
        %6763 = vmatprep.subr.mxu0 0.0
        %6764 = vmatpush1.xpose.msra.mxu0 0.0
        %6765 = vmatprep.subr.mxu0 0.0
        %6766 = vmatpush1.xpose.msra.mxu0 0.0
        %6767 = vmatprep.subr.mxu0 0.0
        %6768 = vmatpush1.xpose.msra.mxu0 0.0
        %6769 = vmatprep.subr.mxu0 0.0
        %6770 = vmatpush1.xpose.msra.mxu0 0.0
        %6771 = vmatprep.subr.mxu0 0.0
        %6772 = vmatpush1.xpose.msra.mxu0 0.0
        %6773 = vmatprep.subr.mxu0 0.0
        %6774 = vmatpush1.xpose.msra.mxu0 0.0
        %6775 = vmatprep.subr.mxu0 0.0
        %6776 = vmatpush1.xpose.msra.mxu0 0.0
        %6777 = vmatprep.subr.mxu0 0.0
        %6778 = vmatpush1.xpose.msra.mxu0 0.0
        %6779 = vmatprep.subr.mxu0 0.0
        %6780 = vmatpush1.xpose.msra.mxu0 0.0
        %6781 = vmatprep.subr.mxu0 0.0
        %6782 = vmatpush1.xpose.msra.mxu0 0.0
        %6783 = vmatprep.subr.mxu0 0.0
        %6784 = vmatpush1.xpose.msra.mxu0 0.0
        %6785 = vmatprep.subr.mxu0 0.0
        %6786 = vmatpush1.xpose.msra.mxu0 0.0
        %6787 = vmatprep.subr.mxu0 0.0
        %6788 = vmatpush1.xpose.msra.mxu0 0.0
        %6789 = vmatprep.subr.mxu0 0.0
        %6790 = vmatpush1.xpose.msra.mxu0 0.0
        %6791 = vmatprep.subr.mxu0 0.0
        %6792 = vmatpush1.xpose.msra.mxu0 0.0
        %6793 = vmatprep.subr.mxu0 0.0
        %6794 = vmatpush1.xpose.msra.mxu0 0.0
        %6795 = vmatprep.subr.mxu0 0.0
        %6796 = vmatpush1.xpose.msra.mxu0 0.0
        %6797 = vmatprep.subr.mxu0 0.0
        %6798 = vmatpush1.xpose.msra.mxu0 0.0
        %6799 = vmatprep.subr.mxu0 0.0
        %6800 = vmatpush1.xpose.msra.mxu0 0.0
        %6801 = vmatprep.subr.mxu0 0.0
        %6802 = vmatpush1.xpose.msra.mxu0 0.0
        %6803 = vmatprep.subr.mxu0 0.0
        %6804 = vmatpush1.xpose.msra.mxu0 0.0
        %6805 = vmatprep.mubr.f32.mxu0 0.0
        %6806 = vmatmul.mubr.f32.gmra.mrb[0].mxu0 %v6706
        %v6807 = vpop.f32.mrb[0].mxu0
        %v6808 = vadd.f32 0.0, %v6807
        %v6809 = vpop.f32.mrb[0].mxu0
        %6810 = vmatprep.mubr.f32.mxu0 0.0
        %6811 = vmatmul.mubr.f32.gmra.mrb[0].mxu0 %v6709
        %v6812 = vpop.f32.mrb[0].mxu0
        %v6813 = vadd.f32 0.0, %v6812
        %v6814 = vpop.f32.mrb[0].mxu0
        %6815 = vmatprep.mubr.f32.mxu0 0.0
        %6816 = vmatmul.mubr.f32.gmra.mrb[0].mxu0 %v6712
        %v6817 = vpop.f32.mrb[0].mxu0
        %v6818 = vadd.f32 0.0, %v6817
        %v6819 = vpop.f32.mrb[0].mxu0
        %6820 = vmatprep.mubr.f32.mxu0 0.0
        %6821 = vmatmul.mubr.f32.gmra.mrb[0].mxu0 %v6715
        %v6822 = vpop.f32.mrb[0].mxu0
        %v6823 = vadd.f32 0.0, %v6822
        %v6824 = vpop.f32.mrb[0].mxu0
        %6825 = vdwg.mxu0
        %v6826 = vmul.f32 %v6808, 0.125
        %v6827 = vmul.f32 %v6813, 0.125
        %v6828 = vmul.f32 %v6818, 0.125
        %v6829 = vmul.f32 %v6823, 0.125
        %v6830 = vmul.f32 %v6435, 0.9
        %v6831 = vmul.f32 %v6436, 0.9
        %v6832 = vmul.f32 %v6437, 0.9
        %v6833 = vmul.f32 %v6438, 0.9
        %v6834 = vsub.f32 %v6830, %v6826
        %v6835 = vsub.f32 %v6831, %v6827
        %v6836 = vsub.f32 %v6832, %v6828
        %v6837 = vsub.f32 %v6833, %v6829
        %v6838 = vmax.f32 %v6834, -4.0
        %v6839 = vmax.f32 %v6835, -4.0
        %v6840 = vmax.f32 %v6836, -4.0
        %v6841 = vmax.f32 %v6837, -4.0
        %v6842 = vmin.f32 %v6838, 4.0
        %v6843 = vmin.f32 %v6839, 4.0
        %v6844 = vmin.f32 %v6840, 4.0
        %v6845 = vmin.f32 %v6841, 4.0
        %6846 = vst.msk [vmem:[%s23] sm:$0xff] %vm157, %v6842
        %6847 = vst.msk [vmem:[%s23 + $0x8] sm:$0xff] %vm157, %v6843
        %6848 = vst.msk [vmem:[%s23 + $0x10] sm:$0xff] %vm157, %v6844
        %6849 = vst.msk [vmem:[%s23 + $0x18] sm:$0xff] %vm157, %v6845
        %v6850 = vld [vmem:[%s19] sm:$0xff]
        %v6851 = vld [vmem:[%s19 + $0x8] sm:$0x3]
        %vm6852 = vcmask 261120
        %v6854 = vsel %vm6852, %v6850, 0
        %v6857 = vsel %vm6852, %v6851, 0
        %6859 = vmatprep.subr.mxu0 0.0
        %6860 = vmatpush1.msra.mxu0 %v6605
        %6861 = vmatprep.subr.mxu0 0.0
        %6862 = vmatpush1.msra.mxu0 %v6606
        %6863 = vmatprep.subr.mxu0 0.0
        %6864 = vmatpush1.msra.mxu0 %v6607
        %6865 = vmatprep.subr.mxu0 0.0
        %6866 = vmatpush1.msra.mxu0 %v6608
        %6867 = vmatprep.subr.mxu0 0.0
        %6868 = vmatpush1.msra.mxu0 0.0
        %6869 = vmatprep.subr.mxu0 0.0
        %6870 = vmatpush1.msra.mxu0 0.0
        %6871 = vmatprep.subr.mxu0 0.0
        %6872 = vmatpush1.msra.mxu0 0.0
        %6873 = vmatprep.subr.mxu0 0.0
        %6874 = vmatpush1.msra.mxu0 0.0
        %6875 = vmatprep.subr.mxu0 0.0
        %6876 = vmatpush1.msra.mxu0 0.0
        %6877 = vmatprep.subr.mxu0 0.0
        %6878 = vmatpush1.msra.mxu0 0.0
        %6879 = vmatprep.subr.mxu0 0.0
        %6880 = vmatpush1.msra.mxu0 0.0
        %6881 = vmatprep.subr.mxu0 0.0
        %6882 = vmatpush1.msra.mxu0 0.0
        %6883 = vmatprep.subr.mxu0 0.0
        %6884 = vmatpush1.msra.mxu0 0.0
        %6885 = vmatprep.subr.mxu0 0.0
        %6886 = vmatpush1.msra.mxu0 0.0
        %6887 = vmatprep.subr.mxu0 0.0
        %6888 = vmatpush1.msra.mxu0 0.0
        %6889 = vmatprep.subr.mxu0 0.0
        %6890 = vmatpush1.msra.mxu0 0.0
        %6891 = vmatprep.subr.mxu0 0.0
        %6892 = vmatpush1.msra.mxu0 0.0
        %6893 = vmatprep.subr.mxu0 0.0
        %6894 = vmatpush1.msra.mxu0 0.0
        %6895 = vmatprep.subr.mxu0 0.0
        %6896 = vmatpush1.msra.mxu0 0.0
        %6897 = vmatprep.subr.mxu0 0.0
        %6898 = vmatpush1.msra.mxu0 0.0
        %6899 = vmatprep.subr.mxu0 0.0
        %6900 = vmatpush1.msra.mxu0 0.0
        %6901 = vmatprep.subr.mxu0 0.0
        %6902 = vmatpush1.msra.mxu0 0.0
        %6903 = vmatprep.subr.mxu0 0.0
        %6904 = vmatpush1.msra.mxu0 0.0
        %6905 = vmatprep.subr.mxu0 0.0
        %6906 = vmatpush1.msra.mxu0 0.0
        %6907 = vmatprep.subr.mxu0 0.0
        %6908 = vmatpush1.msra.mxu0 0.0
        %6909 = vmatprep.subr.mxu0 0.0
        %6910 = vmatpush1.msra.mxu0 0.0
        %6911 = vmatprep.subr.mxu0 0.0
        %6912 = vmatpush1.msra.mxu0 0.0
        %6913 = vmatprep.subr.mxu0 0.0
        %6914 = vmatpush1.msra.mxu0 0.0
        %6915 = vmatprep.subr.mxu0 0.0
        %6916 = vmatpush1.msra.mxu0 0.0
        %6917 = vmatprep.subr.mxu0 0.0
        %6918 = vmatpush1.msra.mxu0 0.0
        %6919 = vmatprep.subr.mxu0 0.0
        %6920 = vmatpush1.msra.mxu0 0.0
        %6921 = vmatprep.subr.mxu0 0.0
        %6922 = vmatpush1.msra.mxu0 0.0
        %6923 = vmatprep.mubr.f32.mxu0 0.0
        %6924 = vmatmul.mubr.f32.gmra.mrb[0].mxu0 %v6854
        %v6925 = vpop.f32.mrb[0].mxu0
        %v6926 = vadd.f32 0.0, %v6925
        %v6927 = vpop.f32.mrb[0].mxu0
        %6928 = vmatprep.mubr.f32.mxu0 0.0
        %6929 = vmatmul.mubr.f32.gmra.mrb[0].mxu0 %v6857
        %v6930 = vpop.f32.mrb[0].mxu0
        %v6931 = vadd.f32 0.0, %v6930
        %v6932 = vpop.f32.mrb[0].mxu0
        %6933 = vdwg.mxu0
        %v6934 = vmul.f32 %v5299, %v6926
        %v6935 = vmul.f32 %v5299, %v6931
        %v6936 = vld [vmem:[%s20] sm:$0xff]
        %v6937 = vld [vmem:[%s20 + $0x8] sm:$0x3]
        %6939 = vset.pattern.permute.xlu0 0
        %6940 = vperm.xlu0 %6939, %v6936
        %v6941 = vpop.permute.xlu0 %6940
        %6944 = vset.pattern.permute.xlu0 0
        %6945 = vperm.xlu0 %6944, %v6937
        %v6946 = vpop.permute.xlu0 %6945
        %v6948 = vadd.f32 %v6934, %v6941
        %v6949 = vadd.f32 %v6935, %v6946
        %v6950 = vld [vmem:[%s21] sm:$0xff]
        %v6951 = vld [vmem:[%s21 + $0x8] sm:$0x3]
        %v6952 = vld [vmem:[#allocation9] sm:$0xff]
        %v6953 = vld [vmem:[#allocation9 + $0x8] sm:$0x3]
        %v6954 = vsub.f32 1.0, %v6952
        %v6955 = vsub.f32 1.0, %v6953
        %v6956 = vmul.f32 %v6950, %v6954
        %v6957 = vmul.f32 %v6951, %v6955
        %v6958 = vmul.f32 %v6956, 0.75
        %v6959 = vmul.f32 %v6957, 0.75
        %v6960 = vadd.f32 %v6958, %v6948
        %v6961 = vadd.f32 %v6959, %v6949
        %vm6962 = vcmp.gt.f32.partialorder %v6960, 0.45
        %vm6963 = vcmp.gt.f32.partialorder %v6961, 0.45
        %v6964 = vsel %vm6962, 1, 0
        %v6965 = vsel %vm6963, 1, 0
        %v6966 = vcvt.s32.f32 %v6964
        %v6967 = vcvt.s32.f32 %v6965
        %6968 = vst.msk [vmem:[%s21] sm:$0xff] %vm139, %v6960
        %6969 = vst.msk [vmem:[%s21 + $0x8] sm:$0x3] %vm145, %v6961
        %6970 = vst.msk [vmem:[#allocation9] sm:$0xff] %vm139, %v6966
        %6971 = vst.msk [vmem:[#allocation9 + $0x8] sm:$0x3] %vm145, %v6967
        %v6972 = vsel %vm139, %v6966, 0.0
        %v6973 = vsel %vm145, %v6967, 0.0
        %v6974 = vadd.f32 %v6972, %v6973
        %v6975 = vrot.slane %v6974, 4
        %v6976 = vadd.f32 %v6974, %v6975
        %v6977 = vrot.slane %v6976, 2
        %v6978 = vadd.f32 %v6976, %v6977
        %v6979 = vrot.slane %v6978, 1
        %v6980 = vadd.f32 %v6978, %v6979
        %vm6981 = vcmp.gt.f32.partialorder %v6980, 0.5
        %v6982 = vsel %vm6981, 1, 0
        %v6983 = vcvt.s32.f32 %v6982
        %vm6984 = vcmask 57344
        %v6985 = vsel %vm6984, %v6983, 0.0
        %6986 = vadd.xlane.f32.xlu0 %v6985
        %v6987 = vpop.xlane.xlu0 %6986
        %v6988 = vrot.slane %v6987, 4
        %v6989 = vadd.f32 %v6987, %v6988
        %v6990 = vrot.slane %v6989, 2
        %v6991 = vadd.f32 %v6989, %v6990
        %v6992 = vrot.slane %v6991, 1
        %v6993 = vadd.f32 %v6991, %v6992
        %s6994 = vtos %v6993
        %s6995 = smul.f32 %s6994, 0.125
        %p6996 = scmp.gt.f32.partialorder %s6995, 0.9
        %p6997 = scmp.gt.s32.totalorder %s841, 0
        %p6998 = pnand %p6996, %p6997
        %p6999 = pneg %p6998
        %s7000 = scalar_select %p6999, 1, 0
        %7001 = sst [smem:[%s162]] %s7000
      $region100: #{snn_forward.1} parent=93 // pred_fallthru
        _
    $region94: #{snn_forward.1} parent=1 // loop_footer
      %s845 = sadd.s32 1, %s841
    $region95: #{snn_forward.1} parent=1 // loop_footer_branch
      %840 = sbr.rel target = $region91
    $region96: #{snn_forward.1} parent=1 // loop_exit
      _
    // Predicated region
    $region101: #{snn_forward.1} parent=1 // pred_check
      _
    $region102: #{snn_forward.1} parent=1 // pred_check_branch
      %7003 = sbr.rel (0) target = $region104
    $region103: #{snn_forward.1} parent=1 // pred_region
      _
    $region104: #{snn_forward.1} parent=1 // pred_fallthru
      _
    // Predicated region
    $region105: #{snn_forward.1} parent=1 // pred_check
      _
    $region106: #{snn_forward.1} parent=1 // pred_check_branch
      %7005 = sbr.rel (0) target = $region108
    $region107: #{snn_forward.1} parent=1 // pred_region
      _
    $region108: #{snn_forward.1} parent=1 // pred_fallthru
      _
    // Predicated region
    $region109: #{snn_forward.1} parent=1 // pred_check
      _
    $region110: #{snn_forward.1} parent=1 // pred_check_branch
      %7007 = sbr.rel (0) target = $region112
    $region111: #{snn_forward.1} parent=1 // pred_region
      _
    $region112: #{snn_forward.1} parent=1 // pred_fallthru
      _
    // Predicated region
    $region113: #{snn_forward.1} parent=1 // pred_check
      _
    $region114: #{snn_forward.1} parent=1 // pred_check_branch
      %7009 = sbr.rel (0) target = $region116
    $region115: #{snn_forward.1} parent=1 // pred_region
      _
    $region116: #{snn_forward.1} parent=1 // pred_fallthru
      _
    // Predicated region
    $region117: #{snn_forward.1} parent=1 // pred_check
      _
    $region118: #{snn_forward.1} parent=1 // pred_check_branch
      %7011 = sbr.rel (0) target = $region120
    $region119: #{snn_forward.1} parent=1 // pred_region
      _
    $region120: #{snn_forward.1} parent=1 // pred_fallthru
      _
    // Predicated region
    $region121: #{snn_forward.1} parent=1 // pred_check
      _
    $region122: #{snn_forward.1} parent=1 // pred_check_branch
      %7013 = sbr.rel (0) target = $region124
    $region123: #{snn_forward.1} parent=1 // pred_region
      _
    $region124: #{snn_forward.1} parent=1 // pred_fallthru
      _
    %7014 = vsyncpa [#allocation14], 1

</llo_original>
